<compile_context>
chip_gen: v7x
topology: tpu7x:2x2x1
jax: 0.10.0
libtpu: 0.0.40
codegen_flags: <defaults>
</compile_context>

<pallas_src>
import jax
import jax.numpy as jnp
import numpy as np
from jax.experimental import pallas as pl
from jax.experimental.pallas import tpu as pltpu


_LN_EPS = 1e-5
_TILE_TARGET_BYTES = 2 * 1024 * 1024   # ~2 MiB of activation traffic per grid step
_MIN_GRID_STEPS = 4                     # >=2 so v7x megacore uses both cores; 4 per review
_VMEM_FALLBACK = 64 * 1024 * 1024
_vmem_cache = [None]


def _vmem_limit_bytes():
    # 3/4 of the per-core physical VMEM: ~48 MiB on v7x (64 MiB), ~96 MiB on v5e/v6e
    # (128 MiB).  Leaves headroom for compiler-internal scratch and double buffers.
    if _vmem_cache[0] is None:
        try:
            cap = int(pltpu.get_tpu_info().vmem_capacity_bytes)
        except Exception:
            cap = _VMEM_FALLBACK
        _vmem_cache[0] = int(cap * 3 // 4)
    return _vmem_cache[0]


def _cp(n_axes=1):
    return pltpu.CompilerParams(
        dimension_semantics=("parallel",) * n_axes,
        vmem_limit_bytes=_vmem_limit_bytes())


def _row_tile(n, bytes_per_row):
    # Tile sized by bytes (target ~2 MiB per step) but capped so the grid has at least
    # _MIN_GRID_STEPS steps; multiple of 16 rows so f32 and bf16 blocks are tile-legal.
    # INVARIANT: every row-tiled kernel below is purely per-row, so padded tail rows of
    # a partial last block can never contaminate valid rows.  Do not add cross-row ops
    # (pooling, prefix sums, ...) to these kernels without revisiting the tiling.
    t = max(16, _TILE_TARGET_BYTES // max(int(bytes_per_row), 1))
    t = min(t, pl.cdiv(n, _MIN_GRID_STEPS))
    t = max(16, (t // 16) * 16)
    return n if t >= n else t


# ----------------------------------------------------------------------------- kernels

def ln_conv1_kernel(x_ref, g_ref, b_ref, w1a_ref, b1a_ref, w1b_ref, b1b_ref,
                    ln1_ref, h0_ref, h1_ref):
    # Fused LayerNorm1 + attn 1x1 conv.  Conv weight columns are pre-split into the two
    # SimpleGate halves (lane-aligned downstream).  Weights arrive bf16; LN stays f32.
    x = x_ref[...]
    mean = jnp.mean(x, axis=-1, keepdims=True)
    var = jnp.mean((x - mean) ** 2, axis=-1, keepdims=True)
    ln1 = (x - mean) * jax.lax.rsqrt(var + _LN_EPS) * g_ref[...] + b_ref[...]
    ln1_ref[...] = ln1
    ln_bf = ln1.astype(jnp.bfloat16)
    h0_ref[...] = (jnp.dot(ln_bf, w1a_ref[...], preferred_element_type=jnp.float32)
                   + b1a_ref[...]).astype(h0_ref.dtype)
    h1_ref[...] = (jnp.dot(ln_bf, w1b_ref[...], preferred_element_type=jnp.float32)
                   + b1b_ref[...]).astype(h1_ref.dtype)


def attn_spatial_kernel(h0_ref, h1_ref, w0_ref, w1_ref, b0_ref, b1_ref,
                        wca_ref, bca_ref, s_ref, xp0_scr, xp1_scr):
    # One batch element per grid step: 3x3 depthwise conv on each pre-split gate half,
    # SimpleGate multiply, global average pool and SCA — fused so the gated tensor and
    # the pooled vector never round-trip through HBM.  The 1-pixel halo is built here
    # in a zero-bordered VMEM scratch (replaces the wrapper-side jnp.pad).
    _, H, W, G = s_ref.shape
    # Zero every step (not just step 0): the grid axis is "parallel", so on v7x each
    # TensorCore owns its own scratch and must initialize it itself.
    xp0_scr[...] = jnp.zeros_like(xp0_scr)
    xp1_scr[...] = jnp.zeros_like(xp1_scr)
    xp0_scr[1:H + 1, 1:W + 1, :] = h0_ref[0].astype(jnp.float32)
    xp1_scr[1:H + 1, 1:W + 1, :] = h1_ref[0].astype(jnp.float32)
    xp0 = xp0_scr[...]
    xp1 = xp1_scr[...]
    w0 = w0_ref[...]                      # (3, 3, G), f32 (VPU work stays f32)
    w1 = w1_ref[...]
    acc0 = jnp.zeros((H, W, G), jnp.float32)
    acc1 = jnp.zeros((H, W, G), jnp.float32)
    for dh in range(3):                   # statically unrolled 3x3 taps
        r0 = xp0[dh:dh + H]               # hoisted row view, reused across dw taps
        r1 = xp1[dh:dh + H]
        for dw in range(3):
            acc0 = acc0 + r0[:, dw:dw + W, :] * w0[dh:dh + 1, dw:dw + 1, :]
            acc1 = acc1 + r1[:, dw:dw + W, :] * w1[dh:dh + 1, dw:dw + 1, :]
    acc0 = acc0 + b0_ref[...].reshape(1, 1, G)
    acc1 = acc1 + b1_ref[...].reshape(1, 1, G)
    g = acc0 * acc1                                            # SimpleGate (lane aligned)
    # AdaptiveAvgPool2d(1) + 1x1 SCA conv (tiny; kept f32)
    pooled = jnp.sum(jnp.sum(g, axis=0), axis=0) * (1.0 / (H * W))        # (G,)
    scale = jnp.dot(pooled.reshape(1, G), wca_ref[...],
                    preferred_element_type=jnp.float32) + bca_ref[...]    # (1, G)
    s_ref[0] = (g * scale.reshape(1, 1, G)).astype(s_ref.dtype)


def tail_fused_kernel(s_ref, ln1_ref, fft_ref,
                      w2_ref, b2_ref, beta_ref,
                      g2_ref, bb2_ref,
                      fw1a_ref, fb1a_ref, fw1b_ref, fb1b_ref,
                      fw2_ref, fb2_ref, gamma_ref, o_ref):
    # attn conv2 + beta residual, LayerNorm2, FFN (pre-split gate halves) + gamma
    # residual, and the final ResFFT add — one pass over the activation slab.
    # MXU operands bf16, residual/LN math f32.
    y = jnp.dot(s_ref[...], w2_ref[...], preferred_element_type=jnp.float32) + b2_ref[...]
    attn = ln1_ref[...] + y * beta_ref[...]
    mean = jnp.mean(attn, axis=-1, keepdims=True)
    var = jnp.mean((attn - mean) ** 2, axis=-1, keepdims=True)
    ln2 = (attn - mean) * jax.lax.rsqrt(var + _LN_EPS) * g2_ref[...] + bb2_ref[...]
    ln2_bf = ln2.astype(jnp.bfloat16)
    h0 = jnp.dot(ln2_bf, fw1a_ref[...], preferred_element_type=jnp.float32) + fb1a_ref[...]
    h1 = jnp.dot(ln2_bf, fw1b_ref[...], preferred_element_type=jnp.float32) + fb1b_ref[...]
    yf = jnp.dot((h0 * h1).astype(jnp.bfloat16), fw2_ref[...],
                 preferred_element_type=jnp.float32) + fb2_ref[...]
    o_ref[...] = (attn + yf * gamma_ref[...] + fft_ref[...]).astype(o_ref.dtype)


def cplx_mlp_kernel(z_ref, w1_ref, w2_ref, o_ref):
    # Complex MLP of ResFFTBlock as real block-matmuls:
    #   [zr zi] @ [[w1r w1i], [-w1i w1r]] = [hr hi];  ReLU;  same for layer 2.
    h = jnp.maximum(jnp.dot(z_ref[...], w1_ref[...],
                            preferred_element_type=jnp.float32), 0.0)
    o_ref[...] = jnp.dot(h.astype(jnp.bfloat16), w2_ref[...],
                         preferred_element_type=jnp.float32).astype(o_ref.dtype)


# ----------------------------------------------------------------------------- wrappers

def ln_conv1(x2d, ln_g, ln_b, w1a, b1a, w1b, b1b):
    N, C = x2d.shape
    G = w1a.shape[1]
    tN = _row_tile(N, bytes_per_row=4 * 2 * C + 2 * 2 * G)   # x + ln1 (f32), h0/h1 (bf16)
    row = lambda i: (i, 0)
    rep = lambda i: (0, 0)
    return pl.pallas_call(
        ln_conv1_kernel,
        out_shape=(jax.ShapeDtypeStruct((N, C), jnp.float32),
                   jax.ShapeDtypeStruct((N, G), jnp.bfloat16),
                   jax.ShapeDtypeStruct((N, G), jnp.bfloat16)),
        grid=(pl.cdiv(N, tN),),
        in_specs=[pl.BlockSpec((tN, C), row),
                  pl.BlockSpec((1, C), rep),
                  pl.BlockSpec((1, C), rep),
                  pl.BlockSpec((C, G), rep),
                  pl.BlockSpec((1, G), rep),
                  pl.BlockSpec((C, G), rep),
                  pl.BlockSpec((1, G), rep)],
        out_specs=(pl.BlockSpec((tN, C), row),
                   pl.BlockSpec((tN, G), row),
                   pl.BlockSpec((tN, G), row)),
        compiler_params=_cp(),
    )(x2d, ln_g.reshape(1, C), ln_b.reshape(1, C),
      w1a.astype(jnp.bfloat16), b1a.reshape(1, G),
      w1b.astype(jnp.bfloat16), b1b.reshape(1, G))


def attn_spatial(h0, h1, wdw0, wdw1, bdw0, bdw1, wca, bca):
    B, H, W, G = h0.shape
    img = lambda b: (b, 0, 0, 0)
    rep3 = lambda b: (0, 0, 0)
    rep2 = lambda b: (0, 0)
    return pl.pallas_call(
        attn_spatial_kernel,
        out_shape=jax.ShapeDtypeStruct((B, H, W, G), jnp.bfloat16),
        grid=(B,),
        in_specs=[pl.BlockSpec((1, H, W, G), img),
                  pl.BlockSpec((1, H, W, G), img),
                  pl.BlockSpec((3, 3, G), rep3),
                  pl.BlockSpec((3, 3, G), rep3),
                  pl.BlockSpec((1, G), rep2),
                  pl.BlockSpec((1, G), rep2),
                  pl.BlockSpec((G, G), rep2),
                  pl.BlockSpec((1, G), rep2)],
        out_specs=pl.BlockSpec((1, H, W, G), img),
        scratch_shapes=[pltpu.VMEM((H + 2, W + 2, G), jnp.float32),
                        pltpu.VMEM((H + 2, W + 2, G), jnp.float32)],
        compiler_params=_cp(),
    )(h0, h1, wdw0, wdw1, bdw0.reshape(1, G), bdw1.reshape(1, G),
      wca, bca.reshape(1, G))


def tail_fused(s2d, ln1_2d, fft2d, w2, b2, beta, ln2_g, ln2_b,
               fw1a, fb1a, fw1b, fb1b, fw2, fb2, gamma):
    N, G = s2d.shape
    C = w2.shape[1]
    Gf = fw1a.shape[1]
    tN = _row_tile(N, bytes_per_row=2 * G + 4 * 3 * C)  # s (bf16) + ln1/fft/out (f32)
    row = lambda i: (i, 0)
    rep = lambda i: (0, 0)
    return pl.pallas_call(
        tail_fused_kernel,
        out_shape=jax.ShapeDtypeStruct((N, C), jnp.float32),
        grid=(pl.cdiv(N, tN),),
        in_specs=[pl.BlockSpec((tN, G), row),
                  pl.BlockSpec((tN, C), row),
                  pl.BlockSpec((tN, C), row),
                  pl.BlockSpec((G, C), rep),
                  pl.BlockSpec((1, C), rep),
                  pl.BlockSpec((1, C), rep),
                  pl.BlockSpec((1, C), rep),
                  pl.BlockSpec((1, C), rep),
                  pl.BlockSpec((C, Gf), rep),
                  pl.BlockSpec((1, Gf), rep),
                  pl.BlockSpec((C, Gf), rep),
                  pl.BlockSpec((1, Gf), rep),
                  pl.BlockSpec((Gf, C), rep),
                  pl.BlockSpec((1, C), rep),
                  pl.BlockSpec((1, C), rep)],
        out_specs=pl.BlockSpec((tN, C), row),
        # fft2d (input 2) and the output share shape/dtype/index_map -> alias the HBM
        # buffer; one fewer (N, C) allocation and writeback stream.
        input_output_aliases={2: 0},
        compiler_params=_cp(),
    )(s2d, ln1_2d, fft2d, w2, b2.reshape(1, C), beta.reshape(1, C),
      ln2_g.reshape(1, C), ln2_b.reshape(1, C),
      fw1a, fb1a.reshape(1, Gf), fw1b, fb1b.reshape(1, Gf),
      fw2, fb2.reshape(1, C), gamma.reshape(1, C))


def cplx_mlp(zcat, w1_blk, w2_blk):
    Nz, C2 = zcat.shape
    H2 = w1_blk.shape[1]
    tN = _row_tile(Nz, bytes_per_row=2 * C2 + 4 * C2)   # zcat bf16 in, f32 out
    row = lambda i: (i, 0)
    rep = lambda i: (0, 0)
    return pl.pallas_call(
        cplx_mlp_kernel,
        out_shape=jax.ShapeDtypeStruct((Nz, C2), jnp.float32),
        grid=(pl.cdiv(Nz, tN),),
        in_specs=[pl.BlockSpec((tN, C2), row),
                  pl.BlockSpec((C2, H2), rep),
                  pl.BlockSpec((H2, C2), rep)],
        out_specs=pl.BlockSpec((tN, C2), row),
        compiler_params=_cp(),
    )(zcat, w1_blk, w2_blk)


# ----------------------------------------------------------------------------- forward

def fnafnet_block_forward(x, p, gate_factor=2):
    assert gate_factor == 2, "kernels pre-split weights into exactly 2 gate halves"
    B, C, H, W = x.shape
    N = B * H * W
    x_cl4 = jnp.transpose(x, (0, 2, 3, 1))                    # NHWC
    x2d = x_cl4.reshape(N, C)

    hid_a = p['attn_w1'].shape[1]
    gat_a = hid_a // gate_factor
    hid_f = p['ffn_w1'].shape[1]
    gat_f = hid_f // gate_factor

    # One-off weight splits (tiny, XLA-side) -> lane-aligned gate halves in-kernel.
    # (Merging the pairs back into a single (C, 2G) dot only pays off when G % 128 == 0.)
    w1a, w1b = p['attn_w1'][:, :gat_a], p['attn_w1'][:, gat_a:]
    b1a, b1b = p['attn_b1'][:gat_a], p['attn_b1'][gat_a:]
    wdw0, wdw1 = p['attn_wdw'][..., :gat_a], p['attn_wdw'][..., gat_a:]
    bdw0, bdw1 = p['attn_bdw'][:gat_a], p['attn_bdw'][gat_a:]
    fw1a, fw1b = p['ffn_w1'][:, :gat_f], p['ffn_w1'][:, gat_f:]
    fb1a, fb1b = p['ffn_b1'][:gat_f], p['ffn_b1'][gat_f:]

    # Kernel A: LayerNorm1 + attn 1x1 conv (both gate halves, bf16 MXU operands).
    ln1, h0, h1 = ln_conv1(x2d, p['ln1_g'], p['ln1_b'], w1a, b1a, w1b, b1b)

    # Kernel B: dw3x3 + SimpleGate + global pool + SCA, fused per batch element.
    # No wrapper-side pad: the halo lives in an in-kernel VMEM scratch.
    s = attn_spatial(h0.reshape(B, H, W, gat_a), h1.reshape(B, H, W, gat_a),
                     wdw0, wdw1, bdw0, bdw1, p['attn_wca'], p['attn_bca'])
    s2d = s.reshape(N, gat_a)

    # ---- ResFFTBlock, channels-last (no NCHW<->NHWC transposes around the FFT) ----
    # TODO(synk): rfft2/irfft2 have no Pallas primitive; computed with jnp.fft here.
    z = jnp.fft.rfft2(x_cl4, axes=(1, 2), norm='backward')    # (B, H, W//2+1, C)
    Bz, Hz, Wz, Cz = z.shape
    zflat = z.reshape(Bz * Hz * Wz, Cz)
    zcat = jnp.concatenate([jnp.real(zflat), jnp.imag(zflat)],
                           axis=-1).astype(jnp.bfloat16)      # (Nz, 2C), bf16 MXU feed
    w1_blk = jnp.concatenate(
        [jnp.concatenate([p['fft_w1r'], p['fft_w1i']], axis=1),
         jnp.concatenate([-p['fft_w1i'], p['fft_w1r']], axis=1)],
        axis=0).astype(jnp.bfloat16)
    w2_blk = jnp.concatenate(
        [jnp.concatenate([p['fft_w2r'], p['fft_w2i']], axis=1),
         jnp.concatenate([-p['fft_w2i'], p['fft_w2r']], axis=1)],
        axis=0).astype(jnp.bfloat16)
    zo = cplx_mlp(zcat, w1_blk, w2_blk)                       # (Nz, 2C) f32
    z2 = (zo[:, :Cz] + 1j * zo[:, Cz:]).reshape(Bz, Hz, Wz, Cz)
    fft_out = jnp.fft.irfft2(z2, s=(H, W), axes=(1, 2), norm='backward')  # (B,H,W,C)
    fft2d = fft_out.reshape(N, C).astype(jnp.float32)

    # Kernel C: conv2 + beta residual + LayerNorm2 + FFN + gamma residual + FFT add.
    out2d = tail_fused(s2d, ln1, fft2d,
                       p['attn_w2'].astype(jnp.bfloat16), p['attn_b2'], p['attn_beta'],
                       p['ln2_g'], p['ln2_b'],
                       fw1a.astype(jnp.bfloat16), fb1a,
                       fw1b.astype(jnp.bfloat16), fb1b,
                       p['ffn_w2'].astype(jnp.bfloat16), p['ffn_b2'], p['ffn_gamma'])
    return out2d.reshape(B, H, W, C).transpose(0, 3, 1, 2)


# ----------------------------------------------------------------------------- reference

def reference_forward(x, p, gate_factor=2):
    B, C, H, W = x.shape

    def ln(v, g, b):
        m = v.mean(-1, keepdims=True)
        var = ((v - m) ** 2).mean(-1, keepdims=True)
        return (v - m) / jnp.sqrt(var + _LN_EPS) * g + b

    x_cl = jnp.transpose(x, (0, 2, 3, 1))
    ln1 = ln(x_cl, p['ln1_g'], p['ln1_b'])
    h = ln1 @ p['attn_w1'] + p['attn_b1']
    hid_a = h.shape[-1]
    hp = jnp.pad(h, ((0, 0), (1, 1), (1, 1), (0, 0)))
    dw = jnp.zeros_like(h)
    for dh in range(3):
        for dwc in range(3):
            dw = dw + hp[:, dh:dh + H, dwc:dwc + W, :] * p['attn_wdw'][dh, dwc]
    dw = dw + p['attn_bdw']
    gat = hid_a // gate_factor
    g_ = dw[..., :gat]
    for i in range(1, gate_factor):
        g_ = g_ * dw[..., i * gat:(i + 1) * gat]
    pooled = g_.mean(axis=(1, 2))
    scale = pooled @ p['attn_wca'] + p['attn_bca']
    y = g_ * scale[:, None, None, :]
    y = y @ p['attn_w2'] + p['attn_b2']
    attn = ln1 + y * p['attn_beta']
    ln2v = ln(attn, p['ln2_g'], p['ln2_b'])
    hf = ln2v @ p['ffn_w1'] + p['ffn_b1']
    gatf = hf.shape[-1] // gate_factor
    gf = hf[..., :gatf]
    for i in range(1, gate_factor):
        gf = gf * hf[..., i * gatf:(i + 1) * gatf]
    yf = gf @ p['ffn_w2'] + p['ffn_b2']
    ffn = attn + yf * p['ffn_gamma']
    z = jnp.fft.rfft2(x, norm='backward')
    zc = jnp.transpose(z, (0, 2, 3, 1))
    w1 = p['fft_w1r'] + 1j * p['fft_w1i']
    w2 = p['fft_w2r'] + 1j * p['fft_w2i']
    z1 = zc @ w1
    z1 = jnp.maximum(z1.real, 0.0) + 1j * jnp.maximum(z1.imag, 0.0)
    z2 = jnp.transpose(z1 @ w2, (0, 3, 1, 2))
    fft_out = jnp.fft.irfft2(z2, s=(H, W), norm='backward')
    return jnp.transpose(ffn, (0, 3, 1, 2)) + fft_out


# ----------------------------------------------------------------------------- params

def init_params(key, C, attn_exp=2, ffn_exp=2, gate_red=2, fft_exp=2):
    hid_a = C * attn_exp
    gat_a = hid_a // gate_red
    hid_f = C * ffn_exp
    gat_f = hid_f // gate_red
    hid_z = C * fft_exp
    keys = jax.random.split(key, 24)

    def u(k, shape, fan_in):
        b = 1.0 / np.sqrt(fan_in)
        return jax.random.uniform(k, shape, jnp.float32, -b, b)

    def kaiming(k, shape, fan_in, a=4.0):
        gain = np.sqrt(2.0 / (1.0 + a * a))
        b = gain * np.sqrt(3.0 / fan_in)
        return jax.random.uniform(k, shape, jnp.float32, -b, b)

    p = {
        'ln1_g': 1.0 + 0.1 * jax.random.normal(keys[0], (C,), jnp.float32),
        'ln1_b': 0.1 * jax.random.normal(keys[1], (C,), jnp.float32),
        'ln2_g': 1.0 + 0.1 * jax.random.normal(keys[2], (C,), jnp.float32),
        'ln2_b': 0.1 * jax.random.normal(keys[3], (C,), jnp.float32),
        'attn_w1': u(keys[4], (C, hid_a), C),
        'attn_b1': u(keys[5], (hid_a,), C),
        'attn_wdw': u(keys[6], (3, 3, hid_a), 9),
        'attn_bdw': u(keys[7], (hid_a,), 9),
        'attn_wca': u(keys[8], (gat_a, gat_a), gat_a),
        'attn_bca': u(keys[9], (gat_a,), gat_a),
        'attn_w2': u(keys[10], (gat_a, C), gat_a),
        'attn_b2': u(keys[11], (C,), gat_a),
        # NOTE: PyTorch NAFNet zero-inits beta/gamma; small random values here so the
        # attn/ffn branches are exercised (synthetic parameters).
        'attn_beta': 0.2 * jax.random.normal(keys[12], (C,), jnp.float32),
        'ffn_w1': u(keys[13], (C, hid_f), C),
        'ffn_b1': u(keys[14], (hid_f,), C),
        'ffn_w2': u(keys[15], (gat_f, C), gat_f),
        'ffn_b2': u(keys[16], (C,), gat_f),
        'ffn_gamma': 0.2 * jax.random.normal(keys[17], (C,), jnp.float32),
        'fft_w1r': kaiming(keys[18], (C, hid_z), hid_z),
        'fft_w1i': kaiming(keys[19], (C, hid_z), hid_z),
        'fft_w2r': kaiming(keys[20], (hid_z, C), C),
        'fft_w2i': kaiming(keys[21], (hid_z, C), C),
    }
    return p


# ----------------------------------------------------------------------------- main

if __name__ == "__main__":
    B, C, H, W = 2, 4, 16, 16
    key = jax.random.PRNGKey(0)
    kx, kp = jax.random.split(key)
    x = jax.random.normal(kx, (B, C, H, W), jnp.float32)
    params = init_params(kp, C)

    fwd = jax.jit(fnafnet_block_forward)
    out = jax.block_until_ready(fwd(x, params))
    assert out.shape == (B, C, H, W), out.shape

    ref = jax.block_until_ready(reference_forward(x, params))
    if not np.allclose(np.asarray(out), np.asarray(ref), rtol=5e-2, atol=5e-2):
        err = float(jnp.max(jnp.abs(out - ref)))
        raise AssertionError(f"mismatch vs JAX reference, max abs err = {err}")

    print("KERNEL_OK")
</pallas_src>

<mosaic_0001>
module attributes {stable_mosaic.version = 11 : i64} {
  func.func @ln_conv1_kernel(%arg0: i32, %arg1: memref<128x4xf32, #tpu.memory_space<vmem>>, %arg2: memref<1x4xf32, #tpu.memory_space<vmem>>, %arg3: memref<1x4xf32, #tpu.memory_space<vmem>>, %arg4: memref<4x4xbf16, #tpu.memory_space<vmem>>, %arg5: memref<1x4xf32, #tpu.memory_space<vmem>>, %arg6: memref<4x4xbf16, #tpu.memory_space<vmem>>, %arg7: memref<1x4xf32, #tpu.memory_space<vmem>>, %arg8: memref<128x4xf32, #tpu.memory_space<vmem>>, %arg9: memref<128x4xbf16, #tpu.memory_space<vmem>>, %arg10: memref<128x4xbf16, #tpu.memory_space<vmem>>) attributes {dimension_semantics = [#tpu.dimension_semantics<parallel>], iteration_bounds = array<i64: 4>, scalar_prefetch = 0 : i64, scratch_operands = 0 : i64, tpu.core_type = #tpu.core_type<tc>, window_params = [{transform_indices = @transform_0, window_bounds = array<i64: 128, 4>}, {pipeline_mode = #tpu.pipeline_mode<synchronous>, transform_indices = @transform_1, window_bounds = array<i64: 1, 4>}, {pipeline_mode = #tpu.pipeline_mode<synchronous>, transform_indices = @transform_2, window_bounds = array<i64: 1, 4>}, {pipeline_mode = #tpu.pipeline_mode<synchronous>, transform_indices = @transform_3, window_bounds = array<i64: 4, 4>}, {pipeline_mode = #tpu.pipeline_mode<synchronous>, transform_indices = @transform_4, window_bounds = array<i64: 1, 4>}, {pipeline_mode = #tpu.pipeline_mode<synchronous>, transform_indices = @transform_5, window_bounds = array<i64: 4, 4>}, {pipeline_mode = #tpu.pipeline_mode<synchronous>, transform_indices = @transform_6, window_bounds = array<i64: 1, 4>}, {transform_indices = @transform_7, window_bounds = array<i64: 128, 4>}, {transform_indices = @transform_8, window_bounds = array<i64: 128, 4>}, {transform_indices = @transform_9, window_bounds = array<i64: 128, 4>}]} {
    %c0 = arith.constant 0 : index
    %c0_0 = arith.constant 0 : index
    %0 = vector.load %arg1[%c0, %c0_0] : memref<128x4xf32, #tpu.memory_space<vmem>>, vector<128x4xf32>
    %cst = arith.constant dense<0.000000e+00> : vector<128xf32>
    %1 = vector.multi_reduction <add>, %0, %cst [1] : vector<128x4xf32> to vector<128xf32>
    %2 = vector.shape_cast %1 : vector<128xf32> to vector<128x1xf32>
    %cst_1 = arith.constant 4.000000e+00 : f32
    %3 = vector.broadcast %cst_1 : f32 to vector<128x1xf32>
    %4 = arith.divf %2, %3 : vector<128x1xf32>
    %5 = vector.broadcast %4 : vector<128x1xf32> to vector<128x4xf32>
    %6 = arith.subf %0, %5 : vector<128x4xf32>
    %7 = arith.mulf %6, %6 : vector<128x4xf32>
    %cst_2 = arith.constant dense<0.000000e+00> : vector<128xf32>
    %8 = vector.multi_reduction <add>, %7, %cst_2 [1] : vector<128x4xf32> to vector<128xf32>
    %9 = vector.shape_cast %8 : vector<128xf32> to vector<128x1xf32>
    %cst_3 = arith.constant 4.000000e+00 : f32
    %10 = vector.broadcast %cst_3 : f32 to vector<128x1xf32>
    %11 = arith.divf %9, %10 : vector<128x1xf32>
    %12 = vector.broadcast %4 : vector<128x1xf32> to vector<128x4xf32>
    %13 = arith.subf %0, %12 : vector<128x4xf32>
    %cst_4 = arith.constant 9.99999974E-6 : f32
    %14 = vector.broadcast %cst_4 : f32 to vector<128x1xf32>
    %15 = arith.addf %11, %14 : vector<128x1xf32>
    %16 = math.rsqrt %15 : vector<128x1xf32>
    %17 = vector.broadcast %16 : vector<128x1xf32> to vector<128x4xf32>
    %18 = arith.mulf %13, %17 : vector<128x4xf32>
    %c0_5 = arith.constant 0 : index
    %c0_6 = arith.constant 0 : index
    %19 = vector.load %arg2[%c0_5, %c0_6] : memref<1x4xf32, #tpu.memory_space<vmem>>, vector<1x4xf32>
    %20 = vector.broadcast %19 : vector<1x4xf32> to vector<128x4xf32>
    %21 = arith.mulf %18, %20 : vector<128x4xf32>
    %c0_7 = arith.constant 0 : index
    %c0_8 = arith.constant 0 : index
    %22 = vector.load %arg3[%c0_7, %c0_8] : memref<1x4xf32, #tpu.memory_space<vmem>>, vector<1x4xf32>
    %23 = vector.broadcast %22 : vector<1x4xf32> to vector<128x4xf32>
    %24 = arith.addf %21, %23 : vector<128x4xf32>
    %c0_9 = arith.constant 0 : index
    %c0_10 = arith.constant 0 : index
    %25 = vector.load %arg8[%c0_9, %c0_10] : memref<128x4xf32, #tpu.memory_space<vmem>>, vector<128x4xf32>
    tpu.vector_store %arg8[%c0_9, %c0_10], %24 {strides = array<i32>} : memref<128x4xf32, #tpu.memory_space<vmem>>, vector<128x4xf32>,
    %26 = arith.truncf %24 : vector<128x4xf32> to vector<128x4xbf16>
    %c0_11 = arith.constant 0 : index
    %c0_12 = arith.constant 0 : index
    %27 = vector.load %arg4[%c0_11, %c0_12] : memref<4x4xbf16, #tpu.memory_space<vmem>>, vector<4x4xbf16>
    %cst_13 = arith.constant dense<0.000000e+00> : vector<128x4xf32>
    %28 = tpu.matmul %26, %27, %cst_13 {dimension_numbers = #tpu.dot_dimension_numbers<[1], [0], [0], [1], [0, 0, 1, 1], [], []>} : vector<128x4xbf16>, vector<4x4xbf16>, vector<128x4xf32> -> vector<128x4xf32>
    %c0_14 = arith.constant 0 : index
    %c0_15 = arith.constant 0 : index
    %29 = vector.load %arg5[%c0_14, %c0_15] : memref<1x4xf32, #tpu.memory_space<vmem>>, vector<1x4xf32>
    %30 = vector.broadcast %29 : vector<1x4xf32> to vector<128x4xf32>
    %31 = arith.addf %28, %30 : vector<128x4xf32>
    %32 = arith.truncf %31 : vector<128x4xf32> to vector<128x4xbf16>
    %c0_16 = arith.constant 0 : index
    %c0_17 = arith.constant 0 : index
    %33 = vector.load %arg9[%c0_16, %c0_17] : memref<128x4xbf16, #tpu.memory_space<vmem>>, vector<128x4xbf16>
    tpu.vector_store %arg9[%c0_16, %c0_17], %32 {strides = array<i32>} : memref<128x4xbf16, #tpu.memory_space<vmem>>, vector<128x4xbf16>,
    %c0_18 = arith.constant 0 : index
    %c0_19 = arith.constant 0 : index
    %34 = vector.load %arg6[%c0_18, %c0_19] : memref<4x4xbf16, #tpu.memory_space<vmem>>, vector<4x4xbf16>
    %cst_20 = arith.constant dense<0.000000e+00> : vector<128x4xf32>
    %35 = tpu.matmul %26, %34, %cst_20 {dimension_numbers = #tpu.dot_dimension_numbers<[1], [0], [0], [1], [0, 0, 1, 1], [], []>} : vector<128x4xbf16>, vector<4x4xbf16>, vector<128x4xf32> -> vector<128x4xf32>
    %c0_21 = arith.constant 0 : index
    %c0_22 = arith.constant 0 : index
    %36 = vector.load %arg7[%c0_21, %c0_22] : memref<1x4xf32, #tpu.memory_space<vmem>>, vector<1x4xf32>
    %37 = vector.broadcast %36 : vector<1x4xf32> to vector<128x4xf32>
    %38 = arith.addf %35, %37 : vector<128x4xf32>
    %39 = arith.truncf %38 : vector<128x4xf32> to vector<128x4xbf16>
    %c0_23 = arith.constant 0 : index
    %c0_24 = arith.constant 0 : index
    %40 = vector.load %arg10[%c0_23, %c0_24] : memref<128x4xbf16, #tpu.memory_space<vmem>>, vector<128x4xbf16>
    tpu.vector_store %arg10[%c0_23, %c0_24], %39 {strides = array<i32>} : memref<128x4xbf16, #tpu.memory_space<vmem>>, vector<128x4xbf16>,
    return
  }
  func.func @transform_0(%arg0: i32) -> (i32, i32) {
    %c0_i32 = arith.constant 0 : i32
    %c0_i32_0 = arith.constant 0 : i32
    return %arg0, %c0_i32 : i32, i32
  }
  func.func @transform_1(%arg0: i32) -> (i32, i32) {
    %c0_i32 = arith.constant 0 : i32
    %c0_i32_0 = arith.constant 0 : i32
    %c0_i32_1 = arith.constant 0 : i32
    return %c0_i32, %c0_i32_0 : i32, i32
  }
  func.func @transform_2(%arg0: i32) -> (i32, i32) {
    %c0_i32 = arith.constant 0 : i32
    %c0_i32_0 = arith.constant 0 : i32
    %c0_i32_1 = arith.constant 0 : i32
    return %c0_i32, %c0_i32_0 : i32, i32
  }
  func.func @transform_3(%arg0: i32) -> (i32, i32) {
    %c0_i32 = arith.constant 0 : i32
    %c0_i32_0 = arith.constant 0 : i32
    %c0_i32_1 = arith.constant 0 : i32
    return %c0_i32, %c0_i32_0 : i32, i32
  }
  func.func @transform_4(%arg0: i32) -> (i32, i32) {
    %c0_i32 = arith.constant 0 : i32
    %c0_i32_0 = arith.constant 0 : i32
    %c0_i32_1 = arith.constant 0 : i32
    return %c0_i32, %c0_i32_0 : i32, i32
  }
  func.func @transform_5(%arg0: i32) -> (i32, i32) {
    %c0_i32 = arith.constant 0 : i32
    %c0_i32_0 = arith.constant 0 : i32
    %c0_i32_1 = arith.constant 0 : i32
    return %c0_i32, %c0_i32_0 : i32, i32
  }
  func.func @transform_6(%arg0: i32) -> (i32, i32) {
    %c0_i32 = arith.constant 0 : i32
    %c0_i32_0 = arith.constant 0 : i32
    %c0_i32_1 = arith.constant 0 : i32
    return %c0_i32, %c0_i32_0 : i32, i32
  }
  func.func @transform_7(%arg0: i32) -> (i32, i32) {
    %c0_i32 = arith.constant 0 : i32
    %c0_i32_0 = arith.constant 0 : i32
    return %arg0, %c0_i32 : i32, i32
  }
  func.func @transform_8(%arg0: i32) -> (i32, i32) {
    %c0_i32 = arith.constant 0 : i32
    %c0_i32_0 = arith.constant 0 : i32
    return %arg0, %c0_i32 : i32, i32
  }
  func.func @transform_9(%arg0: i32) -> (i32, i32) {
    %c0_i32 = arith.constant 0 : i32
    %c0_i32_0 = arith.constant 0 : i32
    return %arg0, %c0_i32 : i32, i32
  }
}

module attributes {stable_mosaic.version = 11 : i64} {
  func.func @attn_spatial_kernel(%arg0: i32, %arg1: memref<1x16x16x4xbf16, #tpu.memory_space<vmem>>, %arg2: memref<1x16x16x4xbf16, #tpu.memory_space<vmem>>, %arg3: memref<3x3x4xf32, #tpu.memory_space<vmem>>, %arg4: memref<3x3x4xf32, #tpu.memory_space<vmem>>, %arg5: memref<1x4xf32, #tpu.memory_space<vmem>>, %arg6: memref<1x4xf32, #tpu.memory_space<vmem>>, %arg7: memref<4x4xf32, #tpu.memory_space<vmem>>, %arg8: memref<1x4xf32, #tpu.memory_space<vmem>>, %arg9: memref<1x16x16x4xbf16, #tpu.memory_space<vmem>>, %arg10: memref<18x18x4xf32, #tpu.memory_space<vmem>>, %arg11: memref<18x18x4xf32, #tpu.memory_space<vmem>>) attributes {dimension_semantics = [#tpu.dimension_semantics<parallel>], iteration_bounds = array<i64: 2>, scalar_prefetch = 0 : i64, scratch_operands = 2 : i64, tpu.core_type = #tpu.core_type<tc>, window_params = [{transform_indices = @transform_0, window_bounds = array<i64: 1, 16, 16, 4>}, {transform_indices = @transform_1, window_bounds = array<i64: 1, 16, 16, 4>}, {pipeline_mode = #tpu.pipeline_mode<synchronous>, transform_indices = @transform_2, window_bounds = array<i64: 3, 3, 4>}, {pipeline_mode = #tpu.pipeline_mode<synchronous>, transform_indices = @transform_3, window_bounds = array<i64: 3, 3, 4>}, {pipeline_mode = #tpu.pipeline_mode<synchronous>, transform_indices = @transform_4, window_bounds = array<i64: 1, 4>}, {pipeline_mode = #tpu.pipeline_mode<synchronous>, transform_indices = @transform_5, window_bounds = array<i64: 1, 4>}, {pipeline_mode = #tpu.pipeline_mode<synchronous>, transform_indices = @transform_6, window_bounds = array<i64: 4, 4>}, {pipeline_mode = #tpu.pipeline_mode<synchronous>, transform_indices = @transform_7, window_bounds = array<i64: 1, 4>}, {transform_indices = @transform_8, window_bounds = array<i64: 1, 16, 16, 4>}]} {
    %cst = arith.constant 0.000000e+00 : f32
    %0 = vector.broadcast %cst : f32 to vector<18x18x4xf32>
    %c0 = arith.constant 0 : index
    %c0_0 = arith.constant 0 : index
    %c0_1 = arith.constant 0 : index
    %1 = vector.load %arg10[%c0, %c0_0, %c0_1] : memref<18x18x4xf32, #tpu.memory_space<vmem>>, vector<18x18x4xf32>
    tpu.vector_store %arg10[%c0, %c0_0, %c0_1], %0 {strides = array<i32>} : memref<18x18x4xf32, #tpu.memory_space<vmem>>, vector<18x18x4xf32>,
    %cst_2 = arith.constant 0.000000e+00 : f32
    %2 = vector.broadcast %cst_2 : f32 to vector<18x18x4xf32>
    %c0_3 = arith.constant 0 : index
    %c0_4 = arith.constant 0 : index
    %c0_5 = arith.constant 0 : index
    %3 = vector.load %arg11[%c0_3, %c0_4, %c0_5] : memref<18x18x4xf32, #tpu.memory_space<vmem>>, vector<18x18x4xf32>
    tpu.vector_store %arg11[%c0_3, %c0_4, %c0_5], %2 {strides = array<i32>} : memref<18x18x4xf32, #tpu.memory_space<vmem>>, vector<18x18x4xf32>,
    %c0_6 = arith.constant 0 : index
    %c0_7 = arith.constant 0 : index
    %c0_8 = arith.constant 0 : index
    %c0_9 = arith.constant 0 : index
    %4 = vector.load %arg1[%c0_6, %c0_7, %c0_8, %c0_9] : memref<1x16x16x4xbf16, #tpu.memory_space<vmem>>, vector<1x16x16x4xbf16>
    %5 = vector.shape_cast %4 : vector<1x16x16x4xbf16> to vector<16x16x4xbf16>
    %6 = arith.extf %5 : vector<16x16x4xbf16> to vector<16x16x4xf32>
    %c1 = arith.constant 1 : index
    %c1_10 = arith.constant 1 : index
    %c0_11 = arith.constant 0 : index
    %7 = vector.load %arg10[%c1, %c1_10, %c0_11] : memref<18x18x4xf32, #tpu.memory_space<vmem>>, vector<16x16x4xf32>
    tpu.vector_store %arg10[%c1, %c1_10, %c0_11], %6 {strides = array<i32>} : memref<18x18x4xf32, #tpu.memory_space<vmem>>, vector<16x16x4xf32>,
    %c0_12 = arith.constant 0 : index
    %c0_13 = arith.constant 0 : index
    %c0_14 = arith.constant 0 : index
    %c0_15 = arith.constant 0 : index
    %8 = vector.load %arg2[%c0_12, %c0_13, %c0_14, %c0_15] : memref<1x16x16x4xbf16, #tpu.memory_space<vmem>>, vector<1x16x16x4xbf16>
    %9 = vector.shape_cast %8 : vector<1x16x16x4xbf16> to vector<16x16x4xbf16>
    %10 = arith.extf %9 : vector<16x16x4xbf16> to vector<16x16x4xf32>
    %c1_16 = arith.constant 1 : index
    %c1_17 = arith.constant 1 : index
    %c0_18 = arith.constant 0 : index
    %11 = vector.load %arg11[%c1_16, %c1_17, %c0_18] : memref<18x18x4xf32, #tpu.memory_space<vmem>>, vector<16x16x4xf32>
    tpu.vector_store %arg11[%c1_16, %c1_17, %c0_18], %10 {strides = array<i32>} : memref<18x18x4xf32, #tpu.memory_space<vmem>>, vector<16x16x4xf32>,
    %c0_19 = arith.constant 0 : index
    %c0_20 = arith.constant 0 : index
    %c0_21 = arith.constant 0 : index
    %12 = vector.load %arg10[%c0_19, %c0_20, %c0_21] : memref<18x18x4xf32, #tpu.memory_space<vmem>>, vector<18x18x4xf32>
    %c0_22 = arith.constant 0 : index
    %c0_23 = arith.constant 0 : index
    %c0_24 = arith.constant 0 : index
    %13 = vector.load %arg11[%c0_22, %c0_23, %c0_24] : memref<18x18x4xf32, #tpu.memory_space<vmem>>, vector<18x18x4xf32>
    %c0_25 = arith.constant 0 : index
    %c0_26 = arith.constant 0 : index
    %c0_27 = arith.constant 0 : index
    %14 = vector.load %arg3[%c0_25, %c0_26, %c0_27] : memref<3x3x4xf32, #tpu.memory_space<vmem>>, vector<3x3x4xf32>
    %c0_28 = arith.constant 0 : index
    %c0_29 = arith.constant 0 : index
    %c0_30 = arith.constant 0 : index
    %15 = vector.load %arg4[%c0_28, %c0_29, %c0_30] : memref<3x3x4xf32, #tpu.memory_space<vmem>>, vector<3x3x4xf32>
    %cst_31 = arith.constant 0.000000e+00 : f32
    %16 = vector.broadcast %cst_31 : f32 to vector<16x16x4xf32>
    %cst_32 = arith.constant 0.000000e+00 : f32
    %17 = vector.broadcast %cst_32 : f32 to vector<16x16x4xf32>
    %18 = vector.extract_strided_slice %12 {offsets = [0, 0, 0], sizes = [16, 18, 4], strides = [1, 1, 1]} : vector<18x18x4xf32> to vector<16x18x4xf32>
    %19 = vector.extract_strided_slice %13 {offsets = [0, 0, 0], sizes = [16, 18, 4], strides = [1, 1, 1]} : vector<18x18x4xf32> to vector<16x18x4xf32>
    %20 = vector.extract_strided_slice %18 {offsets = [0, 0, 0], sizes = [16, 16, 4], strides = [1, 1, 1]} : vector<16x18x4xf32> to vector<16x16x4xf32>
    %21 = vector.extract_strided_slice %14 {offsets = [0, 0, 0], sizes = [1, 1, 4], strides = [1, 1, 1]} : vector<3x3x4xf32> to vector<1x1x4xf32>
    %22 = vector.broadcast %21 : vector<1x1x4xf32> to vector<16x16x4xf32>
    %23 = arith.mulf %20, %22 : vector<16x16x4xf32>
    %24 = arith.addf %16, %23 : vector<16x16x4xf32>
    %25 = vector.extract_strided_slice %19 {offsets = [0, 0, 0], sizes = [16, 16, 4], strides = [1, 1, 1]} : vector<16x18x4xf32> to vector<16x16x4xf32>
    %26 = vector.extract_strided_slice %15 {offsets = [0, 0, 0], sizes = [1, 1, 4], strides = [1, 1, 1]} : vector<3x3x4xf32> to vector<1x1x4xf32>
    %27 = vector.broadcast %26 : vector<1x1x4xf32> to vector<16x16x4xf32>
    %28 = arith.mulf %25, %27 : vector<16x16x4xf32>
    %29 = arith.addf %17, %28 : vector<16x16x4xf32>
    %30 = vector.extract_strided_slice %18 {offsets = [0, 1, 0], sizes = [16, 16, 4], strides = [1, 1, 1]} : vector<16x18x4xf32> to vector<16x16x4xf32>
    %31 = vector.extract_strided_slice %14 {offsets = [0, 1, 0], sizes = [1, 1, 4], strides = [1, 1, 1]} : vector<3x3x4xf32> to vector<1x1x4xf32>
    %32 = vector.broadcast %31 : vector<1x1x4xf32> to vector<16x16x4xf32>
    %33 = arith.mulf %30, %32 : vector<16x16x4xf32>
    %34 = arith.addf %24, %33 : vector<16x16x4xf32>
    %35 = vector.extract_strided_slice %19 {offsets = [0, 1, 0], sizes = [16, 16, 4], strides = [1, 1, 1]} : vector<16x18x4xf32> to vector<16x16x4xf32>
    %36 = vector.extract_strided_slice %15 {offsets = [0, 1, 0], sizes = [1, 1, 4], strides = [1, 1, 1]} : vector<3x3x4xf32> to vector<1x1x4xf32>
    %37 = vector.broadcast %36 : vector<1x1x4xf32> to vector<16x16x4xf32>
    %38 = arith.mulf %35, %37 : vector<16x16x4xf32>
    %39 = arith.addf %29, %38 : vector<16x16x4xf32>
    %40 = vector.extract_strided_slice %18 {offsets = [0, 2, 0], sizes = [16, 16, 4], strides = [1, 1, 1]} : vector<16x18x4xf32> to vector<16x16x4xf32>
    %41 = vector.extract_strided_slice %14 {offsets = [0, 2, 0], sizes = [1, 1, 4], strides = [1, 1, 1]} : vector<3x3x4xf32> to vector<1x1x4xf32>
    %42 = vector.broadcast %41 : vector<1x1x4xf32> to vector<16x16x4xf32>
    %43 = arith.mulf %40, %42 : vector<16x16x4xf32>
    %44 = arith.addf %34, %43 : vector<16x16x4xf32>
    %45 = vector.extract_strided_slice %19 {offsets = [0, 2, 0], sizes = [16, 16, 4], strides = [1, 1, 1]} : vector<16x18x4xf32> to vector<16x16x4xf32>
    %46 = vector.extract_strided_slice %15 {offsets = [0, 2, 0], sizes = [1, 1, 4], strides = [1, 1, 1]} : vector<3x3x4xf32> to vector<1x1x4xf32>
    %47 = vector.broadcast %46 : vector<1x1x4xf32> to vector<16x16x4xf32>
    %48 = arith.mulf %45, %47 : vector<16x16x4xf32>
    %49 = arith.addf %39, %48 : vector<16x16x4xf32>
    %50 = vector.extract_strided_slice %12 {offsets = [1, 0, 0], sizes = [16, 18, 4], strides = [1, 1, 1]} : vector<18x18x4xf32> to vector<16x18x4xf32>
    %51 = vector.extract_strided_slice %13 {offsets = [1, 0, 0], sizes = [16, 18, 4], strides = [1, 1, 1]} : vector<18x18x4xf32> to vector<16x18x4xf32>
    %52 = vector.extract_strided_slice %50 {offsets = [0, 0, 0], sizes = [16, 16, 4], strides = [1, 1, 1]} : vector<16x18x4xf32> to vector<16x16x4xf32>
    %53 = vector.extract_strided_slice %14 {offsets = [1, 0, 0], sizes = [1, 1, 4], strides = [1, 1, 1]} : vector<3x3x4xf32> to vector<1x1x4xf32>
    %54 = vector.broadcast %53 : vector<1x1x4xf32> to vector<16x16x4xf32>
    %55 = arith.mulf %52, %54 : vector<16x16x4xf32>
    %56 = arith.addf %44, %55 : vector<16x16x4xf32>
    %57 = vector.extract_strided_slice %51 {offsets = [0, 0, 0], sizes = [16, 16, 4], strides = [1, 1, 1]} : vector<16x18x4xf32> to vector<16x16x4xf32>
    %58 = vector.extract_strided_slice %15 {offsets = [1, 0, 0], sizes = [1, 1, 4], strides = [1, 1, 1]} : vector<3x3x4xf32> to vector<1x1x4xf32>
    %59 = vector.broadcast %58 : vector<1x1x4xf32> to vector<16x16x4xf32>
    %60 = arith.mulf %57, %59 : vector<16x16x4xf32>
    %61 = arith.addf %49, %60 : vector<16x16x4xf32>
    %62 = vector.extract_strided_slice %50 {offsets = [0, 1, 0], sizes = [16, 16, 4], strides = [1, 1, 1]} : vector<16x18x4xf32> to vector<16x16x4xf32>
    %63 = vector.extract_strided_slice %14 {offsets = [1, 1, 0], sizes = [1, 1, 4], strides = [1, 1, 1]} : vector<3x3x4xf32> to vector<1x1x4xf32>
    %64 = vector.broadcast %63 : vector<1x1x4xf32> to vector<16x16x4xf32>
    %65 = arith.mulf %62, %64 : vector<16x16x4xf32>
    %66 = arith.addf %56, %65 : vector<16x16x4xf32>
    %67 = vector.extract_strided_slice %51 {offsets = [0, 1, 0], sizes = [16, 16, 4], strides = [1, 1, 1]} : vector<16x18x4xf32> to vector<16x16x4xf32>
    %68 = vector.extract_strided_slice %15 {offsets = [1, 1, 0], sizes = [1, 1, 4], strides = [1, 1, 1]} : vector<3x3x4xf32> to vector<1x1x4xf32>
    %69 = vector.broadcast %68 : vector<1x1x4xf32> to vector<16x16x4xf32>
    %70 = arith.mulf %67, %69 : vector<16x16x4xf32>
    %71 = arith.addf %61, %70 : vector<16x16x4xf32>
    %72 = vector.extract_strided_slice %50 {offsets = [0, 2, 0], sizes = [16, 16, 4], strides = [1, 1, 1]} : vector<16x18x4xf32> to vector<16x16x4xf32>
    %73 = vector.extract_strided_slice %14 {offsets = [1, 2, 0], sizes = [1, 1, 4], strides = [1, 1, 1]} : vector<3x3x4xf32> to vector<1x1x4xf32>
    %74 = vector.broadcast %73 : vector<1x1x4xf32> to vector<16x16x4xf32>
    %75 = arith.mulf %72, %74 : vector<16x16x4xf32>
    %76 = arith.addf %66, %75 : vector<16x16x4xf32>
    %77 = vector.extract_strided_slice %51 {offsets = [0, 2, 0], sizes = [16, 16, 4], strides = [1, 1, 1]} : vector<16x18x4xf32> to vector<16x16x4xf32>
    %78 = vector.extract_strided_slice %15 {offsets = [1, 2, 0], sizes = [1, 1, 4], strides = [1, 1, 1]} : vector<3x3x4xf32> to vector<1x1x4xf32>
    %79 = vector.broadcast %78 : vector<1x1x4xf32> to vector<16x16x4xf32>
    %80 = arith.mulf %77, %79 : vector<16x16x4xf32>
    %81 = arith.addf %71, %80 : vector<16x16x4xf32>
    %82 = vector.extract_strided_slice %12 {offsets = [2, 0, 0], sizes = [16, 18, 4], strides = [1, 1, 1]} : vector<18x18x4xf32> to vector<16x18x4xf32>
    %83 = vector.extract_strided_slice %13 {offsets = [2, 0, 0], sizes = [16, 18, 4], strides = [1, 1, 1]} : vector<18x18x4xf32> to vector<16x18x4xf32>
    %84 = vector.extract_strided_slice %82 {offsets = [0, 0, 0], sizes = [16, 16, 4], strides = [1, 1, 1]} : vector<16x18x4xf32> to vector<16x16x4xf32>
    %85 = vector.extract_strided_slice %14 {offsets = [2, 0, 0], sizes = [1, 1, 4], strides = [1, 1, 1]} : vector<3x3x4xf32> to vector<1x1x4xf32>
    %86 = vector.broadcast %85 : vector<1x1x4xf32> to vector<16x16x4xf32>
    %87 = arith.mulf %84, %86 : vector<16x16x4xf32>
    %88 = arith.addf %76, %87 : vector<16x16x4xf32>
    %89 = vector.extract_strided_slice %83 {offsets = [0, 0, 0], sizes = [16, 16, 4], strides = [1, 1, 1]} : vector<16x18x4xf32> to vector<16x16x4xf32>
    %90 = vector.extract_strided_slice %15 {offsets = [2, 0, 0], sizes = [1, 1, 4], strides = [1, 1, 1]} : vector<3x3x4xf32> to vector<1x1x4xf32>
    %91 = vector.broadcast %90 : vector<1x1x4xf32> to vector<16x16x4xf32>
    %92 = arith.mulf %89, %91 : vector<16x16x4xf32>
    %93 = arith.addf %81, %92 : vector<16x16x4xf32>
    %94 = vector.extract_strided_slice %82 {offsets = [0, 1, 0], sizes = [16, 16, 4], strides = [1, 1, 1]} : vector<16x18x4xf32> to vector<16x16x4xf32>
    %95 = vector.extract_strided_slice %14 {offsets = [2, 1, 0], sizes = [1, 1, 4], strides = [1, 1, 1]} : vector<3x3x4xf32> to vector<1x1x4xf32>
    %96 = vector.broadcast %95 : vector<1x1x4xf32> to vector<16x16x4xf32>
    %97 = arith.mulf %94, %96 : vector<16x16x4xf32>
    %98 = arith.addf %88, %97 : vector<16x16x4xf32>
    %99 = vector.extract_strided_slice %83 {offsets = [0, 1, 0], sizes = [16, 16, 4], strides = [1, 1, 1]} : vector<16x18x4xf32> to vector<16x16x4xf32>
    %100 = vector.extract_strided_slice %15 {offsets = [2, 1, 0], sizes = [1, 1, 4], strides = [1, 1, 1]} : vector<3x3x4xf32> to vector<1x1x4xf32>
    %101 = vector.broadcast %100 : vector<1x1x4xf32> to vector<16x16x4xf32>
    %102 = arith.mulf %99, %101 : vector<16x16x4xf32>
    %103 = arith.addf %93, %102 : vector<16x16x4xf32>
    %104 = vector.extract_strided_slice %82 {offsets = [0, 2, 0], sizes = [16, 16, 4], strides = [1, 1, 1]} : vector<16x18x4xf32> to vector<16x16x4xf32>
    %105 = vector.extract_strided_slice %14 {offsets = [2, 2, 0], sizes = [1, 1, 4], strides = [1, 1, 1]} : vector<3x3x4xf32> to vector<1x1x4xf32>
    %106 = vector.broadcast %105 : vector<1x1x4xf32> to vector<16x16x4xf32>
    %107 = arith.mulf %104, %106 : vector<16x16x4xf32>
    %108 = arith.addf %98, %107 : vector<16x16x4xf32>
    %109 = vector.extract_strided_slice %83 {offsets = [0, 2, 0], sizes = [16, 16, 4], strides = [1, 1, 1]} : vector<16x18x4xf32> to vector<16x16x4xf32>
    %110 = vector.extract_strided_slice %15 {offsets = [2, 2, 0], sizes = [1, 1, 4], strides = [1, 1, 1]} : vector<3x3x4xf32> to vector<1x1x4xf32>
    %111 = vector.broadcast %110 : vector<1x1x4xf32> to vector<16x16x4xf32>
    %112 = arith.mulf %109, %111 : vector<16x16x4xf32>
    %113 = arith.addf %103, %112 : vector<16x16x4xf32>
    %c0_33 = arith.constant 0 : index
    %c0_34 = arith.constant 0 : index
    %114 = vector.load %arg5[%c0_33, %c0_34] : memref<1x4xf32, #tpu.memory_space<vmem>>, vector<1x4xf32>
    %115 = vector.shape_cast %114 : vector<1x4xf32> to vector<1x1x4xf32>
    %116 = vector.broadcast %115 : vector<1x1x4xf32> to vector<16x16x4xf32>
    %117 = arith.addf %108, %116 : vector<16x16x4xf32>
    %c0_35 = arith.constant 0 : index
    %c0_36 = arith.constant 0 : index
    %118 = vector.load %arg6[%c0_35, %c0_36] : memref<1x4xf32, #tpu.memory_space<vmem>>, vector<1x4xf32>
    %119 = vector.shape_cast %118 : vector<1x4xf32> to vector<1x1x4xf32>
    %120 = vector.broadcast %119 : vector<1x1x4xf32> to vector<16x16x4xf32>
    %121 = arith.addf %113, %120 : vector<16x16x4xf32>
    %122 = arith.mulf %117, %121 : vector<16x16x4xf32>
    %cst_37 = arith.constant dense<0.000000e+00> : vector<16x4xf32>
    %123 = vector.multi_reduction <add>, %122, %cst_37 [0] : vector<16x16x4xf32> to vector<16x4xf32>
    %cst_38 = arith.constant dense<0.000000e+00> : vector<4xf32>
    %124 = vector.multi_reduction <add>, %123, %cst_38 [0] : vector<16x4xf32> to vector<4xf32>
    %cst_39 = arith.constant 3.906250e-03 : f32
    %125 = vector.broadcast %cst_39 : f32 to vector<4xf32>
    %126 = arith.mulf %124, %125 : vector<4xf32>
    %127 = vector.shape_cast %126 : vector<4xf32> to vector<1x4xf32>
    %c0_40 = arith.constant 0 : index
    %c0_41 = arith.constant 0 : index
    %128 = vector.load %arg7[%c0_40, %c0_41] : memref<4x4xf32, #tpu.memory_space<vmem>>, vector<4x4xf32>
    %cst_42 = arith.constant dense<0.000000e+00> : vector<1x4xf32>
    %129 = tpu.matmul %127, %128, %cst_42 {dimension_numbers = #tpu.dot_dimension_numbers<[1], [0], [0], [1], [0, 0, 1, 1], [], []>} : vector<1x4xf32>, vector<4x4xf32>, vector<1x4xf32> -> vector<1x4xf32>
    %c0_43 = arith.constant 0 : index
    %c0_44 = arith.constant 0 : index
    %130 = vector.load %arg8[%c0_43, %c0_44] : memref<1x4xf32, #tpu.memory_space<vmem>>, vector<1x4xf32>
    %131 = arith.addf %129, %130 : vector<1x4xf32>
    %132 = vector.shape_cast %131 : vector<1x4xf32> to vector<1x1x4xf32>
    %133 = vector.broadcast %132 : vector<1x1x4xf32> to vector<16x16x4xf32>
    %134 = arith.mulf %122, %133 : vector<16x16x4xf32>
    %135 = arith.truncf %134 : vector<16x16x4xf32> to vector<16x16x4xbf16>
    %c0_45 = arith.constant 0 : index
    %c0_46 = arith.constant 0 : index
    %c0_47 = arith.constant 0 : index
    %c0_48 = arith.constant 0 : index
    %136 = vector.load %arg9[%c0_45, %c0_46, %c0_47, %c0_48] : memref<1x16x16x4xbf16, #tpu.memory_space<vmem>>, vector<1x16x16x4xbf16>
    %137 = vector.shape_cast %136 : vector<1x16x16x4xbf16> to vector<16x16x4xbf16>
    %138 = vector.shape_cast %135 : vector<16x16x4xbf16> to vector<1x16x16x4xbf16>
    tpu.vector_store %arg9[%c0_45, %c0_46, %c0_47, %c0_48], %138 {strides = array<i32>} : memref<1x16x16x4xbf16, #tpu.memory_space<vmem>>, vector<1x16x16x4xbf16>,
    return
  }
  func.func @transform_0(%arg0: i32) -> (i32, i32, i32, i32) {
    %c0_i32 = arith.constant 0 : i32
    %c0_i32_0 = arith.constant 0 : i32
    %c0_i32_1 = arith.constant 0 : i32
    %c0_i32_2 = arith.constant 0 : i32
    return %arg0, %c0_i32, %c0_i32_0, %c0_i32_1 : i32, i32, i32, i32
  }
  func.func @transform_1(%arg0: i32) -> (i32, i32, i32, i32) {
    %c0_i32 = arith.constant 0 : i32
    %c0_i32_0 = arith.constant 0 : i32
    %c0_i32_1 = arith.constant 0 : i32
    %c0_i32_2 = arith.constant 0 : i32
    return %arg0, %c0_i32, %c0_i32_0, %c0_i32_1 : i32, i32, i32, i32
  }
  func.func @transform_2(%arg0: i32) -> (i32, i32, i32) {
    %c0_i32 = arith.constant 0 : i32
    %c0_i32_0 = arith.constant 0 : i32
    %c0_i32_1 = arith.constant 0 : i32
    %c0_i32_2 = arith.constant 0 : i32
    return %c0_i32, %c0_i32_0, %c0_i32_1 : i32, i32, i32
  }
  func.func @transform_3(%arg0: i32) -> (i32, i32, i32) {
    %c0_i32 = arith.constant 0 : i32
    %c0_i32_0 = arith.constant 0 : i32
    %c0_i32_1 = arith.constant 0 : i32
    %c0_i32_2 = arith.constant 0 : i32
    return %c0_i32, %c0_i32_0, %c0_i32_1 : i32, i32, i32
  }
  func.func @transform_4(%arg0: i32) -> (i32, i32) {
    %c0_i32 = arith.constant 0 : i32
    %c0_i32_0 = arith.constant 0 : i32
    %c0_i32_1 = arith.constant 0 : i32
    return %c0_i32, %c0_i32_0 : i32, i32
  }
  func.func @transform_5(%arg0: i32) -> (i32, i32) {
    %c0_i32 = arith.constant 0 : i32
    %c0_i32_0 = arith.constant 0 : i32
    %c0_i32_1 = arith.constant 0 : i32
    return %c0_i32, %c0_i32_0 : i32, i32
  }
  func.func @transform_6(%arg0: i32) -> (i32, i32) {
    %c0_i32 = arith.constant 0 : i32
    %c0_i32_0 = arith.constant 0 : i32
    %c0_i32_1 = arith.constant 0 : i32
    return %c0_i32, %c0_i32_0 : i32, i32
  }
  func.func @transform_7(%arg0: i32) -> (i32, i32) {
    %c0_i32 = arith.constant 0 : i32
    %c0_i32_0 = arith.constant 0 : i32
    %c0_i32_1 = arith.constant 0 : i32
    return %c0_i32, %c0_i32_0 : i32, i32
  }
  func.func @transform_8(%arg0: i32) -> (i32, i32, i32, i32) {
    %c0_i32 = arith.constant 0 : i32
    %c0_i32_0 = arith.constant 0 : i32
    %c0_i32_1 = arith.constant 0 : i32
    %c0_i32_2 = arith.constant 0 : i32
    return %arg0, %c0_i32, %c0_i32_0, %c0_i32_1 : i32, i32, i32, i32
  }
}

module attributes {stable_mosaic.version = 11 : i64} {
  func.func @cplx_mlp_kernel(%arg0: i32, %arg1: memref<64x8xbf16, #tpu.memory_space<vmem>>, %arg2: memref<8x16xbf16, #tpu.memory_space<vmem>>, %arg3: memref<16x8xbf16, #tpu.memory_space<vmem>>, %arg4: memref<64x8xf32, #tpu.memory_space<vmem>>) attributes {dimension_semantics = [#tpu.dimension_semantics<parallel>], iteration_bounds = array<i64: 5>, scalar_prefetch = 0 : i64, scratch_operands = 0 : i64, tpu.core_type = #tpu.core_type<tc>, window_params = [{transform_indices = @transform_0, window_bounds = array<i64: 64, 8>}, {pipeline_mode = #tpu.pipeline_mode<synchronous>, transform_indices = @transform_1, window_bounds = array<i64: 8, 16>}, {pipeline_mode = #tpu.pipeline_mode<synchronous>, transform_indices = @transform_2, window_bounds = array<i64: 16, 8>}, {transform_indices = @transform_3, window_bounds = array<i64: 64, 8>}]} {
    %c0 = arith.constant 0 : index
    %c0_0 = arith.constant 0 : index
    %0 = vector.load %arg1[%c0, %c0_0] : memref<64x8xbf16, #tpu.memory_space<vmem>>, vector<64x8xbf16>
    %c0_1 = arith.constant 0 : index
    %c0_2 = arith.constant 0 : index
    %1 = vector.load %arg2[%c0_1, %c0_2] : memref<8x16xbf16, #tpu.memory_space<vmem>>, vector<8x16xbf16>
    %cst = arith.constant dense<0.000000e+00> : vector<64x16xf32>
    %2 = tpu.matmul %0, %1, %cst {dimension_numbers = #tpu.dot_dimension_numbers<[1], [0], [0], [1], [0, 0, 1, 1], [], []>} : vector<64x8xbf16>, vector<8x16xbf16>, vector<64x16xf32> -> vector<64x16xf32>
    %cst_3 = arith.constant 0.000000e+00 : f32
    %3 = vector.broadcast %cst_3 : f32 to vector<64x16xf32>
    %4 = arith.maximumf %2, %3 : vector<64x16xf32>
    %5 = arith.truncf %4 : vector<64x16xf32> to vector<64x16xbf16>
    %c0_4 = arith.constant 0 : index
    %c0_5 = arith.constant 0 : index
    %6 = vector.load %arg3[%c0_4, %c0_5] : memref<16x8xbf16, #tpu.memory_space<vmem>>, vector<16x8xbf16>
    %cst_6 = arith.constant dense<0.000000e+00> : vector<64x8xf32>
    %7 = tpu.matmul %5, %6, %cst_6 {dimension_numbers = #tpu.dot_dimension_numbers<[1], [0], [0], [1], [0, 0, 1, 1], [], []>} : vector<64x16xbf16>, vector<16x8xbf16>, vector<64x8xf32> -> vector<64x8xf32>
    %c0_7 = arith.constant 0 : index
    %c0_8 = arith.constant 0 : index
    %8 = vector.load %arg4[%c0_7, %c0_8] : memref<64x8xf32, #tpu.memory_space<vmem>>, vector<64x8xf32>
    tpu.vector_store %arg4[%c0_7, %c0_8], %7 {strides = array<i32>} : memref<64x8xf32, #tpu.memory_space<vmem>>, vector<64x8xf32>,
    return
  }
  func.func @transform_0(%arg0: i32) -> (i32, i32) {
    %c0_i32 = arith.constant 0 : i32
    %c0_i32_0 = arith.constant 0 : i32
    return %arg0, %c0_i32 : i32, i32
  }
  func.func @transform_1(%arg0: i32) -> (i32, i32) {
    %c0_i32 = arith.constant 0 : i32
    %c0_i32_0 = arith.constant 0 : i32
    %c0_i32_1 = arith.constant 0 : i32
    return %c0_i32, %c0_i32_0 : i32, i32
  }
  func.func @transform_2(%arg0: i32) -> (i32, i32) {
    %c0_i32 = arith.constant 0 : i32
    %c0_i32_0 = arith.constant 0 : i32
    %c0_i32_1 = arith.constant 0 : i32
    return %c0_i32, %c0_i32_0 : i32, i32
  }
  func.func @transform_3(%arg0: i32) -> (i32, i32) {
    %c0_i32 = arith.constant 0 : i32
    %c0_i32_0 = arith.constant 0 : i32
    return %arg0, %c0_i32 : i32, i32
  }
}

module attributes {stable_mosaic.version = 11 : i64} {
  func.func @tail_fused_kernel(%arg0: i32, %arg1: memref<128x4xbf16, #tpu.memory_space<vmem>>, %arg2: memref<128x4xf32, #tpu.memory_space<vmem>>, %arg3: memref<128x4xf32, #tpu.memory_space<vmem>>, %arg4: memref<4x4xbf16, #tpu.memory_space<vmem>>, %arg5: memref<1x4xf32, #tpu.memory_space<vmem>>, %arg6: memref<1x4xf32, #tpu.memory_space<vmem>>, %arg7: memref<1x4xf32, #tpu.memory_space<vmem>>, %arg8: memref<1x4xf32, #tpu.memory_space<vmem>>, %arg9: memref<4x4xbf16, #tpu.memory_space<vmem>>, %arg10: memref<1x4xf32, #tpu.memory_space<vmem>>, %arg11: memref<4x4xbf16, #tpu.memory_space<vmem>>, %arg12: memref<1x4xf32, #tpu.memory_space<vmem>>, %arg13: memref<4x4xbf16, #tpu.memory_space<vmem>>, %arg14: memref<1x4xf32, #tpu.memory_space<vmem>>, %arg15: memref<1x4xf32, #tpu.memory_space<vmem>>, %arg16: memref<128x4xf32, #tpu.memory_space<vmem>>) attributes {dimension_semantics = [#tpu.dimension_semantics<parallel>], iteration_bounds = array<i64: 4>, scalar_prefetch = 0 : i64, scratch_operands = 0 : i64, tpu.core_type = #tpu.core_type<tc>, window_params = [{transform_indices = @transform_0, window_bounds = array<i64: 128, 4>}, {transform_indices = @transform_1, window_bounds = array<i64: 128, 4>}, {transform_indices = @transform_2, window_bounds = array<i64: 128, 4>}, {pipeline_mode = #tpu.pipeline_mode<synchronous>, transform_indices = @transform_3, window_bounds = array<i64: 4, 4>}, {pipeline_mode = #tpu.pipeline_mode<synchronous>, transform_indices = @transform_4, window_bounds = array<i64: 1, 4>}, {pipeline_mode = #tpu.pipeline_mode<synchronous>, transform_indices = @transform_5, window_bounds = array<i64: 1, 4>}, {pipeline_mode = #tpu.pipeline_mode<synchronous>, transform_indices = @transform_6, window_bounds = array<i64: 1, 4>}, {pipeline_mode = #tpu.pipeline_mode<synchronous>, transform_indices = @transform_7, window_bounds = array<i64: 1, 4>}, {pipeline_mode = #tpu.pipeline_mode<synchronous>, transform_indices = @transform_8, window_bounds = array<i64: 4, 4>}, {pipeline_mode = #tpu.pipeline_mode<synchronous>, transform_indices = @transform_9, window_bounds = array<i64: 1, 4>}, {pipeline_mode = #tpu.pipeline_mode<synchronous>, transform_indices = @transform_10, window_bounds = array<i64: 4, 4>}, {pipeline_mode = #tpu.pipeline_mode<synchronous>, transform_indices = @transform_11, window_bounds = array<i64: 1, 4>}, {pipeline_mode = #tpu.pipeline_mode<synchronous>, transform_indices = @transform_12, window_bounds = array<i64: 4, 4>}, {pipeline_mode = #tpu.pipeline_mode<synchronous>, transform_indices = @transform_13, window_bounds = array<i64: 1, 4>}, {pipeline_mode = #tpu.pipeline_mode<synchronous>, transform_indices = @transform_14, window_bounds = array<i64: 1, 4>}, {transform_indices = @transform_15, window_bounds = array<i64: 128, 4>}]} {
    %c0 = arith.constant 0 : index
    %c0_0 = arith.constant 0 : index
    %0 = vector.load %arg1[%c0, %c0_0] : memref<128x4xbf16, #tpu.memory_space<vmem>>, vector<128x4xbf16>
    %c0_1 = arith.constant 0 : index
    %c0_2 = arith.constant 0 : index
    %1 = vector.load %arg4[%c0_1, %c0_2] : memref<4x4xbf16, #tpu.memory_space<vmem>>, vector<4x4xbf16>
    %cst = arith.constant dense<0.000000e+00> : vector<128x4xf32>
    %2 = tpu.matmul %0, %1, %cst {dimension_numbers = #tpu.dot_dimension_numbers<[1], [0], [0], [1], [0, 0, 1, 1], [], []>} : vector<128x4xbf16>, vector<4x4xbf16>, vector<128x4xf32> -> vector<128x4xf32>
    %c0_3 = arith.constant 0 : index
    %c0_4 = arith.constant 0 : index
    %3 = vector.load %arg5[%c0_3, %c0_4] : memref<1x4xf32, #tpu.memory_space<vmem>>, vector<1x4xf32>
    %4 = vector.broadcast %3 : vector<1x4xf32> to vector<128x4xf32>
    %5 = arith.addf %2, %4 : vector<128x4xf32>
    %c0_5 = arith.constant 0 : index
    %c0_6 = arith.constant 0 : index
    %6 = vector.load %arg2[%c0_5, %c0_6] : memref<128x4xf32, #tpu.memory_space<vmem>>, vector<128x4xf32>
    %c0_7 = arith.constant 0 : index
    %c0_8 = arith.constant 0 : index
    %7 = vector.load %arg6[%c0_7, %c0_8] : memref<1x4xf32, #tpu.memory_space<vmem>>, vector<1x4xf32>
    %8 = vector.broadcast %7 : vector<1x4xf32> to vector<128x4xf32>
    %9 = arith.mulf %5, %8 : vector<128x4xf32>
    %10 = arith.addf %6, %9 : vector<128x4xf32>
    %cst_9 = arith.constant dense<0.000000e+00> : vector<128xf32>
    %11 = vector.multi_reduction <add>, %10, %cst_9 [1] : vector<128x4xf32> to vector<128xf32>
    %12 = vector.shape_cast %11 : vector<128xf32> to vector<128x1xf32>
    %cst_10 = arith.constant 4.000000e+00 : f32
    %13 = vector.broadcast %cst_10 : f32 to vector<128x1xf32>
    %14 = arith.divf %12, %13 : vector<128x1xf32>
    %15 = vector.broadcast %14 : vector<128x1xf32> to vector<128x4xf32>
    %16 = arith.subf %10, %15 : vector<128x4xf32>
    %17 = arith.mulf %16, %16 : vector<128x4xf32>
    %cst_11 = arith.constant dense<0.000000e+00> : vector<128xf32>
    %18 = vector.multi_reduction <add>, %17, %cst_11 [1] : vector<128x4xf32> to vector<128xf32>
    %19 = vector.shape_cast %18 : vector<128xf32> to vector<128x1xf32>
    %cst_12 = arith.constant 4.000000e+00 : f32
    %20 = vector.broadcast %cst_12 : f32 to vector<128x1xf32>
    %21 = arith.divf %19, %20 : vector<128x1xf32>
    %22 = vector.broadcast %14 : vector<128x1xf32> to vector<128x4xf32>
    %23 = arith.subf %10, %22 : vector<128x4xf32>
    %cst_13 = arith.constant 9.99999974E-6 : f32
    %24 = vector.broadcast %cst_13 : f32 to vector<128x1xf32>
    %25 = arith.addf %21, %24 : vector<128x1xf32>
    %26 = math.rsqrt %25 : vector<128x1xf32>
    %27 = vector.broadcast %26 : vector<128x1xf32> to vector<128x4xf32>
    %28 = arith.mulf %23, %27 : vector<128x4xf32>
    %c0_14 = arith.constant 0 : index
    %c0_15 = arith.constant 0 : index
    %29 = vector.load %arg7[%c0_14, %c0_15] : memref<1x4xf32, #tpu.memory_space<vmem>>, vector<1x4xf32>
    %30 = vector.broadcast %29 : vector<1x4xf32> to vector<128x4xf32>
    %31 = arith.mulf %28, %30 : vector<128x4xf32>
    %c0_16 = arith.constant 0 : index
    %c0_17 = arith.constant 0 : index
    %32 = vector.load %arg8[%c0_16, %c0_17] : memref<1x4xf32, #tpu.memory_space<vmem>>, vector<1x4xf32>
    %33 = vector.broadcast %32 : vector<1x4xf32> to vector<128x4xf32>
    %34 = arith.addf %31, %33 : vector<128x4xf32>
    %35 = arith.truncf %34 : vector<128x4xf32> to vector<128x4xbf16>
    %c0_18 = arith.constant 0 : index
    %c0_19 = arith.constant 0 : index
    %36 = vector.load %arg9[%c0_18, %c0_19] : memref<4x4xbf16, #tpu.memory_space<vmem>>, vector<4x4xbf16>
    %cst_20 = arith.constant dense<0.000000e+00> : vector<128x4xf32>
    %37 = tpu.matmul %35, %36, %cst_20 {dimension_numbers = #tpu.dot_dimension_numbers<[1], [0], [0], [1], [0, 0, 1, 1], [], []>} : vector<128x4xbf16>, vector<4x4xbf16>, vector<128x4xf32> -> vector<128x4xf32>
    %c0_21 = arith.constant 0 : index
    %c0_22 = arith.constant 0 : index
    %38 = vector.load %arg10[%c0_21, %c0_22] : memref<1x4xf32, #tpu.memory_space<vmem>>, vector<1x4xf32>
    %39 = vector.broadcast %38 : vector<1x4xf32> to vector<128x4xf32>
    %40 = arith.addf %37, %39 : vector<128x4xf32>
    %c0_23 = arith.constant 0 : index
    %c0_24 = arith.constant 0 : index
    %41 = vector.load %arg11[%c0_23, %c0_24] : memref<4x4xbf16, #tpu.memory_space<vmem>>, vector<4x4xbf16>
    %cst_25 = arith.constant dense<0.000000e+00> : vector<128x4xf32>
    %42 = tpu.matmul %35, %41, %cst_25 {dimension_numbers = #tpu.dot_dimension_numbers<[1], [0], [0], [1], [0, 0, 1, 1], [], []>} : vector<128x4xbf16>, vector<4x4xbf16>, vector<128x4xf32> -> vector<128x4xf32>
    %c0_26 = arith.constant 0 : index
    %c0_27 = arith.constant 0 : index
    %43 = vector.load %arg12[%c0_26, %c0_27] : memref<1x4xf32, #tpu.memory_space<vmem>>, vector<1x4xf32>
    %44 = vector.broadcast %43 : vector<1x4xf32> to vector<128x4xf32>
    %45 = arith.addf %42, %44 : vector<128x4xf32>
    %46 = arith.mulf %40, %45 : vector<128x4xf32>
    %47 = arith.truncf %46 : vector<128x4xf32> to vector<128x4xbf16>
    %c0_28 = arith.constant 0 : index
    %c0_29 = arith.constant 0 : index
    %48 = vector.load %arg13[%c0_28, %c0_29] : memref<4x4xbf16, #tpu.memory_space<vmem>>, vector<4x4xbf16>
    %cst_30 = arith.constant dense<0.000000e+00> : vector<128x4xf32>
    %49 = tpu.matmul %47, %48, %cst_30 {dimension_numbers = #tpu.dot_dimension_numbers<[1], [0], [0], [1], [0, 0, 1, 1], [], []>} : vector<128x4xbf16>, vector<4x4xbf16>, vector<128x4xf32> -> vector<128x4xf32>
    %c0_31 = arith.constant 0 : index
    %c0_32 = arith.constant 0 : index
    %50 = vector.load %arg14[%c0_31, %c0_32] : memref<1x4xf32, #tpu.memory_space<vmem>>, vector<1x4xf32>
    %51 = vector.broadcast %50 : vector<1x4xf32> to vector<128x4xf32>
    %52 = arith.addf %49, %51 : vector<128x4xf32>
    %c0_33 = arith.constant 0 : index
    %c0_34 = arith.constant 0 : index
    %53 = vector.load %arg15[%c0_33, %c0_34] : memref<1x4xf32, #tpu.memory_space<vmem>>, vector<1x4xf32>
    %54 = vector.broadcast %53 : vector<1x4xf32> to vector<128x4xf32>
    %55 = arith.mulf %52, %54 : vector<128x4xf32>
    %56 = arith.addf %10, %55 : vector<128x4xf32>
    %c0_35 = arith.constant 0 : index
    %c0_36 = arith.constant 0 : index
    %57 = vector.load %arg3[%c0_35, %c0_36] : memref<128x4xf32, #tpu.memory_space<vmem>>, vector<128x4xf32>
    %58 = arith.addf %56, %57 : vector<128x4xf32>
    %c0_37 = arith.constant 0 : index
    %c0_38 = arith.constant 0 : index
    %59 = vector.load %arg16[%c0_37, %c0_38] : memref<128x4xf32, #tpu.memory_space<vmem>>, vector<128x4xf32>
    tpu.vector_store %arg16[%c0_37, %c0_38], %58 {strides = array<i32>} : memref<128x4xf32, #tpu.memory_space<vmem>>, vector<128x4xf32>,
    return
  }
  func.func @transform_0(%arg0: i32) -> (i32, i32) {
    %c0_i32 = arith.constant 0 : i32
    %c0_i32_0 = arith.constant 0 : i32
    return %arg0, %c0_i32 : i32, i32
  }
  func.func @transform_1(%arg0: i32) -> (i32, i32) {
    %c0_i32 = arith.constant 0 : i32
    %c0_i32_0 = arith.constant 0 : i32
    return %arg0, %c0_i32 : i32, i32
  }
  func.func @transform_2(%arg0: i32) -> (i32, i32) {
    %c0_i32 = arith.constant 0 : i32
    %c0_i32_0 = arith.constant 0 : i32
    return %arg0, %c0_i32 : i32, i32
  }
  func.func @transform_3(%arg0: i32) -> (i32, i32) {
    %c0_i32 = arith.constant 0 : i32
    %c0_i32_0 = arith.constant 0 : i32
    %c0_i32_1 = arith.constant 0 : i32
    return %c0_i32, %c0_i32_0 : i32, i32
  }
  func.func @transform_4(%arg0: i32) -> (i32, i32) {
    %c0_i32 = arith.constant 0 : i32
    %c0_i32_0 = arith.constant 0 : i32
    %c0_i32_1 = arith.constant 0 : i32
    return %c0_i32, %c0_i32_0 : i32, i32
  }
  func.func @transform_5(%arg0: i32) -> (i32, i32) {
    %c0_i32 = arith.constant 0 : i32
    %c0_i32_0 = arith.constant 0 : i32
    %c0_i32_1 = arith.constant 0 : i32
    return %c0_i32, %c0_i32_0 : i32, i32
  }
  func.func @transform_6(%arg0: i32) -> (i32, i32) {
    %c0_i32 = arith.constant 0 : i32
    %c0_i32_0 = arith.constant 0 : i32
    %c0_i32_1 = arith.constant 0 : i32
    return %c0_i32, %c0_i32_0 : i32, i32
  }
  func.func @transform_7(%arg0: i32) -> (i32, i32) {
    %c0_i32 = arith.constant 0 : i32
    %c0_i32_0 = arith.constant 0 : i32
    %c0_i32_1 = arith.constant 0 : i32
    return %c0_i32, %c0_i32_0 : i32, i32
  }
  func.func @transform_8(%arg0: i32) -> (i32, i32) {
    %c0_i32 = arith.constant 0 : i32
    %c0_i32_0 = arith.constant 0 : i32
    %c0_i32_1 = arith.constant 0 : i32
    return %c0_i32, %c0_i32_0 : i32, i32
  }
  func.func @transform_9(%arg0: i32) -> (i32, i32) {
    %c0_i32 = arith.constant 0 : i32
    %c0_i32_0 = arith.constant 0 : i32
    %c0_i32_1 = arith.constant 0 : i32
    return %c0_i32, %c0_i32_0 : i32, i32
  }
  func.func @transform_10(%arg0: i32) -> (i32, i32) {
    %c0_i32 = arith.constant 0 : i32
    %c0_i32_0 = arith.constant 0 : i32
    %c0_i32_1 = arith.constant 0 : i32
    return %c0_i32, %c0_i32_0 : i32, i32
  }
  func.func @transform_11(%arg0: i32) -> (i32, i32) {
    %c0_i32 = arith.constant 0 : i32
    %c0_i32_0 = arith.constant 0 : i32
    %c0_i32_1 = arith.constant 0 : i32
    return %c0_i32, %c0_i32_0 : i32, i32
  }
  func.func @transform_12(%arg0: i32) -> (i32, i32) {
    %c0_i32 = arith.constant 0 : i32
    %c0_i32_0 = arith.constant 0 : i32
    %c0_i32_1 = arith.constant 0 : i32
    return %c0_i32, %c0_i32_0 : i32, i32
  }
  func.func @transform_13(%arg0: i32) -> (i32, i32) {
    %c0_i32 = arith.constant 0 : i32
    %c0_i32_0 = arith.constant 0 : i32
    %c0_i32_1 = arith.constant 0 : i32
    return %c0_i32, %c0_i32_0 : i32, i32
  }
  func.func @transform_14(%arg0: i32) -> (i32, i32) {
    %c0_i32 = arith.constant 0 : i32
    %c0_i32_0 = arith.constant 0 : i32
    %c0_i32_1 = arith.constant 0 : i32
    return %c0_i32, %c0_i32_0 : i32, i32
  }
  func.func @transform_15(%arg0: i32) -> (i32, i32) {
    %c0_i32 = arith.constant 0 : i32
    %c0_i32_0 = arith.constant 0 : i32
    return %arg0, %c0_i32 : i32, i32
  }
}

</mosaic_0001>

<llo_original>
// kernel: fnafnet_block_forward.4
$region0: #{fnafnet_block_forward.4}
  #allocation0 [shape = 'u32[]', space=smem, size = 0x4, offset = 0x4, fixed_abs, tag = 'smem constant byte address 0x4 - core index']
  #allocation1 [shape = 'u32[144,128]{1,0:T(1,128)}', space=vmem, size = 0x12000, scoped, tag = 'internal scratch']
  %s0 = inlined_call_operand.vmem [shape: f32[512,4], index: 0, kind: input, shape index: {}]
  %s1 = inlined_call_operand.vmem [shape: f32[1,4], index: 1, kind: input, shape index: {}]
  %s2 = inlined_call_operand.vmem [shape: f32[1,4], index: 2, kind: input, shape index: {}]
  %s3 = inlined_call_operand.vmem [shape: bf16[4,4], index: 3, kind: input, shape index: {}]
  %s4 = inlined_call_operand.vmem [shape: f32[1,4], index: 4, kind: input, shape index: {}]
  %s5 = inlined_call_operand.vmem [shape: bf16[4,4], index: 5, kind: input, shape index: {}]
  %s6 = inlined_call_operand.vmem [shape: f32[1,4], index: 6, kind: input, shape index: {}]
  %s7 = inlined_call_operand.vmem [shape: f32[512,4], index: 7, kind: output, shape index: {0}]
  %s8 = inlined_call_operand.vmem [shape: bf16[512,4], index: 8, kind: output, shape index: {1}]
  %s9 = inlined_call_operand.vmem [shape: bf16[512,4], index: 9, kind: output, shape index: {2}]
  %10 = xla_tuple %s7, %s8, %s9
  %s11 = sld [smem:[#allocation0]]
  $region77: #{fnafnet_block_forward.4} parent=0
    _
  %s13 = ssub.s32 1, %s11
  %s14 = scalar_select 0, %s13, %s11
  loop: start=0, step=1, limit=6
  $region2: #{fnafnet_block_forward.4} parent=0 // loop_pre_header
    _
  $region3: #{fnafnet_block_forward.4} parent=0 // loop_header
    %s16 = sphi 0, %s20
    %p17 = scmp.ge.s32.totalorder %s16, 6
    %s26 = sphi 0, %s28
    %s29 = sphi 0, %s26
    %s30 = sphi 0, %s29
    %s46 = sphi 0, %s30
    %s50 = sphi 0, %s50
    %s52 = sphi 0, %s50
    %s53 = sphi 0, %s52
    %s67 = sphi 0, %s53
    %s71 = sphi 0, %s71
    %s73 = sphi 0, %s71
    %s74 = sphi 0, %s73
    %s88 = sphi 0, %s74
    %s92 = sphi 0, %s92
    %s94 = sphi 0, %s92
    %s95 = sphi 0, %s94
    %s109 = sphi 0, %s95
    %s113 = sphi 0, %s113
    %s115 = sphi 0, %s113
    %s116 = sphi 0, %s115
    %s130 = sphi 0, %s116
    %s134 = sphi 0, %s134
    %s136 = sphi 0, %s134
    %s137 = sphi 0, %s136
    %s151 = sphi 0, %s137
    %s155 = sphi 0, %s155
    %s157 = sphi 0, %s155
    %s158 = sphi 0, %s157
    %s172 = sphi 0, %s158
    %s178 = sphi 0, %s180
    %s181 = sphi 0, %s178
    %s182 = sphi 0, %s181
    %s198 = sphi 0, %s182
    %s204 = sphi 0, %s206
    %s207 = sphi 0, %s204
    %s208 = sphi 0, %s207
    %s224 = sphi 0, %s208
    %s230 = sphi 0, %s232
    %s233 = sphi 0, %s230
    %s234 = sphi 0, %s233
    %s250 = sphi 0, %s234
  $region4: #{fnafnet_block_forward.4} parent=0 // loop_header_branch
    %19 = sbr.rel (%p17) target = $region8
  $region5: #{fnafnet_block_forward.4} parent=0 // loop_body
    %s21 = ssub.s32 %s16, 1
    %s22 = ssub.s32 %s16, 2
    %s23 = sadd.s32 %s16, 1
    %s24 = ssub.s32 %s16, %s23
    %p25 = scmp.eq.s32.totalorder %s24, 0
    %s27 = sadd.s32 %s26, 1
    %s28 = scalar_select %p25, %s26, %s27
    %p31 = pneg %p25
    %p32 = scmp.eq.s32.totalorder %s16, 3
    %p33 = por %p31, %p32
    %p34 = scmp.ne.s32.totalorder %s26, %s29
    %p35 = scmp.eq.s32.totalorder %s16, 0
    %p36 = por %p34, %p35
    %p37 = scmp.ne.s32.totalorder %s26, %s29
    %p38 = scmp.eq.s32.totalorder %s21, 3
    %p39 = por %p37, %p38
    %p40 = scmp.ne.s32.totalorder %s29, %s30
    %p41 = scmp.eq.s32.totalorder %s21, 0
    %p42 = por %p40, %p41
    %p43 = scmp.ne.s32.totalorder %s29, %s30
    %p44 = scmp.eq.s32.totalorder %s22, 3
    %p45 = por %p43, %p44
    %p47 = scmp.ne.s32.totalorder %s30, %s46
    %p48 = scmp.eq.s32.totalorder %s22, 0
    %p49 = por %p47, %p48
    %s51 = sadd.s32 %s50, 1
    %p54 = scmp.eq.s32.totalorder %s16, 3
    %p55 = scmp.ne.s32.totalorder %s50, %s52
    %p56 = scmp.eq.s32.totalorder %s16, 0
    %p57 = por %p55, %p56
    %p58 = scmp.ne.s32.totalorder %s50, %s52
    %p59 = scmp.eq.s32.totalorder %s21, 3
    %p60 = por %p58, %p59
    %p61 = scmp.ne.s32.totalorder %s52, %s53
    %p62 = scmp.eq.s32.totalorder %s21, 0
    %p63 = por %p61, %p62
    %p64 = scmp.ne.s32.totalorder %s52, %s53
    %p65 = scmp.eq.s32.totalorder %s22, 3
    %p66 = por %p64, %p65
    %p68 = scmp.ne.s32.totalorder %s53, %s67
    %p69 = scmp.eq.s32.totalorder %s22, 0
    %p70 = por %p68, %p69
    %s72 = sadd.s32 %s71, 1
    %p75 = scmp.eq.s32.totalorder %s16, 3
    %p76 = scmp.ne.s32.totalorder %s71, %s73
    %p77 = scmp.eq.s32.totalorder %s16, 0
    %p78 = por %p76, %p77
    %p79 = scmp.ne.s32.totalorder %s71, %s73
    %p80 = scmp.eq.s32.totalorder %s21, 3
    %p81 = por %p79, %p80
    %p82 = scmp.ne.s32.totalorder %s73, %s74
    %p83 = scmp.eq.s32.totalorder %s21, 0
    %p84 = por %p82, %p83
    %p85 = scmp.ne.s32.totalorder %s73, %s74
    %p86 = scmp.eq.s32.totalorder %s22, 3
    %p87 = por %p85, %p86
    %p89 = scmp.ne.s32.totalorder %s74, %s88
    %p90 = scmp.eq.s32.totalorder %s22, 0
    %p91 = por %p89, %p90
    %s93 = sadd.s32 %s92, 1
    %p96 = scmp.eq.s32.totalorder %s16, 3
    %p97 = scmp.ne.s32.totalorder %s92, %s94
    %p98 = scmp.eq.s32.totalorder %s16, 0
    %p99 = por %p97, %p98
    %p100 = scmp.ne.s32.totalorder %s92, %s94
    %p101 = scmp.eq.s32.totalorder %s21, 3
    %p102 = por %p100, %p101
    %p103 = scmp.ne.s32.totalorder %s94, %s95
    %p104 = scmp.eq.s32.totalorder %s21, 0
    %p105 = por %p103, %p104
    %p106 = scmp.ne.s32.totalorder %s94, %s95
    %p107 = scmp.eq.s32.totalorder %s22, 3
    %p108 = por %p106, %p107
    %p110 = scmp.ne.s32.totalorder %s95, %s109
    %p111 = scmp.eq.s32.totalorder %s22, 0
    %p112 = por %p110, %p111
    %s114 = sadd.s32 %s113, 1
    %p117 = scmp.eq.s32.totalorder %s16, 3
    %p118 = scmp.ne.s32.totalorder %s113, %s115
    %p119 = scmp.eq.s32.totalorder %s16, 0
    %p120 = por %p118, %p119
    %p121 = scmp.ne.s32.totalorder %s113, %s115
    %p122 = scmp.eq.s32.totalorder %s21, 3
    %p123 = por %p121, %p122
    %p124 = scmp.ne.s32.totalorder %s115, %s116
    %p125 = scmp.eq.s32.totalorder %s21, 0
    %p126 = por %p124, %p125
    %p127 = scmp.ne.s32.totalorder %s115, %s116
    %p128 = scmp.eq.s32.totalorder %s22, 3
    %p129 = por %p127, %p128
    %p131 = scmp.ne.s32.totalorder %s116, %s130
    %p132 = scmp.eq.s32.totalorder %s22, 0
    %p133 = por %p131, %p132
    %s135 = sadd.s32 %s134, 1
    %p138 = scmp.eq.s32.totalorder %s16, 3
    %p139 = scmp.ne.s32.totalorder %s134, %s136
    %p140 = scmp.eq.s32.totalorder %s16, 0
    %p141 = por %p139, %p140
    %p142 = scmp.ne.s32.totalorder %s134, %s136
    %p143 = scmp.eq.s32.totalorder %s21, 3
    %p144 = por %p142, %p143
    %p145 = scmp.ne.s32.totalorder %s136, %s137
    %p146 = scmp.eq.s32.totalorder %s21, 0
    %p147 = por %p145, %p146
    %p148 = scmp.ne.s32.totalorder %s136, %s137
    %p149 = scmp.eq.s32.totalorder %s22, 3
    %p150 = por %p148, %p149
    %p152 = scmp.ne.s32.totalorder %s137, %s151
    %p153 = scmp.eq.s32.totalorder %s22, 0
    %p154 = por %p152, %p153
    %s156 = sadd.s32 %s155, 1
    %p159 = scmp.eq.s32.totalorder %s16, 3
    %p160 = scmp.ne.s32.totalorder %s155, %s157
    %p161 = scmp.eq.s32.totalorder %s16, 0
    %p162 = por %p160, %p161
    %p163 = scmp.ne.s32.totalorder %s155, %s157
    %p164 = scmp.eq.s32.totalorder %s21, 3
    %p165 = por %p163, %p164
    %p166 = scmp.ne.s32.totalorder %s157, %s158
    %p167 = scmp.eq.s32.totalorder %s21, 0
    %p168 = por %p166, %p167
    %p169 = scmp.ne.s32.totalorder %s157, %s158
    %p170 = scmp.eq.s32.totalorder %s22, 3
    %p171 = por %p169, %p170
    %p173 = scmp.ne.s32.totalorder %s158, %s172
    %p174 = scmp.eq.s32.totalorder %s22, 0
    %p175 = por %p173, %p174
    %s176 = ssub.s32 %s16, %s23
    %p177 = scmp.eq.s32.totalorder %s176, 0
    %s179 = sadd.s32 %s178, 1
    %s180 = scalar_select %p177, %s178, %s179
    %p183 = pneg %p177
    %p184 = scmp.eq.s32.totalorder %s16, 3
    %p185 = por %p183, %p184
    %p186 = scmp.ne.s32.totalorder %s178, %s181
    %p187 = scmp.eq.s32.totalorder %s16, 0
    %p188 = por %p186, %p187
    %p189 = scmp.ne.s32.totalorder %s178, %s181
    %p190 = scmp.eq.s32.totalorder %s21, 3
    %p191 = por %p189, %p190
    %p192 = scmp.ne.s32.totalorder %s181, %s182
    %p193 = scmp.eq.s32.totalorder %s21, 0
    %p194 = por %p192, %p193
    %p195 = scmp.ne.s32.totalorder %s181, %s182
    %p196 = scmp.eq.s32.totalorder %s22, 3
    %p197 = por %p195, %p196
    %p199 = scmp.ne.s32.totalorder %s182, %s198
    %p200 = scmp.eq.s32.totalorder %s22, 0
    %p201 = por %p199, %p200
    %s202 = ssub.s32 %s16, %s23
    %p203 = scmp.eq.s32.totalorder %s202, 0
    %s205 = sadd.s32 %s204, 1
    %s206 = scalar_select %p203, %s204, %s205
    %p209 = pneg %p203
    %p210 = scmp.eq.s32.totalorder %s16, 3
    %p211 = por %p209, %p210
    %p212 = scmp.ne.s32.totalorder %s204, %s207
    %p213 = scmp.eq.s32.totalorder %s16, 0
    %p214 = por %p212, %p213
    %p215 = scmp.ne.s32.totalorder %s204, %s207
    %p216 = scmp.eq.s32.totalorder %s21, 3
    %p217 = por %p215, %p216
    %p218 = scmp.ne.s32.totalorder %s207, %s208
    %p219 = scmp.eq.s32.totalorder %s21, 0
    %p220 = por %p218, %p219
    %p221 = scmp.ne.s32.totalorder %s207, %s208
    %p222 = scmp.eq.s32.totalorder %s22, 3
    %p223 = por %p221, %p222
    %p225 = scmp.ne.s32.totalorder %s208, %s224
    %p226 = scmp.eq.s32.totalorder %s22, 0
    %p227 = por %p225, %p226
    %s228 = ssub.s32 %s16, %s23
    %p229 = scmp.eq.s32.totalorder %s228, 0
    %s231 = sadd.s32 %s230, 1
    %s232 = scalar_select %p229, %s230, %s231
    %p235 = pneg %p229
    %p236 = scmp.eq.s32.totalorder %s16, 3
    %p237 = por %p235, %p236
    %p238 = scmp.ne.s32.totalorder %s230, %s233
    %p239 = scmp.eq.s32.totalorder %s16, 0
    %p240 = por %p238, %p239
    %p241 = scmp.ne.s32.totalorder %s230, %s233
    %p242 = scmp.eq.s32.totalorder %s21, 3
    %p243 = por %p241, %p242
    %p244 = scmp.ne.s32.totalorder %s233, %s234
    %p245 = scmp.eq.s32.totalorder %s21, 0
    %p246 = por %p244, %p245
    %p247 = scmp.ne.s32.totalorder %s233, %s234
    %p248 = scmp.eq.s32.totalorder %s22, 3
    %p249 = por %p247, %p248
    %p251 = scmp.ne.s32.totalorder %s234, %s250
    %p252 = scmp.eq.s32.totalorder %s22, 0
    %p253 = por %p251, %p252
    %p254 = scmp.le.s32.totalorder 1, %s16
    %p255 = scmp.lt.s32.totalorder %s16, 5
    %p256 = pnand %p254, %p255
    %p257 = pneg %p256
    // Predicated region
    $region9: #{fnafnet_block_forward.4} parent=5 // pred_check
      _
    $region10: #{fnafnet_block_forward.4} parent=5 // pred_check_branch
      %259 = sbr.rel (%p256) target = $region12
    $region11: #{fnafnet_block_forward.4} parent=5 // pred_region
      %s260 = ssub.s32 %s16, 1
      // Predicated region
      $region13: #{fnafnet_block_forward.4} parent=11 // pred_check
        %p261 = pneg %p63
      $region14: #{fnafnet_block_forward.4} parent=11 // pred_check_branch
        %263 = sbr.rel (%p261) target = $region16
      $region15: #{fnafnet_block_forward.4} parent=11 // pred_region
        _
      $region16: #{fnafnet_block_forward.4} parent=11 // pred_fallthru
        _
      // Predicated region
      $region17: #{fnafnet_block_forward.4} parent=11 // pred_check
        %p264 = pneg %p84
      $region18: #{fnafnet_block_forward.4} parent=11 // pred_check_branch
        %266 = sbr.rel (%p264) target = $region20
      $region19: #{fnafnet_block_forward.4} parent=11 // pred_region
        _
      $region20: #{fnafnet_block_forward.4} parent=11 // pred_fallthru
        _
      // Predicated region
      $region21: #{fnafnet_block_forward.4} parent=11 // pred_check
        %p267 = pneg %p105
      $region22: #{fnafnet_block_forward.4} parent=11 // pred_check_branch
        %269 = sbr.rel (%p267) target = $region24
      $region23: #{fnafnet_block_forward.4} parent=11 // pred_region
        _
      $region24: #{fnafnet_block_forward.4} parent=11 // pred_fallthru
        _
      // Predicated region
      $region25: #{fnafnet_block_forward.4} parent=11 // pred_check
        %p270 = pneg %p126
      $region26: #{fnafnet_block_forward.4} parent=11 // pred_check_branch
        %272 = sbr.rel (%p270) target = $region28
      $region27: #{fnafnet_block_forward.4} parent=11 // pred_region
        _
      $region28: #{fnafnet_block_forward.4} parent=11 // pred_fallthru
        _
      // Predicated region
      $region29: #{fnafnet_block_forward.4} parent=11 // pred_check
        %p273 = pneg %p147
      $region30: #{fnafnet_block_forward.4} parent=11 // pred_check_branch
        %275 = sbr.rel (%p273) target = $region32
      $region31: #{fnafnet_block_forward.4} parent=11 // pred_region
        _
      $region32: #{fnafnet_block_forward.4} parent=11 // pred_fallthru
        _
      // Predicated region
      $region33: #{fnafnet_block_forward.4} parent=11 // pred_check
        %p276 = pneg %p168
      $region34: #{fnafnet_block_forward.4} parent=11 // pred_check_branch
        %278 = sbr.rel (%p276) target = $region36
      $region35: #{fnafnet_block_forward.4} parent=11 // pred_region
        _
      $region36: #{fnafnet_block_forward.4} parent=11 // pred_fallthru
        _
    $region12: #{fnafnet_block_forward.4} parent=5 // pred_fallthru
      _
    %p279 = scmp.lt.s32.totalorder %s16, 4
    // Predicated region
    $region37: #{fnafnet_block_forward.4} parent=5 // pred_check
      %p280 = pneg %p279
    $region38: #{fnafnet_block_forward.4} parent=5 // pred_check_branch
      %282 = sbr.rel (%p280) target = $region40
    $region39: #{fnafnet_block_forward.4} parent=5 // pred_region
      // Predicated region
      $region41: #{fnafnet_block_forward.4} parent=39 // pred_check
        %p283 = pneg %p36
      $region42: #{fnafnet_block_forward.4} parent=39 // pred_check_branch
        %285 = sbr.rel (%p283) target = $region44
      $region43: #{fnafnet_block_forward.4} parent=39 // pred_region
        %s286 = smul.u32 16, %s16
        %p287 = scmp.lt.s32.totalorder %s286, 63
        %s288 = scalar_select %p287, %s286, 63
        %s289 = smul.addr %s288, 8
        %s290 = scalar_lea.vmem %s0, %s289
        %s291 = smul.u32 16, %s16
      $region44: #{fnafnet_block_forward.4} parent=39 // pred_fallthru
        _
    $region40: #{fnafnet_block_forward.4} parent=5 // pred_fallthru
      _
    %p292 = scmp.le.s32.totalorder 1, %s16
    %p293 = scmp.lt.s32.totalorder %s16, 5
    %p294 = pnand %p292, %p293
    %p295 = pneg %p294
    // Predicated region
    $region45: #{fnafnet_block_forward.4} parent=5 // pred_check
      _
    $region46: #{fnafnet_block_forward.4} parent=5 // pred_check_branch
      %297 = sbr.rel (%p294) target = $region48
    $region47: #{fnafnet_block_forward.4} parent=5 // pred_region
      %s298 = ssub.s32 %s16, 1
      %s299 = smul.u32 16, %s21
      %p300 = scmp.lt.s32.totalorder %s299, 63
      %s301 = scalar_select %p300, %s299, 63
      %s302 = smul.addr %s301, 8
      %s303 = scalar_lea.vmem %s0, %s302
      %p304 = pneg %p42
      %p305 = pneg %p39
      %p306 = pneg %p63
      %p307 = pneg %p60
      %p308 = pneg %p84
      %p309 = pneg %p81
      %p310 = pneg %p105
      %p311 = pneg %p102
      %p312 = pneg %p126
      %p313 = pneg %p123
      %p314 = pneg %p147
      %p315 = pneg %p144
      %p316 = pneg %p168
      %p317 = pneg %p165
      %p318 = pneg %p194
      %p319 = pneg %p191
      %s320 = smul.u32 16, %s21
      %p321 = scmp.lt.s32.totalorder %s320, 63
      %s322 = scalar_select %p321, %s320, 63
      %s323 = smul.addr %s322, 8
      %s324 = scalar_lea.vmem %s7, %s323
      %p325 = pneg %p220
      %p326 = pneg %p217
      %s327 = smul.u32 16, %s21
      %p328 = scmp.lt.s32.totalorder %s327, 63
      %s329 = scalar_select %p328, %s327, 63
      %s330 = smul.addr %s329, 4
      %s331 = scalar_lea.vmem %s8, %s330
      %p332 = pneg %p246
      %p333 = pneg %p243
      %s334 = smul.u32 16, %s21
      %p335 = scmp.lt.s32.totalorder %s334, 63
      %s336 = scalar_select %p335, %s334, 63
      %s337 = smul.addr %s336, 4
      %s338 = scalar_lea.vmem %s9, %s337
      %s339 = smul.u32 16, %s21
      %p340 = scmp.lt.s32.totalorder %s339, 63
      %s341 = scalar_select %p340, %s339, 63
      %s342 = smul.addr %s341, 8
      %s343 = scalar_lea.vmem %s0, %s342
      %s344 = smul.u32 16, %s21
      %s345 = smul.u32 16, %s21
      %p346 = scmp.lt.s32.totalorder %s345, 63
      %s347 = scalar_select %p346, %s345, 63
      %s348 = smul.addr %s347, 8
      %s349 = scalar_lea.vmem %s7, %s348
      %s350 = smul.u32 16, %s21
      %s351 = smul.u32 16, %s21
      %p352 = scmp.lt.s32.totalorder %s351, 63
      %s353 = scalar_select %p352, %s351, 63
      %s354 = smul.addr %s353, 4
      %s355 = scalar_lea.vmem %s8, %s354
      %s356 = smul.u32 16, %s21
      %s357 = smul.u32 16, %s21
      %p358 = scmp.lt.s32.totalorder %s357, 63
      %s359 = scalar_select %p358, %s357, 63
      %s360 = smul.addr %s359, 4
      %s361 = scalar_lea.vmem %s9, %s360
      %s362 = smul.u32 16, %s21
      %v364 = vld [vmem:[%s343] sm:$0xff]
      %v365 = vld [vmem:[%s343 + $0x8] sm:$0xff]
      %v366 = vld [vmem:[%s343 + $0x10] sm:$0xff]
      %v367 = vld [vmem:[%s343 + $0x18] sm:$0xff]
      %v368 = vld [vmem:[%s343 + $0x20] sm:$0xff]
      %v369 = vld [vmem:[%s343 + $0x28] sm:$0xff]
      %v370 = vld [vmem:[%s343 + $0x30] sm:$0xff]
      %v371 = vld [vmem:[%s343 + $0x38] sm:$0xff]
      %v372 = vld [vmem:[%s343 + $0x40] sm:$0xff]
      %v373 = vld [vmem:[%s343 + $0x48] sm:$0xff]
      %v374 = vld [vmem:[%s343 + $0x50] sm:$0xff]
      %v375 = vld [vmem:[%s343 + $0x58] sm:$0xff]
      %v376 = vld [vmem:[%s343 + $0x60] sm:$0xff]
      %v377 = vld [vmem:[%s343 + $0x68] sm:$0xff]
      %v378 = vld [vmem:[%s343 + $0x70] sm:$0xff]
      %v379 = vld [vmem:[%s343 + $0x78] sm:$0xff]
      %vm380 = vcmask 31744
      %v381 = vsel %vm380, %v364, 0.0
      %382 = vadd.xlane.f32.xlu0 %v381
      %v383 = vpop.xlane.xlu0 %382
      %v384 = vsel %vm380, %v365, 0.0
      %385 = vadd.xlane.f32.xlu0 %v384
      %v386 = vpop.xlane.xlu0 %385
      %v387 = vsel %vm380, %v366, 0.0
      %388 = vadd.xlane.f32.xlu0 %v387
      %v389 = vpop.xlane.xlu0 %388
      %v390 = vsel %vm380, %v367, 0.0
      %391 = vadd.xlane.f32.xlu0 %v390
      %v392 = vpop.xlane.xlu0 %391
      %v393 = vsel %vm380, %v368, 0.0
      %394 = vadd.xlane.f32.xlu0 %v393
      %v395 = vpop.xlane.xlu0 %394
      %v396 = vsel %vm380, %v369, 0.0
      %397 = vadd.xlane.f32.xlu0 %v396
      %v398 = vpop.xlane.xlu0 %397
      %v399 = vsel %vm380, %v370, 0.0
      %400 = vadd.xlane.f32.xlu0 %v399
      %v401 = vpop.xlane.xlu0 %400
      %v402 = vsel %vm380, %v371, 0.0
      %403 = vadd.xlane.f32.xlu0 %v402
      %v404 = vpop.xlane.xlu0 %403
      %v405 = vsel %vm380, %v372, 0.0
      %406 = vadd.xlane.f32.xlu0 %v405
      %v407 = vpop.xlane.xlu0 %406
      %v408 = vsel %vm380, %v373, 0.0
      %409 = vadd.xlane.f32.xlu0 %v408
      %v410 = vpop.xlane.xlu0 %409
      %v411 = vsel %vm380, %v374, 0.0
      %412 = vadd.xlane.f32.xlu0 %v411
      %v413 = vpop.xlane.xlu0 %412
      %v414 = vsel %vm380, %v375, 0.0
      %415 = vadd.xlane.f32.xlu0 %v414
      %v416 = vpop.xlane.xlu0 %415
      %v417 = vsel %vm380, %v376, 0.0
      %418 = vadd.xlane.f32.xlu0 %v417
      %v419 = vpop.xlane.xlu0 %418
      %v420 = vsel %vm380, %v377, 0.0
      %421 = vadd.xlane.f32.xlu0 %v420
      %v422 = vpop.xlane.xlu0 %421
      %v423 = vsel %vm380, %v378, 0.0
      %424 = vadd.xlane.f32.xlu0 %v423
      %v425 = vpop.xlane.xlu0 %424
      %v426 = vsel %vm380, %v379, 0.0
      %427 = vadd.xlane.f32.xlu0 %v426
      %v428 = vpop.xlane.xlu0 %427
      %v429 = vrcp.pop 4.0
      %v430 = vmul.f32 %v383, %v429
      %v431 = vmul.f32 %v386, %v429
      %v432 = vmul.f32 %v389, %v429
      %v433 = vmul.f32 %v392, %v429
      %v434 = vmul.f32 %v395, %v429
      %v435 = vmul.f32 %v398, %v429
      %v436 = vmul.f32 %v401, %v429
      %v437 = vmul.f32 %v404, %v429
      %v438 = vmul.f32 %v407, %v429
      %v439 = vmul.f32 %v410, %v429
      %v440 = vmul.f32 %v413, %v429
      %v441 = vmul.f32 %v416, %v429
      %v442 = vmul.f32 %v419, %v429
      %v443 = vmul.f32 %v422, %v429
      %v444 = vmul.f32 %v425, %v429
      %v445 = vmul.f32 %v428, %v429
      %v446 = vsub.f32 %v364, %v430
      %v447 = vsub.f32 %v365, %v431
      %v448 = vsub.f32 %v366, %v432
      %v449 = vsub.f32 %v367, %v433
      %v450 = vsub.f32 %v368, %v434
      %v451 = vsub.f32 %v369, %v435
      %v452 = vsub.f32 %v370, %v436
      %v453 = vsub.f32 %v371, %v437
      %v454 = vsub.f32 %v372, %v438
      %v455 = vsub.f32 %v373, %v439
      %v456 = vsub.f32 %v374, %v440
      %v457 = vsub.f32 %v375, %v441
      %v458 = vsub.f32 %v376, %v442
      %v459 = vsub.f32 %v377, %v443
      %v460 = vsub.f32 %v378, %v444
      %v461 = vsub.f32 %v379, %v445
      %v462 = vmul.f32 %v446, %v446
      %v463 = vmul.f32 %v447, %v447
      %v464 = vmul.f32 %v448, %v448
      %v465 = vmul.f32 %v449, %v449
      %v466 = vmul.f32 %v450, %v450
      %v467 = vmul.f32 %v451, %v451
      %v468 = vmul.f32 %v452, %v452
      %v469 = vmul.f32 %v453, %v453
      %v470 = vmul.f32 %v454, %v454
      %v471 = vmul.f32 %v455, %v455
      %v472 = vmul.f32 %v456, %v456
      %v473 = vmul.f32 %v457, %v457
      %v474 = vmul.f32 %v458, %v458
      %v475 = vmul.f32 %v459, %v459
      %v476 = vmul.f32 %v460, %v460
      %v477 = vmul.f32 %v461, %v461
      %v478 = vsel %vm380, %v462, 0.0
      %479 = vadd.xlane.f32.xlu0 %v478
      %v480 = vpop.xlane.xlu0 %479
      %v481 = vsel %vm380, %v463, 0.0
      %482 = vadd.xlane.f32.xlu0 %v481
      %v483 = vpop.xlane.xlu0 %482
      %v484 = vsel %vm380, %v464, 0.0
      %485 = vadd.xlane.f32.xlu0 %v484
      %v486 = vpop.xlane.xlu0 %485
      %v487 = vsel %vm380, %v465, 0.0
      %488 = vadd.xlane.f32.xlu0 %v487
      %v489 = vpop.xlane.xlu0 %488
      %v490 = vsel %vm380, %v466, 0.0
      %491 = vadd.xlane.f32.xlu0 %v490
      %v492 = vpop.xlane.xlu0 %491
      %v493 = vsel %vm380, %v467, 0.0
      %494 = vadd.xlane.f32.xlu0 %v493
      %v495 = vpop.xlane.xlu0 %494
      %v496 = vsel %vm380, %v468, 0.0
      %497 = vadd.xlane.f32.xlu0 %v496
      %v498 = vpop.xlane.xlu0 %497
      %v499 = vsel %vm380, %v469, 0.0
      %500 = vadd.xlane.f32.xlu0 %v499
      %v501 = vpop.xlane.xlu0 %500
      %v502 = vsel %vm380, %v470, 0.0
      %503 = vadd.xlane.f32.xlu0 %v502
      %v504 = vpop.xlane.xlu0 %503
      %v505 = vsel %vm380, %v471, 0.0
      %506 = vadd.xlane.f32.xlu0 %v505
      %v507 = vpop.xlane.xlu0 %506
      %v508 = vsel %vm380, %v472, 0.0
      %509 = vadd.xlane.f32.xlu0 %v508
      %v510 = vpop.xlane.xlu0 %509
      %v511 = vsel %vm380, %v473, 0.0
      %512 = vadd.xlane.f32.xlu0 %v511
      %v513 = vpop.xlane.xlu0 %512
      %v514 = vsel %vm380, %v474, 0.0
      %515 = vadd.xlane.f32.xlu0 %v514
      %v516 = vpop.xlane.xlu0 %515
      %v517 = vsel %vm380, %v475, 0.0
      %518 = vadd.xlane.f32.xlu0 %v517
      %v519 = vpop.xlane.xlu0 %518
      %v520 = vsel %vm380, %v476, 0.0
      %521 = vadd.xlane.f32.xlu0 %v520
      %v522 = vpop.xlane.xlu0 %521
      %v523 = vsel %vm380, %v477, 0.0
      %524 = vadd.xlane.f32.xlu0 %v523
      %v525 = vpop.xlane.xlu0 %524
      %v526 = vmul.f32 %v480, %v429
      %v527 = vmul.f32 %v483, %v429
      %v528 = vmul.f32 %v486, %v429
      %v529 = vmul.f32 %v489, %v429
      %v530 = vmul.f32 %v492, %v429
      %v531 = vmul.f32 %v495, %v429
      %v532 = vmul.f32 %v498, %v429
      %v533 = vmul.f32 %v501, %v429
      %v534 = vmul.f32 %v504, %v429
      %v535 = vmul.f32 %v507, %v429
      %v536 = vmul.f32 %v510, %v429
      %v537 = vmul.f32 %v513, %v429
      %v538 = vmul.f32 %v516, %v429
      %v539 = vmul.f32 %v519, %v429
      %v540 = vmul.f32 %v522, %v429
      %v541 = vmul.f32 %v525, %v429
      %v542 = vadd.f32 %v526, 1e-05
      %v543 = vadd.f32 %v527, 1e-05
      %v544 = vadd.f32 %v528, 1e-05
      %v545 = vadd.f32 %v529, 1e-05
      %v546 = vadd.f32 %v530, 1e-05
      %v547 = vadd.f32 %v531, 1e-05
      %v548 = vadd.f32 %v532, 1e-05
      %v549 = vadd.f32 %v533, 1e-05
      %v550 = vadd.f32 %v534, 1e-05
      %v551 = vadd.f32 %v535, 1e-05
      %v552 = vadd.f32 %v536, 1e-05
      %v553 = vadd.f32 %v537, 1e-05
      %v554 = vadd.f32 %v538, 1e-05
      %v555 = vadd.f32 %v539, 1e-05
      %v556 = vadd.f32 %v540, 1e-05
      %v557 = vadd.f32 %v541, 1e-05
      %v558 = vrsqrt.pop %v542
      %v559 = vrsqrt.pop %v543
      %v560 = vrsqrt.pop %v544
      %v561 = vrsqrt.pop %v545
      %v562 = vrsqrt.pop %v546
      %v563 = vrsqrt.pop %v547
      %v564 = vrsqrt.pop %v548
      %v565 = vrsqrt.pop %v549
      %v566 = vrsqrt.pop %v550
      %v567 = vrsqrt.pop %v551
      %v568 = vrsqrt.pop %v552
      %v569 = vrsqrt.pop %v553
      %v570 = vrsqrt.pop %v554
      %v571 = vrsqrt.pop %v555
      %v572 = vrsqrt.pop %v556
      %v573 = vrsqrt.pop %v557
      %v574 = vmul.f32 %v446, %v558
      %v575 = vmul.f32 %v447, %v559
      %v576 = vmul.f32 %v448, %v560
      %v577 = vmul.f32 %v449, %v561
      %v578 = vmul.f32 %v450, %v562
      %v579 = vmul.f32 %v451, %v563
      %v580 = vmul.f32 %v452, %v564
      %v581 = vmul.f32 %v453, %v565
      %v582 = vmul.f32 %v454, %v566
      %v583 = vmul.f32 %v455, %v567
      %v584 = vmul.f32 %v456, %v568
      %v585 = vmul.f32 %v457, %v569
      %v586 = vmul.f32 %v458, %v570
      %v587 = vmul.f32 %v459, %v571
      %v588 = vmul.f32 %v460, %v572
      %v589 = vmul.f32 %v461, %v573
      %v590 = vld [vmem:[%s1] sm:$0x1]
      %v592 = vlaneseq
      %v593 = vshrl.u32 %v592, 7
      %v594 = vsub.s32 0, %v593
      %v595 = vrot.slane %v590, %v594
      %v597 = vmul.f32 %v574, %v595
      %v598 = vmul.f32 %v575, %v595
      %v599 = vmul.f32 %v576, %v595
      %v600 = vmul.f32 %v577, %v595
      %v601 = vmul.f32 %v578, %v595
      %v602 = vmul.f32 %v579, %v595
      %v603 = vmul.f32 %v580, %v595
      %v604 = vmul.f32 %v581, %v595
      %v605 = vmul.f32 %v582, %v595
      %v606 = vmul.f32 %v583, %v595
      %v607 = vmul.f32 %v584, %v595
      %v608 = vmul.f32 %v585, %v595
      %v609 = vmul.f32 %v586, %v595
      %v610 = vmul.f32 %v587, %v595
      %v611 = vmul.f32 %v588, %v595
      %v612 = vmul.f32 %v589, %v595
      %v613 = vld [vmem:[%s2] sm:$0x1]
      %v615 = vlaneseq
      %v616 = vshrl.u32 %v615, 7
      %v617 = vsub.s32 0, %v616
      %v618 = vrot.slane %v613, %v617
      %v620 = vadd.f32 %v597, %v618
      %v621 = vadd.f32 %v598, %v618
      %v622 = vadd.f32 %v599, %v618
      %v623 = vadd.f32 %v600, %v618
      %v624 = vadd.f32 %v601, %v618
      %v625 = vadd.f32 %v602, %v618
      %v626 = vadd.f32 %v603, %v618
      %v627 = vadd.f32 %v604, %v618
      %v628 = vadd.f32 %v605, %v618
      %v629 = vadd.f32 %v606, %v618
      %v630 = vadd.f32 %v607, %v618
      %v631 = vadd.f32 %v608, %v618
      %v632 = vadd.f32 %v609, %v618
      %v633 = vadd.f32 %v610, %v618
      %v634 = vadd.f32 %v611, %v618
      %v635 = vadd.f32 %v612, %v618
      %636 = vst.msk [vmem:[%s349] sm:$0xff] %vm380, %v620
      %637 = vst.msk [vmem:[%s349 + $0x8] sm:$0xff] %vm380, %v621
      %638 = vst.msk [vmem:[%s349 + $0x10] sm:$0xff] %vm380, %v622
      %639 = vst.msk [vmem:[%s349 + $0x18] sm:$0xff] %vm380, %v623
      %640 = vst.msk [vmem:[%s349 + $0x20] sm:$0xff] %vm380, %v624
      %641 = vst.msk [vmem:[%s349 + $0x28] sm:$0xff] %vm380, %v625
      %642 = vst.msk [vmem:[%s349 + $0x30] sm:$0xff] %vm380, %v626
      %643 = vst.msk [vmem:[%s349 + $0x38] sm:$0xff] %vm380, %v627
      %644 = vst.msk [vmem:[%s349 + $0x40] sm:$0xff] %vm380, %v628
      %645 = vst.msk [vmem:[%s349 + $0x48] sm:$0xff] %vm380, %v629
      %646 = vst.msk [vmem:[%s349 + $0x50] sm:$0xff] %vm380, %v630
      %647 = vst.msk [vmem:[%s349 + $0x58] sm:$0xff] %vm380, %v631
      %648 = vst.msk [vmem:[%s349 + $0x60] sm:$0xff] %vm380, %v632
      %649 = vst.msk [vmem:[%s349 + $0x68] sm:$0xff] %vm380, %v633
      %650 = vst.msk [vmem:[%s349 + $0x70] sm:$0xff] %vm380, %v634
      %651 = vst.msk [vmem:[%s349 + $0x78] sm:$0xff] %vm380, %v635
      %v652 = vpack.c.bf16 %v621, %v620
      %v653 = vpack.c.bf16 %v623, %v622
      %v654 = vpack.c.bf16 %v625, %v624
      %v655 = vpack.c.bf16 %v627, %v626
      %v656 = vpack.c.bf16 %v629, %v628
      %v657 = vpack.c.bf16 %v631, %v630
      %v658 = vpack.c.bf16 %v633, %v632
      %v659 = vpack.c.bf16 %v635, %v634
      %v660 = vld [vmem:[%s3] sm:$0x3]
      %v661 = vld [vmem:[%s4] sm:$0x1]
      %v663 = vlaneseq
      %v664 = vshrl.u32 %v663, 7
      %v665 = vsub.s32 0, %v664
      %v666 = vrot.slane %v661, %v665
      %v669 = vsel %vm380, %v652, 0
      %v672 = vsel %vm380, %v653, 0
      %v675 = vsel %vm380, %v654, 0
      %v678 = vsel %vm380, %v655, 0
      %v681 = vsel %vm380, %v656, 0
      %v684 = vsel %vm380, %v657, 0
      %v687 = vsel %vm380, %v658, 0
      %v690 = vsel %vm380, %v659, 0
      %vm692 = vcmask 1041408
      %v694 = vsel %vm692, %v660, 0
      %696 = vmatprep.subr.bf16.mxu0 0
      %697 = vmatpush1.bf16.msra.mxu0 %v694
      %698 = vmatprep.subr.bf16.mxu0 0
      %699 = vmatpush1.bf16.msra.mxu0 0
      %700 = vmatprep.subr.bf16.mxu0 0
      %701 = vmatpush1.bf16.msra.mxu0 0
      %702 = vmatprep.subr.bf16.mxu0 0
      %703 = vmatpush1.bf16.msra.mxu0 0
      %704 = vmatprep.subr.bf16.mxu0 0
      %705 = vmatpush1.bf16.msra.mxu0 0
      %706 = vmatprep.subr.bf16.mxu0 0
      %707 = vmatpush1.bf16.msra.mxu0 0
      %708 = vmatprep.subr.bf16.mxu0 0
      %709 = vmatpush1.bf16.msra.mxu0 0
      %710 = vmatprep.subr.bf16.mxu0 0
      %711 = vmatpush1.bf16.msra.mxu0 0
      %712 = vmatprep.subr.bf16.mxu0 0
      %713 = vmatpush1.bf16.msra.mxu0 0
      %714 = vmatprep.subr.bf16.mxu0 0
      %715 = vmatpush1.bf16.msra.mxu0 0
      %716 = vmatprep.subr.bf16.mxu0 0
      %717 = vmatpush1.bf16.msra.mxu0 0
      %718 = vmatprep.subr.bf16.mxu0 0
      %719 = vmatpush1.bf16.msra.mxu0 0
      %720 = vmatprep.subr.bf16.mxu0 0
      %721 = vmatpush1.bf16.msra.mxu0 0
      %722 = vmatprep.subr.bf16.mxu0 0
      %723 = vmatpush1.bf16.msra.mxu0 0
      %724 = vmatprep.subr.bf16.mxu0 0
      %725 = vmatpush1.bf16.msra.mxu0 0
      %726 = vmatprep.subr.bf16.mxu0 0
      %727 = vmatpush1.bf16.msra.mxu0 0
      %728 = vmatprep.mubr.bf16.mxu0 0
      %729 = vmatmul.mubr.bf16.gmra.mrb[0].mxu0 %v669
      %v730 = vpop.f32.mrb[0].mxu0
      %v731 = vadd.f32 %v666, %v730
      %v732 = vpop.f32.mrb[0].mxu0
      %v733 = vpop.f32.mrb[0].mxu0
      %v734 = vadd.f32 %v666, %v733
      %v735 = vpop.f32.mrb[0].mxu0
      %736 = vmatprep.mubr.bf16.mxu0 0
      %737 = vmatmul.mubr.bf16.gmra.mrb[0].mxu0 %v672
      %v738 = vpop.f32.mrb[0].mxu0
      %v739 = vadd.f32 %v666, %v738
      %v740 = vpop.f32.mrb[0].mxu0
      %v741 = vpop.f32.mrb[0].mxu0
      %v742 = vadd.f32 %v666, %v741
      %v743 = vpop.f32.mrb[0].mxu0
      %744 = vmatprep.mubr.bf16.mxu0 0
      %745 = vmatmul.mubr.bf16.gmra.mrb[0].mxu0 %v675
      %v746 = vpop.f32.mrb[0].mxu0
      %v747 = vadd.f32 %v666, %v746
      %v748 = vpop.f32.mrb[0].mxu0
      %v749 = vpop.f32.mrb[0].mxu0
      %v750 = vadd.f32 %v666, %v749
      %v751 = vpop.f32.mrb[0].mxu0
      %752 = vmatprep.mubr.bf16.mxu0 0
      %753 = vmatmul.mubr.bf16.gmra.mrb[0].mxu0 %v678
      %v754 = vpop.f32.mrb[0].mxu0
      %v755 = vadd.f32 %v666, %v754
      %v756 = vpop.f32.mrb[0].mxu0
      %v757 = vpop.f32.mrb[0].mxu0
      %v758 = vadd.f32 %v666, %v757
      %v759 = vpop.f32.mrb[0].mxu0
      %760 = vmatprep.mubr.bf16.mxu0 0
      %761 = vmatmul.mubr.bf16.gmra.mrb[0].mxu0 %v681
      %v762 = vpop.f32.mrb[0].mxu0
      %v763 = vadd.f32 %v666, %v762
      %v764 = vpop.f32.mrb[0].mxu0
      %v765 = vpop.f32.mrb[0].mxu0
      %v766 = vadd.f32 %v666, %v765
      %v767 = vpop.f32.mrb[0].mxu0
      %768 = vmatprep.mubr.bf16.mxu0 0
      %769 = vmatmul.mubr.bf16.gmra.mrb[0].mxu0 %v684
      %v770 = vpop.f32.mrb[0].mxu0
      %v771 = vadd.f32 %v666, %v770
      %v772 = vpop.f32.mrb[0].mxu0
      %v773 = vpop.f32.mrb[0].mxu0
      %v774 = vadd.f32 %v666, %v773
      %v775 = vpop.f32.mrb[0].mxu0
      %776 = vmatprep.mubr.bf16.mxu0 0
      %777 = vmatmul.mubr.bf16.gmra.mrb[0].mxu0 %v687
      %v778 = vpop.f32.mrb[0].mxu0
      %v779 = vadd.f32 %v666, %v778
      %v780 = vpop.f32.mrb[0].mxu0
      %v781 = vpop.f32.mrb[0].mxu0
      %v782 = vadd.f32 %v666, %v781
      %v783 = vpop.f32.mrb[0].mxu0
      %784 = vmatprep.mubr.bf16.mxu0 0
      %785 = vmatmul.mubr.bf16.gmra.mrb[0].mxu0 %v690
      %v786 = vpop.f32.mrb[0].mxu0
      %v787 = vadd.f32 %v666, %v786
      %v788 = vpop.f32.mrb[0].mxu0
      %v789 = vpop.f32.mrb[0].mxu0
      %v790 = vadd.f32 %v666, %v789
      %v791 = vpop.f32.mrb[0].mxu0
      %792 = vdwg.mxu0
      %v793 = vpack.c.bf16 %v734, %v731
      %v794 = vpack.c.bf16 %v742, %v739
      %v795 = vpack.c.bf16 %v750, %v747
      %v796 = vpack.c.bf16 %v758, %v755
      %v797 = vpack.c.bf16 %v766, %v763
      %v798 = vpack.c.bf16 %v774, %v771
      %v799 = vpack.c.bf16 %v782, %v779
      %v800 = vpack.c.bf16 %v790, %v787
      %v809 = vunpack.c.l.b16 %v793
      %v810 = vunpack.c.h.b16 %v793
      %v811 = vunpack.c.l.b16 %v794
      %v812 = vunpack.c.h.b16 %v794
      %v813 = vunpack.c.l.b16 %v795
      %v814 = vunpack.c.h.b16 %v795
      %v815 = vunpack.c.l.b16 %v796
      %v816 = vunpack.c.h.b16 %v796
      %v817 = vunpack.c.l.b16 %v797
      %v818 = vunpack.c.h.b16 %v797
      %v819 = vunpack.c.l.b16 %v798
      %v820 = vunpack.c.h.b16 %v798
      %v821 = vunpack.c.l.b16 %v799
      %v822 = vunpack.c.h.b16 %v799
      %v823 = vunpack.c.l.b16 %v800
      %v824 = vunpack.c.h.b16 %v800
      %v825 = vpack.c.b16 %v809, %v809
      %v826 = vpack.c.b16 %v810, %v810
      %v827 = vpack.c.b16 %v811, %v811
      %v828 = vpack.c.b16 %v812, %v812
      %v829 = vpack.c.b16 %v813, %v813
      %v830 = vpack.c.b16 %v814, %v814
      %v831 = vpack.c.b16 %v815, %v815
      %v832 = vpack.c.b16 %v816, %v816
      %v833 = vpack.c.b16 %v817, %v817
      %v834 = vpack.c.b16 %v818, %v818
      %v835 = vpack.c.b16 %v819, %v819
      %v836 = vpack.c.b16 %v820, %v820
      %v837 = vpack.c.b16 %v821, %v821
      %v838 = vpack.c.b16 %v822, %v822
      %v839 = vpack.c.b16 %v823, %v823
      %v840 = vpack.c.b16 %v824, %v824
      %vm857 = vcmask 27648
      %858 = vst.msk [vmem:[%s355] sm:$0xf] %vm857, %v825
      %859 = vst.msk [vmem:[%s355 + $0x4] sm:$0xf] %vm857, %v826
      %860 = vst.msk [vmem:[%s355 + $0x8] sm:$0xf] %vm857, %v827
      %861 = vst.msk [vmem:[%s355 + $0xc] sm:$0xf] %vm857, %v828
      %862 = vst.msk [vmem:[%s355 + $0x10] sm:$0xf] %vm857, %v829
      %863 = vst.msk [vmem:[%s355 + $0x14] sm:$0xf] %vm857, %v830
      %864 = vst.msk [vmem:[%s355 + $0x18] sm:$0xf] %vm857, %v831
      %865 = vst.msk [vmem:[%s355 + $0x1c] sm:$0xf] %vm857, %v832
      %866 = vst.msk [vmem:[%s355 + $0x20] sm:$0xf] %vm857, %v833
      %867 = vst.msk [vmem:[%s355 + $0x24] sm:$0xf] %vm857, %v834
      %868 = vst.msk [vmem:[%s355 + $0x28] sm:$0xf] %vm857, %v835
      %869 = vst.msk [vmem:[%s355 + $0x2c] sm:$0xf] %vm857, %v836
      %870 = vst.msk [vmem:[%s355 + $0x30] sm:$0xf] %vm857, %v837
      %871 = vst.msk [vmem:[%s355 + $0x34] sm:$0xf] %vm857, %v838
      %872 = vst.msk [vmem:[%s355 + $0x38] sm:$0xf] %vm857, %v839
      %873 = vst.msk [vmem:[%s355 + $0x3c] sm:$0xf] %vm857, %v840
      %v874 = vld [vmem:[%s5] sm:$0x3]
      %v875 = vld [vmem:[%s6] sm:$0x1]
      %v877 = vlaneseq
      %v878 = vshrl.u32 %v877, 7
      %v879 = vsub.s32 0, %v878
      %v880 = vrot.slane %v875, %v879
      %v883 = vsel %vm692, %v874, 0
      %885 = vmatprep.subr.bf16.mxu0 0
      %886 = vmatpush1.bf16.msra.mxu0 %v883
      %887 = vmatprep.subr.bf16.mxu0 0
      %888 = vmatpush1.bf16.msra.mxu0 0
      %889 = vmatprep.subr.bf16.mxu0 0
      %890 = vmatpush1.bf16.msra.mxu0 0
      %891 = vmatprep.subr.bf16.mxu0 0
      %892 = vmatpush1.bf16.msra.mxu0 0
      %893 = vmatprep.subr.bf16.mxu0 0
      %894 = vmatpush1.bf16.msra.mxu0 0
      %895 = vmatprep.subr.bf16.mxu0 0
      %896 = vmatpush1.bf16.msra.mxu0 0
      %897 = vmatprep.subr.bf16.mxu0 0
      %898 = vmatpush1.bf16.msra.mxu0 0
      %899 = vmatprep.subr.bf16.mxu0 0
      %900 = vmatpush1.bf16.msra.mxu0 0
      %901 = vmatprep.subr.bf16.mxu0 0
      %902 = vmatpush1.bf16.msra.mxu0 0
      %903 = vmatprep.subr.bf16.mxu0 0
      %904 = vmatpush1.bf16.msra.mxu0 0
      %905 = vmatprep.subr.bf16.mxu0 0
      %906 = vmatpush1.bf16.msra.mxu0 0
      %907 = vmatprep.subr.bf16.mxu0 0
      %908 = vmatpush1.bf16.msra.mxu0 0
      %909 = vmatprep.subr.bf16.mxu0 0
      %910 = vmatpush1.bf16.msra.mxu0 0
      %911 = vmatprep.subr.bf16.mxu0 0
      %912 = vmatpush1.bf16.msra.mxu0 0
      %913 = vmatprep.subr.bf16.mxu0 0
      %914 = vmatpush1.bf16.msra.mxu0 0
      %915 = vmatprep.subr.bf16.mxu0 0
      %916 = vmatpush1.bf16.msra.mxu0 0
      %917 = vmatprep.mubr.bf16.mxu0 0
      %918 = vmatmul.mubr.bf16.gmra.mrb[0].mxu0 %v669
      %v919 = vpop.f32.mrb[0].mxu0
      %v920 = vadd.f32 %v880, %v919
      %v921 = vpop.f32.mrb[0].mxu0
      %v922 = vpop.f32.mrb[0].mxu0
      %v923 = vadd.f32 %v880, %v922
      %v924 = vpop.f32.mrb[0].mxu0
      %925 = vmatprep.mubr.bf16.mxu0 0
      %926 = vmatmul.mubr.bf16.gmra.mrb[0].mxu0 %v672
      %v927 = vpop.f32.mrb[0].mxu0
      %v928 = vadd.f32 %v880, %v927
      %v929 = vpop.f32.mrb[0].mxu0
      %v930 = vpop.f32.mrb[0].mxu0
      %v931 = vadd.f32 %v880, %v930
      %v932 = vpop.f32.mrb[0].mxu0
      %933 = vmatprep.mubr.bf16.mxu0 0
      %934 = vmatmul.mubr.bf16.gmra.mrb[0].mxu0 %v675
      %v935 = vpop.f32.mrb[0].mxu0
      %v936 = vadd.f32 %v880, %v935
      %v937 = vpop.f32.mrb[0].mxu0
      %v938 = vpop.f32.mrb[0].mxu0
      %v939 = vadd.f32 %v880, %v938
      %v940 = vpop.f32.mrb[0].mxu0
      %941 = vmatprep.mubr.bf16.mxu0 0
      %942 = vmatmul.mubr.bf16.gmra.mrb[0].mxu0 %v678
      %v943 = vpop.f32.mrb[0].mxu0
      %v944 = vadd.f32 %v880, %v943
      %v945 = vpop.f32.mrb[0].mxu0
      %v946 = vpop.f32.mrb[0].mxu0
      %v947 = vadd.f32 %v880, %v946
      %v948 = vpop.f32.mrb[0].mxu0
      %949 = vmatprep.mubr.bf16.mxu0 0
      %950 = vmatmul.mubr.bf16.gmra.mrb[0].mxu0 %v681
      %v951 = vpop.f32.mrb[0].mxu0
      %v952 = vadd.f32 %v880, %v951
      %v953 = vpop.f32.mrb[0].mxu0
      %v954 = vpop.f32.mrb[0].mxu0
      %v955 = vadd.f32 %v880, %v954
      %v956 = vpop.f32.mrb[0].mxu0
      %957 = vmatprep.mubr.bf16.mxu0 0
      %958 = vmatmul.mubr.bf16.gmra.mrb[0].mxu0 %v684
      %v959 = vpop.f32.mrb[0].mxu0
      %v960 = vadd.f32 %v880, %v959
      %v961 = vpop.f32.mrb[0].mxu0
      %v962 = vpop.f32.mrb[0].mxu0
      %v963 = vadd.f32 %v880, %v962
      %v964 = vpop.f32.mrb[0].mxu0
      %965 = vmatprep.mubr.bf16.mxu0 0
      %966 = vmatmul.mubr.bf16.gmra.mrb[0].mxu0 %v687
      %v967 = vpop.f32.mrb[0].mxu0
      %v968 = vadd.f32 %v880, %v967
      %v969 = vpop.f32.mrb[0].mxu0
      %v970 = vpop.f32.mrb[0].mxu0
      %v971 = vadd.f32 %v880, %v970
      %v972 = vpop.f32.mrb[0].mxu0
      %973 = vmatprep.mubr.bf16.mxu0 0
      %974 = vmatmul.mubr.bf16.gmra.mrb[0].mxu0 %v690
      %v975 = vpop.f32.mrb[0].mxu0
      %v976 = vadd.f32 %v880, %v975
      %v977 = vpop.f32.mrb[0].mxu0
      %v978 = vpop.f32.mrb[0].mxu0
      %v979 = vadd.f32 %v880, %v978
      %v980 = vpop.f32.mrb[0].mxu0
      %981 = vdwg.mxu0
      %v982 = vpack.c.bf16 %v923, %v920
      %v983 = vpack.c.bf16 %v931, %v928
      %v984 = vpack.c.bf16 %v939, %v936
      %v985 = vpack.c.bf16 %v947, %v944
      %v986 = vpack.c.bf16 %v955, %v952
      %v987 = vpack.c.bf16 %v963, %v960
      %v988 = vpack.c.bf16 %v971, %v968
      %v989 = vpack.c.bf16 %v979, %v976
      %v998 = vunpack.c.l.b16 %v982
      %v999 = vunpack.c.h.b16 %v982
      %v1000 = vunpack.c.l.b16 %v983
      %v1001 = vunpack.c.h.b16 %v983
      %v1002 = vunpack.c.l.b16 %v984
      %v1003 = vunpack.c.h.b16 %v984
      %v1004 = vunpack.c.l.b16 %v985
      %v1005 = vunpack.c.h.b16 %v985
      %v1006 = vunpack.c.l.b16 %v986
      %v1007 = vunpack.c.h.b16 %v986
      %v1008 = vunpack.c.l.b16 %v987
      %v1009 = vunpack.c.h.b16 %v987
      %v1010 = vunpack.c.l.b16 %v988
      %v1011 = vunpack.c.h.b16 %v988
      %v1012 = vunpack.c.l.b16 %v989
      %v1013 = vunpack.c.h.b16 %v989
      %v1014 = vpack.c.b16 %v998, %v998
      %v1015 = vpack.c.b16 %v999, %v999
      %v1016 = vpack.c.b16 %v1000, %v1000
      %v1017 = vpack.c.b16 %v1001, %v1001
      %v1018 = vpack.c.b16 %v1002, %v1002
      %v1019 = vpack.c.b16 %v1003, %v1003
      %v1020 = vpack.c.b16 %v1004, %v1004
      %v1021 = vpack.c.b16 %v1005, %v1005
      %v1022 = vpack.c.b16 %v1006, %v1006
      %v1023 = vpack.c.b16 %v1007, %v1007
      %v1024 = vpack.c.b16 %v1008, %v1008
      %v1025 = vpack.c.b16 %v1009, %v1009
      %v1026 = vpack.c.b16 %v1010, %v1010
      %v1027 = vpack.c.b16 %v1011, %v1011
      %v1028 = vpack.c.b16 %v1012, %v1012
      %v1029 = vpack.c.b16 %v1013, %v1013
      %1046 = vst.msk [vmem:[%s361] sm:$0xf] %vm857, %v1014
      %1047 = vst.msk [vmem:[%s361 + $0x4] sm:$0xf] %vm857, %v1015
      %1048 = vst.msk [vmem:[%s361 + $0x8] sm:$0xf] %vm857, %v1016
      %1049 = vst.msk [vmem:[%s361 + $0xc] sm:$0xf] %vm857, %v1017
      %1050 = vst.msk [vmem:[%s361 + $0x10] sm:$0xf] %vm857, %v1018
      %1051 = vst.msk [vmem:[%s361 + $0x14] sm:$0xf] %vm857, %v1019
      %1052 = vst.msk [vmem:[%s361 + $0x18] sm:$0xf] %vm857, %v1020
      %1053 = vst.msk [vmem:[%s361 + $0x1c] sm:$0xf] %vm857, %v1021
      %1054 = vst.msk [vmem:[%s361 + $0x20] sm:$0xf] %vm857, %v1022
      %1055 = vst.msk [vmem:[%s361 + $0x24] sm:$0xf] %vm857, %v1023
      %1056 = vst.msk [vmem:[%s361 + $0x28] sm:$0xf] %vm857, %v1024
      %1057 = vst.msk [vmem:[%s361 + $0x2c] sm:$0xf] %vm857, %v1025
      %1058 = vst.msk [vmem:[%s361 + $0x30] sm:$0xf] %vm857, %v1026
      %1059 = vst.msk [vmem:[%s361 + $0x34] sm:$0xf] %vm857, %v1027
      %1060 = vst.msk [vmem:[%s361 + $0x38] sm:$0xf] %vm857, %v1028
      %1061 = vst.msk [vmem:[%s361 + $0x3c] sm:$0xf] %vm857, %v1029
      %s1062 = smul.u32 16, %s21
      %p1063 = scmp.lt.s32.totalorder %s1062, 63
      %s1064 = scalar_select %p1063, %s1062, 63
      %s1065 = smul.addr %s1064, 8
      %s1066 = scalar_lea.vmem %s7, %s1065
      %s1067 = smul.u32 16, %s21
      %p1068 = scmp.lt.s32.totalorder %s1067, 63
      %s1069 = scalar_select %p1068, %s1067, 63
      %s1070 = smul.addr %s1069, 4
      %s1071 = scalar_lea.vmem %s8, %s1070
      %s1072 = smul.u32 16, %s21
      %p1073 = scmp.lt.s32.totalorder %s1072, 63
      %s1074 = scalar_select %p1073, %s1072, 63
      %s1075 = smul.addr %s1074, 4
      %s1076 = scalar_lea.vmem %s9, %s1075
      // Predicated region
      $region49: #{fnafnet_block_forward.4} parent=47 // pred_check
        %p1077 = pneg %p191
      $region50: #{fnafnet_block_forward.4} parent=47 // pred_check_branch
        %1079 = sbr.rel (%p1077) target = $region52
      $region51: #{fnafnet_block_forward.4} parent=47 // pred_region
        %s1080 = smul.u32 16, %s21
      $region52: #{fnafnet_block_forward.4} parent=47 // pred_fallthru
        _
      // Predicated region
      $region53: #{fnafnet_block_forward.4} parent=47 // pred_check
        %p1081 = pneg %p217
      $region54: #{fnafnet_block_forward.4} parent=47 // pred_check_branch
        %1083 = sbr.rel (%p1081) target = $region56
      $region55: #{fnafnet_block_forward.4} parent=47 // pred_region
        %s1084 = smul.u32 16, %s21
      $region56: #{fnafnet_block_forward.4} parent=47 // pred_fallthru
        _
      // Predicated region
      $region57: #{fnafnet_block_forward.4} parent=47 // pred_check
        %p1085 = pneg %p243
      $region58: #{fnafnet_block_forward.4} parent=47 // pred_check_branch
        %1087 = sbr.rel (%p1085) target = $region60
      $region59: #{fnafnet_block_forward.4} parent=47 // pred_region
        %s1088 = smul.u32 16, %s21
      $region60: #{fnafnet_block_forward.4} parent=47 // pred_fallthru
        _
    $region48: #{fnafnet_block_forward.4} parent=5 // pred_fallthru
      _
    %p1089 = scmp.le.s32.totalorder 2, %s16
    // Predicated region
    $region61: #{fnafnet_block_forward.4} parent=5 // pred_check
      %p1090 = pneg %p1089
    $region62: #{fnafnet_block_forward.4} parent=5 // pred_check_branch
      %1092 = sbr.rel (%p1090) target = $region64
    $region63: #{fnafnet_block_forward.4} parent=5 // pred_region
      %s1093 = ssub.s32 %s16, 2
      // Predicated region
      $region65: #{fnafnet_block_forward.4} parent=63 // pred_check
        %p1094 = pneg %p197
      $region66: #{fnafnet_block_forward.4} parent=63 // pred_check_branch
        %1096 = sbr.rel (%p1094) target = $region68
      $region67: #{fnafnet_block_forward.4} parent=63 // pred_region
        %s1097 = smul.u32 16, %s22
        %p1098 = scmp.lt.s32.totalorder %s1097, 63
        %s1099 = scalar_select %p1098, %s1097, 63
        %s1100 = smul.addr %s1099, 8
        %s1101 = scalar_lea.vmem %s7, %s1100
      $region68: #{fnafnet_block_forward.4} parent=63 // pred_fallthru
        _
      // Predicated region
      $region69: #{fnafnet_block_forward.4} parent=63 // pred_check
        %p1102 = pneg %p223
      $region70: #{fnafnet_block_forward.4} parent=63 // pred_check_branch
        %1104 = sbr.rel (%p1102) target = $region72
      $region71: #{fnafnet_block_forward.4} parent=63 // pred_region
        %s1105 = smul.u32 16, %s22
        %p1106 = scmp.lt.s32.totalorder %s1105, 63
        %s1107 = scalar_select %p1106, %s1105, 63
        %s1108 = smul.addr %s1107, 4
        %s1109 = scalar_lea.vmem %s8, %s1108
      $region72: #{fnafnet_block_forward.4} parent=63 // pred_fallthru
        _
      // Predicated region
      $region73: #{fnafnet_block_forward.4} parent=63 // pred_check
        %p1110 = pneg %p249
      $region74: #{fnafnet_block_forward.4} parent=63 // pred_check_branch
        %1112 = sbr.rel (%p1110) target = $region76
      $region75: #{fnafnet_block_forward.4} parent=63 // pred_region
        %s1113 = smul.u32 16, %s22
        %p1114 = scmp.lt.s32.totalorder %s1113, 63
        %s1115 = scalar_select %p1114, %s1113, 63
        %s1116 = smul.addr %s1115, 4
        %s1117 = scalar_lea.vmem %s9, %s1116
      $region76: #{fnafnet_block_forward.4} parent=63 // pred_fallthru
        _
    $region64: #{fnafnet_block_forward.4} parent=5 // pred_fallthru
      _
  $region6: #{fnafnet_block_forward.4} parent=0 // loop_footer
    %s20 = sadd.s32 1, %s16
  $region7: #{fnafnet_block_forward.4} parent=0 // loop_footer_branch
    %15 = sbr.rel target = $region3
  $region8: #{fnafnet_block_forward.4} parent=0 // loop_exit
    _

// kernel: fnafnet_block_forward.6
$region0: #{fnafnet_block_forward.6}
  #allocation0 [shape = 'u32[]', space=smem, size = 0x4, offset = 0x4, fixed_abs, tag = 'smem constant byte address 0x4 - core index']
  #allocation1 [shape = 'u32[144,128]{1,0:T(1,128)}', space=vmem, size = 0x12000, scoped, tag = 'internal scratch']
  %s0 = inlined_call_operand.vmem [shape: bf16[288,8], index: 0, kind: input, shape index: {}]
  %s1 = inlined_call_operand.vmem [shape: bf16[8,16], index: 1, kind: input, shape index: {}]
  %s2 = inlined_call_operand.vmem [shape: bf16[16,8], index: 2, kind: input, shape index: {}]
  %s3 = inlined_call_operand.vmem [shape: f32[288,8], index: 3, kind: output, shape index: {}]
  %s4 = sld [smem:[#allocation0]]
  $region93: #{fnafnet_block_forward.6} parent=0
    _
  %s6 = ssub.s32 1, %s4
  %s7 = scalar_select 0, %s6, %s4
  $region1: #{fnafnet_block_forward.6} parent=0
    #allocation2 [shape = 'u8[65536]{0}', space=vmem, size = 0x10000, scoped, tag = 'output window, operand 0']
    loop: start=0, step=1, limit=7
    $region2: #{fnafnet_block_forward.6} parent=1 // loop_pre_header
      _
    $region3: #{fnafnet_block_forward.6} parent=1 // loop_header
      %s9 = sphi 0, %s13
      %p10 = scmp.ge.s32.totalorder %s9, 7
      %s19 = sphi 0, %s21
      %s22 = sphi 0, %s19
      %s23 = sphi 0, %s22
      %s39 = sphi 0, %s23
      %s43 = sphi 0, %s43
      %s45 = sphi 0, %s43
      %s46 = sphi 0, %s45
      %s60 = sphi 0, %s46
      %s64 = sphi 0, %s64
      %s66 = sphi 0, %s64
      %s67 = sphi 0, %s66
      %s81 = sphi 0, %s67
      %s87 = sphi 0, %s89
      %s90 = sphi 0, %s87
      %s91 = sphi 0, %s90
      %s107 = sphi 0, %s91
    $region4: #{fnafnet_block_forward.6} parent=1 // loop_header_branch
      %12 = sbr.rel (%p10) target = $region8
    $region5: #{fnafnet_block_forward.6} parent=1 // loop_body
      %s14 = ssub.s32 %s9, 1
      %s15 = ssub.s32 %s9, 2
      %s16 = sadd.s32 %s9, 1
      %s17 = ssub.s32 %s9, %s16
      %p18 = scmp.eq.s32.totalorder %s17, 0
      %s20 = sadd.s32 %s19, 1
      %s21 = scalar_select %p18, %s19, %s20
      %p24 = pneg %p18
      %p25 = scmp.eq.s32.totalorder %s9, 4
      %p26 = por %p24, %p25
      %p27 = scmp.ne.s32.totalorder %s19, %s22
      %p28 = scmp.eq.s32.totalorder %s9, 0
      %p29 = por %p27, %p28
      %p30 = scmp.ne.s32.totalorder %s19, %s22
      %p31 = scmp.eq.s32.totalorder %s14, 4
      %p32 = por %p30, %p31
      %p33 = scmp.ne.s32.totalorder %s22, %s23
      %p34 = scmp.eq.s32.totalorder %s14, 0
      %p35 = por %p33, %p34
      %p36 = scmp.ne.s32.totalorder %s22, %s23
      %p37 = scmp.eq.s32.totalorder %s15, 4
      %p38 = por %p36, %p37
      %p40 = scmp.ne.s32.totalorder %s23, %s39
      %p41 = scmp.eq.s32.totalorder %s15, 0
      %p42 = por %p40, %p41
      %s44 = sadd.s32 %s43, 1
      %p47 = scmp.eq.s32.totalorder %s9, 4
      %p48 = scmp.ne.s32.totalorder %s43, %s45
      %p49 = scmp.eq.s32.totalorder %s9, 0
      %p50 = por %p48, %p49
      %p51 = scmp.ne.s32.totalorder %s43, %s45
      %p52 = scmp.eq.s32.totalorder %s14, 4
      %p53 = por %p51, %p52
      %p54 = scmp.ne.s32.totalorder %s45, %s46
      %p55 = scmp.eq.s32.totalorder %s14, 0
      %p56 = por %p54, %p55
      %p57 = scmp.ne.s32.totalorder %s45, %s46
      %p58 = scmp.eq.s32.totalorder %s15, 4
      %p59 = por %p57, %p58
      %p61 = scmp.ne.s32.totalorder %s46, %s60
      %p62 = scmp.eq.s32.totalorder %s15, 0
      %p63 = por %p61, %p62
      %s65 = sadd.s32 %s64, 1
      %p68 = scmp.eq.s32.totalorder %s9, 4
      %p69 = scmp.ne.s32.totalorder %s64, %s66
      %p70 = scmp.eq.s32.totalorder %s9, 0
      %p71 = por %p69, %p70
      %p72 = scmp.ne.s32.totalorder %s64, %s66
      %p73 = scmp.eq.s32.totalorder %s14, 4
      %p74 = por %p72, %p73
      %p75 = scmp.ne.s32.totalorder %s66, %s67
      %p76 = scmp.eq.s32.totalorder %s14, 0
      %p77 = por %p75, %p76
      %p78 = scmp.ne.s32.totalorder %s66, %s67
      %p79 = scmp.eq.s32.totalorder %s15, 4
      %p80 = por %p78, %p79
      %p82 = scmp.ne.s32.totalorder %s67, %s81
      %p83 = scmp.eq.s32.totalorder %s15, 0
      %p84 = por %p82, %p83
      %s85 = ssub.s32 %s9, %s16
      %p86 = scmp.eq.s32.totalorder %s85, 0
      %s88 = sadd.s32 %s87, 1
      %s89 = scalar_select %p86, %s87, %s88
      %p92 = pneg %p86
      %p93 = scmp.eq.s32.totalorder %s9, 4
      %p94 = por %p92, %p93
      %p95 = scmp.ne.s32.totalorder %s87, %s90
      %p96 = scmp.eq.s32.totalorder %s9, 0
      %p97 = por %p95, %p96
      %p98 = scmp.ne.s32.totalorder %s87, %s90
      %p99 = scmp.eq.s32.totalorder %s14, 4
      %p100 = por %p98, %p99
      %p101 = scmp.ne.s32.totalorder %s90, %s91
      %p102 = scmp.eq.s32.totalorder %s14, 0
      %p103 = por %p101, %p102
      %p104 = scmp.ne.s32.totalorder %s90, %s91
      %p105 = scmp.eq.s32.totalorder %s15, 4
      %p106 = por %p104, %p105
      %p108 = scmp.ne.s32.totalorder %s91, %s107
      %p109 = scmp.eq.s32.totalorder %s15, 0
      %p110 = por %p108, %p109
      %p111 = scmp.le.s32.totalorder 1, %s9
      %p112 = scmp.lt.s32.totalorder %s9, 6
      %p113 = pnand %p111, %p112
      %p114 = pneg %p113
      // Predicated region
      $region9: #{fnafnet_block_forward.6} parent=5 // pred_check
        _
      $region10: #{fnafnet_block_forward.6} parent=5 // pred_check_branch
        %116 = sbr.rel (%p113) target = $region12
      $region11: #{fnafnet_block_forward.6} parent=5 // pred_region
        %s117 = ssub.s32 %s9, 1
        // Predicated region
        $region13: #{fnafnet_block_forward.6} parent=11 // pred_check
          %p118 = pneg %p56
        $region14: #{fnafnet_block_forward.6} parent=11 // pred_check_branch
          %120 = sbr.rel (%p118) target = $region16
        $region15: #{fnafnet_block_forward.6} parent=11 // pred_region
          _
        $region16: #{fnafnet_block_forward.6} parent=11 // pred_fallthru
          _
        // Predicated region
        $region17: #{fnafnet_block_forward.6} parent=11 // pred_check
          %p121 = pneg %p77
        $region18: #{fnafnet_block_forward.6} parent=11 // pred_check_branch
          %123 = sbr.rel (%p121) target = $region20
        $region19: #{fnafnet_block_forward.6} parent=11 // pred_region
          _
        $region20: #{fnafnet_block_forward.6} parent=11 // pred_fallthru
          _
      $region12: #{fnafnet_block_forward.6} parent=5 // pred_fallthru
        _
      %p124 = scmp.lt.s32.totalorder %s9, 5
      // Predicated region
      $region21: #{fnafnet_block_forward.6} parent=5 // pred_check
        %p125 = pneg %p124
      $region22: #{fnafnet_block_forward.6} parent=5 // pred_check_branch
        %127 = sbr.rel (%p125) target = $region24
      $region23: #{fnafnet_block_forward.6} parent=5 // pred_region
        // Predicated region
        $region25: #{fnafnet_block_forward.6} parent=23 // pred_check
          %p128 = pneg %p29
        $region26: #{fnafnet_block_forward.6} parent=23 // pred_check_branch
          %130 = sbr.rel (%p128) target = $region28
        $region27: #{fnafnet_block_forward.6} parent=23 // pred_region
          %s131 = smul.u32 8, %s9
          %s132 = ssub.s32 36, %s131
          %p133 = scmp.lt.s32.totalorder %s132, 8
          %s134 = scalar_select %p133, %s132, 8
          %s135 = smul.u32 64, %s134
          %p136 = scmp.lt.s32.totalorder %s131, 35
          %s137 = scalar_select %p136, %s131, 35
          %s138 = smul.addr %s137, 4
          %s139 = scalar_lea.vmem %s0, %s138
          %s140 = smul.u32 8, %s9
          %s141 = ssub.s32 36, %s140
          %p142 = scmp.lt.s32.totalorder %s141, 8
          %s143 = scalar_select %p142, %s141, 8
          %s144 = smul.u32 64, %s143
        $region28: #{fnafnet_block_forward.6} parent=23 // pred_fallthru
          _
      $region24: #{fnafnet_block_forward.6} parent=5 // pred_fallthru
        _
      %p145 = scmp.le.s32.totalorder 1, %s9
      %p146 = scmp.lt.s32.totalorder %s9, 6
      %p147 = pnand %p145, %p146
      %p148 = pneg %p147
      // Predicated region
      $region29: #{fnafnet_block_forward.6} parent=5 // pred_check
        _
      $region30: #{fnafnet_block_forward.6} parent=5 // pred_check_branch
        %150 = sbr.rel (%p147) target = $region32
      $region31: #{fnafnet_block_forward.6} parent=5 // pred_region
        %s151 = ssub.s32 %s9, 1
        %s152 = smul.u32 8, %s14
        %s153 = ssub.s32 36, %s152
        %p154 = scmp.lt.s32.totalorder %s153, 8
        %s155 = scalar_select %p154, %s153, 8
        %s156 = smul.u32 64, %s155
        %p157 = scmp.lt.s32.totalorder %s152, 35
        %s158 = scalar_select %p157, %s152, 35
        %s159 = smul.addr %s158, 4
        %s160 = scalar_lea.vmem %s0, %s159
        %p161 = pneg %p35
        %p162 = pneg %p32
        %p163 = pneg %p56
        %p164 = pneg %p53
        %p165 = pneg %p77
        %p166 = pneg %p74
        %p167 = pneg %p103
        %p168 = pneg %p100
        %s169 = sand.u32 %s90, 1
        %s170 = sand.u32 %s90, 1
        %s171 = smul.addr %s170, 64
        %s172 = scalar_lea.vmem [#allocation2], %s171
        %s173 = smul.u32 8, %s14
        %s174 = ssub.s32 36, %s173
        %p175 = scmp.lt.s32.totalorder %s174, 8
        %s176 = scalar_select %p175, %s174, 8
        %s177 = smul.u32 64, %s176
        %p178 = scmp.lt.s32.totalorder %s173, 35
        %s179 = scalar_select %p178, %s173, 35
        %s180 = smul.addr %s179, 4
        %s181 = scalar_lea.vmem %s0, %s180
        %s182 = smul.u32 8, %s14
        %s183 = ssub.s32 36, %s182
        %p184 = scmp.lt.s32.totalorder %s183, 8
        %s185 = scalar_select %p184, %s183, 8
        %s186 = smul.u32 64, %s185
        %s187 = smul.u32 8, %s14
        %s188 = ssub.s32 36, %s187
        %p189 = scmp.lt.s32.totalorder %s188, 8
        %s190 = scalar_select %p189, %s188, 8
        %s191 = smul.u32 128, %s190
        %v193 = vld [vmem:[%s181] sm:$0xf]
        %v194 = vld [vmem:[%s181 + $0x4] sm:$0xf]
        %v195 = vld [vmem:[%s181 + $0x8] sm:$0xf]
        %v196 = vld [vmem:[%s181 + $0xc] sm:$0xf]
        %v197 = vld [vmem:[%s181 + $0x10] sm:$0xf]
        %v198 = vld [vmem:[%s181 + $0x14] sm:$0xf]
        %v199 = vld [vmem:[%s181 + $0x18] sm:$0xf]
        %v200 = vld [vmem:[%s181 + $0x1c] sm:$0xf]
        %v201 = vld [vmem:[%s1] sm:$0xf]
        %v210 = vunpack.c.l.b16 %v193
        %v211 = vunpack.c.l.b16 %v194
        %v212 = vunpack.c.l.b16 %v195
        %v213 = vunpack.c.l.b16 %v196
        %v214 = vunpack.c.l.b16 %v197
        %v215 = vunpack.c.l.b16 %v198
        %v216 = vunpack.c.l.b16 %v199
        %v217 = vunpack.c.l.b16 %v200
        %v218 = vpack.c.b16 %v211, %v210
        %v219 = vpack.c.b16 %v213, %v212
        %v220 = vpack.c.b16 %v215, %v214
        %v221 = vpack.c.b16 %v217, %v216
        %vm222 = vcmask 64512
        %v224 = vsel %vm222, %v218, 0
        %v227 = vsel %vm222, %v219, 0
        %v230 = vsel %vm222, %v220, 0
        %v233 = vsel %vm222, %v221, 0
        %vm235 = vcmask 1043456
        %v237 = vsel %vm235, %v201, 0
        %239 = vmatprep.subr.bf16.mxu0 0
        %240 = vmatpush1.bf16.msra.mxu0 %v237
        %241 = vmatprep.subr.bf16.mxu0 0
        %242 = vmatpush1.bf16.msra.mxu0 0
        %243 = vmatprep.subr.bf16.mxu0 0
        %244 = vmatpush1.bf16.msra.mxu0 0
        %245 = vmatprep.subr.bf16.mxu0 0
        %246 = vmatpush1.bf16.msra.mxu0 0
        %247 = vmatprep.subr.bf16.mxu0 0
        %248 = vmatpush1.bf16.msra.mxu0 0
        %249 = vmatprep.subr.bf16.mxu0 0
        %250 = vmatpush1.bf16.msra.mxu0 0
        %251 = vmatprep.subr.bf16.mxu0 0
        %252 = vmatpush1.bf16.msra.mxu0 0
        %253 = vmatprep.subr.bf16.mxu0 0
        %254 = vmatpush1.bf16.msra.mxu0 0
        %255 = vmatprep.subr.bf16.mxu0 0
        %256 = vmatpush1.bf16.msra.mxu0 0
        %257 = vmatprep.subr.bf16.mxu0 0
        %258 = vmatpush1.bf16.msra.mxu0 0
        %259 = vmatprep.subr.bf16.mxu0 0
        %260 = vmatpush1.bf16.msra.mxu0 0
        %261 = vmatprep.subr.bf16.mxu0 0
        %262 = vmatpush1.bf16.msra.mxu0 0
        %263 = vmatprep.subr.bf16.mxu0 0
        %264 = vmatpush1.bf16.msra.mxu0 0
        %265 = vmatprep.subr.bf16.mxu0 0
        %266 = vmatpush1.bf16.msra.mxu0 0
        %267 = vmatprep.subr.bf16.mxu0 0
        %268 = vmatpush1.bf16.msra.mxu0 0
        %269 = vmatprep.subr.bf16.mxu0 0
        %270 = vmatpush1.bf16.msra.mxu0 0
        %271 = vmatprep.mubr.bf16.mxu0 0
        %272 = vmatmul.mubr.bf16.gmra.mrb[0].mxu0 %v224
        %v273 = vpop.f32.mrb[0].mxu0
        %v274 = vadd.f32 0.0, %v273
        %v275 = vpop.f32.mrb[0].mxu0
        %v276 = vpop.f32.mrb[0].mxu0
        %v277 = vadd.f32 0.0, %v276
        %v278 = vpop.f32.mrb[0].mxu0
        %279 = vmatprep.mubr.bf16.mxu0 0
        %280 = vmatmul.mubr.bf16.gmra.mrb[0].mxu0 %v227
        %v281 = vpop.f32.mrb[0].mxu0
        %v282 = vadd.f32 0.0, %v281
        %v283 = vpop.f32.mrb[0].mxu0
        %v284 = vpop.f32.mrb[0].mxu0
        %v285 = vadd.f32 0.0, %v284
        %v286 = vpop.f32.mrb[0].mxu0
        %287 = vmatprep.mubr.bf16.mxu0 0
        %288 = vmatmul.mubr.bf16.gmra.mrb[0].mxu0 %v230
        %v289 = vpop.f32.mrb[0].mxu0
        %v290 = vadd.f32 0.0, %v289
        %v291 = vpop.f32.mrb[0].mxu0
        %v292 = vpop.f32.mrb[0].mxu0
        %v293 = vadd.f32 0.0, %v292
        %v294 = vpop.f32.mrb[0].mxu0
        %295 = vmatprep.mubr.bf16.mxu0 0
        %296 = vmatmul.mubr.bf16.gmra.mrb[0].mxu0 %v233
        %v297 = vpop.f32.mrb[0].mxu0
        %v298 = vadd.f32 0.0, %v297
        %v299 = vpop.f32.mrb[0].mxu0
        %v300 = vpop.f32.mrb[0].mxu0
        %v301 = vadd.f32 0.0, %v300
        %v302 = vpop.f32.mrb[0].mxu0
        %303 = vdwg.mxu0
        %v304 = vmax.f32 %v274, 0.0
        %v305 = vmax.f32 %v277, 0.0
        %v306 = vmax.f32 %v282, 0.0
        %v307 = vmax.f32 %v285, 0.0
        %v308 = vmax.f32 %v290, 0.0
        %v309 = vmax.f32 %v293, 0.0
        %v310 = vmax.f32 %v298, 0.0
        %v311 = vmax.f32 %v301, 0.0
        %v312 = vpack.c.bf16 %v305, %v304
        %v313 = vpack.c.bf16 %v307, %v306
        %v314 = vpack.c.bf16 %v309, %v308
        %v315 = vpack.c.bf16 %v311, %v310
        %v316 = vld [vmem:[%s2] sm:$0xf]
        %v317 = vld [vmem:[%s2 + $0x4] sm:$0xf]
        %v320 = vunpack.c.l.b16 %v316
        %v321 = vunpack.c.l.b16 %v317
        %v322 = vpack.c.b16 %v321, %v320
        %vm324 = vcmask 130048
        %v326 = vsel %vm324, %v312, 0
        %v329 = vsel %vm324, %v313, 0
        %v332 = vsel %vm324, %v314, 0
        %v335 = vsel %vm324, %v315, 0
        %337 = vmatprep.subr.bf16.mxu0 0
        %338 = vmatpush1.bf16.msra.mxu0 %v322
        %339 = vmatprep.subr.bf16.mxu0 0
        %340 = vmatpush1.bf16.msra.mxu0 0
        %341 = vmatprep.subr.bf16.mxu0 0
        %342 = vmatpush1.bf16.msra.mxu0 0
        %343 = vmatprep.subr.bf16.mxu0 0
        %344 = vmatpush1.bf16.msra.mxu0 0
        %345 = vmatprep.subr.bf16.mxu0 0
        %346 = vmatpush1.bf16.msra.mxu0 0
        %347 = vmatprep.subr.bf16.mxu0 0
        %348 = vmatpush1.bf16.msra.mxu0 0
        %349 = vmatprep.subr.bf16.mxu0 0
        %350 = vmatpush1.bf16.msra.mxu0 0
        %351 = vmatprep.subr.bf16.mxu0 0
        %352 = vmatpush1.bf16.msra.mxu0 0
        %353 = vmatprep.subr.bf16.mxu0 0
        %354 = vmatpush1.bf16.msra.mxu0 0
        %355 = vmatprep.subr.bf16.mxu0 0
        %356 = vmatpush1.bf16.msra.mxu0 0
        %357 = vmatprep.subr.bf16.mxu0 0
        %358 = vmatpush1.bf16.msra.mxu0 0
        %359 = vmatprep.subr.bf16.mxu0 0
        %360 = vmatpush1.bf16.msra.mxu0 0
        %361 = vmatprep.subr.bf16.mxu0 0
        %362 = vmatpush1.bf16.msra.mxu0 0
        %363 = vmatprep.subr.bf16.mxu0 0
        %364 = vmatpush1.bf16.msra.mxu0 0
        %365 = vmatprep.subr.bf16.mxu0 0
        %366 = vmatpush1.bf16.msra.mxu0 0
        %367 = vmatprep.subr.bf16.mxu0 0
        %368 = vmatpush1.bf16.msra.mxu0 0
        %369 = vmatprep.mubr.bf16.mxu0 0
        %370 = vmatmul.mubr.bf16.gmra.mrb[0].mxu0 %v326
        %v371 = vpop.f32.mrb[0].mxu0
        %v372 = vadd.f32 0.0, %v371
        %v373 = vpop.f32.mrb[0].mxu0
        %v374 = vpop.f32.mrb[0].mxu0
        %v375 = vadd.f32 0.0, %v374
        %v376 = vpop.f32.mrb[0].mxu0
        %377 = vmatprep.mubr.bf16.mxu0 0
        %378 = vmatmul.mubr.bf16.gmra.mrb[0].mxu0 %v329
        %v379 = vpop.f32.mrb[0].mxu0
        %v380 = vadd.f32 0.0, %v379
        %v381 = vpop.f32.mrb[0].mxu0
        %v382 = vpop.f32.mrb[0].mxu0
        %v383 = vadd.f32 0.0, %v382
        %v384 = vpop.f32.mrb[0].mxu0
        %385 = vmatprep.mubr.bf16.mxu0 0
        %386 = vmatmul.mubr.bf16.gmra.mrb[0].mxu0 %v332
        %v387 = vpop.f32.mrb[0].mxu0
        %v388 = vadd.f32 0.0, %v387
        %v389 = vpop.f32.mrb[0].mxu0
        %v390 = vpop.f32.mrb[0].mxu0
        %v391 = vadd.f32 0.0, %v390
        %v392 = vpop.f32.mrb[0].mxu0
        %393 = vmatprep.mubr.bf16.mxu0 0
        %394 = vmatmul.mubr.bf16.gmra.mrb[0].mxu0 %v335
        %v395 = vpop.f32.mrb[0].mxu0
        %v396 = vadd.f32 0.0, %v395
        %v397 = vpop.f32.mrb[0].mxu0
        %v398 = vpop.f32.mrb[0].mxu0
        %v399 = vadd.f32 0.0, %v398
        %v400 = vpop.f32.mrb[0].mxu0
        %401 = vdwg.mxu0
        %402 = vst.msk [vmem:[%s172] sm:$0xff] %vm222, %v372
        %403 = vst.msk [vmem:[%s172 + $0x8] sm:$0xff] %vm222, %v375
        %404 = vst.msk [vmem:[%s172 + $0x10] sm:$0xff] %vm222, %v380
        %405 = vst.msk [vmem:[%s172 + $0x18] sm:$0xff] %vm222, %v383
        %406 = vst.msk [vmem:[%s172 + $0x20] sm:$0xff] %vm222, %v388
        %407 = vst.msk [vmem:[%s172 + $0x28] sm:$0xff] %vm222, %v391
        %408 = vst.msk [vmem:[%s172 + $0x30] sm:$0xff] %vm222, %v396
        %409 = vst.msk [vmem:[%s172 + $0x38] sm:$0xff] %vm222, %v399
        %s410 = sand.u32 %s90, 1
        %s411 = sand.u32 %s90, 1
        %s412 = smul.addr %s411, 64
        %s413 = scalar_lea.vmem [#allocation2], %s412
        // Predicated region
        $region33: #{fnafnet_block_forward.6} parent=31 // pred_check
          %p414 = pneg %p100
        $region34: #{fnafnet_block_forward.6} parent=31 // pred_check_branch
          %416 = sbr.rel (%p414) target = $region36
        $region35: #{fnafnet_block_forward.6} parent=31 // pred_region
          %s417 = smul.u32 8, %s14
          %s418 = ssub.s32 36, %s417
          %p419 = scmp.lt.s32.totalorder %s418, 8
          %s420 = scalar_select %p419, %s418, 8
          %s421 = smul.u32 128, %s420
          %p422 = scmp.ne.s32.totalorder 0, %s421
          %s423 = smul.addr %s417, 8
          %s424 = scalar_lea.vmem %s3, %s423
          // Predicated region
          $region37: #{fnafnet_block_forward.6} parent=35 // pred_check
            %p425 = pneg %p422
          $region38: #{fnafnet_block_forward.6} parent=35 // pred_check_branch
            %427 = sbr.rel (%p425) target = $region40
          $region39: #{fnafnet_block_forward.6} parent=35 // pred_region
            // Predicated region
            $region41: #{fnafnet_block_forward.6} parent=39 // pred_check
              _
            $region42: #{fnafnet_block_forward.6} parent=39 // pred_check_branch
              %429 = sbr.rel (0) target = $region44
            $region43: #{fnafnet_block_forward.6} parent=39 // pred_region
              // Predicated region
              $region63: #{fnafnet_block_forward.6} parent=43 // pred_check
                _
              $region64: #{fnafnet_block_forward.6} parent=43 // pred_check_branch
                %492 = sbr.rel (0) target = $region66
              $region65: #{fnafnet_block_forward.6} parent=43 // pred_region
                %s493 = sshrl.u32 %s420, 3
                // While loop
                $region67: #{fnafnet_block_forward.6} parent=65 // loop_pre_header
                  _
                $region68: #{fnafnet_block_forward.6} parent=65 // loop_header
                  %s495 = sphi 0, %s497
                  %p496 = scmp.ge.s32.totalorder %s495, %s493
                  %s500 = sphi 0, %s521
                  %s501 = sphi %s413, %s524
                  %s502 = sphi %s424, %s525
                $region69: #{fnafnet_block_forward.6} parent=65 // loop_header_branch
                  %499 = sbr.rel (%p496) target = $region73
                $region70: #{fnafnet_block_forward.6} parent=65 // loop_body
                  %v503 = vld [vmem:[%s501] sm:$0xff]
                  %504 = vst [vmem:[%s502] sm:$0xff] %v503
                  %v505 = vld [vmem:[%s501 + $0x8] sm:$0xff]
                  %506 = vst [vmem:[%s502 + $0x8] sm:$0xff] %v505
                  %v507 = vld [vmem:[%s501 + $0x10] sm:$0xff]
                  %508 = vst [vmem:[%s502 + $0x10] sm:$0xff] %v507
                  %v509 = vld [vmem:[%s501 + $0x18] sm:$0xff]
                  %510 = vst [vmem:[%s502 + $0x18] sm:$0xff] %v509
                  %v511 = vld [vmem:[%s501 + $0x20] sm:$0xff]
                  %512 = vst [vmem:[%s502 + $0x20] sm:$0xff] %v511
                  %v513 = vld [vmem:[%s501 + $0x28] sm:$0xff]
                  %514 = vst [vmem:[%s502 + $0x28] sm:$0xff] %v513
                  %v515 = vld [vmem:[%s501 + $0x30] sm:$0xff]
                  %516 = vst [vmem:[%s502 + $0x30] sm:$0xff] %v515
                  %v517 = vld [vmem:[%s501 + $0x38] sm:$0xff]
                  %518 = vst [vmem:[%s502 + $0x38] sm:$0xff] %v517
                  %s519 = sadd.s32 1, %s500
                  %p520 = scmp.ge.s32.totalorder %s519, %s493
                  %s521 = scalar_select %p520, 0, %s519
                  %s522 = smul.u32 %s521, 64
                  %s523 = smul.u32 %s521, 64
                  %s524 = scalar_lea.vmem %s413, %s522 [#allocation2]
                  %s525 = scalar_lea.vmem %s424, %s523
                $region71: #{fnafnet_block_forward.6} parent=65 // loop_footer
                  %s497 = sadd.s32 %s495, 1
                $region72: #{fnafnet_block_forward.6} parent=65 // loop_footer_branch
                  %494 = sbr.rel target = $region68
                $region73: #{fnafnet_block_forward.6} parent=65 // loop_exit
                  _
                %s526 = sshrl.u32 %s420, 3
                %s527 = sand.u32 %s420, 7
                %s528 = smul.u32 %s526, 8
                %s529 = smul.u32 8, %s528
                %s530 = scalar_lea.vmem %s413, %s529 [#allocation2]
                %s531 = smul.u32 8, %s528
                %s532 = scalar_lea.vmem %s424, %s531
                // While loop
                $region74: #{fnafnet_block_forward.6} parent=65 // loop_pre_header
                  _
                $region75: #{fnafnet_block_forward.6} parent=65 // loop_header
                  %s534 = sphi 0, %s536
                  %p535 = scmp.ge.s32.totalorder %s534, %s527
                  %s539 = sphi 0, %s546
                  %s540 = sphi %s530, %s549
                  %s541 = sphi %s532, %s550
                $region76: #{fnafnet_block_forward.6} parent=65 // loop_header_branch
                  %538 = sbr.rel (%p535) target = $region80
                $region77: #{fnafnet_block_forward.6} parent=65 // loop_body
                  %v542 = vld [vmem:[%s540] sm:$0xff]
                  %543 = vst [vmem:[%s541] sm:$0xff] %v542
                  %s544 = sadd.s32 1, %s539
                  %p545 = scmp.ge.s32.totalorder %s544, %s527
                  %s546 = scalar_select %p545, 0, %s544
                  %s547 = smul.u32 %s546, 8
                  %s548 = smul.u32 %s546, 8
                  %s549 = scalar_lea.vmem %s530, %s547 [#allocation2]
                  %s550 = scalar_lea.vmem %s532, %s548
                $region78: #{fnafnet_block_forward.6} parent=65 // loop_footer
                  %s536 = sadd.s32 %s534, 1
                $region79: #{fnafnet_block_forward.6} parent=65 // loop_footer_branch
                  %533 = sbr.rel target = $region75
                $region80: #{fnafnet_block_forward.6} parent=65 // loop_exit
                  _
              $region66: #{fnafnet_block_forward.6} parent=43 // pred_fallthru
                _
              // Predicated region
              $region81: #{fnafnet_block_forward.6} parent=43 // pred_check
                _
              $region82: #{fnafnet_block_forward.6} parent=43 // pred_check_branch
                %552 = sbr.rel target = $region84
              $region83: #{fnafnet_block_forward.6} parent=43 // pred_region
                _
              $region84: #{fnafnet_block_forward.6} parent=43 // pred_fallthru
                _
            $region44: #{fnafnet_block_forward.6} parent=39 // pred_fallthru
              _
            // Predicated region
            $region45: #{fnafnet_block_forward.6} parent=39 // pred_check
              _
            $region46: #{fnafnet_block_forward.6} parent=39 // pred_check_branch
              %431 = sbr.rel target = $region48
            $region47: #{fnafnet_block_forward.6} parent=39 // pred_region
              %s433 = sshrl.u32 %s420, 3
              // While loop
              $region49: #{fnafnet_block_forward.6} parent=47 // loop_pre_header
                _
              $region50: #{fnafnet_block_forward.6} parent=47 // loop_header
                %s435 = sphi 0, %s437
                %p436 = scmp.ge.s32.totalorder %s435, %s433
                %s440 = sphi 0, %s461
                %s441 = sphi %s413, %s464
                %s442 = sphi %s424, %s465
              $region51: #{fnafnet_block_forward.6} parent=47 // loop_header_branch
                %439 = sbr.rel (%p436) target = $region55
              $region52: #{fnafnet_block_forward.6} parent=47 // loop_body
                %v443 = vld [vmem:[%s441] sm:$0xff]
                %444 = vst [vmem:[%s442] sm:$0xff] %v443
                %v445 = vld [vmem:[%s441 + $0x8] sm:$0xff]
                %446 = vst [vmem:[%s442 + $0x8] sm:$0xff] %v445
                %v447 = vld [vmem:[%s441 + $0x10] sm:$0xff]
                %448 = vst [vmem:[%s442 + $0x10] sm:$0xff] %v447
                %v449 = vld [vmem:[%s441 + $0x18] sm:$0xff]
                %450 = vst [vmem:[%s442 + $0x18] sm:$0xff] %v449
                %v451 = vld [vmem:[%s441 + $0x20] sm:$0xff]
                %452 = vst [vmem:[%s442 + $0x20] sm:$0xff] %v451
                %v453 = vld [vmem:[%s441 + $0x28] sm:$0xff]
                %454 = vst [vmem:[%s442 + $0x28] sm:$0xff] %v453
                %v455 = vld [vmem:[%s441 + $0x30] sm:$0xff]
                %456 = vst [vmem:[%s442 + $0x30] sm:$0xff] %v455
                %v457 = vld [vmem:[%s441 + $0x38] sm:$0xff]
                %458 = vst [vmem:[%s442 + $0x38] sm:$0xff] %v457
                %s459 = sadd.s32 1, %s440
                %p460 = scmp.ge.s32.totalorder %s459, %s433
                %s461 = scalar_select %p460, 0, %s459
                %s462 = smul.u32 %s461, 64
                %s463 = smul.u32 %s461, 64
                %s464 = scalar_lea.vmem %s413, %s462 [#allocation2]
                %s465 = scalar_lea.vmem %s424, %s463
              $region53: #{fnafnet_block_forward.6} parent=47 // loop_footer
                %s437 = sadd.s32 %s435, 1
              $region54: #{fnafnet_block_forward.6} parent=47 // loop_footer_branch
                %434 = sbr.rel target = $region50
              $region55: #{fnafnet_block_forward.6} parent=47 // loop_exit
                _
              %s466 = sshrl.u32 %s420, 3
              %s467 = sand.u32 %s420, 7
              %s468 = smul.u32 %s466, 8
              %s469 = smul.u32 8, %s468
              %s470 = scalar_lea.vmem %s413, %s469 [#allocation2]
              %s471 = smul.u32 8, %s468
              %s472 = scalar_lea.vmem %s424, %s471
              // While loop
              $region56: #{fnafnet_block_forward.6} parent=47 // loop_pre_header
                _
              $region57: #{fnafnet_block_forward.6} parent=47 // loop_header
                %s474 = sphi 0, %s476
                %p475 = scmp.ge.s32.totalorder %s474, %s467
                %s479 = sphi 0, %s486
                %s480 = sphi %s470, %s489
                %s481 = sphi %s472, %s490
              $region58: #{fnafnet_block_forward.6} parent=47 // loop_header_branch
                %478 = sbr.rel (%p475) target = $region62
              $region59: #{fnafnet_block_forward.6} parent=47 // loop_body
                %v482 = vld [vmem:[%s480] sm:$0xff]
                %483 = vst [vmem:[%s481] sm:$0xff] %v482
                %s484 = sadd.s32 1, %s479
                %p485 = scmp.ge.s32.totalorder %s484, %s467
                %s486 = scalar_select %p485, 0, %s484
                %s487 = smul.u32 %s486, 8
                %s488 = smul.u32 %s486, 8
                %s489 = scalar_lea.vmem %s470, %s487 [#allocation2]
                %s490 = scalar_lea.vmem %s472, %s488
              $region60: #{fnafnet_block_forward.6} parent=47 // loop_footer
                %s476 = sadd.s32 %s474, 1
              $region61: #{fnafnet_block_forward.6} parent=47 // loop_footer_branch
                %473 = sbr.rel target = $region57
              $region62: #{fnafnet_block_forward.6} parent=47 // loop_exit
                _
            $region48: #{fnafnet_block_forward.6} parent=39 // pred_fallthru
              _
          $region40: #{fnafnet_block_forward.6} parent=35 // pred_fallthru
            _
          %553 = vnop
        $region36: #{fnafnet_block_forward.6} parent=31 // pred_fallthru
          _
      $region32: #{fnafnet_block_forward.6} parent=5 // pred_fallthru
        _
      %p554 = scmp.le.s32.totalorder 2, %s9
      // Predicated region
      $region85: #{fnafnet_block_forward.6} parent=5 // pred_check
        %p555 = pneg %p554
      $region86: #{fnafnet_block_forward.6} parent=5 // pred_check_branch
        %557 = sbr.rel (%p555) target = $region88
      $region87: #{fnafnet_block_forward.6} parent=5 // pred_region
        %s558 = ssub.s32 %s9, 2
        // Predicated region
        $region89: #{fnafnet_block_forward.6} parent=87 // pred_check
          %p559 = pneg %p106
        $region90: #{fnafnet_block_forward.6} parent=87 // pred_check_branch
          %561 = sbr.rel (%p559) target = $region92
        $region91: #{fnafnet_block_forward.6} parent=87 // pred_region
          %s562 = sand.u32 %s91, 1
          %s563 = sand.u32 %s91, 1
          %s564 = smul.addr %s563, 64
          %s565 = scalar_lea.vmem [#allocation2], %s564
        $region92: #{fnafnet_block_forward.6} parent=87 // pred_fallthru
          _
      $region88: #{fnafnet_block_forward.6} parent=5 // pred_fallthru
        _
    $region6: #{fnafnet_block_forward.6} parent=1 // loop_footer
      %s13 = sadd.s32 1, %s9
    $region7: #{fnafnet_block_forward.6} parent=1 // loop_footer_branch
      %8 = sbr.rel target = $region3
    $region8: #{fnafnet_block_forward.6} parent=1 // loop_exit
      _

// kernel: reverse.0
$region0: #{reverse.0}
  %s0 = inlined_call_operand.vmem [shape: f32[2,4,16,7], index: 0, kind: input, shape index: {}]
  %s1 = inlined_call_operand.vmem [shape: f32[2,4,16,7], index: 1, kind: output, shape index: {}]
  $region1: #{reverse.0} parent=0
    #allocation0 [shape = 'u8[65536]{0}', space=vmem, size = 0x10000, scoped, tag = 'operand span for operand 0']
    #allocation1 [shape = 'u8[32768]{0}', space=vmem, size = 0x8000, scoped, tag = 'operand span for operand 1']
    %s2 = scalar_lea.vmem [#allocation0], 8
    // Predicated region
    $region2: #{reverse.0} parent=1 // pred_check
      _
    $region3: #{reverse.0} parent=1 // pred_check_branch
      %4 = sbr.rel (0) target = $region5
    $region4: #{reverse.0} parent=1 // pred_region
      // Predicated region
      $region6: #{reverse.0} parent=4 // pred_check
        _
      $region7: #{reverse.0} parent=4 // pred_check_branch
        %6 = sbr.rel (0) target = $region9
      $region8: #{reverse.0} parent=4 // pred_region
        // Predicated region
        $region21: #{reverse.0} parent=8 // pred_check
          _
        $region22: #{reverse.0} parent=8 // pred_check_branch
          %35 = sbr.rel (0) target = $region24
        $region23: #{reverse.0} parent=8 // pred_region
          loop: start=0, step=1, limit=1
          $region25: #{reverse.0} parent=23 // loop_pre_header
            _
          $region26: #{reverse.0} parent=23 // loop_header
            %s37 = sphi 0, %s41
            %p38 = scmp.ge.s32.totalorder %s37, 1
            %s42 = sphi %s0, %s0
            %s43 = sphi %s2, %s2
          $region27: #{reverse.0} parent=23 // loop_header_branch
            %40 = sbr.rel (%p38) target = $region31
          $region28: #{reverse.0} parent=23 // loop_body
            %v44 = vld [vmem:[%s42] sm:$0xff]
            %45 = vst [vmem:[%s43] sm:$0xff] %v44
            %v46 = vld [vmem:[%s42 + $0x8] sm:$0xff]
            %47 = vst [vmem:[%s43 + $0x10] sm:$0xff] %v46
            %v48 = vld [vmem:[%s42 + $0x10] sm:$0xff]
            %49 = vst [vmem:[%s43 + $0x20] sm:$0xff] %v48
            %v50 = vld [vmem:[%s42 + $0x18] sm:$0xff]
            %51 = vst [vmem:[%s43 + $0x30] sm:$0xff] %v50
            %v52 = vld [vmem:[%s42 + $0x20] sm:$0xff]
            %53 = vst [vmem:[%s43 + $0x40] sm:$0xff] %v52
            %v54 = vld [vmem:[%s42 + $0x28] sm:$0xff]
            %55 = vst [vmem:[%s43 + $0x50] sm:$0xff] %v54
            %v56 = vld [vmem:[%s42 + $0x30] sm:$0xff]
            %57 = vst [vmem:[%s43 + $0x60] sm:$0xff] %v56
            %v58 = vld [vmem:[%s42 + $0x38] sm:$0xff]
            %59 = vst [vmem:[%s43 + $0x70] sm:$0xff] %v58
          $region29: #{reverse.0} parent=23 // loop_footer
            %s41 = sadd.s32 1, %s37
          $region30: #{reverse.0} parent=23 // loop_footer_branch
            %36 = sbr.rel target = $region26
          $region31: #{reverse.0} parent=23 // loop_exit
            _
        $region24: #{reverse.0} parent=8 // pred_fallthru
          _
        // Predicated region
        $region32: #{reverse.0} parent=8 // pred_check
          _
        $region33: #{reverse.0} parent=8 // pred_check_branch
          %61 = sbr.rel target = $region35
        $region34: #{reverse.0} parent=8 // pred_region
          _
        $region35: #{reverse.0} parent=8 // pred_fallthru
          _
      $region9: #{reverse.0} parent=4 // pred_fallthru
        _
      // Predicated region
      $region10: #{reverse.0} parent=4 // pred_check
        _
      $region11: #{reverse.0} parent=4 // pred_check_branch
        %8 = sbr.rel target = $region13
      $region12: #{reverse.0} parent=4 // pred_region
        loop: start=0, step=1, limit=1
        $region14: #{reverse.0} parent=12 // loop_pre_header
          _
        $region15: #{reverse.0} parent=12 // loop_header
          %s11 = sphi 0, %s15
          %p12 = scmp.ge.s32.totalorder %s11, 1
          %s16 = sphi %s0, %s0
          %s17 = sphi %s2, %s2
        $region16: #{reverse.0} parent=12 // loop_header_branch
          %14 = sbr.rel (%p12) target = $region20
        $region17: #{reverse.0} parent=12 // loop_body
          %v18 = vld [vmem:[%s16] sm:$0xff]
          %19 = vst [vmem:[%s17] sm:$0xff] %v18
          %v20 = vld [vmem:[%s16 + $0x8] sm:$0xff]
          %21 = vst [vmem:[%s17 + $0x10] sm:$0xff] %v20
          %v22 = vld [vmem:[%s16 + $0x10] sm:$0xff]
          %23 = vst [vmem:[%s17 + $0x20] sm:$0xff] %v22
          %v24 = vld [vmem:[%s16 + $0x18] sm:$0xff]
          %25 = vst [vmem:[%s17 + $0x30] sm:$0xff] %v24
          %v26 = vld [vmem:[%s16 + $0x20] sm:$0xff]
          %27 = vst [vmem:[%s17 + $0x40] sm:$0xff] %v26
          %v28 = vld [vmem:[%s16 + $0x28] sm:$0xff]
          %29 = vst [vmem:[%s17 + $0x50] sm:$0xff] %v28
          %v30 = vld [vmem:[%s16 + $0x30] sm:$0xff]
          %31 = vst [vmem:[%s17 + $0x60] sm:$0xff] %v30
          %v32 = vld [vmem:[%s16 + $0x38] sm:$0xff]
          %33 = vst [vmem:[%s17 + $0x70] sm:$0xff] %v32
        $region18: #{reverse.0} parent=12 // loop_footer
          %s15 = sadd.s32 1, %s11
        $region19: #{reverse.0} parent=12 // loop_footer_branch
          %10 = sbr.rel target = $region15
        $region20: #{reverse.0} parent=12 // loop_exit
          _
      $region13: #{reverse.0} parent=4 // pred_fallthru
        _
    $region5: #{reverse.0} parent=1 // pred_fallthru
      _
    %62 = vnop
    %s63 = scalar_lea.vmem [#allocation0], 7
    %v64 = vld [vmem:[%s63] ss:$-1 sm:$0xff]
    %v65 = vrot.slane %v64, 1
    %66 = vst [vmem:[#allocation1] sm:$0xff] %v65
    %s67 = scalar_lea.vmem [#allocation0], 8
    %s68 = scalar_lea.vmem %s67, 7 [#allocation0]
    %v69 = vld [vmem:[%s68] ss:$-1 sm:$0xff]
    %v70 = vrot.slane %v69, 1
    %v71 = vlaneseq
    %v72 = vshrl.u32 %v71, 7
    %vm73 = vcmp.lt.s32.totalorder %v72, 7
    %74 = vst.msk [vmem:[#allocation1] sm:$0xff] %vm73, %v70
    %s75 = scalar_lea.vmem [#allocation1], 8
    %s76 = scalar_lea.vmem [#allocation0], 16
    %s77 = scalar_lea.vmem %s76, 7 [#allocation0]
    %v78 = vld [vmem:[%s77] ss:$-1 sm:$0xff]
    %v79 = vrot.slane %v78, 1
    %80 = vst [vmem:[%s75] sm:$0xff] %v79
    %s81 = scalar_lea.vmem %s76, 8 [#allocation0]
    %s82 = scalar_lea.vmem %s81, 7 [#allocation0]
    %v83 = vld [vmem:[%s82] ss:$-1 sm:$0xff]
    %v84 = vrot.slane %v83, 1
    %v85 = vlaneseq
    %v86 = vshrl.u32 %v85, 7
    %vm87 = vcmp.lt.s32.totalorder %v86, 7
    %88 = vst.msk [vmem:[%s75] sm:$0xff] %vm87, %v84
    %s89 = scalar_lea.vmem [#allocation1], 16
    %s90 = scalar_lea.vmem [#allocation0], 32
    %s91 = scalar_lea.vmem %s90, 7 [#allocation0]
    %v92 = vld [vmem:[%s91] ss:$-1 sm:$0xff]
    %v93 = vrot.slane %v92, 1
    %94 = vst [vmem:[%s89] sm:$0xff] %v93
    %s95 = scalar_lea.vmem %s90, 8 [#allocation0]
    %s96 = scalar_lea.vmem %s95, 7 [#allocation0]
    %v97 = vld [vmem:[%s96] ss:$-1 sm:$0xff]
    %v98 = vrot.slane %v97, 1
    %v99 = vlaneseq
    %v100 = vshrl.u32 %v99, 7
    %vm101 = vcmp.lt.s32.totalorder %v100, 7
    %102 = vst.msk [vmem:[%s89] sm:$0xff] %vm101, %v98
    %s103 = scalar_lea.vmem [#allocation1], 24
    %s104 = scalar_lea.vmem [#allocation0], 48
    %s105 = scalar_lea.vmem %s104, 7 [#allocation0]
    %v106 = vld [vmem:[%s105] ss:$-1 sm:$0xff]
    %v107 = vrot.slane %v106, 1
    %108 = vst [vmem:[%s103] sm:$0xff] %v107
    %s109 = scalar_lea.vmem %s104, 8 [#allocation0]
    %s110 = scalar_lea.vmem %s109, 7 [#allocation0]
    %v111 = vld [vmem:[%s110] ss:$-1 sm:$0xff]
    %v112 = vrot.slane %v111, 1
    %v113 = vlaneseq
    %v114 = vshrl.u32 %v113, 7
    %vm115 = vcmp.lt.s32.totalorder %v114, 7
    %116 = vst.msk [vmem:[%s103] sm:$0xff] %vm115, %v112
    %s117 = scalar_lea.vmem [#allocation1], 32
    %s118 = scalar_lea.vmem [#allocation0], 64
    %s119 = scalar_lea.vmem %s118, 7 [#allocation0]
    %v120 = vld [vmem:[%s119] ss:$-1 sm:$0xff]
    %v121 = vrot.slane %v120, 1
    %122 = vst [vmem:[%s117] sm:$0xff] %v121
    %s123 = scalar_lea.vmem %s118, 8 [#allocation0]
    %s124 = scalar_lea.vmem %s123, 7 [#allocation0]
    %v125 = vld [vmem:[%s124] ss:$-1 sm:$0xff]
    %v126 = vrot.slane %v125, 1
    %v127 = vlaneseq
    %v128 = vshrl.u32 %v127, 7
    %vm129 = vcmp.lt.s32.totalorder %v128, 7
    %130 = vst.msk [vmem:[%s117] sm:$0xff] %vm129, %v126
    %s131 = scalar_lea.vmem [#allocation1], 40
    %s132 = scalar_lea.vmem [#allocation0], 80
    %s133 = scalar_lea.vmem %s132, 7 [#allocation0]
    %v134 = vld [vmem:[%s133] ss:$-1 sm:$0xff]
    %v135 = vrot.slane %v134, 1
    %136 = vst [vmem:[%s131] sm:$0xff] %v135
    %s137 = scalar_lea.vmem %s132, 8 [#allocation0]
    %s138 = scalar_lea.vmem %s137, 7 [#allocation0]
    %v139 = vld [vmem:[%s138] ss:$-1 sm:$0xff]
    %v140 = vrot.slane %v139, 1
    %v141 = vlaneseq
    %v142 = vshrl.u32 %v141, 7
    %vm143 = vcmp.lt.s32.totalorder %v142, 7
    %144 = vst.msk [vmem:[%s131] sm:$0xff] %vm143, %v140
    %s145 = scalar_lea.vmem [#allocation1], 48
    %s146 = scalar_lea.vmem [#allocation0], 96
    %s147 = scalar_lea.vmem %s146, 7 [#allocation0]
    %v148 = vld [vmem:[%s147] ss:$-1 sm:$0xff]
    %v149 = vrot.slane %v148, 1
    %150 = vst [vmem:[%s145] sm:$0xff] %v149
    %s151 = scalar_lea.vmem %s146, 8 [#allocation0]
    %s152 = scalar_lea.vmem %s151, 7 [#allocation0]
    %v153 = vld [vmem:[%s152] ss:$-1 sm:$0xff]
    %v154 = vrot.slane %v153, 1
    %v155 = vlaneseq
    %v156 = vshrl.u32 %v155, 7
    %vm157 = vcmp.lt.s32.totalorder %v156, 7
    %158 = vst.msk [vmem:[%s145] sm:$0xff] %vm157, %v154
    %s159 = scalar_lea.vmem [#allocation1], 56
    %s160 = scalar_lea.vmem [#allocation0], 112
    %s161 = scalar_lea.vmem %s160, 7 [#allocation0]
    %v162 = vld [vmem:[%s161] ss:$-1 sm:$0xff]
    %v163 = vrot.slane %v162, 1
    %164 = vst [vmem:[%s159] sm:$0xff] %v163
    %s165 = scalar_lea.vmem %s160, 8 [#allocation0]
    %s166 = scalar_lea.vmem %s165, 7 [#allocation0]
    %v167 = vld [vmem:[%s166] ss:$-1 sm:$0xff]
    %v168 = vrot.slane %v167, 1
    %v169 = vlaneseq
    %v170 = vshrl.u32 %v169, 7
    %vm171 = vcmp.lt.s32.totalorder %v170, 7
    %172 = vst.msk [vmem:[%s159] sm:$0xff] %vm171, %v168
    // Predicated region
    $region36: #{reverse.0} parent=1 // pred_check
      _
    $region37: #{reverse.0} parent=1 // pred_check_branch
      %174 = sbr.rel (0) target = $region39
    $region38: #{reverse.0} parent=1 // pred_region
      // Predicated region
      $region40: #{reverse.0} parent=38 // pred_check
        _
      $region41: #{reverse.0} parent=38 // pred_check_branch
        %176 = sbr.rel (0) target = $region43
      $region42: #{reverse.0} parent=38 // pred_region
        // Predicated region
        $region55: #{reverse.0} parent=42 // pred_check
          _
        $region56: #{reverse.0} parent=42 // pred_check_branch
          %205 = sbr.rel (0) target = $region58
        $region57: #{reverse.0} parent=42 // pred_region
          loop: start=0, step=1, limit=1
          $region59: #{reverse.0} parent=57 // loop_pre_header
            _
          $region60: #{reverse.0} parent=57 // loop_header
            %s207 = sphi 0, %s211
            %p208 = scmp.ge.s32.totalorder %s207, 1
            %s212 = sphi [#allocation1], [#allocation1]
            %s213 = sphi %s1, %s1
          $region61: #{reverse.0} parent=57 // loop_header_branch
            %210 = sbr.rel (%p208) target = $region65
          $region62: #{reverse.0} parent=57 // loop_body
            %v214 = vld [vmem:[%s212] sm:$0xff]
            %215 = vst [vmem:[%s213] sm:$0xff] %v214
            %v216 = vld [vmem:[%s212 + $0x8] sm:$0xff]
            %217 = vst [vmem:[%s213 + $0x8] sm:$0xff] %v216
            %v218 = vld [vmem:[%s212 + $0x10] sm:$0xff]
            %219 = vst [vmem:[%s213 + $0x10] sm:$0xff] %v218
            %v220 = vld [vmem:[%s212 + $0x18] sm:$0xff]
            %221 = vst [vmem:[%s213 + $0x18] sm:$0xff] %v220
            %v222 = vld [vmem:[%s212 + $0x20] sm:$0xff]
            %223 = vst [vmem:[%s213 + $0x20] sm:$0xff] %v222
            %v224 = vld [vmem:[%s212 + $0x28] sm:$0xff]
            %225 = vst [vmem:[%s213 + $0x28] sm:$0xff] %v224
            %v226 = vld [vmem:[%s212 + $0x30] sm:$0xff]
            %227 = vst [vmem:[%s213 + $0x30] sm:$0xff] %v226
            %v228 = vld [vmem:[%s212 + $0x38] sm:$0xff]
            %229 = vst [vmem:[%s213 + $0x38] sm:$0xff] %v228
          $region63: #{reverse.0} parent=57 // loop_footer
            %s211 = sadd.s32 1, %s207
          $region64: #{reverse.0} parent=57 // loop_footer_branch
            %206 = sbr.rel target = $region60
          $region65: #{reverse.0} parent=57 // loop_exit
            _
        $region58: #{reverse.0} parent=42 // pred_fallthru
          _
        // Predicated region
        $region66: #{reverse.0} parent=42 // pred_check
          _
        $region67: #{reverse.0} parent=42 // pred_check_branch
          %231 = sbr.rel target = $region69
        $region68: #{reverse.0} parent=42 // pred_region
          _
        $region69: #{reverse.0} parent=42 // pred_fallthru
          _
      $region43: #{reverse.0} parent=38 // pred_fallthru
        _
      // Predicated region
      $region44: #{reverse.0} parent=38 // pred_check
        _
      $region45: #{reverse.0} parent=38 // pred_check_branch
        %178 = sbr.rel target = $region47
      $region46: #{reverse.0} parent=38 // pred_region
        loop: start=0, step=1, limit=1
        $region48: #{reverse.0} parent=46 // loop_pre_header
          _
        $region49: #{reverse.0} parent=46 // loop_header
          %s181 = sphi 0, %s185
          %p182 = scmp.ge.s32.totalorder %s181, 1
          %s186 = sphi [#allocation1], [#allocation1]
          %s187 = sphi %s1, %s1
        $region50: #{reverse.0} parent=46 // loop_header_branch
          %184 = sbr.rel (%p182) target = $region54
        $region51: #{reverse.0} parent=46 // loop_body
          %v188 = vld [vmem:[%s186] sm:$0xff]
          %189 = vst [vmem:[%s187] sm:$0xff] %v188
          %v190 = vld [vmem:[%s186 + $0x8] sm:$0xff]
          %191 = vst [vmem:[%s187 + $0x8] sm:$0xff] %v190
          %v192 = vld [vmem:[%s186 + $0x10] sm:$0xff]
          %193 = vst [vmem:[%s187 + $0x10] sm:$0xff] %v192
          %v194 = vld [vmem:[%s186 + $0x18] sm:$0xff]
          %195 = vst [vmem:[%s187 + $0x18] sm:$0xff] %v194
          %v196 = vld [vmem:[%s186 + $0x20] sm:$0xff]
          %197 = vst [vmem:[%s187 + $0x20] sm:$0xff] %v196
          %v198 = vld [vmem:[%s186 + $0x28] sm:$0xff]
          %199 = vst [vmem:[%s187 + $0x28] sm:$0xff] %v198
          %v200 = vld [vmem:[%s186 + $0x30] sm:$0xff]
          %201 = vst [vmem:[%s187 + $0x30] sm:$0xff] %v200
          %v202 = vld [vmem:[%s186 + $0x38] sm:$0xff]
          %203 = vst [vmem:[%s187 + $0x38] sm:$0xff] %v202
        $region52: #{reverse.0} parent=46 // loop_footer
          %s185 = sadd.s32 1, %s181
        $region53: #{reverse.0} parent=46 // loop_footer_branch
          %180 = sbr.rel target = $region49
        $region54: #{reverse.0} parent=46 // loop_exit
          _
      $region47: #{reverse.0} parent=38 // pred_fallthru
        _
    $region39: #{reverse.0} parent=1 // pred_fallthru
      _
    %232 = vnop

// kernel: fnafnet_block_forward.5
$region0: #{fnafnet_block_forward.5}
  #allocation0 [shape = 'u32[]', space=smem, size = 0x4, offset = 0x4, fixed_abs, tag = 'smem constant byte address 0x4 - core index']
  #allocation1 [shape = 'u32[144,128]{1,0:T(1,128)}', space=vmem, size = 0x12000, scoped, tag = 'internal scratch']
  #allocation2 [shape = 'f32[18,18,4]{2,1,0:T(8,128)}', space=vmem, size = 0x36000, scoped, tag = 'scratch operand']
  #allocation3 [shape = 'f32[18,18,4]{2,1,0:T(8,128)}', space=vmem, size = 0x36000, scoped, tag = 'scratch operand']
  %s0 = inlined_call_operand.vmem [shape: bf16[2,16,16,4], index: 0, kind: input, shape index: {}]
  %s1 = inlined_call_operand.vmem [shape: bf16[2,16,16,4], index: 1, kind: input, shape index: {}]
  %s2 = inlined_call_operand.vmem [shape: f32[3,3,4], index: 2, kind: input, shape index: {}]
  %s3 = inlined_call_operand.vmem [shape: f32[3,3,4], index: 3, kind: input, shape index: {}]
  %s4 = inlined_call_operand.vmem [shape: f32[1,4], index: 4, kind: input, shape index: {}]
  %s5 = inlined_call_operand.vmem [shape: f32[1,4], index: 5, kind: input, shape index: {}]
  %s6 = inlined_call_operand.vmem [shape: f32[4,4], index: 6, kind: input, shape index: {}]
  %s7 = inlined_call_operand.vmem [shape: f32[1,4], index: 7, kind: input, shape index: {}]
  %s8 = inlined_call_operand.vmem [shape: bf16[2,16,16,4], index: 8, kind: output, shape index: {}]
  %s9 = sld [smem:[#allocation0]]
  $region65: #{fnafnet_block_forward.5} parent=0
    _
  %s11 = ssub.s32 1, %s9
  %s12 = scalar_select 0, %s11, %s9
  loop: start=0, step=1, limit=4
  $region2: #{fnafnet_block_forward.5} parent=0 // loop_pre_header
    _
  $region3: #{fnafnet_block_forward.5} parent=0 // loop_header
    %s14 = sphi 0, %s18
    %p15 = scmp.ge.s32.totalorder %s14, 4
    %s24 = sphi 0, %s26
    %s27 = sphi 0, %s24
    %s28 = sphi 0, %s27
    %s44 = sphi 0, %s28
    %s50 = sphi 0, %s52
    %s53 = sphi 0, %s50
    %s54 = sphi 0, %s53
    %s70 = sphi 0, %s54
    %s74 = sphi 0, %s74
    %s76 = sphi 0, %s74
    %s77 = sphi 0, %s76
    %s91 = sphi 0, %s77
    %s95 = sphi 0, %s95
    %s97 = sphi 0, %s95
    %s98 = sphi 0, %s97
    %s112 = sphi 0, %s98
    %s116 = sphi 0, %s116
    %s118 = sphi 0, %s116
    %s119 = sphi 0, %s118
    %s133 = sphi 0, %s119
    %s137 = sphi 0, %s137
    %s139 = sphi 0, %s137
    %s140 = sphi 0, %s139
    %s154 = sphi 0, %s140
    %s158 = sphi 0, %s158
    %s160 = sphi 0, %s158
    %s161 = sphi 0, %s160
    %s175 = sphi 0, %s161
    %s179 = sphi 0, %s179
    %s181 = sphi 0, %s179
    %s182 = sphi 0, %s181
    %s196 = sphi 0, %s182
    %s202 = sphi 0, %s204
    %s205 = sphi 0, %s202
    %s206 = sphi 0, %s205
    %s222 = sphi 0, %s206
  $region4: #{fnafnet_block_forward.5} parent=0 // loop_header_branch
    %17 = sbr.rel (%p15) target = $region8
  $region5: #{fnafnet_block_forward.5} parent=0 // loop_body
    %s19 = ssub.s32 %s14, 1
    %s20 = ssub.s32 %s14, 2
    %s21 = sadd.s32 %s14, 1
    %s22 = ssub.s32 %s14, %s21
    %p23 = scmp.eq.s32.totalorder %s22, 0
    %s25 = sadd.s32 %s24, 1
    %s26 = scalar_select %p23, %s24, %s25
    %p29 = pneg %p23
    %p30 = scmp.eq.s32.totalorder %s14, 1
    %p31 = por %p29, %p30
    %p32 = scmp.ne.s32.totalorder %s24, %s27
    %p33 = scmp.eq.s32.totalorder %s14, 0
    %p34 = por %p32, %p33
    %p35 = scmp.ne.s32.totalorder %s24, %s27
    %p36 = scmp.eq.s32.totalorder %s19, 1
    %p37 = por %p35, %p36
    %p38 = scmp.ne.s32.totalorder %s27, %s28
    %p39 = scmp.eq.s32.totalorder %s19, 0
    %p40 = por %p38, %p39
    %p41 = scmp.ne.s32.totalorder %s27, %s28
    %p42 = scmp.eq.s32.totalorder %s20, 1
    %p43 = por %p41, %p42
    %p45 = scmp.ne.s32.totalorder %s28, %s44
    %p46 = scmp.eq.s32.totalorder %s20, 0
    %p47 = por %p45, %p46
    %s48 = ssub.s32 %s14, %s21
    %p49 = scmp.eq.s32.totalorder %s48, 0
    %s51 = sadd.s32 %s50, 1
    %s52 = scalar_select %p49, %s50, %s51
    %p55 = pneg %p49
    %p56 = scmp.eq.s32.totalorder %s14, 1
    %p57 = por %p55, %p56
    %p58 = scmp.ne.s32.totalorder %s50, %s53
    %p59 = scmp.eq.s32.totalorder %s14, 0
    %p60 = por %p58, %p59
    %p61 = scmp.ne.s32.totalorder %s50, %s53
    %p62 = scmp.eq.s32.totalorder %s19, 1
    %p63 = por %p61, %p62
    %p64 = scmp.ne.s32.totalorder %s53, %s54
    %p65 = scmp.eq.s32.totalorder %s19, 0
    %p66 = por %p64, %p65
    %p67 = scmp.ne.s32.totalorder %s53, %s54
    %p68 = scmp.eq.s32.totalorder %s20, 1
    %p69 = por %p67, %p68
    %p71 = scmp.ne.s32.totalorder %s54, %s70
    %p72 = scmp.eq.s32.totalorder %s20, 0
    %p73 = por %p71, %p72
    %s75 = sadd.s32 %s74, 1
    %p78 = scmp.eq.s32.totalorder %s14, 1
    %p79 = scmp.ne.s32.totalorder %s74, %s76
    %p80 = scmp.eq.s32.totalorder %s14, 0
    %p81 = por %p79, %p80
    %p82 = scmp.ne.s32.totalorder %s74, %s76
    %p83 = scmp.eq.s32.totalorder %s19, 1
    %p84 = por %p82, %p83
    %p85 = scmp.ne.s32.totalorder %s76, %s77
    %p86 = scmp.eq.s32.totalorder %s19, 0
    %p87 = por %p85, %p86
    %p88 = scmp.ne.s32.totalorder %s76, %s77
    %p89 = scmp.eq.s32.totalorder %s20, 1
    %p90 = por %p88, %p89
    %p92 = scmp.ne.s32.totalorder %s77, %s91
    %p93 = scmp.eq.s32.totalorder %s20, 0
    %p94 = por %p92, %p93
    %s96 = sadd.s32 %s95, 1
    %p99 = scmp.eq.s32.totalorder %s14, 1
    %p100 = scmp.ne.s32.totalorder %s95, %s97
    %p101 = scmp.eq.s32.totalorder %s14, 0
    %p102 = por %p100, %p101
    %p103 = scmp.ne.s32.totalorder %s95, %s97
    %p104 = scmp.eq.s32.totalorder %s19, 1
    %p105 = por %p103, %p104
    %p106 = scmp.ne.s32.totalorder %s97, %s98
    %p107 = scmp.eq.s32.totalorder %s19, 0
    %p108 = por %p106, %p107
    %p109 = scmp.ne.s32.totalorder %s97, %s98
    %p110 = scmp.eq.s32.totalorder %s20, 1
    %p111 = por %p109, %p110
    %p113 = scmp.ne.s32.totalorder %s98, %s112
    %p114 = scmp.eq.s32.totalorder %s20, 0
    %p115 = por %p113, %p114
    %s117 = sadd.s32 %s116, 1
    %p120 = scmp.eq.s32.totalorder %s14, 1
    %p121 = scmp.ne.s32.totalorder %s116, %s118
    %p122 = scmp.eq.s32.totalorder %s14, 0
    %p123 = por %p121, %p122
    %p124 = scmp.ne.s32.totalorder %s116, %s118
    %p125 = scmp.eq.s32.totalorder %s19, 1
    %p126 = por %p124, %p125
    %p127 = scmp.ne.s32.totalorder %s118, %s119
    %p128 = scmp.eq.s32.totalorder %s19, 0
    %p129 = por %p127, %p128
    %p130 = scmp.ne.s32.totalorder %s118, %s119
    %p131 = scmp.eq.s32.totalorder %s20, 1
    %p132 = por %p130, %p131
    %p134 = scmp.ne.s32.totalorder %s119, %s133
    %p135 = scmp.eq.s32.totalorder %s20, 0
    %p136 = por %p134, %p135
    %s138 = sadd.s32 %s137, 1
    %p141 = scmp.eq.s32.totalorder %s14, 1
    %p142 = scmp.ne.s32.totalorder %s137, %s139
    %p143 = scmp.eq.s32.totalorder %s14, 0
    %p144 = por %p142, %p143
    %p145 = scmp.ne.s32.totalorder %s137, %s139
    %p146 = scmp.eq.s32.totalorder %s19, 1
    %p147 = por %p145, %p146
    %p148 = scmp.ne.s32.totalorder %s139, %s140
    %p149 = scmp.eq.s32.totalorder %s19, 0
    %p150 = por %p148, %p149
    %p151 = scmp.ne.s32.totalorder %s139, %s140
    %p152 = scmp.eq.s32.totalorder %s20, 1
    %p153 = por %p151, %p152
    %p155 = scmp.ne.s32.totalorder %s140, %s154
    %p156 = scmp.eq.s32.totalorder %s20, 0
    %p157 = por %p155, %p156
    %s159 = sadd.s32 %s158, 1
    %p162 = scmp.eq.s32.totalorder %s14, 1
    %p163 = scmp.ne.s32.totalorder %s158, %s160
    %p164 = scmp.eq.s32.totalorder %s14, 0
    %p165 = por %p163, %p164
    %p166 = scmp.ne.s32.totalorder %s158, %s160
    %p167 = scmp.eq.s32.totalorder %s19, 1
    %p168 = por %p166, %p167
    %p169 = scmp.ne.s32.totalorder %s160, %s161
    %p170 = scmp.eq.s32.totalorder %s19, 0
    %p171 = por %p169, %p170
    %p172 = scmp.ne.s32.totalorder %s160, %s161
    %p173 = scmp.eq.s32.totalorder %s20, 1
    %p174 = por %p172, %p173
    %p176 = scmp.ne.s32.totalorder %s161, %s175
    %p177 = scmp.eq.s32.totalorder %s20, 0
    %p178 = por %p176, %p177
    %s180 = sadd.s32 %s179, 1
    %p183 = scmp.eq.s32.totalorder %s14, 1
    %p184 = scmp.ne.s32.totalorder %s179, %s181
    %p185 = scmp.eq.s32.totalorder %s14, 0
    %p186 = por %p184, %p185
    %p187 = scmp.ne.s32.totalorder %s179, %s181
    %p188 = scmp.eq.s32.totalorder %s19, 1
    %p189 = por %p187, %p188
    %p190 = scmp.ne.s32.totalorder %s181, %s182
    %p191 = scmp.eq.s32.totalorder %s19, 0
    %p192 = por %p190, %p191
    %p193 = scmp.ne.s32.totalorder %s181, %s182
    %p194 = scmp.eq.s32.totalorder %s20, 1
    %p195 = por %p193, %p194
    %p197 = scmp.ne.s32.totalorder %s182, %s196
    %p198 = scmp.eq.s32.totalorder %s20, 0
    %p199 = por %p197, %p198
    %s200 = ssub.s32 %s14, %s21
    %p201 = scmp.eq.s32.totalorder %s200, 0
    %s203 = sadd.s32 %s202, 1
    %s204 = scalar_select %p201, %s202, %s203
    %p207 = pneg %p201
    %p208 = scmp.eq.s32.totalorder %s14, 1
    %p209 = por %p207, %p208
    %p210 = scmp.ne.s32.totalorder %s202, %s205
    %p211 = scmp.eq.s32.totalorder %s14, 0
    %p212 = por %p210, %p211
    %p213 = scmp.ne.s32.totalorder %s202, %s205
    %p214 = scmp.eq.s32.totalorder %s19, 1
    %p215 = por %p213, %p214
    %p216 = scmp.ne.s32.totalorder %s205, %s206
    %p217 = scmp.eq.s32.totalorder %s19, 0
    %p218 = por %p216, %p217
    %p219 = scmp.ne.s32.totalorder %s205, %s206
    %p220 = scmp.eq.s32.totalorder %s20, 1
    %p221 = por %p219, %p220
    %p223 = scmp.ne.s32.totalorder %s206, %s222
    %p224 = scmp.eq.s32.totalorder %s20, 0
    %p225 = por %p223, %p224
    %p226 = scmp.le.s32.totalorder 1, %s14
    %p227 = scmp.lt.s32.totalorder %s14, 3
    %p228 = pnand %p226, %p227
    %p229 = pneg %p228
    // Predicated region
    $region9: #{fnafnet_block_forward.5} parent=5 // pred_check
      _
    $region10: #{fnafnet_block_forward.5} parent=5 // pred_check_branch
      %231 = sbr.rel (%p228) target = $region12
    $region11: #{fnafnet_block_forward.5} parent=5 // pred_region
      %s232 = ssub.s32 %s14, 1
      // Predicated region
      $region13: #{fnafnet_block_forward.5} parent=11 // pred_check
        %p233 = pneg %p87
      $region14: #{fnafnet_block_forward.5} parent=11 // pred_check_branch
        %235 = sbr.rel (%p233) target = $region16
      $region15: #{fnafnet_block_forward.5} parent=11 // pred_region
        _
      $region16: #{fnafnet_block_forward.5} parent=11 // pred_fallthru
        _
      // Predicated region
      $region17: #{fnafnet_block_forward.5} parent=11 // pred_check
        %p236 = pneg %p108
      $region18: #{fnafnet_block_forward.5} parent=11 // pred_check_branch
        %238 = sbr.rel (%p236) target = $region20
      $region19: #{fnafnet_block_forward.5} parent=11 // pred_region
        _
      $region20: #{fnafnet_block_forward.5} parent=11 // pred_fallthru
        _
      // Predicated region
      $region21: #{fnafnet_block_forward.5} parent=11 // pred_check
        %p239 = pneg %p129
      $region22: #{fnafnet_block_forward.5} parent=11 // pred_check_branch
        %241 = sbr.rel (%p239) target = $region24
      $region23: #{fnafnet_block_forward.5} parent=11 // pred_region
        _
      $region24: #{fnafnet_block_forward.5} parent=11 // pred_fallthru
        _
      // Predicated region
      $region25: #{fnafnet_block_forward.5} parent=11 // pred_check
        %p242 = pneg %p150
      $region26: #{fnafnet_block_forward.5} parent=11 // pred_check_branch
        %244 = sbr.rel (%p242) target = $region28
      $region27: #{fnafnet_block_forward.5} parent=11 // pred_region
        _
      $region28: #{fnafnet_block_forward.5} parent=11 // pred_fallthru
        _
      // Predicated region
      $region29: #{fnafnet_block_forward.5} parent=11 // pred_check
        %p245 = pneg %p171
      $region30: #{fnafnet_block_forward.5} parent=11 // pred_check_branch
        %247 = sbr.rel (%p245) target = $region32
      $region31: #{fnafnet_block_forward.5} parent=11 // pred_region
        _
      $region32: #{fnafnet_block_forward.5} parent=11 // pred_fallthru
        _
      // Predicated region
      $region33: #{fnafnet_block_forward.5} parent=11 // pred_check
        %p248 = pneg %p192
      $region34: #{fnafnet_block_forward.5} parent=11 // pred_check_branch
        %250 = sbr.rel (%p248) target = $region36
      $region35: #{fnafnet_block_forward.5} parent=11 // pred_region
        _
      $region36: #{fnafnet_block_forward.5} parent=11 // pred_fallthru
        _
    $region12: #{fnafnet_block_forward.5} parent=5 // pred_fallthru
      _
    %p251 = scmp.lt.s32.totalorder %s14, 2
    // Predicated region
    $region37: #{fnafnet_block_forward.5} parent=5 // pred_check
      %p252 = pneg %p251
    $region38: #{fnafnet_block_forward.5} parent=5 // pred_check_branch
      %254 = sbr.rel (%p252) target = $region40
    $region39: #{fnafnet_block_forward.5} parent=5 // pred_region
      // Predicated region
      $region41: #{fnafnet_block_forward.5} parent=39 // pred_check
        %p255 = pneg %p34
      $region42: #{fnafnet_block_forward.5} parent=39 // pred_check_branch
        %257 = sbr.rel (%p255) target = $region44
      $region43: #{fnafnet_block_forward.5} parent=39 // pred_region
        %p258 = scmp.lt.s32.totalorder %s14, 1
        %s259 = scalar_select %p258, %s14, 1
        %s260 = smul.addr %s259, 32
        %s261 = smul.addr %s260, 4
        %s262 = scalar_lea.vmem %s0, %s261
      $region44: #{fnafnet_block_forward.5} parent=39 // pred_fallthru
        _
      // Predicated region
      $region45: #{fnafnet_block_forward.5} parent=39 // pred_check
        %p263 = pneg %p60
      $region46: #{fnafnet_block_forward.5} parent=39 // pred_check_branch
        %265 = sbr.rel (%p263) target = $region48
      $region47: #{fnafnet_block_forward.5} parent=39 // pred_region
        %p266 = scmp.lt.s32.totalorder %s14, 1
        %s267 = scalar_select %p266, %s14, 1
        %s268 = smul.addr %s267, 32
        %s269 = smul.addr %s268, 4
        %s270 = scalar_lea.vmem %s1, %s269
      $region48: #{fnafnet_block_forward.5} parent=39 // pred_fallthru
        _
    $region40: #{fnafnet_block_forward.5} parent=5 // pred_fallthru
      _
    %p271 = scmp.le.s32.totalorder 1, %s14
    %p272 = scmp.lt.s32.totalorder %s14, 3
    %p273 = pnand %p271, %p272
    %p274 = pneg %p273
    // Predicated region
    $region49: #{fnafnet_block_forward.5} parent=5 // pred_check
      _
    $region50: #{fnafnet_block_forward.5} parent=5 // pred_check_branch
      %276 = sbr.rel (%p273) target = $region52
    $region51: #{fnafnet_block_forward.5} parent=5 // pred_region
      %s277 = ssub.s32 %s14, 1
      %p278 = scmp.lt.s32.totalorder %s19, 1
      %s279 = scalar_select %p278, %s19, 1
      %s280 = smul.addr %s279, 32
      %s281 = smul.addr %s280, 4
      %s282 = scalar_lea.vmem %s0, %s281
      %p283 = pneg %p40
      %p284 = pneg %p37
      %p285 = scmp.lt.s32.totalorder %s19, 1
      %s286 = scalar_select %p285, %s19, 1
      %s287 = smul.addr %s286, 32
      %s288 = smul.addr %s287, 4
      %s289 = scalar_lea.vmem %s1, %s288
      %p290 = pneg %p66
      %p291 = pneg %p63
      %p292 = pneg %p87
      %p293 = pneg %p84
      %p294 = pneg %p108
      %p295 = pneg %p105
      %p296 = pneg %p129
      %p297 = pneg %p126
      %p298 = pneg %p150
      %p299 = pneg %p147
      %p300 = pneg %p171
      %p301 = pneg %p168
      %p302 = pneg %p192
      %p303 = pneg %p189
      %p304 = pneg %p218
      %p305 = pneg %p215
      %p306 = scmp.lt.s32.totalorder %s19, 1
      %s307 = scalar_select %p306, %s19, 1
      %s308 = smul.addr %s307, 32
      %s309 = smul.addr %s308, 4
      %s310 = scalar_lea.vmem %s8, %s309
      %p311 = scmp.lt.s32.totalorder %s19, 1
      %s312 = scalar_select %p311, %s19, 1
      %s313 = smul.addr %s312, 32
      %s314 = smul.addr %s313, 4
      %s315 = scalar_lea.vmem %s0, %s314
      %p316 = scmp.lt.s32.totalorder %s19, 1
      %s317 = scalar_select %p316, %s19, 1
      %s318 = smul.addr %s317, 32
      %s319 = smul.addr %s318, 4
      %s320 = scalar_lea.vmem %s1, %s319
      %p321 = scmp.lt.s32.totalorder %s19, 1
      %s322 = scalar_select %p321, %s19, 1
      %s323 = smul.addr %s322, 32
      %s324 = smul.addr %s323, 4
      %s325 = scalar_lea.vmem %s8, %s324
      %vm326 = vcmask 31744
      %327 = vst.msk [vmem:[#allocation2] sm:$0xff] %vm326, 0.0
      %328 = vst.msk [vmem:[#allocation2 + $0x8] sm:$0xff] %vm326, 0.0
      %vm329 = vcmask 25600
      %330 = vst.msk [vmem:[#allocation2 + $0x10] sm:$0x3] %vm329, 0.0
      %331 = vst.msk [vmem:[#allocation2 + $0x18] sm:$0xff] %vm326, 0.0
      %332 = vst.msk [vmem:[#allocation2 + $0x20] sm:$0xff] %vm326, 0.0
      %333 = vst.msk [vmem:[#allocation2 + $0x28] sm:$0x3] %vm329, 0.0
      %334 = vst.msk [vmem:[#allocation2 + $0x30] sm:$0xff] %vm326, 0.0
      %335 = vst.msk [vmem:[#allocation2 + $0x38] sm:$0xff] %vm326, 0.0
      %336 = vst.msk [vmem:[#allocation2 + $0x40] sm:$0x3] %vm329, 0.0
      %337 = vst.msk [vmem:[#allocation2 + $0x48] sm:$0xff] %vm326, 0.0
      %338 = vst.msk [vmem:[#allocation2 + $0x50] sm:$0xff] %vm326, 0.0
      %339 = vst.msk [vmem:[#allocation2 + $0x58] sm:$0x3] %vm329, 0.0
      %340 = vst.msk [vmem:[#allocation2 + $0x60] sm:$0xff] %vm326, 0.0
      %341 = vst.msk [vmem:[#allocation2 + $0x68] sm:$0xff] %vm326, 0.0
      %342 = vst.msk [vmem:[#allocation2 + $0x70] sm:$0x3] %vm329, 0.0
      %343 = vst.msk [vmem:[#allocation2 + $0x78] sm:$0xff] %vm326, 0.0
      %344 = vst.msk [vmem:[#allocation2 + $0x80] sm:$0xff] %vm326, 0.0
      %345 = vst.msk [vmem:[#allocation2 + $0x88] sm:$0x3] %vm329, 0.0
      %346 = vst.msk [vmem:[#allocation2 + $0x90] sm:$0xff] %vm326, 0.0
      %347 = vst.msk [vmem:[#allocation2 + $0x98] sm:$0xff] %vm326, 0.0
      %348 = vst.msk [vmem:[#allocation2 + $0xa0] sm:$0x3] %vm329, 0.0
      %349 = vst.msk [vmem:[#allocation2 + $0xa8] sm:$0xff] %vm326, 0.0
      %350 = vst.msk [vmem:[#allocation2 + $0xb0] sm:$0xff] %vm326, 0.0
      %351 = vst.msk [vmem:[#allocation2 + $0xb8] sm:$0x3] %vm329, 0.0
      %352 = vst.msk [vmem:[#allocation2 + $0xc0] sm:$0xff] %vm326, 0.0
      %353 = vst.msk [vmem:[#allocation2 + $0xc8] sm:$0xff] %vm326, 0.0
      %354 = vst.msk [vmem:[#allocation2 + $0xd0] sm:$0x3] %vm329, 0.0
      %355 = vst.msk [vmem:[#allocation2 + $0xd8] sm:$0xff] %vm326, 0.0
      %356 = vst.msk [vmem:[#allocation2 + $0xe0] sm:$0xff] %vm326, 0.0
      %357 = vst.msk [vmem:[#allocation2 + $0xe8] sm:$0x3] %vm329, 0.0
      %358 = vst.msk [vmem:[#allocation2 + $0xf0] sm:$0xff] %vm326, 0.0
      %359 = vst.msk [vmem:[#allocation2 + $0xf8] sm:$0xff] %vm326, 0.0
      %360 = vst.msk [vmem:[#allocation2 + $0x100] sm:$0x3] %vm329, 0.0
      %361 = vst.msk [vmem:[#allocation2 + $0x108] sm:$0xff] %vm326, 0.0
      %362 = vst.msk [vmem:[#allocation2 + $0x110] sm:$0xff] %vm326, 0.0
      %363 = vst.msk [vmem:[#allocation2 + $0x118] sm:$0x3] %vm329, 0.0
      %364 = vst.msk [vmem:[#allocation2 + $0x120] sm:$0xff] %vm326, 0.0
      %365 = vst.msk [vmem:[#allocation2 + $0x128] sm:$0xff] %vm326, 0.0
      %366 = vst.msk [vmem:[#allocation2 + $0x130] sm:$0x3] %vm329, 0.0
      %367 = vst.msk [vmem:[#allocation2 + $0x138] sm:$0xff] %vm326, 0.0
      %368 = vst.msk [vmem:[#allocation2 + $0x140] sm:$0xff] %vm326, 0.0
      %369 = vst.msk [vmem:[#allocation2 + $0x148] sm:$0x3] %vm329, 0.0
      %370 = vst.msk [vmem:[#allocation2 + $0x150] sm:$0xff] %vm326, 0.0
      %371 = vst.msk [vmem:[#allocation2 + $0x158] sm:$0xff] %vm326, 0.0
      %372 = vst.msk [vmem:[#allocation2 + $0x160] sm:$0x3] %vm329, 0.0
      %373 = vst.msk [vmem:[#allocation2 + $0x168] sm:$0xff] %vm326, 0.0
      %374 = vst.msk [vmem:[#allocation2 + $0x170] sm:$0xff] %vm326, 0.0
      %375 = vst.msk [vmem:[#allocation2 + $0x178] sm:$0x3] %vm329, 0.0
      %376 = vst.msk [vmem:[#allocation2 + $0x180] sm:$0xff] %vm326, 0.0
      %377 = vst.msk [vmem:[#allocation2 + $0x188] sm:$0xff] %vm326, 0.0
      %378 = vst.msk [vmem:[#allocation2 + $0x190] sm:$0x3] %vm329, 0.0
      %379 = vst.msk [vmem:[#allocation2 + $0x198] sm:$0xff] %vm326, 0.0
      %380 = vst.msk [vmem:[#allocation2 + $0x1a0] sm:$0xff] %vm326, 0.0
      %381 = vst.msk [vmem:[#allocation2 + $0x1a8] sm:$0x3] %vm329, 0.0
      %382 = vst.msk [vmem:[#allocation3] sm:$0xff] %vm326, 0.0
      %383 = vst.msk [vmem:[#allocation3 + $0x8] sm:$0xff] %vm326, 0.0
      %384 = vst.msk [vmem:[#allocation3 + $0x10] sm:$0x3] %vm329, 0.0
      %385 = vst.msk [vmem:[#allocation3 + $0x18] sm:$0xff] %vm326, 0.0
      %386 = vst.msk [vmem:[#allocation3 + $0x20] sm:$0xff] %vm326, 0.0
      %387 = vst.msk [vmem:[#allocation3 + $0x28] sm:$0x3] %vm329, 0.0
      %388 = vst.msk [vmem:[#allocation3 + $0x30] sm:$0xff] %vm326, 0.0
      %389 = vst.msk [vmem:[#allocation3 + $0x38] sm:$0xff] %vm326, 0.0
      %390 = vst.msk [vmem:[#allocation3 + $0x40] sm:$0x3] %vm329, 0.0
      %391 = vst.msk [vmem:[#allocation3 + $0x48] sm:$0xff] %vm326, 0.0
      %392 = vst.msk [vmem:[#allocation3 + $0x50] sm:$0xff] %vm326, 0.0
      %393 = vst.msk [vmem:[#allocation3 + $0x58] sm:$0x3] %vm329, 0.0
      %394 = vst.msk [vmem:[#allocation3 + $0x60] sm:$0xff] %vm326, 0.0
      %395 = vst.msk [vmem:[#allocation3 + $0x68] sm:$0xff] %vm326, 0.0
      %396 = vst.msk [vmem:[#allocation3 + $0x70] sm:$0x3] %vm329, 0.0
      %397 = vst.msk [vmem:[#allocation3 + $0x78] sm:$0xff] %vm326, 0.0
      %398 = vst.msk [vmem:[#allocation3 + $0x80] sm:$0xff] %vm326, 0.0
      %399 = vst.msk [vmem:[#allocation3 + $0x88] sm:$0x3] %vm329, 0.0
      %400 = vst.msk [vmem:[#allocation3 + $0x90] sm:$0xff] %vm326, 0.0
      %401 = vst.msk [vmem:[#allocation3 + $0x98] sm:$0xff] %vm326, 0.0
      %402 = vst.msk [vmem:[#allocation3 + $0xa0] sm:$0x3] %vm329, 0.0
      %403 = vst.msk [vmem:[#allocation3 + $0xa8] sm:$0xff] %vm326, 0.0
      %404 = vst.msk [vmem:[#allocation3 + $0xb0] sm:$0xff] %vm326, 0.0
      %405 = vst.msk [vmem:[#allocation3 + $0xb8] sm:$0x3] %vm329, 0.0
      %406 = vst.msk [vmem:[#allocation3 + $0xc0] sm:$0xff] %vm326, 0.0
      %407 = vst.msk [vmem:[#allocation3 + $0xc8] sm:$0xff] %vm326, 0.0
      %408 = vst.msk [vmem:[#allocation3 + $0xd0] sm:$0x3] %vm329, 0.0
      %409 = vst.msk [vmem:[#allocation3 + $0xd8] sm:$0xff] %vm326, 0.0
      %410 = vst.msk [vmem:[#allocation3 + $0xe0] sm:$0xff] %vm326, 0.0
      %411 = vst.msk [vmem:[#allocation3 + $0xe8] sm:$0x3] %vm329, 0.0
      %412 = vst.msk [vmem:[#allocation3 + $0xf0] sm:$0xff] %vm326, 0.0
      %413 = vst.msk [vmem:[#allocation3 + $0xf8] sm:$0xff] %vm326, 0.0
      %414 = vst.msk [vmem:[#allocation3 + $0x100] sm:$0x3] %vm329, 0.0
      %415 = vst.msk [vmem:[#allocation3 + $0x108] sm:$0xff] %vm326, 0.0
      %416 = vst.msk [vmem:[#allocation3 + $0x110] sm:$0xff] %vm326, 0.0
      %417 = vst.msk [vmem:[#allocation3 + $0x118] sm:$0x3] %vm329, 0.0
      %418 = vst.msk [vmem:[#allocation3 + $0x120] sm:$0xff] %vm326, 0.0
      %419 = vst.msk [vmem:[#allocation3 + $0x128] sm:$0xff] %vm326, 0.0
      %420 = vst.msk [vmem:[#allocation3 + $0x130] sm:$0x3] %vm329, 0.0
      %421 = vst.msk [vmem:[#allocation3 + $0x138] sm:$0xff] %vm326, 0.0
      %422 = vst.msk [vmem:[#allocation3 + $0x140] sm:$0xff] %vm326, 0.0
      %423 = vst.msk [vmem:[#allocation3 + $0x148] sm:$0x3] %vm329, 0.0
      %424 = vst.msk [vmem:[#allocation3 + $0x150] sm:$0xff] %vm326, 0.0
      %425 = vst.msk [vmem:[#allocation3 + $0x158] sm:$0xff] %vm326, 0.0
      %426 = vst.msk [vmem:[#allocation3 + $0x160] sm:$0x3] %vm329, 0.0
      %427 = vst.msk [vmem:[#allocation3 + $0x168] sm:$0xff] %vm326, 0.0
      %428 = vst.msk [vmem:[#allocation3 + $0x170] sm:$0xff] %vm326, 0.0
      %429 = vst.msk [vmem:[#allocation3 + $0x178] sm:$0x3] %vm329, 0.0
      %430 = vst.msk [vmem:[#allocation3 + $0x180] sm:$0xff] %vm326, 0.0
      %431 = vst.msk [vmem:[#allocation3 + $0x188] sm:$0xff] %vm326, 0.0
      %432 = vst.msk [vmem:[#allocation3 + $0x190] sm:$0x3] %vm329, 0.0
      %433 = vst.msk [vmem:[#allocation3 + $0x198] sm:$0xff] %vm326, 0.0
      %434 = vst.msk [vmem:[#allocation3 + $0x1a0] sm:$0xff] %vm326, 0.0
      %435 = vst.msk [vmem:[#allocation3 + $0x1a8] sm:$0x3] %vm329, 0.0
      %v436 = vld [vmem:[%s315] sm:$0xf]
      %v437 = vld [vmem:[%s315 + $0x4] sm:$0xf]
      %v438 = vld [vmem:[%s315 + $0x8] sm:$0xf]
      %v439 = vld [vmem:[%s315 + $0xc] sm:$0xf]
      %v440 = vld [vmem:[%s315 + $0x10] sm:$0xf]
      %v441 = vld [vmem:[%s315 + $0x14] sm:$0xf]
      %v442 = vld [vmem:[%s315 + $0x18] sm:$0xf]
      %v443 = vld [vmem:[%s315 + $0x1c] sm:$0xf]
      %v444 = vld [vmem:[%s315 + $0x20] sm:$0xf]
      %v445 = vld [vmem:[%s315 + $0x24] sm:$0xf]
      %v446 = vld [vmem:[%s315 + $0x28] sm:$0xf]
      %v447 = vld [vmem:[%s315 + $0x2c] sm:$0xf]
      %v448 = vld [vmem:[%s315 + $0x30] sm:$0xf]
      %v449 = vld [vmem:[%s315 + $0x34] sm:$0xf]
      %v450 = vld [vmem:[%s315 + $0x38] sm:$0xf]
      %v451 = vld [vmem:[%s315 + $0x3c] sm:$0xf]
      %v452 = vld [vmem:[%s315 + $0x40] sm:$0xf]
      %v453 = vld [vmem:[%s315 + $0x44] sm:$0xf]
      %v454 = vld [vmem:[%s315 + $0x48] sm:$0xf]
      %v455 = vld [vmem:[%s315 + $0x4c] sm:$0xf]
      %v456 = vld [vmem:[%s315 + $0x50] sm:$0xf]
      %v457 = vld [vmem:[%s315 + $0x54] sm:$0xf]
      %v458 = vld [vmem:[%s315 + $0x58] sm:$0xf]
      %v459 = vld [vmem:[%s315 + $0x5c] sm:$0xf]
      %v460 = vld [vmem:[%s315 + $0x60] sm:$0xf]
      %v461 = vld [vmem:[%s315 + $0x64] sm:$0xf]
      %v462 = vld [vmem:[%s315 + $0x68] sm:$0xf]
      %v463 = vld [vmem:[%s315 + $0x6c] sm:$0xf]
      %v464 = vld [vmem:[%s315 + $0x70] sm:$0xf]
      %v465 = vld [vmem:[%s315 + $0x74] sm:$0xf]
      %v466 = vld [vmem:[%s315 + $0x78] sm:$0xf]
      %v467 = vld [vmem:[%s315 + $0x7c] sm:$0xf]
      %v468 = vunpack.c.l.bf16 %v436
      %v469 = vunpack.c.l.bf16 %v437
      %v470 = vunpack.c.l.bf16 %v438
      %v471 = vunpack.c.l.bf16 %v439
      %v472 = vunpack.c.l.bf16 %v440
      %v473 = vunpack.c.l.bf16 %v441
      %v474 = vunpack.c.l.bf16 %v442
      %v475 = vunpack.c.l.bf16 %v443
      %v476 = vunpack.c.l.bf16 %v444
      %v477 = vunpack.c.l.bf16 %v445
      %v478 = vunpack.c.l.bf16 %v446
      %v479 = vunpack.c.l.bf16 %v447
      %v480 = vunpack.c.l.bf16 %v448
      %v481 = vunpack.c.l.bf16 %v449
      %v482 = vunpack.c.l.bf16 %v450
      %v483 = vunpack.c.l.bf16 %v451
      %v484 = vunpack.c.l.bf16 %v452
      %v485 = vunpack.c.l.bf16 %v453
      %v486 = vunpack.c.l.bf16 %v454
      %v487 = vunpack.c.l.bf16 %v455
      %v488 = vunpack.c.l.bf16 %v456
      %v489 = vunpack.c.l.bf16 %v457
      %v490 = vunpack.c.l.bf16 %v458
      %v491 = vunpack.c.l.bf16 %v459
      %v492 = vunpack.c.l.bf16 %v460
      %v493 = vunpack.c.l.bf16 %v461
      %v494 = vunpack.c.l.bf16 %v462
      %v495 = vunpack.c.l.bf16 %v463
      %v496 = vunpack.c.l.bf16 %v464
      %v497 = vunpack.c.l.bf16 %v465
      %v498 = vunpack.c.l.bf16 %v466
      %v499 = vunpack.c.l.bf16 %v467
      %s500 = scalar_lea.vmem [#allocation2], 24
      %501 = vst.msk [vmem:[%s500 + $0x1] sm:$0xff] %vm326, %v468
      %502 = vst.msk [vmem:[%s500 + $0x9] sm:$0xff] %vm326, %v469
      %503 = vst.msk [vmem:[%s500 + $0x19] sm:$0xff] %vm326, %v470
      %504 = vst.msk [vmem:[%s500 + $0x21] sm:$0xff] %vm326, %v471
      %505 = vst.msk [vmem:[%s500 + $0x31] sm:$0xff] %vm326, %v472
      %506 = vst.msk [vmem:[%s500 + $0x39] sm:$0xff] %vm326, %v473
      %507 = vst.msk [vmem:[%s500 + $0x49] sm:$0xff] %vm326, %v474
      %508 = vst.msk [vmem:[%s500 + $0x51] sm:$0xff] %vm326, %v475
      %509 = vst.msk [vmem:[%s500 + $0x61] sm:$0xff] %vm326, %v476
      %510 = vst.msk [vmem:[%s500 + $0x69] sm:$0xff] %vm326, %v477
      %511 = vst.msk [vmem:[%s500 + $0x79] sm:$0xff] %vm326, %v478
      %512 = vst.msk [vmem:[%s500 + $0x81] sm:$0xff] %vm326, %v479
      %513 = vst.msk [vmem:[%s500 + $0x91] sm:$0xff] %vm326, %v480
      %514 = vst.msk [vmem:[%s500 + $0x99] sm:$0xff] %vm326, %v481
      %515 = vst.msk [vmem:[%s500 + $0xa9] sm:$0xff] %vm326, %v482
      %516 = vst.msk [vmem:[%s500 + $0xb1] sm:$0xff] %vm326, %v483
      %517 = vst.msk [vmem:[%s500 + $0xc1] sm:$0xff] %vm326, %v484
      %518 = vst.msk [vmem:[%s500 + $0xc9] sm:$0xff] %vm326, %v485
      %519 = vst.msk [vmem:[%s500 + $0xd9] sm:$0xff] %vm326, %v486
      %520 = vst.msk [vmem:[%s500 + $0xe1] sm:$0xff] %vm326, %v487
      %521 = vst.msk [vmem:[%s500 + $0xf1] sm:$0xff] %vm326, %v488
      %522 = vst.msk [vmem:[%s500 + $0xf9] sm:$0xff] %vm326, %v489
      %523 = vst.msk [vmem:[%s500 + $0x109] sm:$0xff] %vm326, %v490
      %524 = vst.msk [vmem:[%s500 + $0x111] sm:$0xff] %vm326, %v491
      %525 = vst.msk [vmem:[%s500 + $0x121] sm:$0xff] %vm326, %v492
      %526 = vst.msk [vmem:[%s500 + $0x129] sm:$0xff] %vm326, %v493
      %527 = vst.msk [vmem:[%s500 + $0x139] sm:$0xff] %vm326, %v494
      %528 = vst.msk [vmem:[%s500 + $0x141] sm:$0xff] %vm326, %v495
      %529 = vst.msk [vmem:[%s500 + $0x151] sm:$0xff] %vm326, %v496
      %530 = vst.msk [vmem:[%s500 + $0x159] sm:$0xff] %vm326, %v497
      %531 = vst.msk [vmem:[%s500 + $0x169] sm:$0xff] %vm326, %v498
      %532 = vst.msk [vmem:[%s500 + $0x171] sm:$0xff] %vm326, %v499
      %v533 = vld [vmem:[%s320] sm:$0xf]
      %v534 = vld [vmem:[%s320 + $0x4] sm:$0xf]
      %v535 = vld [vmem:[%s320 + $0x8] sm:$0xf]
      %v536 = vld [vmem:[%s320 + $0xc] sm:$0xf]
      %v537 = vld [vmem:[%s320 + $0x10] sm:$0xf]
      %v538 = vld [vmem:[%s320 + $0x14] sm:$0xf]
      %v539 = vld [vmem:[%s320 + $0x18] sm:$0xf]
      %v540 = vld [vmem:[%s320 + $0x1c] sm:$0xf]
      %v541 = vld [vmem:[%s320 + $0x20] sm:$0xf]
      %v542 = vld [vmem:[%s320 + $0x24] sm:$0xf]
      %v543 = vld [vmem:[%s320 + $0x28] sm:$0xf]
      %v544 = vld [vmem:[%s320 + $0x2c] sm:$0xf]
      %v545 = vld [vmem:[%s320 + $0x30] sm:$0xf]
      %v546 = vld [vmem:[%s320 + $0x34] sm:$0xf]
      %v547 = vld [vmem:[%s320 + $0x38] sm:$0xf]
      %v548 = vld [vmem:[%s320 + $0x3c] sm:$0xf]
      %v549 = vld [vmem:[%s320 + $0x40] sm:$0xf]
      %v550 = vld [vmem:[%s320 + $0x44] sm:$0xf]
      %v551 = vld [vmem:[%s320 + $0x48] sm:$0xf]
      %v552 = vld [vmem:[%s320 + $0x4c] sm:$0xf]
      %v553 = vld [vmem:[%s320 + $0x50] sm:$0xf]
      %v554 = vld [vmem:[%s320 + $0x54] sm:$0xf]
      %v555 = vld [vmem:[%s320 + $0x58] sm:$0xf]
      %v556 = vld [vmem:[%s320 + $0x5c] sm:$0xf]
      %v557 = vld [vmem:[%s320 + $0x60] sm:$0xf]
      %v558 = vld [vmem:[%s320 + $0x64] sm:$0xf]
      %v559 = vld [vmem:[%s320 + $0x68] sm:$0xf]
      %v560 = vld [vmem:[%s320 + $0x6c] sm:$0xf]
      %v561 = vld [vmem:[%s320 + $0x70] sm:$0xf]
      %v562 = vld [vmem:[%s320 + $0x74] sm:$0xf]
      %v563 = vld [vmem:[%s320 + $0x78] sm:$0xf]
      %v564 = vld [vmem:[%s320 + $0x7c] sm:$0xf]
      %v565 = vunpack.c.l.bf16 %v533
      %v566 = vunpack.c.l.bf16 %v534
      %v567 = vunpack.c.l.bf16 %v535
      %v568 = vunpack.c.l.bf16 %v536
      %v569 = vunpack.c.l.bf16 %v537
      %v570 = vunpack.c.l.bf16 %v538
      %v571 = vunpack.c.l.bf16 %v539
      %v572 = vunpack.c.l.bf16 %v540
      %v573 = vunpack.c.l.bf16 %v541
      %v574 = vunpack.c.l.bf16 %v542
      %v575 = vunpack.c.l.bf16 %v543
      %v576 = vunpack.c.l.bf16 %v544
      %v577 = vunpack.c.l.bf16 %v545
      %v578 = vunpack.c.l.bf16 %v546
      %v579 = vunpack.c.l.bf16 %v547
      %v580 = vunpack.c.l.bf16 %v548
      %v581 = vunpack.c.l.bf16 %v549
      %v582 = vunpack.c.l.bf16 %v550
      %v583 = vunpack.c.l.bf16 %v551
      %v584 = vunpack.c.l.bf16 %v552
      %v585 = vunpack.c.l.bf16 %v553
      %v586 = vunpack.c.l.bf16 %v554
      %v587 = vunpack.c.l.bf16 %v555
      %v588 = vunpack.c.l.bf16 %v556
      %v589 = vunpack.c.l.bf16 %v557
      %v590 = vunpack.c.l.bf16 %v558
      %v591 = vunpack.c.l.bf16 %v559
      %v592 = vunpack.c.l.bf16 %v560
      %v593 = vunpack.c.l.bf16 %v561
      %v594 = vunpack.c.l.bf16 %v562
      %v595 = vunpack.c.l.bf16 %v563
      %v596 = vunpack.c.l.bf16 %v564
      %s597 = scalar_lea.vmem [#allocation3], 24
      %598 = vst.msk [vmem:[%s597 + $0x1] sm:$0xff] %vm326, %v565
      %599 = vst.msk [vmem:[%s597 + $0x9] sm:$0xff] %vm326, %v566
      %600 = vst.msk [vmem:[%s597 + $0x19] sm:$0xff] %vm326, %v567
      %601 = vst.msk [vmem:[%s597 + $0x21] sm:$0xff] %vm326, %v568
      %602 = vst.msk [vmem:[%s597 + $0x31] sm:$0xff] %vm326, %v569
      %603 = vst.msk [vmem:[%s597 + $0x39] sm:$0xff] %vm326, %v570
      %604 = vst.msk [vmem:[%s597 + $0x49] sm:$0xff] %vm326, %v571
      %605 = vst.msk [vmem:[%s597 + $0x51] sm:$0xff] %vm326, %v572
      %606 = vst.msk [vmem:[%s597 + $0x61] sm:$0xff] %vm326, %v573
      %607 = vst.msk [vmem:[%s597 + $0x69] sm:$0xff] %vm326, %v574
      %608 = vst.msk [vmem:[%s597 + $0x79] sm:$0xff] %vm326, %v575
      %609 = vst.msk [vmem:[%s597 + $0x81] sm:$0xff] %vm326, %v576
      %610 = vst.msk [vmem:[%s597 + $0x91] sm:$0xff] %vm326, %v577
      %611 = vst.msk [vmem:[%s597 + $0x99] sm:$0xff] %vm326, %v578
      %612 = vst.msk [vmem:[%s597 + $0xa9] sm:$0xff] %vm326, %v579
      %613 = vst.msk [vmem:[%s597 + $0xb1] sm:$0xff] %vm326, %v580
      %614 = vst.msk [vmem:[%s597 + $0xc1] sm:$0xff] %vm326, %v581
      %615 = vst.msk [vmem:[%s597 + $0xc9] sm:$0xff] %vm326, %v582
      %616 = vst.msk [vmem:[%s597 + $0xd9] sm:$0xff] %vm326, %v583
      %617 = vst.msk [vmem:[%s597 + $0xe1] sm:$0xff] %vm326, %v584
      %618 = vst.msk [vmem:[%s597 + $0xf1] sm:$0xff] %vm326, %v585
      %619 = vst.msk [vmem:[%s597 + $0xf9] sm:$0xff] %vm326, %v586
      %620 = vst.msk [vmem:[%s597 + $0x109] sm:$0xff] %vm326, %v587
      %621 = vst.msk [vmem:[%s597 + $0x111] sm:$0xff] %vm326, %v588
      %622 = vst.msk [vmem:[%s597 + $0x121] sm:$0xff] %vm326, %v589
      %623 = vst.msk [vmem:[%s597 + $0x129] sm:$0xff] %vm326, %v590
      %624 = vst.msk [vmem:[%s597 + $0x139] sm:$0xff] %vm326, %v591
      %625 = vst.msk [vmem:[%s597 + $0x141] sm:$0xff] %vm326, %v592
      %626 = vst.msk [vmem:[%s597 + $0x151] sm:$0xff] %vm326, %v593
      %627 = vst.msk [vmem:[%s597 + $0x159] sm:$0xff] %vm326, %v594
      %628 = vst.msk [vmem:[%s597 + $0x169] sm:$0xff] %vm326, %v595
      %629 = vst.msk [vmem:[%s597 + $0x171] sm:$0xff] %vm326, %v596
      %v630 = vld [vmem:[#allocation2] sm:$0xff]
      %v631 = vld [vmem:[#allocation2 + $0x8] sm:$0xff]
      %v632 = vld [vmem:[#allocation2 + $0x10] sm:$0x3]
      %v633 = vld [vmem:[#allocation2 + $0x18] sm:$0xff]
      %v634 = vld [vmem:[#allocation2 + $0x20] sm:$0xff]
      %v635 = vld [vmem:[#allocation2 + $0x28] sm:$0x3]
      %v636 = vld [vmem:[#allocation2 + $0x30] sm:$0xff]
      %v637 = vld [vmem:[#allocation2 + $0x38] sm:$0xff]
      %v638 = vld [vmem:[#allocation2 + $0x40] sm:$0x3]
      %v639 = vld [vmem:[#allocation2 + $0x48] sm:$0xff]
      %v640 = vld [vmem:[#allocation2 + $0x50] sm:$0xff]
      %v641 = vld [vmem:[#allocation2 + $0x58] sm:$0x3]
      %v642 = vld [vmem:[#allocation2 + $0x60] sm:$0xff]
      %v643 = vld [vmem:[#allocation2 + $0x68] sm:$0xff]
      %v644 = vld [vmem:[#allocation2 + $0x70] sm:$0x3]
      %v645 = vld [vmem:[#allocation2 + $0x78] sm:$0xff]
      %v646 = vld [vmem:[#allocation2 + $0x80] sm:$0xff]
      %v647 = vld [vmem:[#allocation2 + $0x88] sm:$0x3]
      %v648 = vld [vmem:[#allocation2 + $0x90] sm:$0xff]
      %v649 = vld [vmem:[#allocation2 + $0x98] sm:$0xff]
      %v650 = vld [vmem:[#allocation2 + $0xa0] sm:$0x3]
      %v651 = vld [vmem:[#allocation2 + $0xa8] sm:$0xff]
      %v652 = vld [vmem:[#allocation2 + $0xb0] sm:$0xff]
      %v653 = vld [vmem:[#allocation2 + $0xb8] sm:$0x3]
      %v654 = vld [vmem:[#allocation2 + $0xc0] sm:$0xff]
      %v655 = vld [vmem:[#allocation2 + $0xc8] sm:$0xff]
      %v656 = vld [vmem:[#allocation2 + $0xd0] sm:$0x3]
      %v657 = vld [vmem:[#allocation2 + $0xd8] sm:$0xff]
      %v658 = vld [vmem:[#allocation2 + $0xe0] sm:$0xff]
      %v659 = vld [vmem:[#allocation2 + $0xe8] sm:$0x3]
      %v660 = vld [vmem:[#allocation2 + $0xf0] sm:$0xff]
      %v661 = vld [vmem:[#allocation2 + $0xf8] sm:$0xff]
      %v662 = vld [vmem:[#allocation2 + $0x100] sm:$0x3]
      %v663 = vld [vmem:[#allocation2 + $0x108] sm:$0xff]
      %v664 = vld [vmem:[#allocation2 + $0x110] sm:$0xff]
      %v665 = vld [vmem:[#allocation2 + $0x118] sm:$0x3]
      %v666 = vld [vmem:[#allocation2 + $0x120] sm:$0xff]
      %v667 = vld [vmem:[#allocation2 + $0x128] sm:$0xff]
      %v668 = vld [vmem:[#allocation2 + $0x130] sm:$0x3]
      %v669 = vld [vmem:[#allocation2 + $0x138] sm:$0xff]
      %v670 = vld [vmem:[#allocation2 + $0x140] sm:$0xff]
      %v671 = vld [vmem:[#allocation2 + $0x148] sm:$0x3]
      %v672 = vld [vmem:[#allocation2 + $0x150] sm:$0xff]
      %v673 = vld [vmem:[#allocation2 + $0x158] sm:$0xff]
      %v674 = vld [vmem:[#allocation2 + $0x160] sm:$0x3]
      %v675 = vld [vmem:[#allocation2 + $0x168] sm:$0xff]
      %v676 = vld [vmem:[#allocation2 + $0x170] sm:$0xff]
      %v677 = vld [vmem:[#allocation2 + $0x178] sm:$0x3]
      %v678 = vld [vmem:[#allocation2 + $0x180] sm:$0xff]
      %v679 = vld [vmem:[#allocation2 + $0x188] sm:$0xff]
      %v680 = vld [vmem:[#allocation2 + $0x190] sm:$0x3]
      %v681 = vld [vmem:[#allocation2 + $0x198] sm:$0xff]
      %v682 = vld [vmem:[#allocation2 + $0x1a0] sm:$0xff]
      %v683 = vld [vmem:[#allocation2 + $0x1a8] sm:$0x3]
      %v684 = vld [vmem:[#allocation3] sm:$0xff]
      %v685 = vld [vmem:[#allocation3 + $0x8] sm:$0xff]
      %v686 = vld [vmem:[#allocation3 + $0x10] sm:$0x3]
      %v687 = vld [vmem:[#allocation3 + $0x18] sm:$0xff]
      %v688 = vld [vmem:[#allocation3 + $0x20] sm:$0xff]
      %v689 = vld [vmem:[#allocation3 + $0x28] sm:$0x3]
      %v690 = vld [vmem:[#allocation3 + $0x30] sm:$0xff]
      %v691 = vld [vmem:[#allocation3 + $0x38] sm:$0xff]
      %v692 = vld [vmem:[#allocation3 + $0x40] sm:$0x3]
      %v693 = vld [vmem:[#allocation3 + $0x48] sm:$0xff]
      %v694 = vld [vmem:[#allocation3 + $0x50] sm:$0xff]
      %v695 = vld [vmem:[#allocation3 + $0x58] sm:$0x3]
      %v696 = vld [vmem:[#allocation3 + $0x60] sm:$0xff]
      %v697 = vld [vmem:[#allocation3 + $0x68] sm:$0xff]
      %v698 = vld [vmem:[#allocation3 + $0x70] sm:$0x3]
      %v699 = vld [vmem:[#allocation3 + $0x78] sm:$0xff]
      %v700 = vld [vmem:[#allocation3 + $0x80] sm:$0xff]
      %v701 = vld [vmem:[#allocation3 + $0x88] sm:$0x3]
      %v702 = vld [vmem:[#allocation3 + $0x90] sm:$0xff]
      %v703 = vld [vmem:[#allocation3 + $0x98] sm:$0xff]
      %v704 = vld [vmem:[#allocation3 + $0xa0] sm:$0x3]
      %v705 = vld [vmem:[#allocation3 + $0xa8] sm:$0xff]
      %v706 = vld [vmem:[#allocation3 + $0xb0] sm:$0xff]
      %v707 = vld [vmem:[#allocation3 + $0xb8] sm:$0x3]
      %v708 = vld [vmem:[#allocation3 + $0xc0] sm:$0xff]
      %v709 = vld [vmem:[#allocation3 + $0xc8] sm:$0xff]
      %v710 = vld [vmem:[#allocation3 + $0xd0] sm:$0x3]
      %v711 = vld [vmem:[#allocation3 + $0xd8] sm:$0xff]
      %v712 = vld [vmem:[#allocation3 + $0xe0] sm:$0xff]
      %v713 = vld [vmem:[#allocation3 + $0xe8] sm:$0x3]
      %v714 = vld [vmem:[#allocation3 + $0xf0] sm:$0xff]
      %v715 = vld [vmem:[#allocation3 + $0xf8] sm:$0xff]
      %v716 = vld [vmem:[#allocation3 + $0x100] sm:$0x3]
      %v717 = vld [vmem:[#allocation3 + $0x108] sm:$0xff]
      %v718 = vld [vmem:[#allocation3 + $0x110] sm:$0xff]
      %v719 = vld [vmem:[#allocation3 + $0x118] sm:$0x3]
      %v720 = vld [vmem:[#allocation3 + $0x120] sm:$0xff]
      %v721 = vld [vmem:[#allocation3 + $0x128] sm:$0xff]
      %v722 = vld [vmem:[#allocation3 + $0x130] sm:$0x3]
      %v723 = vld [vmem:[#allocation3 + $0x138] sm:$0xff]
      %v724 = vld [vmem:[#allocation3 + $0x140] sm:$0xff]
      %v725 = vld [vmem:[#allocation3 + $0x148] sm:$0x3]
      %v726 = vld [vmem:[#allocation3 + $0x150] sm:$0xff]
      %v727 = vld [vmem:[#allocation3 + $0x158] sm:$0xff]
      %v728 = vld [vmem:[#allocation3 + $0x160] sm:$0x3]
      %v729 = vld [vmem:[#allocation3 + $0x168] sm:$0xff]
      %v730 = vld [vmem:[#allocation3 + $0x170] sm:$0xff]
      %v731 = vld [vmem:[#allocation3 + $0x178] sm:$0x3]
      %v732 = vld [vmem:[#allocation3 + $0x180] sm:$0xff]
      %v733 = vld [vmem:[#allocation3 + $0x188] sm:$0xff]
      %v734 = vld [vmem:[#allocation3 + $0x190] sm:$0x3]
      %v735 = vld [vmem:[#allocation3 + $0x198] sm:$0xff]
      %v736 = vld [vmem:[#allocation3 + $0x1a0] sm:$0xff]
      %v737 = vld [vmem:[#allocation3 + $0x1a8] sm:$0x3]
      %v738 = vld [vmem:[%s2] sm:$0x7]
      %v739 = vld [vmem:[%s2 + $0x4] sm:$0x7]
      %v740 = vld [vmem:[%s2 + $0x8] sm:$0x7]
      %v741 = vld [vmem:[%s3] sm:$0x7]
      %v742 = vld [vmem:[%s3 + $0x4] sm:$0x7]
      %v743 = vld [vmem:[%s3 + $0x8] sm:$0x7]
      %v744 = vlaneseq
      %v745 = vshrl.u32 %v744, 7
      %v746 = vsub.s32 0, %v745
      %v747 = vrot.slane %v738, %v746
      %v748 = vmul.f32 %v630, %v747
      %v749 = vmul.f32 %v631, %v747
      %v750 = vmul.f32 %v633, %v747
      %v751 = vmul.f32 %v634, %v747
      %v752 = vmul.f32 %v636, %v747
      %v753 = vmul.f32 %v637, %v747
      %v754 = vmul.f32 %v639, %v747
      %v755 = vmul.f32 %v640, %v747
      %v756 = vmul.f32 %v642, %v747
      %v757 = vmul.f32 %v643, %v747
      %v758 = vmul.f32 %v645, %v747
      %v759 = vmul.f32 %v646, %v747
      %v760 = vmul.f32 %v648, %v747
      %v761 = vmul.f32 %v649, %v747
      %v762 = vmul.f32 %v651, %v747
      %v763 = vmul.f32 %v652, %v747
      %v764 = vmul.f32 %v654, %v747
      %v765 = vmul.f32 %v655, %v747
      %v766 = vmul.f32 %v657, %v747
      %v767 = vmul.f32 %v658, %v747
      %v768 = vmul.f32 %v660, %v747
      %v769 = vmul.f32 %v661, %v747
      %v770 = vmul.f32 %v663, %v747
      %v771 = vmul.f32 %v664, %v747
      %v772 = vmul.f32 %v666, %v747
      %v773 = vmul.f32 %v667, %v747
      %v774 = vmul.f32 %v669, %v747
      %v775 = vmul.f32 %v670, %v747
      %v776 = vmul.f32 %v672, %v747
      %v777 = vmul.f32 %v673, %v747
      %v778 = vmul.f32 %v675, %v747
      %v779 = vmul.f32 %v676, %v747
      %v780 = vadd.f32 %v748, 0.0
      %v781 = vadd.f32 %v749, 0.0
      %v782 = vadd.f32 %v750, 0.0
      %v783 = vadd.f32 %v751, 0.0
      %v784 = vadd.f32 %v752, 0.0
      %v785 = vadd.f32 %v753, 0.0
      %v786 = vadd.f32 %v754, 0.0
      %v787 = vadd.f32 %v755, 0.0
      %v788 = vadd.f32 %v756, 0.0
      %v789 = vadd.f32 %v757, 0.0
      %v790 = vadd.f32 %v758, 0.0
      %v791 = vadd.f32 %v759, 0.0
      %v792 = vadd.f32 %v760, 0.0
      %v793 = vadd.f32 %v761, 0.0
      %v794 = vadd.f32 %v762, 0.0
      %v795 = vadd.f32 %v763, 0.0
      %v796 = vadd.f32 %v764, 0.0
      %v797 = vadd.f32 %v765, 0.0
      %v798 = vadd.f32 %v766, 0.0
      %v799 = vadd.f32 %v767, 0.0
      %v800 = vadd.f32 %v768, 0.0
      %v801 = vadd.f32 %v769, 0.0
      %v802 = vadd.f32 %v770, 0.0
      %v803 = vadd.f32 %v771, 0.0
      %v804 = vadd.f32 %v772, 0.0
      %v805 = vadd.f32 %v773, 0.0
      %v806 = vadd.f32 %v774, 0.0
      %v807 = vadd.f32 %v775, 0.0
      %v808 = vadd.f32 %v776, 0.0
      %v809 = vadd.f32 %v777, 0.0
      %v810 = vadd.f32 %v778, 0.0
      %v811 = vadd.f32 %v779, 0.0
      %v812 = vlaneseq
      %v813 = vshrl.u32 %v812, 7
      %v814 = vsub.s32 0, %v813
      %v815 = vrot.slane %v741, %v814
      %v816 = vmul.f32 %v684, %v815
      %v817 = vmul.f32 %v685, %v815
      %v818 = vmul.f32 %v687, %v815
      %v819 = vmul.f32 %v688, %v815
      %v820 = vmul.f32 %v690, %v815
      %v821 = vmul.f32 %v691, %v815
      %v822 = vmul.f32 %v693, %v815
      %v823 = vmul.f32 %v694, %v815
      %v824 = vmul.f32 %v696, %v815
      %v825 = vmul.f32 %v697, %v815
      %v826 = vmul.f32 %v699, %v815
      %v827 = vmul.f32 %v700, %v815
      %v828 = vmul.f32 %v702, %v815
      %v829 = vmul.f32 %v703, %v815
      %v830 = vmul.f32 %v705, %v815
      %v831 = vmul.f32 %v706, %v815
      %v832 = vmul.f32 %v708, %v815
      %v833 = vmul.f32 %v709, %v815
      %v834 = vmul.f32 %v711, %v815
      %v835 = vmul.f32 %v712, %v815
      %v836 = vmul.f32 %v714, %v815
      %v837 = vmul.f32 %v715, %v815
      %v838 = vmul.f32 %v717, %v815
      %v839 = vmul.f32 %v718, %v815
      %v840 = vmul.f32 %v720, %v815
      %v841 = vmul.f32 %v721, %v815
      %v842 = vmul.f32 %v723, %v815
      %v843 = vmul.f32 %v724, %v815
      %v844 = vmul.f32 %v726, %v815
      %v845 = vmul.f32 %v727, %v815
      %v846 = vmul.f32 %v729, %v815
      %v847 = vmul.f32 %v730, %v815
      %v848 = vadd.f32 %v816, 0.0
      %v849 = vadd.f32 %v817, 0.0
      %v850 = vadd.f32 %v818, 0.0
      %v851 = vadd.f32 %v819, 0.0
      %v852 = vadd.f32 %v820, 0.0
      %v853 = vadd.f32 %v821, 0.0
      %v854 = vadd.f32 %v822, 0.0
      %v855 = vadd.f32 %v823, 0.0
      %v856 = vadd.f32 %v824, 0.0
      %v857 = vadd.f32 %v825, 0.0
      %v858 = vadd.f32 %v826, 0.0
      %v859 = vadd.f32 %v827, 0.0
      %v860 = vadd.f32 %v828, 0.0
      %v861 = vadd.f32 %v829, 0.0
      %v862 = vadd.f32 %v830, 0.0
      %v863 = vadd.f32 %v831, 0.0
      %v864 = vadd.f32 %v832, 0.0
      %v865 = vadd.f32 %v833, 0.0
      %v866 = vadd.f32 %v834, 0.0
      %v867 = vadd.f32 %v835, 0.0
      %v868 = vadd.f32 %v836, 0.0
      %v869 = vadd.f32 %v837, 0.0
      %v870 = vadd.f32 %v838, 0.0
      %v871 = vadd.f32 %v839, 0.0
      %v872 = vadd.f32 %v840, 0.0
      %v873 = vadd.f32 %v841, 0.0
      %v874 = vadd.f32 %v842, 0.0
      %v875 = vadd.f32 %v843, 0.0
      %v876 = vadd.f32 %v844, 0.0
      %v877 = vadd.f32 %v845, 0.0
      %v878 = vadd.f32 %v846, 0.0
      %v879 = vadd.f32 %v847, 0.0
      %v880 = vlaneseq
      %v881 = vshrl.u32 %v880, 7
      %v882 = vsub.s32 1, %v881
      %v883 = vrot.slane %v738, %v882
      %v884 = vmul.f32 %v630, %v883
      %v885 = vmul.f32 %v631, %v883
      %v886 = vmul.f32 %v632, %v883
      %v887 = vmul.f32 %v633, %v883
      %v888 = vmul.f32 %v634, %v883
      %v889 = vmul.f32 %v635, %v883
      %v890 = vmul.f32 %v636, %v883
      %v891 = vmul.f32 %v637, %v883
      %v892 = vmul.f32 %v638, %v883
      %v893 = vmul.f32 %v639, %v883
      %v894 = vmul.f32 %v640, %v883
      %v895 = vmul.f32 %v641, %v883
      %v896 = vmul.f32 %v642, %v883
      %v897 = vmul.f32 %v643, %v883
      %v898 = vmul.f32 %v644, %v883
      %v899 = vmul.f32 %v645, %v883
      %v900 = vmul.f32 %v646, %v883
      %v901 = vmul.f32 %v647, %v883
      %v902 = vmul.f32 %v648, %v883
      %v903 = vmul.f32 %v649, %v883
      %v904 = vmul.f32 %v650, %v883
      %v905 = vmul.f32 %v651, %v883
      %v906 = vmul.f32 %v652, %v883
      %v907 = vmul.f32 %v653, %v883
      %v908 = vmul.f32 %v654, %v883
      %v909 = vmul.f32 %v655, %v883
      %v910 = vmul.f32 %v656, %v883
      %v911 = vmul.f32 %v657, %v883
      %v912 = vmul.f32 %v658, %v883
      %v913 = vmul.f32 %v659, %v883
      %v914 = vmul.f32 %v660, %v883
      %v915 = vmul.f32 %v661, %v883
      %v916 = vmul.f32 %v662, %v883
      %v917 = vmul.f32 %v663, %v883
      %v918 = vmul.f32 %v664, %v883
      %v919 = vmul.f32 %v665, %v883
      %v920 = vmul.f32 %v666, %v883
      %v921 = vmul.f32 %v667, %v883
      %v922 = vmul.f32 %v668, %v883
      %v923 = vmul.f32 %v669, %v883
      %v924 = vmul.f32 %v670, %v883
      %v925 = vmul.f32 %v671, %v883
      %v926 = vmul.f32 %v672, %v883
      %v927 = vmul.f32 %v673, %v883
      %v928 = vmul.f32 %v674, %v883
      %v929 = vmul.f32 %v675, %v883
      %v930 = vmul.f32 %v676, %v883
      %v931 = vmul.f32 %v677, %v883
      %vm980 = vcmask 1046528
      %v981 = vrot.slane %v884, 1
      %v982 = vrot.slane %v885, 1
      %v983 = vsel %vm980, %v981, %v982
      %v984 = vrot.slane %v886, 1
      %v985 = vsel %vm980, %v982, %v984
      %v986 = vrot.slane %v887, 1
      %v987 = vrot.slane %v888, 1
      %v988 = vsel %vm980, %v986, %v987
      %v989 = vrot.slane %v889, 1
      %v990 = vsel %vm980, %v987, %v989
      %v991 = vrot.slane %v890, 1
      %v992 = vrot.slane %v891, 1
      %v993 = vsel %vm980, %v991, %v992
      %v994 = vrot.slane %v892, 1
      %v995 = vsel %vm980, %v992, %v994
      %v996 = vrot.slane %v893, 1
      %v997 = vrot.slane %v894, 1
      %v998 = vsel %vm980, %v996, %v997
      %v999 = vrot.slane %v895, 1
      %v1000 = vsel %vm980, %v997, %v999
      %v1001 = vrot.slane %v896, 1
      %v1002 = vrot.slane %v897, 1
      %v1003 = vsel %vm980, %v1001, %v1002
      %v1004 = vrot.slane %v898, 1
      %v1005 = vsel %vm980, %v1002, %v1004
      %v1006 = vrot.slane %v899, 1
      %v1007 = vrot.slane %v900, 1
      %v1008 = vsel %vm980, %v1006, %v1007
      %v1009 = vrot.slane %v901, 1
      %v1010 = vsel %vm980, %v1007, %v1009
      %v1011 = vrot.slane %v902, 1
      %v1012 = vrot.slane %v903, 1
      %v1013 = vsel %vm980, %v1011, %v1012
      %v1014 = vrot.slane %v904, 1
      %v1015 = vsel %vm980, %v1012, %v1014
      %v1016 = vrot.slane %v905, 1
      %v1017 = vrot.slane %v906, 1
      %v1018 = vsel %vm980, %v1016, %v1017
      %v1019 = vrot.slane %v907, 1
      %v1020 = vsel %vm980, %v1017, %v1019
      %v1021 = vrot.slane %v908, 1
      %v1022 = vrot.slane %v909, 1
      %v1023 = vsel %vm980, %v1021, %v1022
      %v1024 = vrot.slane %v910, 1
      %v1025 = vsel %vm980, %v1022, %v1024
      %v1026 = vrot.slane %v911, 1
      %v1027 = vrot.slane %v912, 1
      %v1028 = vsel %vm980, %v1026, %v1027
      %v1029 = vrot.slane %v913, 1
      %v1030 = vsel %vm980, %v1027, %v1029
      %v1031 = vrot.slane %v914, 1
      %v1032 = vrot.slane %v915, 1
      %v1033 = vsel %vm980, %v1031, %v1032
      %v1034 = vrot.slane %v916, 1
      %v1035 = vsel %vm980, %v1032, %v1034
      %v1036 = vrot.slane %v917, 1
      %v1037 = vrot.slane %v918, 1
      %v1038 = vsel %vm980, %v1036, %v1037
      %v1039 = vrot.slane %v919, 1
      %v1040 = vsel %vm980, %v1037, %v1039
      %v1041 = vrot.slane %v920, 1
      %v1042 = vrot.slane %v921, 1
      %v1043 = vsel %vm980, %v1041, %v1042
      %v1044 = vrot.slane %v922, 1
      %v1045 = vsel %vm980, %v1042, %v1044
      %v1046 = vrot.slane %v923, 1
      %v1047 = vrot.slane %v924, 1
      %v1048 = vsel %vm980, %v1046, %v1047
      %v1049 = vrot.slane %v925, 1
      %v1050 = vsel %vm980, %v1047, %v1049
      %v1051 = vrot.slane %v926, 1
      %v1052 = vrot.slane %v927, 1
      %v1053 = vsel %vm980, %v1051, %v1052
      %v1054 = vrot.slane %v928, 1
      %v1055 = vsel %vm980, %v1052, %v1054
      %v1056 = vrot.slane %v929, 1
      %v1057 = vrot.slane %v930, 1
      %v1058 = vsel %vm980, %v1056, %v1057
      %v1059 = vrot.slane %v931, 1
      %v1060 = vsel %vm980, %v1057, %v1059
      %v1093 = vadd.f32 %v780, %v983
      %v1094 = vadd.f32 %v781, %v985
      %v1095 = vadd.f32 %v782, %v988
      %v1096 = vadd.f32 %v783, %v990
      %v1097 = vadd.f32 %v784, %v993
      %v1098 = vadd.f32 %v785, %v995
      %v1099 = vadd.f32 %v786, %v998
      %v1100 = vadd.f32 %v787, %v1000
      %v1101 = vadd.f32 %v788, %v1003
      %v1102 = vadd.f32 %v789, %v1005
      %v1103 = vadd.f32 %v790, %v1008
      %v1104 = vadd.f32 %v791, %v1010
      %v1105 = vadd.f32 %v792, %v1013
      %v1106 = vadd.f32 %v793, %v1015
      %v1107 = vadd.f32 %v794, %v1018
      %v1108 = vadd.f32 %v795, %v1020
      %v1109 = vadd.f32 %v796, %v1023
      %v1110 = vadd.f32 %v797, %v1025
      %v1111 = vadd.f32 %v798, %v1028
      %v1112 = vadd.f32 %v799, %v1030
      %v1113 = vadd.f32 %v800, %v1033
      %v1114 = vadd.f32 %v801, %v1035
      %v1115 = vadd.f32 %v802, %v1038
      %v1116 = vadd.f32 %v803, %v1040
      %v1117 = vadd.f32 %v804, %v1043
      %v1118 = vadd.f32 %v805, %v1045
      %v1119 = vadd.f32 %v806, %v1048
      %v1120 = vadd.f32 %v807, %v1050
      %v1121 = vadd.f32 %v808, %v1053
      %v1122 = vadd.f32 %v809, %v1055
      %v1123 = vadd.f32 %v810, %v1058
      %v1124 = vadd.f32 %v811, %v1060
      %v1125 = vlaneseq
      %v1126 = vshrl.u32 %v1125, 7
      %v1127 = vsub.s32 1, %v1126
      %v1128 = vrot.slane %v741, %v1127
      %v1129 = vmul.f32 %v684, %v1128
      %v1130 = vmul.f32 %v685, %v1128
      %v1131 = vmul.f32 %v686, %v1128
      %v1132 = vmul.f32 %v687, %v1128
      %v1133 = vmul.f32 %v688, %v1128
      %v1134 = vmul.f32 %v689, %v1128
      %v1135 = vmul.f32 %v690, %v1128
      %v1136 = vmul.f32 %v691, %v1128
      %v1137 = vmul.f32 %v692, %v1128
      %v1138 = vmul.f32 %v693, %v1128
      %v1139 = vmul.f32 %v694, %v1128
      %v1140 = vmul.f32 %v695, %v1128
      %v1141 = vmul.f32 %v696, %v1128
      %v1142 = vmul.f32 %v697, %v1128
      %v1143 = vmul.f32 %v698, %v1128
      %v1144 = vmul.f32 %v699, %v1128
      %v1145 = vmul.f32 %v700, %v1128
      %v1146 = vmul.f32 %v701, %v1128
      %v1147 = vmul.f32 %v702, %v1128
      %v1148 = vmul.f32 %v703, %v1128
      %v1149 = vmul.f32 %v704, %v1128
      %v1150 = vmul.f32 %v705, %v1128
      %v1151 = vmul.f32 %v706, %v1128
      %v1152 = vmul.f32 %v707, %v1128
      %v1153 = vmul.f32 %v708, %v1128
      %v1154 = vmul.f32 %v709, %v1128
      %v1155 = vmul.f32 %v710, %v1128
      %v1156 = vmul.f32 %v711, %v1128
      %v1157 = vmul.f32 %v712, %v1128
      %v1158 = vmul.f32 %v713, %v1128
      %v1159 = vmul.f32 %v714, %v1128
      %v1160 = vmul.f32 %v715, %v1128
      %v1161 = vmul.f32 %v716, %v1128
      %v1162 = vmul.f32 %v717, %v1128
      %v1163 = vmul.f32 %v718, %v1128
      %v1164 = vmul.f32 %v719, %v1128
      %v1165 = vmul.f32 %v720, %v1128
      %v1166 = vmul.f32 %v721, %v1128
      %v1167 = vmul.f32 %v722, %v1128
      %v1168 = vmul.f32 %v723, %v1128
      %v1169 = vmul.f32 %v724, %v1128
      %v1170 = vmul.f32 %v725, %v1128
      %v1171 = vmul.f32 %v726, %v1128
      %v1172 = vmul.f32 %v727, %v1128
      %v1173 = vmul.f32 %v728, %v1128
      %v1174 = vmul.f32 %v729, %v1128
      %v1175 = vmul.f32 %v730, %v1128
      %v1176 = vmul.f32 %v731, %v1128
      %v1225 = vrot.slane %v1129, 1
      %v1226 = vrot.slane %v1130, 1
      %v1227 = vsel %vm980, %v1225, %v1226
      %v1228 = vrot.slane %v1131, 1
      %v1229 = vsel %vm980, %v1226, %v1228
      %v1230 = vrot.slane %v1132, 1
      %v1231 = vrot.slane %v1133, 1
      %v1232 = vsel %vm980, %v1230, %v1231
      %v1233 = vrot.slane %v1134, 1
      %v1234 = vsel %vm980, %v1231, %v1233
      %v1235 = vrot.slane %v1135, 1
      %v1236 = vrot.slane %v1136, 1
      %v1237 = vsel %vm980, %v1235, %v1236
      %v1238 = vrot.slane %v1137, 1
      %v1239 = vsel %vm980, %v1236, %v1238
      %v1240 = vrot.slane %v1138, 1
      %v1241 = vrot.slane %v1139, 1
      %v1242 = vsel %vm980, %v1240, %v1241
      %v1243 = vrot.slane %v1140, 1
      %v1244 = vsel %vm980, %v1241, %v1243
      %v1245 = vrot.slane %v1141, 1
      %v1246 = vrot.slane %v1142, 1
      %v1247 = vsel %vm980, %v1245, %v1246
      %v1248 = vrot.slane %v1143, 1
      %v1249 = vsel %vm980, %v1246, %v1248
      %v1250 = vrot.slane %v1144, 1
      %v1251 = vrot.slane %v1145, 1
      %v1252 = vsel %vm980, %v1250, %v1251
      %v1253 = vrot.slane %v1146, 1
      %v1254 = vsel %vm980, %v1251, %v1253
      %v1255 = vrot.slane %v1147, 1
      %v1256 = vrot.slane %v1148, 1
      %v1257 = vsel %vm980, %v1255, %v1256
      %v1258 = vrot.slane %v1149, 1
      %v1259 = vsel %vm980, %v1256, %v1258
      %v1260 = vrot.slane %v1150, 1
      %v1261 = vrot.slane %v1151, 1
      %v1262 = vsel %vm980, %v1260, %v1261
      %v1263 = vrot.slane %v1152, 1
      %v1264 = vsel %vm980, %v1261, %v1263
      %v1265 = vrot.slane %v1153, 1
      %v1266 = vrot.slane %v1154, 1
      %v1267 = vsel %vm980, %v1265, %v1266
      %v1268 = vrot.slane %v1155, 1
      %v1269 = vsel %vm980, %v1266, %v1268
      %v1270 = vrot.slane %v1156, 1
      %v1271 = vrot.slane %v1157, 1
      %v1272 = vsel %vm980, %v1270, %v1271
      %v1273 = vrot.slane %v1158, 1
      %v1274 = vsel %vm980, %v1271, %v1273
      %v1275 = vrot.slane %v1159, 1
      %v1276 = vrot.slane %v1160, 1
      %v1277 = vsel %vm980, %v1275, %v1276
      %v1278 = vrot.slane %v1161, 1
      %v1279 = vsel %vm980, %v1276, %v1278
      %v1280 = vrot.slane %v1162, 1
      %v1281 = vrot.slane %v1163, 1
      %v1282 = vsel %vm980, %v1280, %v1281
      %v1283 = vrot.slane %v1164, 1
      %v1284 = vsel %vm980, %v1281, %v1283
      %v1285 = vrot.slane %v1165, 1
      %v1286 = vrot.slane %v1166, 1
      %v1287 = vsel %vm980, %v1285, %v1286
      %v1288 = vrot.slane %v1167, 1
      %v1289 = vsel %vm980, %v1286, %v1288
      %v1290 = vrot.slane %v1168, 1
      %v1291 = vrot.slane %v1169, 1
      %v1292 = vsel %vm980, %v1290, %v1291
      %v1293 = vrot.slane %v1170, 1
      %v1294 = vsel %vm980, %v1291, %v1293
      %v1295 = vrot.slane %v1171, 1
      %v1296 = vrot.slane %v1172, 1
      %v1297 = vsel %vm980, %v1295, %v1296
      %v1298 = vrot.slane %v1173, 1
      %v1299 = vsel %vm980, %v1296, %v1298
      %v1300 = vrot.slane %v1174, 1
      %v1301 = vrot.slane %v1175, 1
      %v1302 = vsel %vm980, %v1300, %v1301
      %v1303 = vrot.slane %v1176, 1
      %v1304 = vsel %vm980, %v1301, %v1303
      %v1337 = vadd.f32 %v848, %v1227
      %v1338 = vadd.f32 %v849, %v1229
      %v1339 = vadd.f32 %v850, %v1232
      %v1340 = vadd.f32 %v851, %v1234
      %v1341 = vadd.f32 %v852, %v1237
      %v1342 = vadd.f32 %v853, %v1239
      %v1343 = vadd.f32 %v854, %v1242
      %v1344 = vadd.f32 %v855, %v1244
      %v1345 = vadd.f32 %v856, %v1247
      %v1346 = vadd.f32 %v857, %v1249
      %v1347 = vadd.f32 %v858, %v1252
      %v1348 = vadd.f32 %v859, %v1254
      %v1349 = vadd.f32 %v860, %v1257
      %v1350 = vadd.f32 %v861, %v1259
      %v1351 = vadd.f32 %v862, %v1262
      %v1352 = vadd.f32 %v863, %v1264
      %v1353 = vadd.f32 %v864, %v1267
      %v1354 = vadd.f32 %v865, %v1269
      %v1355 = vadd.f32 %v866, %v1272
      %v1356 = vadd.f32 %v867, %v1274
      %v1357 = vadd.f32 %v868, %v1277
      %v1358 = vadd.f32 %v869, %v1279
      %v1359 = vadd.f32 %v870, %v1282
      %v1360 = vadd.f32 %v871, %v1284
      %v1361 = vadd.f32 %v872, %v1287
      %v1362 = vadd.f32 %v873, %v1289
      %v1363 = vadd.f32 %v874, %v1292
      %v1364 = vadd.f32 %v875, %v1294
      %v1365 = vadd.f32 %v876, %v1297
      %v1366 = vadd.f32 %v877, %v1299
      %v1367 = vadd.f32 %v878, %v1302
      %v1368 = vadd.f32 %v879, %v1304
      %v1369 = vlaneseq
      %v1370 = vshrl.u32 %v1369, 7
      %v1371 = vsub.s32 2, %v1370
      %v1372 = vrot.slane %v738, %v1371
      %v1373 = vmul.f32 %v630, %v1372
      %v1374 = vmul.f32 %v631, %v1372
      %v1375 = vmul.f32 %v632, %v1372
      %v1376 = vmul.f32 %v633, %v1372
      %v1377 = vmul.f32 %v634, %v1372
      %v1378 = vmul.f32 %v635, %v1372
      %v1379 = vmul.f32 %v636, %v1372
      %v1380 = vmul.f32 %v637, %v1372
      %v1381 = vmul.f32 %v638, %v1372
      %v1382 = vmul.f32 %v639, %v1372
      %v1383 = vmul.f32 %v640, %v1372
      %v1384 = vmul.f32 %v641, %v1372
      %v1385 = vmul.f32 %v642, %v1372
      %v1386 = vmul.f32 %v643, %v1372
      %v1387 = vmul.f32 %v644, %v1372
      %v1388 = vmul.f32 %v645, %v1372
      %v1389 = vmul.f32 %v646, %v1372
      %v1390 = vmul.f32 %v647, %v1372
      %v1391 = vmul.f32 %v648, %v1372
      %v1392 = vmul.f32 %v649, %v1372
      %v1393 = vmul.f32 %v650, %v1372
      %v1394 = vmul.f32 %v651, %v1372
      %v1395 = vmul.f32 %v652, %v1372
      %v1396 = vmul.f32 %v653, %v1372
      %v1397 = vmul.f32 %v654, %v1372
      %v1398 = vmul.f32 %v655, %v1372
      %v1399 = vmul.f32 %v656, %v1372
      %v1400 = vmul.f32 %v657, %v1372
      %v1401 = vmul.f32 %v658, %v1372
      %v1402 = vmul.f32 %v659, %v1372
      %v1403 = vmul.f32 %v660, %v1372
      %v1404 = vmul.f32 %v661, %v1372
      %v1405 = vmul.f32 %v662, %v1372
      %v1406 = vmul.f32 %v663, %v1372
      %v1407 = vmul.f32 %v664, %v1372
      %v1408 = vmul.f32 %v665, %v1372
      %v1409 = vmul.f32 %v666, %v1372
      %v1410 = vmul.f32 %v667, %v1372
      %v1411 = vmul.f32 %v668, %v1372
      %v1412 = vmul.f32 %v669, %v1372
      %v1413 = vmul.f32 %v670, %v1372
      %v1414 = vmul.f32 %v671, %v1372
      %v1415 = vmul.f32 %v672, %v1372
      %v1416 = vmul.f32 %v673, %v1372
      %v1417 = vmul.f32 %v674, %v1372
      %v1418 = vmul.f32 %v675, %v1372
      %v1419 = vmul.f32 %v676, %v1372
      %v1420 = vmul.f32 %v677, %v1372
      %vm1469 = vcmask 1045504
      %v1470 = vrot.slane %v1373, 2
      %v1471 = vrot.slane %v1374, 2
      %v1472 = vsel %vm1469, %v1470, %v1471
      %v1473 = vrot.slane %v1375, 2
      %v1474 = vsel %vm1469, %v1471, %v1473
      %v1475 = vrot.slane %v1376, 2
      %v1476 = vrot.slane %v1377, 2
      %v1477 = vsel %vm1469, %v1475, %v1476
      %v1478 = vrot.slane %v1378, 2
      %v1479 = vsel %vm1469, %v1476, %v1478
      %v1480 = vrot.slane %v1379, 2
      %v1481 = vrot.slane %v1380, 2
      %v1482 = vsel %vm1469, %v1480, %v1481
      %v1483 = vrot.slane %v1381, 2
      %v1484 = vsel %vm1469, %v1481, %v1483
      %v1485 = vrot.slane %v1382, 2
      %v1486 = vrot.slane %v1383, 2
      %v1487 = vsel %vm1469, %v1485, %v1486
      %v1488 = vrot.slane %v1384, 2
      %v1489 = vsel %vm1469, %v1486, %v1488
      %v1490 = vrot.slane %v1385, 2
      %v1491 = vrot.slane %v1386, 2
      %v1492 = vsel %vm1469, %v1490, %v1491
      %v1493 = vrot.slane %v1387, 2
      %v1494 = vsel %vm1469, %v1491, %v1493
      %v1495 = vrot.slane %v1388, 2
      %v1496 = vrot.slane %v1389, 2
      %v1497 = vsel %vm1469, %v1495, %v1496
      %v1498 = vrot.slane %v1390, 2
      %v1499 = vsel %vm1469, %v1496, %v1498
      %v1500 = vrot.slane %v1391, 2
      %v1501 = vrot.slane %v1392, 2
      %v1502 = vsel %vm1469, %v1500, %v1501
      %v1503 = vrot.slane %v1393, 2
      %v1504 = vsel %vm1469, %v1501, %v1503
      %v1505 = vrot.slane %v1394, 2
      %v1506 = vrot.slane %v1395, 2
      %v1507 = vsel %vm1469, %v1505, %v1506
      %v1508 = vrot.slane %v1396, 2
      %v1509 = vsel %vm1469, %v1506, %v1508
      %v1510 = vrot.slane %v1397, 2
      %v1511 = vrot.slane %v1398, 2
      %v1512 = vsel %vm1469, %v1510, %v1511
      %v1513 = vrot.slane %v1399, 2
      %v1514 = vsel %vm1469, %v1511, %v1513
      %v1515 = vrot.slane %v1400, 2
      %v1516 = vrot.slane %v1401, 2
      %v1517 = vsel %vm1469, %v1515, %v1516
      %v1518 = vrot.slane %v1402, 2
      %v1519 = vsel %vm1469, %v1516, %v1518
      %v1520 = vrot.slane %v1403, 2
      %v1521 = vrot.slane %v1404, 2
      %v1522 = vsel %vm1469, %v1520, %v1521
      %v1523 = vrot.slane %v1405, 2
      %v1524 = vsel %vm1469, %v1521, %v1523
      %v1525 = vrot.slane %v1406, 2
      %v1526 = vrot.slane %v1407, 2
      %v1527 = vsel %vm1469, %v1525, %v1526
      %v1528 = vrot.slane %v1408, 2
      %v1529 = vsel %vm1469, %v1526, %v1528
      %v1530 = vrot.slane %v1409, 2
      %v1531 = vrot.slane %v1410, 2
      %v1532 = vsel %vm1469, %v1530, %v1531
      %v1533 = vrot.slane %v1411, 2
      %v1534 = vsel %vm1469, %v1531, %v1533
      %v1535 = vrot.slane %v1412, 2
      %v1536 = vrot.slane %v1413, 2
      %v1537 = vsel %vm1469, %v1535, %v1536
      %v1538 = vrot.slane %v1414, 2
      %v1539 = vsel %vm1469, %v1536, %v1538
      %v1540 = vrot.slane %v1415, 2
      %v1541 = vrot.slane %v1416, 2
      %v1542 = vsel %vm1469, %v1540, %v1541
      %v1543 = vrot.slane %v1417, 2
      %v1544 = vsel %vm1469, %v1541, %v1543
      %v1545 = vrot.slane %v1418, 2
      %v1546 = vrot.slane %v1419, 2
      %v1547 = vsel %vm1469, %v1545, %v1546
      %v1548 = vrot.slane %v1420, 2
      %v1549 = vsel %vm1469, %v1546, %v1548
      %v1582 = vadd.f32 %v1093, %v1472
      %v1583 = vadd.f32 %v1094, %v1474
      %v1584 = vadd.f32 %v1095, %v1477
      %v1585 = vadd.f32 %v1096, %v1479
      %v1586 = vadd.f32 %v1097, %v1482
      %v1587 = vadd.f32 %v1098, %v1484
      %v1588 = vadd.f32 %v1099, %v1487
      %v1589 = vadd.f32 %v1100, %v1489
      %v1590 = vadd.f32 %v1101, %v1492
      %v1591 = vadd.f32 %v1102, %v1494
      %v1592 = vadd.f32 %v1103, %v1497
      %v1593 = vadd.f32 %v1104, %v1499
      %v1594 = vadd.f32 %v1105, %v1502
      %v1595 = vadd.f32 %v1106, %v1504
      %v1596 = vadd.f32 %v1107, %v1507
      %v1597 = vadd.f32 %v1108, %v1509
      %v1598 = vadd.f32 %v1109, %v1512
      %v1599 = vadd.f32 %v1110, %v1514
      %v1600 = vadd.f32 %v1111, %v1517
      %v1601 = vadd.f32 %v1112, %v1519
      %v1602 = vadd.f32 %v1113, %v1522
      %v1603 = vadd.f32 %v1114, %v1524
      %v1604 = vadd.f32 %v1115, %v1527
      %v1605 = vadd.f32 %v1116, %v1529
      %v1606 = vadd.f32 %v1117, %v1532
      %v1607 = vadd.f32 %v1118, %v1534
      %v1608 = vadd.f32 %v1119, %v1537
      %v1609 = vadd.f32 %v1120, %v1539
      %v1610 = vadd.f32 %v1121, %v1542
      %v1611 = vadd.f32 %v1122, %v1544
      %v1612 = vadd.f32 %v1123, %v1547
      %v1613 = vadd.f32 %v1124, %v1549
      %v1614 = vlaneseq
      %v1615 = vshrl.u32 %v1614, 7
      %v1616 = vsub.s32 2, %v1615
      %v1617 = vrot.slane %v741, %v1616
      %v1618 = vmul.f32 %v684, %v1617
      %v1619 = vmul.f32 %v685, %v1617
      %v1620 = vmul.f32 %v686, %v1617
      %v1621 = vmul.f32 %v687, %v1617
      %v1622 = vmul.f32 %v688, %v1617
      %v1623 = vmul.f32 %v689, %v1617
      %v1624 = vmul.f32 %v690, %v1617
      %v1625 = vmul.f32 %v691, %v1617
      %v1626 = vmul.f32 %v692, %v1617
      %v1627 = vmul.f32 %v693, %v1617
      %v1628 = vmul.f32 %v694, %v1617
      %v1629 = vmul.f32 %v695, %v1617
      %v1630 = vmul.f32 %v696, %v1617
      %v1631 = vmul.f32 %v697, %v1617
      %v1632 = vmul.f32 %v698, %v1617
      %v1633 = vmul.f32 %v699, %v1617
      %v1634 = vmul.f32 %v700, %v1617
      %v1635 = vmul.f32 %v701, %v1617
      %v1636 = vmul.f32 %v702, %v1617
      %v1637 = vmul.f32 %v703, %v1617
      %v1638 = vmul.f32 %v704, %v1617
      %v1639 = vmul.f32 %v705, %v1617
      %v1640 = vmul.f32 %v706, %v1617
      %v1641 = vmul.f32 %v707, %v1617
      %v1642 = vmul.f32 %v708, %v1617
      %v1643 = vmul.f32 %v709, %v1617
      %v1644 = vmul.f32 %v710, %v1617
      %v1645 = vmul.f32 %v711, %v1617
      %v1646 = vmul.f32 %v712, %v1617
      %v1647 = vmul.f32 %v713, %v1617
      %v1648 = vmul.f32 %v714, %v1617
      %v1649 = vmul.f32 %v715, %v1617
      %v1650 = vmul.f32 %v716, %v1617
      %v1651 = vmul.f32 %v717, %v1617
      %v1652 = vmul.f32 %v718, %v1617
      %v1653 = vmul.f32 %v719, %v1617
      %v1654 = vmul.f32 %v720, %v1617
      %v1655 = vmul.f32 %v721, %v1617
      %v1656 = vmul.f32 %v722, %v1617
      %v1657 = vmul.f32 %v723, %v1617
      %v1658 = vmul.f32 %v724, %v1617
      %v1659 = vmul.f32 %v725, %v1617
      %v1660 = vmul.f32 %v726, %v1617
      %v1661 = vmul.f32 %v727, %v1617
      %v1662 = vmul.f32 %v728, %v1617
      %v1663 = vmul.f32 %v729, %v1617
      %v1664 = vmul.f32 %v730, %v1617
      %v1665 = vmul.f32 %v731, %v1617
      %v1714 = vrot.slane %v1618, 2
      %v1715 = vrot.slane %v1619, 2
      %v1716 = vsel %vm1469, %v1714, %v1715
      %v1717 = vrot.slane %v1620, 2
      %v1718 = vsel %vm1469, %v1715, %v1717
      %v1719 = vrot.slane %v1621, 2
      %v1720 = vrot.slane %v1622, 2
      %v1721 = vsel %vm1469, %v1719, %v1720
      %v1722 = vrot.slane %v1623, 2
      %v1723 = vsel %vm1469, %v1720, %v1722
      %v1724 = vrot.slane %v1624, 2
      %v1725 = vrot.slane %v1625, 2
      %v1726 = vsel %vm1469, %v1724, %v1725
      %v1727 = vrot.slane %v1626, 2
      %v1728 = vsel %vm1469, %v1725, %v1727
      %v1729 = vrot.slane %v1627, 2
      %v1730 = vrot.slane %v1628, 2
      %v1731 = vsel %vm1469, %v1729, %v1730
      %v1732 = vrot.slane %v1629, 2
      %v1733 = vsel %vm1469, %v1730, %v1732
      %v1734 = vrot.slane %v1630, 2
      %v1735 = vrot.slane %v1631, 2
      %v1736 = vsel %vm1469, %v1734, %v1735
      %v1737 = vrot.slane %v1632, 2
      %v1738 = vsel %vm1469, %v1735, %v1737
      %v1739 = vrot.slane %v1633, 2
      %v1740 = vrot.slane %v1634, 2
      %v1741 = vsel %vm1469, %v1739, %v1740
      %v1742 = vrot.slane %v1635, 2
      %v1743 = vsel %vm1469, %v1740, %v1742
      %v1744 = vrot.slane %v1636, 2
      %v1745 = vrot.slane %v1637, 2
      %v1746 = vsel %vm1469, %v1744, %v1745
      %v1747 = vrot.slane %v1638, 2
      %v1748 = vsel %vm1469, %v1745, %v1747
      %v1749 = vrot.slane %v1639, 2
      %v1750 = vrot.slane %v1640, 2
      %v1751 = vsel %vm1469, %v1749, %v1750
      %v1752 = vrot.slane %v1641, 2
      %v1753 = vsel %vm1469, %v1750, %v1752
      %v1754 = vrot.slane %v1642, 2
      %v1755 = vrot.slane %v1643, 2
      %v1756 = vsel %vm1469, %v1754, %v1755
      %v1757 = vrot.slane %v1644, 2
      %v1758 = vsel %vm1469, %v1755, %v1757
      %v1759 = vrot.slane %v1645, 2
      %v1760 = vrot.slane %v1646, 2
      %v1761 = vsel %vm1469, %v1759, %v1760
      %v1762 = vrot.slane %v1647, 2
      %v1763 = vsel %vm1469, %v1760, %v1762
      %v1764 = vrot.slane %v1648, 2
      %v1765 = vrot.slane %v1649, 2
      %v1766 = vsel %vm1469, %v1764, %v1765
      %v1767 = vrot.slane %v1650, 2
      %v1768 = vsel %vm1469, %v1765, %v1767
      %v1769 = vrot.slane %v1651, 2
      %v1770 = vrot.slane %v1652, 2
      %v1771 = vsel %vm1469, %v1769, %v1770
      %v1772 = vrot.slane %v1653, 2
      %v1773 = vsel %vm1469, %v1770, %v1772
      %v1774 = vrot.slane %v1654, 2
      %v1775 = vrot.slane %v1655, 2
      %v1776 = vsel %vm1469, %v1774, %v1775
      %v1777 = vrot.slane %v1656, 2
      %v1778 = vsel %vm1469, %v1775, %v1777
      %v1779 = vrot.slane %v1657, 2
      %v1780 = vrot.slane %v1658, 2
      %v1781 = vsel %vm1469, %v1779, %v1780
      %v1782 = vrot.slane %v1659, 2
      %v1783 = vsel %vm1469, %v1780, %v1782
      %v1784 = vrot.slane %v1660, 2
      %v1785 = vrot.slane %v1661, 2
      %v1786 = vsel %vm1469, %v1784, %v1785
      %v1787 = vrot.slane %v1662, 2
      %v1788 = vsel %vm1469, %v1785, %v1787
      %v1789 = vrot.slane %v1663, 2
      %v1790 = vrot.slane %v1664, 2
      %v1791 = vsel %vm1469, %v1789, %v1790
      %v1792 = vrot.slane %v1665, 2
      %v1793 = vsel %vm1469, %v1790, %v1792
      %v1826 = vadd.f32 %v1337, %v1716
      %v1827 = vadd.f32 %v1338, %v1718
      %v1828 = vadd.f32 %v1339, %v1721
      %v1829 = vadd.f32 %v1340, %v1723
      %v1830 = vadd.f32 %v1341, %v1726
      %v1831 = vadd.f32 %v1342, %v1728
      %v1832 = vadd.f32 %v1343, %v1731
      %v1833 = vadd.f32 %v1344, %v1733
      %v1834 = vadd.f32 %v1345, %v1736
      %v1835 = vadd.f32 %v1346, %v1738
      %v1836 = vadd.f32 %v1347, %v1741
      %v1837 = vadd.f32 %v1348, %v1743
      %v1838 = vadd.f32 %v1349, %v1746
      %v1839 = vadd.f32 %v1350, %v1748
      %v1840 = vadd.f32 %v1351, %v1751
      %v1841 = vadd.f32 %v1352, %v1753
      %v1842 = vadd.f32 %v1353, %v1756
      %v1843 = vadd.f32 %v1354, %v1758
      %v1844 = vadd.f32 %v1355, %v1761
      %v1845 = vadd.f32 %v1356, %v1763
      %v1846 = vadd.f32 %v1357, %v1766
      %v1847 = vadd.f32 %v1358, %v1768
      %v1848 = vadd.f32 %v1359, %v1771
      %v1849 = vadd.f32 %v1360, %v1773
      %v1850 = vadd.f32 %v1361, %v1776
      %v1851 = vadd.f32 %v1362, %v1778
      %v1852 = vadd.f32 %v1363, %v1781
      %v1853 = vadd.f32 %v1364, %v1783
      %v1854 = vadd.f32 %v1365, %v1786
      %v1855 = vadd.f32 %v1366, %v1788
      %v1856 = vadd.f32 %v1367, %v1791
      %v1857 = vadd.f32 %v1368, %v1793
      %v1858 = vlaneseq
      %v1859 = vshrl.u32 %v1858, 7
      %v1860 = vsub.s32 0, %v1859
      %v1861 = vrot.slane %v739, %v1860
      %v1862 = vmul.f32 %v633, %v1861
      %v1863 = vmul.f32 %v634, %v1861
      %v1864 = vmul.f32 %v636, %v1861
      %v1865 = vmul.f32 %v637, %v1861
      %v1866 = vmul.f32 %v639, %v1861
      %v1867 = vmul.f32 %v640, %v1861
      %v1868 = vmul.f32 %v642, %v1861
      %v1869 = vmul.f32 %v643, %v1861
      %v1870 = vmul.f32 %v645, %v1861
      %v1871 = vmul.f32 %v646, %v1861
      %v1872 = vmul.f32 %v648, %v1861
      %v1873 = vmul.f32 %v649, %v1861
      %v1874 = vmul.f32 %v651, %v1861
      %v1875 = vmul.f32 %v652, %v1861
      %v1876 = vmul.f32 %v654, %v1861
      %v1877 = vmul.f32 %v655, %v1861
      %v1878 = vmul.f32 %v657, %v1861
      %v1879 = vmul.f32 %v658, %v1861
      %v1880 = vmul.f32 %v660, %v1861
      %v1881 = vmul.f32 %v661, %v1861
      %v1882 = vmul.f32 %v663, %v1861
      %v1883 = vmul.f32 %v664, %v1861
      %v1884 = vmul.f32 %v666, %v1861
      %v1885 = vmul.f32 %v667, %v1861
      %v1886 = vmul.f32 %v669, %v1861
      %v1887 = vmul.f32 %v670, %v1861
      %v1888 = vmul.f32 %v672, %v1861
      %v1889 = vmul.f32 %v673, %v1861
      %v1890 = vmul.f32 %v675, %v1861
      %v1891 = vmul.f32 %v676, %v1861
      %v1892 = vmul.f32 %v678, %v1861
      %v1893 = vmul.f32 %v679, %v1861
      %v1894 = vadd.f32 %v1582, %v1862
      %v1895 = vadd.f32 %v1583, %v1863
      %v1896 = vadd.f32 %v1584, %v1864
      %v1897 = vadd.f32 %v1585, %v1865
      %v1898 = vadd.f32 %v1586, %v1866
      %v1899 = vadd.f32 %v1587, %v1867
      %v1900 = vadd.f32 %v1588, %v1868
      %v1901 = vadd.f32 %v1589, %v1869
      %v1902 = vadd.f32 %v1590, %v1870
      %v1903 = vadd.f32 %v1591, %v1871
      %v1904 = vadd.f32 %v1592, %v1872
      %v1905 = vadd.f32 %v1593, %v1873
      %v1906 = vadd.f32 %v1594, %v1874
      %v1907 = vadd.f32 %v1595, %v1875
      %v1908 = vadd.f32 %v1596, %v1876
      %v1909 = vadd.f32 %v1597, %v1877
      %v1910 = vadd.f32 %v1598, %v1878
      %v1911 = vadd.f32 %v1599, %v1879
      %v1912 = vadd.f32 %v1600, %v1880
      %v1913 = vadd.f32 %v1601, %v1881
      %v1914 = vadd.f32 %v1602, %v1882
      %v1915 = vadd.f32 %v1603, %v1883
      %v1916 = vadd.f32 %v1604, %v1884
      %v1917 = vadd.f32 %v1605, %v1885
      %v1918 = vadd.f32 %v1606, %v1886
      %v1919 = vadd.f32 %v1607, %v1887
      %v1920 = vadd.f32 %v1608, %v1888
      %v1921 = vadd.f32 %v1609, %v1889
      %v1922 = vadd.f32 %v1610, %v1890
      %v1923 = vadd.f32 %v1611, %v1891
      %v1924 = vadd.f32 %v1612, %v1892
      %v1925 = vadd.f32 %v1613, %v1893
      %v1926 = vlaneseq
      %v1927 = vshrl.u32 %v1926, 7
      %v1928 = vsub.s32 0, %v1927
      %v1929 = vrot.slane %v742, %v1928
      %v1930 = vmul.f32 %v687, %v1929
      %v1931 = vmul.f32 %v688, %v1929
      %v1932 = vmul.f32 %v690, %v1929
      %v1933 = vmul.f32 %v691, %v1929
      %v1934 = vmul.f32 %v693, %v1929
      %v1935 = vmul.f32 %v694, %v1929
      %v1936 = vmul.f32 %v696, %v1929
      %v1937 = vmul.f32 %v697, %v1929
      %v1938 = vmul.f32 %v699, %v1929
      %v1939 = vmul.f32 %v700, %v1929
      %v1940 = vmul.f32 %v702, %v1929
      %v1941 = vmul.f32 %v703, %v1929
      %v1942 = vmul.f32 %v705, %v1929
      %v1943 = vmul.f32 %v706, %v1929
      %v1944 = vmul.f32 %v708, %v1929
      %v1945 = vmul.f32 %v709, %v1929
      %v1946 = vmul.f32 %v711, %v1929
      %v1947 = vmul.f32 %v712, %v1929
      %v1948 = vmul.f32 %v714, %v1929
      %v1949 = vmul.f32 %v715, %v1929
      %v1950 = vmul.f32 %v717, %v1929
      %v1951 = vmul.f32 %v718, %v1929
      %v1952 = vmul.f32 %v720, %v1929
      %v1953 = vmul.f32 %v721, %v1929
      %v1954 = vmul.f32 %v723, %v1929
      %v1955 = vmul.f32 %v724, %v1929
      %v1956 = vmul.f32 %v726, %v1929
      %v1957 = vmul.f32 %v727, %v1929
      %v1958 = vmul.f32 %v729, %v1929
      %v1959 = vmul.f32 %v730, %v1929
      %v1960 = vmul.f32 %v732, %v1929
      %v1961 = vmul.f32 %v733, %v1929
      %v1962 = vadd.f32 %v1826, %v1930
      %v1963 = vadd.f32 %v1827, %v1931
      %v1964 = vadd.f32 %v1828, %v1932
      %v1965 = vadd.f32 %v1829, %v1933
      %v1966 = vadd.f32 %v1830, %v1934
      %v1967 = vadd.f32 %v1831, %v1935
      %v1968 = vadd.f32 %v1832, %v1936
      %v1969 = vadd.f32 %v1833, %v1937
      %v1970 = vadd.f32 %v1834, %v1938
      %v1971 = vadd.f32 %v1835, %v1939
      %v1972 = vadd.f32 %v1836, %v1940
      %v1973 = vadd.f32 %v1837, %v1941
      %v1974 = vadd.f32 %v1838, %v1942
      %v1975 = vadd.f32 %v1839, %v1943
      %v1976 = vadd.f32 %v1840, %v1944
      %v1977 = vadd.f32 %v1841, %v1945
      %v1978 = vadd.f32 %v1842, %v1946
      %v1979 = vadd.f32 %v1843, %v1947
      %v1980 = vadd.f32 %v1844, %v1948
      %v1981 = vadd.f32 %v1845, %v1949
      %v1982 = vadd.f32 %v1846, %v1950
      %v1983 = vadd.f32 %v1847, %v1951
      %v1984 = vadd.f32 %v1848, %v1952
      %v1985 = vadd.f32 %v1849, %v1953
      %v1986 = vadd.f32 %v1850, %v1954
      %v1987 = vadd.f32 %v1851, %v1955
      %v1988 = vadd.f32 %v1852, %v1956
      %v1989 = vadd.f32 %v1853, %v1957
      %v1990 = vadd.f32 %v1854, %v1958
      %v1991 = vadd.f32 %v1855, %v1959
      %v1992 = vadd.f32 %v1856, %v1960
      %v1993 = vadd.f32 %v1857, %v1961
      %v1994 = vlaneseq
      %v1995 = vshrl.u32 %v1994, 7
      %v1996 = vsub.s32 1, %v1995
      %v1997 = vrot.slane %v739, %v1996
      %v1998 = vmul.f32 %v633, %v1997
      %v1999 = vmul.f32 %v634, %v1997
      %v2000 = vmul.f32 %v635, %v1997
      %v2001 = vmul.f32 %v636, %v1997
      %v2002 = vmul.f32 %v637, %v1997
      %v2003 = vmul.f32 %v638, %v1997
      %v2004 = vmul.f32 %v639, %v1997
      %v2005 = vmul.f32 %v640, %v1997
      %v2006 = vmul.f32 %v641, %v1997
      %v2007 = vmul.f32 %v642, %v1997
      %v2008 = vmul.f32 %v643, %v1997
      %v2009 = vmul.f32 %v644, %v1997
      %v2010 = vmul.f32 %v645, %v1997
      %v2011 = vmul.f32 %v646, %v1997
      %v2012 = vmul.f32 %v647, %v1997
      %v2013 = vmul.f32 %v648, %v1997
      %v2014 = vmul.f32 %v649, %v1997
      %v2015 = vmul.f32 %v650, %v1997
      %v2016 = vmul.f32 %v651, %v1997
      %v2017 = vmul.f32 %v652, %v1997
      %v2018 = vmul.f32 %v653, %v1997
      %v2019 = vmul.f32 %v654, %v1997
      %v2020 = vmul.f32 %v655, %v1997
      %v2021 = vmul.f32 %v656, %v1997
      %v2022 = vmul.f32 %v657, %v1997
      %v2023 = vmul.f32 %v658, %v1997
      %v2024 = vmul.f32 %v659, %v1997
      %v2025 = vmul.f32 %v660, %v1997
      %v2026 = vmul.f32 %v661, %v1997
      %v2027 = vmul.f32 %v662, %v1997
      %v2028 = vmul.f32 %v663, %v1997
      %v2029 = vmul.f32 %v664, %v1997
      %v2030 = vmul.f32 %v665, %v1997
      %v2031 = vmul.f32 %v666, %v1997
      %v2032 = vmul.f32 %v667, %v1997
      %v2033 = vmul.f32 %v668, %v1997
      %v2034 = vmul.f32 %v669, %v1997
      %v2035 = vmul.f32 %v670, %v1997
      %v2036 = vmul.f32 %v671, %v1997
      %v2037 = vmul.f32 %v672, %v1997
      %v2038 = vmul.f32 %v673, %v1997
      %v2039 = vmul.f32 %v674, %v1997
      %v2040 = vmul.f32 %v675, %v1997
      %v2041 = vmul.f32 %v676, %v1997
      %v2042 = vmul.f32 %v677, %v1997
      %v2043 = vmul.f32 %v678, %v1997
      %v2044 = vmul.f32 %v679, %v1997
      %v2045 = vmul.f32 %v680, %v1997
      %v2094 = vrot.slane %v1998, 1
      %v2095 = vrot.slane %v1999, 1
      %v2096 = vsel %vm980, %v2094, %v2095
      %v2097 = vrot.slane %v2000, 1
      %v2098 = vsel %vm980, %v2095, %v2097
      %v2099 = vrot.slane %v2001, 1
      %v2100 = vrot.slane %v2002, 1
      %v2101 = vsel %vm980, %v2099, %v2100
      %v2102 = vrot.slane %v2003, 1
      %v2103 = vsel %vm980, %v2100, %v2102
      %v2104 = vrot.slane %v2004, 1
      %v2105 = vrot.slane %v2005, 1
      %v2106 = vsel %vm980, %v2104, %v2105
      %v2107 = vrot.slane %v2006, 1
      %v2108 = vsel %vm980, %v2105, %v2107
      %v2109 = vrot.slane %v2007, 1
      %v2110 = vrot.slane %v2008, 1
      %v2111 = vsel %vm980, %v2109, %v2110
      %v2112 = vrot.slane %v2009, 1
      %v2113 = vsel %vm980, %v2110, %v2112
      %v2114 = vrot.slane %v2010, 1
      %v2115 = vrot.slane %v2011, 1
      %v2116 = vsel %vm980, %v2114, %v2115
      %v2117 = vrot.slane %v2012, 1
      %v2118 = vsel %vm980, %v2115, %v2117
      %v2119 = vrot.slane %v2013, 1
      %v2120 = vrot.slane %v2014, 1
      %v2121 = vsel %vm980, %v2119, %v2120
      %v2122 = vrot.slane %v2015, 1
      %v2123 = vsel %vm980, %v2120, %v2122
      %v2124 = vrot.slane %v2016, 1
      %v2125 = vrot.slane %v2017, 1
      %v2126 = vsel %vm980, %v2124, %v2125
      %v2127 = vrot.slane %v2018, 1
      %v2128 = vsel %vm980, %v2125, %v2127
      %v2129 = vrot.slane %v2019, 1
      %v2130 = vrot.slane %v2020, 1
      %v2131 = vsel %vm980, %v2129, %v2130
      %v2132 = vrot.slane %v2021, 1
      %v2133 = vsel %vm980, %v2130, %v2132
      %v2134 = vrot.slane %v2022, 1
      %v2135 = vrot.slane %v2023, 1
      %v2136 = vsel %vm980, %v2134, %v2135
      %v2137 = vrot.slane %v2024, 1
      %v2138 = vsel %vm980, %v2135, %v2137
      %v2139 = vrot.slane %v2025, 1
      %v2140 = vrot.slane %v2026, 1
      %v2141 = vsel %vm980, %v2139, %v2140
      %v2142 = vrot.slane %v2027, 1
      %v2143 = vsel %vm980, %v2140, %v2142
      %v2144 = vrot.slane %v2028, 1
      %v2145 = vrot.slane %v2029, 1
      %v2146 = vsel %vm980, %v2144, %v2145
      %v2147 = vrot.slane %v2030, 1
      %v2148 = vsel %vm980, %v2145, %v2147
      %v2149 = vrot.slane %v2031, 1
      %v2150 = vrot.slane %v2032, 1
      %v2151 = vsel %vm980, %v2149, %v2150
      %v2152 = vrot.slane %v2033, 1
      %v2153 = vsel %vm980, %v2150, %v2152
      %v2154 = vrot.slane %v2034, 1
      %v2155 = vrot.slane %v2035, 1
      %v2156 = vsel %vm980, %v2154, %v2155
      %v2157 = vrot.slane %v2036, 1
      %v2158 = vsel %vm980, %v2155, %v2157
      %v2159 = vrot.slane %v2037, 1
      %v2160 = vrot.slane %v2038, 1
      %v2161 = vsel %vm980, %v2159, %v2160
      %v2162 = vrot.slane %v2039, 1
      %v2163 = vsel %vm980, %v2160, %v2162
      %v2164 = vrot.slane %v2040, 1
      %v2165 = vrot.slane %v2041, 1
      %v2166 = vsel %vm980, %v2164, %v2165
      %v2167 = vrot.slane %v2042, 1
      %v2168 = vsel %vm980, %v2165, %v2167
      %v2169 = vrot.slane %v2043, 1
      %v2170 = vrot.slane %v2044, 1
      %v2171 = vsel %vm980, %v2169, %v2170
      %v2172 = vrot.slane %v2045, 1
      %v2173 = vsel %vm980, %v2170, %v2172
      %v2206 = vadd.f32 %v1894, %v2096
      %v2207 = vadd.f32 %v1895, %v2098
      %v2208 = vadd.f32 %v1896, %v2101
      %v2209 = vadd.f32 %v1897, %v2103
      %v2210 = vadd.f32 %v1898, %v2106
      %v2211 = vadd.f32 %v1899, %v2108
      %v2212 = vadd.f32 %v1900, %v2111
      %v2213 = vadd.f32 %v1901, %v2113
      %v2214 = vadd.f32 %v1902, %v2116
      %v2215 = vadd.f32 %v1903, %v2118
      %v2216 = vadd.f32 %v1904, %v2121
      %v2217 = vadd.f32 %v1905, %v2123
      %v2218 = vadd.f32 %v1906, %v2126
      %v2219 = vadd.f32 %v1907, %v2128
      %v2220 = vadd.f32 %v1908, %v2131
      %v2221 = vadd.f32 %v1909, %v2133
      %v2222 = vadd.f32 %v1910, %v2136
      %v2223 = vadd.f32 %v1911, %v2138
      %v2224 = vadd.f32 %v1912, %v2141
      %v2225 = vadd.f32 %v1913, %v2143
      %v2226 = vadd.f32 %v1914, %v2146
      %v2227 = vadd.f32 %v1915, %v2148
      %v2228 = vadd.f32 %v1916, %v2151
      %v2229 = vadd.f32 %v1917, %v2153
      %v2230 = vadd.f32 %v1918, %v2156
      %v2231 = vadd.f32 %v1919, %v2158
      %v2232 = vadd.f32 %v1920, %v2161
      %v2233 = vadd.f32 %v1921, %v2163
      %v2234 = vadd.f32 %v1922, %v2166
      %v2235 = vadd.f32 %v1923, %v2168
      %v2236 = vadd.f32 %v1924, %v2171
      %v2237 = vadd.f32 %v1925, %v2173
      %v2238 = vlaneseq
      %v2239 = vshrl.u32 %v2238, 7
      %v2240 = vsub.s32 1, %v2239
      %v2241 = vrot.slane %v742, %v2240
      %v2242 = vmul.f32 %v687, %v2241
      %v2243 = vmul.f32 %v688, %v2241
      %v2244 = vmul.f32 %v689, %v2241
      %v2245 = vmul.f32 %v690, %v2241
      %v2246 = vmul.f32 %v691, %v2241
      %v2247 = vmul.f32 %v692, %v2241
      %v2248 = vmul.f32 %v693, %v2241
      %v2249 = vmul.f32 %v694, %v2241
      %v2250 = vmul.f32 %v695, %v2241
      %v2251 = vmul.f32 %v696, %v2241
      %v2252 = vmul.f32 %v697, %v2241
      %v2253 = vmul.f32 %v698, %v2241
      %v2254 = vmul.f32 %v699, %v2241
      %v2255 = vmul.f32 %v700, %v2241
      %v2256 = vmul.f32 %v701, %v2241
      %v2257 = vmul.f32 %v702, %v2241
      %v2258 = vmul.f32 %v703, %v2241
      %v2259 = vmul.f32 %v704, %v2241
      %v2260 = vmul.f32 %v705, %v2241
      %v2261 = vmul.f32 %v706, %v2241
      %v2262 = vmul.f32 %v707, %v2241
      %v2263 = vmul.f32 %v708, %v2241
      %v2264 = vmul.f32 %v709, %v2241
      %v2265 = vmul.f32 %v710, %v2241
      %v2266 = vmul.f32 %v711, %v2241
      %v2267 = vmul.f32 %v712, %v2241
      %v2268 = vmul.f32 %v713, %v2241
      %v2269 = vmul.f32 %v714, %v2241
      %v2270 = vmul.f32 %v715, %v2241
      %v2271 = vmul.f32 %v716, %v2241
      %v2272 = vmul.f32 %v717, %v2241
      %v2273 = vmul.f32 %v718, %v2241
      %v2274 = vmul.f32 %v719, %v2241
      %v2275 = vmul.f32 %v720, %v2241
      %v2276 = vmul.f32 %v721, %v2241
      %v2277 = vmul.f32 %v722, %v2241
      %v2278 = vmul.f32 %v723, %v2241
      %v2279 = vmul.f32 %v724, %v2241
      %v2280 = vmul.f32 %v725, %v2241
      %v2281 = vmul.f32 %v726, %v2241
      %v2282 = vmul.f32 %v727, %v2241
      %v2283 = vmul.f32 %v728, %v2241
      %v2284 = vmul.f32 %v729, %v2241
      %v2285 = vmul.f32 %v730, %v2241
      %v2286 = vmul.f32 %v731, %v2241
      %v2287 = vmul.f32 %v732, %v2241
      %v2288 = vmul.f32 %v733, %v2241
      %v2289 = vmul.f32 %v734, %v2241
      %v2338 = vrot.slane %v2242, 1
      %v2339 = vrot.slane %v2243, 1
      %v2340 = vsel %vm980, %v2338, %v2339
      %v2341 = vrot.slane %v2244, 1
      %v2342 = vsel %vm980, %v2339, %v2341
      %v2343 = vrot.slane %v2245, 1
      %v2344 = vrot.slane %v2246, 1
      %v2345 = vsel %vm980, %v2343, %v2344
      %v2346 = vrot.slane %v2247, 1
      %v2347 = vsel %vm980, %v2344, %v2346
      %v2348 = vrot.slane %v2248, 1
      %v2349 = vrot.slane %v2249, 1
      %v2350 = vsel %vm980, %v2348, %v2349
      %v2351 = vrot.slane %v2250, 1
      %v2352 = vsel %vm980, %v2349, %v2351
      %v2353 = vrot.slane %v2251, 1
      %v2354 = vrot.slane %v2252, 1
      %v2355 = vsel %vm980, %v2353, %v2354
      %v2356 = vrot.slane %v2253, 1
      %v2357 = vsel %vm980, %v2354, %v2356
      %v2358 = vrot.slane %v2254, 1
      %v2359 = vrot.slane %v2255, 1
      %v2360 = vsel %vm980, %v2358, %v2359
      %v2361 = vrot.slane %v2256, 1
      %v2362 = vsel %vm980, %v2359, %v2361
      %v2363 = vrot.slane %v2257, 1
      %v2364 = vrot.slane %v2258, 1
      %v2365 = vsel %vm980, %v2363, %v2364
      %v2366 = vrot.slane %v2259, 1
      %v2367 = vsel %vm980, %v2364, %v2366
      %v2368 = vrot.slane %v2260, 1
      %v2369 = vrot.slane %v2261, 1
      %v2370 = vsel %vm980, %v2368, %v2369
      %v2371 = vrot.slane %v2262, 1
      %v2372 = vsel %vm980, %v2369, %v2371
      %v2373 = vrot.slane %v2263, 1
      %v2374 = vrot.slane %v2264, 1
      %v2375 = vsel %vm980, %v2373, %v2374
      %v2376 = vrot.slane %v2265, 1
      %v2377 = vsel %vm980, %v2374, %v2376
      %v2378 = vrot.slane %v2266, 1
      %v2379 = vrot.slane %v2267, 1
      %v2380 = vsel %vm980, %v2378, %v2379
      %v2381 = vrot.slane %v2268, 1
      %v2382 = vsel %vm980, %v2379, %v2381
      %v2383 = vrot.slane %v2269, 1
      %v2384 = vrot.slane %v2270, 1
      %v2385 = vsel %vm980, %v2383, %v2384
      %v2386 = vrot.slane %v2271, 1
      %v2387 = vsel %vm980, %v2384, %v2386
      %v2388 = vrot.slane %v2272, 1
      %v2389 = vrot.slane %v2273, 1
      %v2390 = vsel %vm980, %v2388, %v2389
      %v2391 = vrot.slane %v2274, 1
      %v2392 = vsel %vm980, %v2389, %v2391
      %v2393 = vrot.slane %v2275, 1
      %v2394 = vrot.slane %v2276, 1
      %v2395 = vsel %vm980, %v2393, %v2394
      %v2396 = vrot.slane %v2277, 1
      %v2397 = vsel %vm980, %v2394, %v2396
      %v2398 = vrot.slane %v2278, 1
      %v2399 = vrot.slane %v2279, 1
      %v2400 = vsel %vm980, %v2398, %v2399
      %v2401 = vrot.slane %v2280, 1
      %v2402 = vsel %vm980, %v2399, %v2401
      %v2403 = vrot.slane %v2281, 1
      %v2404 = vrot.slane %v2282, 1
      %v2405 = vsel %vm980, %v2403, %v2404
      %v2406 = vrot.slane %v2283, 1
      %v2407 = vsel %vm980, %v2404, %v2406
      %v2408 = vrot.slane %v2284, 1
      %v2409 = vrot.slane %v2285, 1
      %v2410 = vsel %vm980, %v2408, %v2409
      %v2411 = vrot.slane %v2286, 1
      %v2412 = vsel %vm980, %v2409, %v2411
      %v2413 = vrot.slane %v2287, 1
      %v2414 = vrot.slane %v2288, 1
      %v2415 = vsel %vm980, %v2413, %v2414
      %v2416 = vrot.slane %v2289, 1
      %v2417 = vsel %vm980, %v2414, %v2416
      %v2450 = vadd.f32 %v1962, %v2340
      %v2451 = vadd.f32 %v1963, %v2342
      %v2452 = vadd.f32 %v1964, %v2345
      %v2453 = vadd.f32 %v1965, %v2347
      %v2454 = vadd.f32 %v1966, %v2350
      %v2455 = vadd.f32 %v1967, %v2352
      %v2456 = vadd.f32 %v1968, %v2355
      %v2457 = vadd.f32 %v1969, %v2357
      %v2458 = vadd.f32 %v1970, %v2360
      %v2459 = vadd.f32 %v1971, %v2362
      %v2460 = vadd.f32 %v1972, %v2365
      %v2461 = vadd.f32 %v1973, %v2367
      %v2462 = vadd.f32 %v1974, %v2370
      %v2463 = vadd.f32 %v1975, %v2372
      %v2464 = vadd.f32 %v1976, %v2375
      %v2465 = vadd.f32 %v1977, %v2377
      %v2466 = vadd.f32 %v1978, %v2380
      %v2467 = vadd.f32 %v1979, %v2382
      %v2468 = vadd.f32 %v1980, %v2385
      %v2469 = vadd.f32 %v1981, %v2387
      %v2470 = vadd.f32 %v1982, %v2390
      %v2471 = vadd.f32 %v1983, %v2392
      %v2472 = vadd.f32 %v1984, %v2395
      %v2473 = vadd.f32 %v1985, %v2397
      %v2474 = vadd.f32 %v1986, %v2400
      %v2475 = vadd.f32 %v1987, %v2402
      %v2476 = vadd.f32 %v1988, %v2405
      %v2477 = vadd.f32 %v1989, %v2407
      %v2478 = vadd.f32 %v1990, %v2410
      %v2479 = vadd.f32 %v1991, %v2412
      %v2480 = vadd.f32 %v1992, %v2415
      %v2481 = vadd.f32 %v1993, %v2417
      %v2482 = vlaneseq
      %v2483 = vshrl.u32 %v2482, 7
      %v2484 = vsub.s32 2, %v2483
      %v2485 = vrot.slane %v739, %v2484
      %v2486 = vmul.f32 %v633, %v2485
      %v2487 = vmul.f32 %v634, %v2485
      %v2488 = vmul.f32 %v635, %v2485
      %v2489 = vmul.f32 %v636, %v2485
      %v2490 = vmul.f32 %v637, %v2485
      %v2491 = vmul.f32 %v638, %v2485
      %v2492 = vmul.f32 %v639, %v2485
      %v2493 = vmul.f32 %v640, %v2485
      %v2494 = vmul.f32 %v641, %v2485
      %v2495 = vmul.f32 %v642, %v2485
      %v2496 = vmul.f32 %v643, %v2485
      %v2497 = vmul.f32 %v644, %v2485
      %v2498 = vmul.f32 %v645, %v2485
      %v2499 = vmul.f32 %v646, %v2485
      %v2500 = vmul.f32 %v647, %v2485
      %v2501 = vmul.f32 %v648, %v2485
      %v2502 = vmul.f32 %v649, %v2485
      %v2503 = vmul.f32 %v650, %v2485
      %v2504 = vmul.f32 %v651, %v2485
      %v2505 = vmul.f32 %v652, %v2485
      %v2506 = vmul.f32 %v653, %v2485
      %v2507 = vmul.f32 %v654, %v2485
      %v2508 = vmul.f32 %v655, %v2485
      %v2509 = vmul.f32 %v656, %v2485
      %v2510 = vmul.f32 %v657, %v2485
      %v2511 = vmul.f32 %v658, %v2485
      %v2512 = vmul.f32 %v659, %v2485
      %v2513 = vmul.f32 %v660, %v2485
      %v2514 = vmul.f32 %v661, %v2485
      %v2515 = vmul.f32 %v662, %v2485
      %v2516 = vmul.f32 %v663, %v2485
      %v2517 = vmul.f32 %v664, %v2485
      %v2518 = vmul.f32 %v665, %v2485
      %v2519 = vmul.f32 %v666, %v2485
      %v2520 = vmul.f32 %v667, %v2485
      %v2521 = vmul.f32 %v668, %v2485
      %v2522 = vmul.f32 %v669, %v2485
      %v2523 = vmul.f32 %v670, %v2485
      %v2524 = vmul.f32 %v671, %v2485
      %v2525 = vmul.f32 %v672, %v2485
      %v2526 = vmul.f32 %v673, %v2485
      %v2527 = vmul.f32 %v674, %v2485
      %v2528 = vmul.f32 %v675, %v2485
      %v2529 = vmul.f32 %v676, %v2485
      %v2530 = vmul.f32 %v677, %v2485
      %v2531 = vmul.f32 %v678, %v2485
      %v2532 = vmul.f32 %v679, %v2485
      %v2533 = vmul.f32 %v680, %v2485
      %v2582 = vrot.slane %v2486, 2
      %v2583 = vrot.slane %v2487, 2
      %v2584 = vsel %vm1469, %v2582, %v2583
      %v2585 = vrot.slane %v2488, 2
      %v2586 = vsel %vm1469, %v2583, %v2585
      %v2587 = vrot.slane %v2489, 2
      %v2588 = vrot.slane %v2490, 2
      %v2589 = vsel %vm1469, %v2587, %v2588
      %v2590 = vrot.slane %v2491, 2
      %v2591 = vsel %vm1469, %v2588, %v2590
      %v2592 = vrot.slane %v2492, 2
      %v2593 = vrot.slane %v2493, 2
      %v2594 = vsel %vm1469, %v2592, %v2593
      %v2595 = vrot.slane %v2494, 2
      %v2596 = vsel %vm1469, %v2593, %v2595
      %v2597 = vrot.slane %v2495, 2
      %v2598 = vrot.slane %v2496, 2
      %v2599 = vsel %vm1469, %v2597, %v2598
      %v2600 = vrot.slane %v2497, 2
      %v2601 = vsel %vm1469, %v2598, %v2600
      %v2602 = vrot.slane %v2498, 2
      %v2603 = vrot.slane %v2499, 2
      %v2604 = vsel %vm1469, %v2602, %v2603
      %v2605 = vrot.slane %v2500, 2
      %v2606 = vsel %vm1469, %v2603, %v2605
      %v2607 = vrot.slane %v2501, 2
      %v2608 = vrot.slane %v2502, 2
      %v2609 = vsel %vm1469, %v2607, %v2608
      %v2610 = vrot.slane %v2503, 2
      %v2611 = vsel %vm1469, %v2608, %v2610
      %v2612 = vrot.slane %v2504, 2
      %v2613 = vrot.slane %v2505, 2
      %v2614 = vsel %vm1469, %v2612, %v2613
      %v2615 = vrot.slane %v2506, 2
      %v2616 = vsel %vm1469, %v2613, %v2615
      %v2617 = vrot.slane %v2507, 2
      %v2618 = vrot.slane %v2508, 2
      %v2619 = vsel %vm1469, %v2617, %v2618
      %v2620 = vrot.slane %v2509, 2
      %v2621 = vsel %vm1469, %v2618, %v2620
      %v2622 = vrot.slane %v2510, 2
      %v2623 = vrot.slane %v2511, 2
      %v2624 = vsel %vm1469, %v2622, %v2623
      %v2625 = vrot.slane %v2512, 2
      %v2626 = vsel %vm1469, %v2623, %v2625
      %v2627 = vrot.slane %v2513, 2
      %v2628 = vrot.slane %v2514, 2
      %v2629 = vsel %vm1469, %v2627, %v2628
      %v2630 = vrot.slane %v2515, 2
      %v2631 = vsel %vm1469, %v2628, %v2630
      %v2632 = vrot.slane %v2516, 2
      %v2633 = vrot.slane %v2517, 2
      %v2634 = vsel %vm1469, %v2632, %v2633
      %v2635 = vrot.slane %v2518, 2
      %v2636 = vsel %vm1469, %v2633, %v2635
      %v2637 = vrot.slane %v2519, 2
      %v2638 = vrot.slane %v2520, 2
      %v2639 = vsel %vm1469, %v2637, %v2638
      %v2640 = vrot.slane %v2521, 2
      %v2641 = vsel %vm1469, %v2638, %v2640
      %v2642 = vrot.slane %v2522, 2
      %v2643 = vrot.slane %v2523, 2
      %v2644 = vsel %vm1469, %v2642, %v2643
      %v2645 = vrot.slane %v2524, 2
      %v2646 = vsel %vm1469, %v2643, %v2645
      %v2647 = vrot.slane %v2525, 2
      %v2648 = vrot.slane %v2526, 2
      %v2649 = vsel %vm1469, %v2647, %v2648
      %v2650 = vrot.slane %v2527, 2
      %v2651 = vsel %vm1469, %v2648, %v2650
      %v2652 = vrot.slane %v2528, 2
      %v2653 = vrot.slane %v2529, 2
      %v2654 = vsel %vm1469, %v2652, %v2653
      %v2655 = vrot.slane %v2530, 2
      %v2656 = vsel %vm1469, %v2653, %v2655
      %v2657 = vrot.slane %v2531, 2
      %v2658 = vrot.slane %v2532, 2
      %v2659 = vsel %vm1469, %v2657, %v2658
      %v2660 = vrot.slane %v2533, 2
      %v2661 = vsel %vm1469, %v2658, %v2660
      %v2694 = vadd.f32 %v2206, %v2584
      %v2695 = vadd.f32 %v2207, %v2586
      %v2696 = vadd.f32 %v2208, %v2589
      %v2697 = vadd.f32 %v2209, %v2591
      %v2698 = vadd.f32 %v2210, %v2594
      %v2699 = vadd.f32 %v2211, %v2596
      %v2700 = vadd.f32 %v2212, %v2599
      %v2701 = vadd.f32 %v2213, %v2601
      %v2702 = vadd.f32 %v2214, %v2604
      %v2703 = vadd.f32 %v2215, %v2606
      %v2704 = vadd.f32 %v2216, %v2609
      %v2705 = vadd.f32 %v2217, %v2611
      %v2706 = vadd.f32 %v2218, %v2614
      %v2707 = vadd.f32 %v2219, %v2616
      %v2708 = vadd.f32 %v2220, %v2619
      %v2709 = vadd.f32 %v2221, %v2621
      %v2710 = vadd.f32 %v2222, %v2624
      %v2711 = vadd.f32 %v2223, %v2626
      %v2712 = vadd.f32 %v2224, %v2629
      %v2713 = vadd.f32 %v2225, %v2631
      %v2714 = vadd.f32 %v2226, %v2634
      %v2715 = vadd.f32 %v2227, %v2636
      %v2716 = vadd.f32 %v2228, %v2639
      %v2717 = vadd.f32 %v2229, %v2641
      %v2718 = vadd.f32 %v2230, %v2644
      %v2719 = vadd.f32 %v2231, %v2646
      %v2720 = vadd.f32 %v2232, %v2649
      %v2721 = vadd.f32 %v2233, %v2651
      %v2722 = vadd.f32 %v2234, %v2654
      %v2723 = vadd.f32 %v2235, %v2656
      %v2724 = vadd.f32 %v2236, %v2659
      %v2725 = vadd.f32 %v2237, %v2661
      %v2726 = vlaneseq
      %v2727 = vshrl.u32 %v2726, 7
      %v2728 = vsub.s32 2, %v2727
      %v2729 = vrot.slane %v742, %v2728
      %v2730 = vmul.f32 %v687, %v2729
      %v2731 = vmul.f32 %v688, %v2729
      %v2732 = vmul.f32 %v689, %v2729
      %v2733 = vmul.f32 %v690, %v2729
      %v2734 = vmul.f32 %v691, %v2729
      %v2735 = vmul.f32 %v692, %v2729
      %v2736 = vmul.f32 %v693, %v2729
      %v2737 = vmul.f32 %v694, %v2729
      %v2738 = vmul.f32 %v695, %v2729
      %v2739 = vmul.f32 %v696, %v2729
      %v2740 = vmul.f32 %v697, %v2729
      %v2741 = vmul.f32 %v698, %v2729
      %v2742 = vmul.f32 %v699, %v2729
      %v2743 = vmul.f32 %v700, %v2729
      %v2744 = vmul.f32 %v701, %v2729
      %v2745 = vmul.f32 %v702, %v2729
      %v2746 = vmul.f32 %v703, %v2729
      %v2747 = vmul.f32 %v704, %v2729
      %v2748 = vmul.f32 %v705, %v2729
      %v2749 = vmul.f32 %v706, %v2729
      %v2750 = vmul.f32 %v707, %v2729
      %v2751 = vmul.f32 %v708, %v2729
      %v2752 = vmul.f32 %v709, %v2729
      %v2753 = vmul.f32 %v710, %v2729
      %v2754 = vmul.f32 %v711, %v2729
      %v2755 = vmul.f32 %v712, %v2729
      %v2756 = vmul.f32 %v713, %v2729
      %v2757 = vmul.f32 %v714, %v2729
      %v2758 = vmul.f32 %v715, %v2729
      %v2759 = vmul.f32 %v716, %v2729
      %v2760 = vmul.f32 %v717, %v2729
      %v2761 = vmul.f32 %v718, %v2729
      %v2762 = vmul.f32 %v719, %v2729
      %v2763 = vmul.f32 %v720, %v2729
      %v2764 = vmul.f32 %v721, %v2729
      %v2765 = vmul.f32 %v722, %v2729
      %v2766 = vmul.f32 %v723, %v2729
      %v2767 = vmul.f32 %v724, %v2729
      %v2768 = vmul.f32 %v725, %v2729
      %v2769 = vmul.f32 %v726, %v2729
      %v2770 = vmul.f32 %v727, %v2729
      %v2771 = vmul.f32 %v728, %v2729
      %v2772 = vmul.f32 %v729, %v2729
      %v2773 = vmul.f32 %v730, %v2729
      %v2774 = vmul.f32 %v731, %v2729
      %v2775 = vmul.f32 %v732, %v2729
      %v2776 = vmul.f32 %v733, %v2729
      %v2777 = vmul.f32 %v734, %v2729
      %v2826 = vrot.slane %v2730, 2
      %v2827 = vrot.slane %v2731, 2
      %v2828 = vsel %vm1469, %v2826, %v2827
      %v2829 = vrot.slane %v2732, 2
      %v2830 = vsel %vm1469, %v2827, %v2829
      %v2831 = vrot.slane %v2733, 2
      %v2832 = vrot.slane %v2734, 2
      %v2833 = vsel %vm1469, %v2831, %v2832
      %v2834 = vrot.slane %v2735, 2
      %v2835 = vsel %vm1469, %v2832, %v2834
      %v2836 = vrot.slane %v2736, 2
      %v2837 = vrot.slane %v2737, 2
      %v2838 = vsel %vm1469, %v2836, %v2837
      %v2839 = vrot.slane %v2738, 2
      %v2840 = vsel %vm1469, %v2837, %v2839
      %v2841 = vrot.slane %v2739, 2
      %v2842 = vrot.slane %v2740, 2
      %v2843 = vsel %vm1469, %v2841, %v2842
      %v2844 = vrot.slane %v2741, 2
      %v2845 = vsel %vm1469, %v2842, %v2844
      %v2846 = vrot.slane %v2742, 2
      %v2847 = vrot.slane %v2743, 2
      %v2848 = vsel %vm1469, %v2846, %v2847
      %v2849 = vrot.slane %v2744, 2
      %v2850 = vsel %vm1469, %v2847, %v2849
      %v2851 = vrot.slane %v2745, 2
      %v2852 = vrot.slane %v2746, 2
      %v2853 = vsel %vm1469, %v2851, %v2852
      %v2854 = vrot.slane %v2747, 2
      %v2855 = vsel %vm1469, %v2852, %v2854
      %v2856 = vrot.slane %v2748, 2
      %v2857 = vrot.slane %v2749, 2
      %v2858 = vsel %vm1469, %v2856, %v2857
      %v2859 = vrot.slane %v2750, 2
      %v2860 = vsel %vm1469, %v2857, %v2859
      %v2861 = vrot.slane %v2751, 2
      %v2862 = vrot.slane %v2752, 2
      %v2863 = vsel %vm1469, %v2861, %v2862
      %v2864 = vrot.slane %v2753, 2
      %v2865 = vsel %vm1469, %v2862, %v2864
      %v2866 = vrot.slane %v2754, 2
      %v2867 = vrot.slane %v2755, 2
      %v2868 = vsel %vm1469, %v2866, %v2867
      %v2869 = vrot.slane %v2756, 2
      %v2870 = vsel %vm1469, %v2867, %v2869
      %v2871 = vrot.slane %v2757, 2
      %v2872 = vrot.slane %v2758, 2
      %v2873 = vsel %vm1469, %v2871, %v2872
      %v2874 = vrot.slane %v2759, 2
      %v2875 = vsel %vm1469, %v2872, %v2874
      %v2876 = vrot.slane %v2760, 2
      %v2877 = vrot.slane %v2761, 2
      %v2878 = vsel %vm1469, %v2876, %v2877
      %v2879 = vrot.slane %v2762, 2
      %v2880 = vsel %vm1469, %v2877, %v2879
      %v2881 = vrot.slane %v2763, 2
      %v2882 = vrot.slane %v2764, 2
      %v2883 = vsel %vm1469, %v2881, %v2882
      %v2884 = vrot.slane %v2765, 2
      %v2885 = vsel %vm1469, %v2882, %v2884
      %v2886 = vrot.slane %v2766, 2
      %v2887 = vrot.slane %v2767, 2
      %v2888 = vsel %vm1469, %v2886, %v2887
      %v2889 = vrot.slane %v2768, 2
      %v2890 = vsel %vm1469, %v2887, %v2889
      %v2891 = vrot.slane %v2769, 2
      %v2892 = vrot.slane %v2770, 2
      %v2893 = vsel %vm1469, %v2891, %v2892
      %v2894 = vrot.slane %v2771, 2
      %v2895 = vsel %vm1469, %v2892, %v2894
      %v2896 = vrot.slane %v2772, 2
      %v2897 = vrot.slane %v2773, 2
      %v2898 = vsel %vm1469, %v2896, %v2897
      %v2899 = vrot.slane %v2774, 2
      %v2900 = vsel %vm1469, %v2897, %v2899
      %v2901 = vrot.slane %v2775, 2
      %v2902 = vrot.slane %v2776, 2
      %v2903 = vsel %vm1469, %v2901, %v2902
      %v2904 = vrot.slane %v2777, 2
      %v2905 = vsel %vm1469, %v2902, %v2904
      %v2938 = vadd.f32 %v2450, %v2828
      %v2939 = vadd.f32 %v2451, %v2830
      %v2940 = vadd.f32 %v2452, %v2833
      %v2941 = vadd.f32 %v2453, %v2835
      %v2942 = vadd.f32 %v2454, %v2838
      %v2943 = vadd.f32 %v2455, %v2840
      %v2944 = vadd.f32 %v2456, %v2843
      %v2945 = vadd.f32 %v2457, %v2845
      %v2946 = vadd.f32 %v2458, %v2848
      %v2947 = vadd.f32 %v2459, %v2850
      %v2948 = vadd.f32 %v2460, %v2853
      %v2949 = vadd.f32 %v2461, %v2855
      %v2950 = vadd.f32 %v2462, %v2858
      %v2951 = vadd.f32 %v2463, %v2860
      %v2952 = vadd.f32 %v2464, %v2863
      %v2953 = vadd.f32 %v2465, %v2865
      %v2954 = vadd.f32 %v2466, %v2868
      %v2955 = vadd.f32 %v2467, %v2870
      %v2956 = vadd.f32 %v2468, %v2873
      %v2957 = vadd.f32 %v2469, %v2875
      %v2958 = vadd.f32 %v2470, %v2878
      %v2959 = vadd.f32 %v2471, %v2880
      %v2960 = vadd.f32 %v2472, %v2883
      %v2961 = vadd.f32 %v2473, %v2885
      %v2962 = vadd.f32 %v2474, %v2888
      %v2963 = vadd.f32 %v2475, %v2890
      %v2964 = vadd.f32 %v2476, %v2893
      %v2965 = vadd.f32 %v2477, %v2895
      %v2966 = vadd.f32 %v2478, %v2898
      %v2967 = vadd.f32 %v2479, %v2900
      %v2968 = vadd.f32 %v2480, %v2903
      %v2969 = vadd.f32 %v2481, %v2905
      %v2970 = vlaneseq
      %v2971 = vshrl.u32 %v2970, 7
      %v2972 = vsub.s32 0, %v2971
      %v2973 = vrot.slane %v740, %v2972
      %v2974 = vmul.f32 %v636, %v2973
      %v2975 = vmul.f32 %v637, %v2973
      %v2976 = vmul.f32 %v639, %v2973
      %v2977 = vmul.f32 %v640, %v2973
      %v2978 = vmul.f32 %v642, %v2973
      %v2979 = vmul.f32 %v643, %v2973
      %v2980 = vmul.f32 %v645, %v2973
      %v2981 = vmul.f32 %v646, %v2973
      %v2982 = vmul.f32 %v648, %v2973
      %v2983 = vmul.f32 %v649, %v2973
      %v2984 = vmul.f32 %v651, %v2973
      %v2985 = vmul.f32 %v652, %v2973
      %v2986 = vmul.f32 %v654, %v2973
      %v2987 = vmul.f32 %v655, %v2973
      %v2988 = vmul.f32 %v657, %v2973
      %v2989 = vmul.f32 %v658, %v2973
      %v2990 = vmul.f32 %v660, %v2973
      %v2991 = vmul.f32 %v661, %v2973
      %v2992 = vmul.f32 %v663, %v2973
      %v2993 = vmul.f32 %v664, %v2973
      %v2994 = vmul.f32 %v666, %v2973
      %v2995 = vmul.f32 %v667, %v2973
      %v2996 = vmul.f32 %v669, %v2973
      %v2997 = vmul.f32 %v670, %v2973
      %v2998 = vmul.f32 %v672, %v2973
      %v2999 = vmul.f32 %v673, %v2973
      %v3000 = vmul.f32 %v675, %v2973
      %v3001 = vmul.f32 %v676, %v2973
      %v3002 = vmul.f32 %v678, %v2973
      %v3003 = vmul.f32 %v679, %v2973
      %v3004 = vmul.f32 %v681, %v2973
      %v3005 = vmul.f32 %v682, %v2973
      %v3006 = vadd.f32 %v2694, %v2974
      %v3007 = vadd.f32 %v2695, %v2975
      %v3008 = vadd.f32 %v2696, %v2976
      %v3009 = vadd.f32 %v2697, %v2977
      %v3010 = vadd.f32 %v2698, %v2978
      %v3011 = vadd.f32 %v2699, %v2979
      %v3012 = vadd.f32 %v2700, %v2980
      %v3013 = vadd.f32 %v2701, %v2981
      %v3014 = vadd.f32 %v2702, %v2982
      %v3015 = vadd.f32 %v2703, %v2983
      %v3016 = vadd.f32 %v2704, %v2984
      %v3017 = vadd.f32 %v2705, %v2985
      %v3018 = vadd.f32 %v2706, %v2986
      %v3019 = vadd.f32 %v2707, %v2987
      %v3020 = vadd.f32 %v2708, %v2988
      %v3021 = vadd.f32 %v2709, %v2989
      %v3022 = vadd.f32 %v2710, %v2990
      %v3023 = vadd.f32 %v2711, %v2991
      %v3024 = vadd.f32 %v2712, %v2992
      %v3025 = vadd.f32 %v2713, %v2993
      %v3026 = vadd.f32 %v2714, %v2994
      %v3027 = vadd.f32 %v2715, %v2995
      %v3028 = vadd.f32 %v2716, %v2996
      %v3029 = vadd.f32 %v2717, %v2997
      %v3030 = vadd.f32 %v2718, %v2998
      %v3031 = vadd.f32 %v2719, %v2999
      %v3032 = vadd.f32 %v2720, %v3000
      %v3033 = vadd.f32 %v2721, %v3001
      %v3034 = vadd.f32 %v2722, %v3002
      %v3035 = vadd.f32 %v2723, %v3003
      %v3036 = vadd.f32 %v2724, %v3004
      %v3037 = vadd.f32 %v2725, %v3005
      %v3038 = vlaneseq
      %v3039 = vshrl.u32 %v3038, 7
      %v3040 = vsub.s32 0, %v3039
      %v3041 = vrot.slane %v743, %v3040
      %v3042 = vmul.f32 %v690, %v3041
      %v3043 = vmul.f32 %v691, %v3041
      %v3044 = vmul.f32 %v693, %v3041
      %v3045 = vmul.f32 %v694, %v3041
      %v3046 = vmul.f32 %v696, %v3041
      %v3047 = vmul.f32 %v697, %v3041
      %v3048 = vmul.f32 %v699, %v3041
      %v3049 = vmul.f32 %v700, %v3041
      %v3050 = vmul.f32 %v702, %v3041
      %v3051 = vmul.f32 %v703, %v3041
      %v3052 = vmul.f32 %v705, %v3041
      %v3053 = vmul.f32 %v706, %v3041
      %v3054 = vmul.f32 %v708, %v3041
      %v3055 = vmul.f32 %v709, %v3041
      %v3056 = vmul.f32 %v711, %v3041
      %v3057 = vmul.f32 %v712, %v3041
      %v3058 = vmul.f32 %v714, %v3041
      %v3059 = vmul.f32 %v715, %v3041
      %v3060 = vmul.f32 %v717, %v3041
      %v3061 = vmul.f32 %v718, %v3041
      %v3062 = vmul.f32 %v720, %v3041
      %v3063 = vmul.f32 %v721, %v3041
      %v3064 = vmul.f32 %v723, %v3041
      %v3065 = vmul.f32 %v724, %v3041
      %v3066 = vmul.f32 %v726, %v3041
      %v3067 = vmul.f32 %v727, %v3041
      %v3068 = vmul.f32 %v729, %v3041
      %v3069 = vmul.f32 %v730, %v3041
      %v3070 = vmul.f32 %v732, %v3041
      %v3071 = vmul.f32 %v733, %v3041
      %v3072 = vmul.f32 %v735, %v3041
      %v3073 = vmul.f32 %v736, %v3041
      %v3074 = vadd.f32 %v2938, %v3042
      %v3075 = vadd.f32 %v2939, %v3043
      %v3076 = vadd.f32 %v2940, %v3044
      %v3077 = vadd.f32 %v2941, %v3045
      %v3078 = vadd.f32 %v2942, %v3046
      %v3079 = vadd.f32 %v2943, %v3047
      %v3080 = vadd.f32 %v2944, %v3048
      %v3081 = vadd.f32 %v2945, %v3049
      %v3082 = vadd.f32 %v2946, %v3050
      %v3083 = vadd.f32 %v2947, %v3051
      %v3084 = vadd.f32 %v2948, %v3052
      %v3085 = vadd.f32 %v2949, %v3053
      %v3086 = vadd.f32 %v2950, %v3054
      %v3087 = vadd.f32 %v2951, %v3055
      %v3088 = vadd.f32 %v2952, %v3056
      %v3089 = vadd.f32 %v2953, %v3057
      %v3090 = vadd.f32 %v2954, %v3058
      %v3091 = vadd.f32 %v2955, %v3059
      %v3092 = vadd.f32 %v2956, %v3060
      %v3093 = vadd.f32 %v2957, %v3061
      %v3094 = vadd.f32 %v2958, %v3062
      %v3095 = vadd.f32 %v2959, %v3063
      %v3096 = vadd.f32 %v2960, %v3064
      %v3097 = vadd.f32 %v2961, %v3065
      %v3098 = vadd.f32 %v2962, %v3066
      %v3099 = vadd.f32 %v2963, %v3067
      %v3100 = vadd.f32 %v2964, %v3068
      %v3101 = vadd.f32 %v2965, %v3069
      %v3102 = vadd.f32 %v2966, %v3070
      %v3103 = vadd.f32 %v2967, %v3071
      %v3104 = vadd.f32 %v2968, %v3072
      %v3105 = vadd.f32 %v2969, %v3073
      %v3106 = vlaneseq
      %v3107 = vshrl.u32 %v3106, 7
      %v3108 = vsub.s32 1, %v3107
      %v3109 = vrot.slane %v740, %v3108
      %v3110 = vmul.f32 %v636, %v3109
      %v3111 = vmul.f32 %v637, %v3109
      %v3112 = vmul.f32 %v638, %v3109
      %v3113 = vmul.f32 %v639, %v3109
      %v3114 = vmul.f32 %v640, %v3109
      %v3115 = vmul.f32 %v641, %v3109
      %v3116 = vmul.f32 %v642, %v3109
      %v3117 = vmul.f32 %v643, %v3109
      %v3118 = vmul.f32 %v644, %v3109
      %v3119 = vmul.f32 %v645, %v3109
      %v3120 = vmul.f32 %v646, %v3109
      %v3121 = vmul.f32 %v647, %v3109
      %v3122 = vmul.f32 %v648, %v3109
      %v3123 = vmul.f32 %v649, %v3109
      %v3124 = vmul.f32 %v650, %v3109
      %v3125 = vmul.f32 %v651, %v3109
      %v3126 = vmul.f32 %v652, %v3109
      %v3127 = vmul.f32 %v653, %v3109
      %v3128 = vmul.f32 %v654, %v3109
      %v3129 = vmul.f32 %v655, %v3109
      %v3130 = vmul.f32 %v656, %v3109
      %v3131 = vmul.f32 %v657, %v3109
      %v3132 = vmul.f32 %v658, %v3109
      %v3133 = vmul.f32 %v659, %v3109
      %v3134 = vmul.f32 %v660, %v3109
      %v3135 = vmul.f32 %v661, %v3109
      %v3136 = vmul.f32 %v662, %v3109
      %v3137 = vmul.f32 %v663, %v3109
      %v3138 = vmul.f32 %v664, %v3109
      %v3139 = vmul.f32 %v665, %v3109
      %v3140 = vmul.f32 %v666, %v3109
      %v3141 = vmul.f32 %v667, %v3109
      %v3142 = vmul.f32 %v668, %v3109
      %v3143 = vmul.f32 %v669, %v3109
      %v3144 = vmul.f32 %v670, %v3109
      %v3145 = vmul.f32 %v671, %v3109
      %v3146 = vmul.f32 %v672, %v3109
      %v3147 = vmul.f32 %v673, %v3109
      %v3148 = vmul.f32 %v674, %v3109
      %v3149 = vmul.f32 %v675, %v3109
      %v3150 = vmul.f32 %v676, %v3109
      %v3151 = vmul.f32 %v677, %v3109
      %v3152 = vmul.f32 %v678, %v3109
      %v3153 = vmul.f32 %v679, %v3109
      %v3154 = vmul.f32 %v680, %v3109
      %v3155 = vmul.f32 %v681, %v3109
      %v3156 = vmul.f32 %v682, %v3109
      %v3157 = vmul.f32 %v683, %v3109
      %v3206 = vrot.slane %v3110, 1
      %v3207 = vrot.slane %v3111, 1
      %v3208 = vsel %vm980, %v3206, %v3207
      %v3209 = vrot.slane %v3112, 1
      %v3210 = vsel %vm980, %v3207, %v3209
      %v3211 = vrot.slane %v3113, 1
      %v3212 = vrot.slane %v3114, 1
      %v3213 = vsel %vm980, %v3211, %v3212
      %v3214 = vrot.slane %v3115, 1
      %v3215 = vsel %vm980, %v3212, %v3214
      %v3216 = vrot.slane %v3116, 1
      %v3217 = vrot.slane %v3117, 1
      %v3218 = vsel %vm980, %v3216, %v3217
      %v3219 = vrot.slane %v3118, 1
      %v3220 = vsel %vm980, %v3217, %v3219
      %v3221 = vrot.slane %v3119, 1
      %v3222 = vrot.slane %v3120, 1
      %v3223 = vsel %vm980, %v3221, %v3222
      %v3224 = vrot.slane %v3121, 1
      %v3225 = vsel %vm980, %v3222, %v3224
      %v3226 = vrot.slane %v3122, 1
      %v3227 = vrot.slane %v3123, 1
      %v3228 = vsel %vm980, %v3226, %v3227
      %v3229 = vrot.slane %v3124, 1
      %v3230 = vsel %vm980, %v3227, %v3229
      %v3231 = vrot.slane %v3125, 1
      %v3232 = vrot.slane %v3126, 1
      %v3233 = vsel %vm980, %v3231, %v3232
      %v3234 = vrot.slane %v3127, 1
      %v3235 = vsel %vm980, %v3232, %v3234
      %v3236 = vrot.slane %v3128, 1
      %v3237 = vrot.slane %v3129, 1
      %v3238 = vsel %vm980, %v3236, %v3237
      %v3239 = vrot.slane %v3130, 1
      %v3240 = vsel %vm980, %v3237, %v3239
      %v3241 = vrot.slane %v3131, 1
      %v3242 = vrot.slane %v3132, 1
      %v3243 = vsel %vm980, %v3241, %v3242
      %v3244 = vrot.slane %v3133, 1
      %v3245 = vsel %vm980, %v3242, %v3244
      %v3246 = vrot.slane %v3134, 1
      %v3247 = vrot.slane %v3135, 1
      %v3248 = vsel %vm980, %v3246, %v3247
      %v3249 = vrot.slane %v3136, 1
      %v3250 = vsel %vm980, %v3247, %v3249
      %v3251 = vrot.slane %v3137, 1
      %v3252 = vrot.slane %v3138, 1
      %v3253 = vsel %vm980, %v3251, %v3252
      %v3254 = vrot.slane %v3139, 1
      %v3255 = vsel %vm980, %v3252, %v3254
      %v3256 = vrot.slane %v3140, 1
      %v3257 = vrot.slane %v3141, 1
      %v3258 = vsel %vm980, %v3256, %v3257
      %v3259 = vrot.slane %v3142, 1
      %v3260 = vsel %vm980, %v3257, %v3259
      %v3261 = vrot.slane %v3143, 1
      %v3262 = vrot.slane %v3144, 1
      %v3263 = vsel %vm980, %v3261, %v3262
      %v3264 = vrot.slane %v3145, 1
      %v3265 = vsel %vm980, %v3262, %v3264
      %v3266 = vrot.slane %v3146, 1
      %v3267 = vrot.slane %v3147, 1
      %v3268 = vsel %vm980, %v3266, %v3267
      %v3269 = vrot.slane %v3148, 1
      %v3270 = vsel %vm980, %v3267, %v3269
      %v3271 = vrot.slane %v3149, 1
      %v3272 = vrot.slane %v3150, 1
      %v3273 = vsel %vm980, %v3271, %v3272
      %v3274 = vrot.slane %v3151, 1
      %v3275 = vsel %vm980, %v3272, %v3274
      %v3276 = vrot.slane %v3152, 1
      %v3277 = vrot.slane %v3153, 1
      %v3278 = vsel %vm980, %v3276, %v3277
      %v3279 = vrot.slane %v3154, 1
      %v3280 = vsel %vm980, %v3277, %v3279
      %v3281 = vrot.slane %v3155, 1
      %v3282 = vrot.slane %v3156, 1
      %v3283 = vsel %vm980, %v3281, %v3282
      %v3284 = vrot.slane %v3157, 1
      %v3285 = vsel %vm980, %v3282, %v3284
      %v3318 = vadd.f32 %v3006, %v3208
      %v3319 = vadd.f32 %v3007, %v3210
      %v3320 = vadd.f32 %v3008, %v3213
      %v3321 = vadd.f32 %v3009, %v3215
      %v3322 = vadd.f32 %v3010, %v3218
      %v3323 = vadd.f32 %v3011, %v3220
      %v3324 = vadd.f32 %v3012, %v3223
      %v3325 = vadd.f32 %v3013, %v3225
      %v3326 = vadd.f32 %v3014, %v3228
      %v3327 = vadd.f32 %v3015, %v3230
      %v3328 = vadd.f32 %v3016, %v3233
      %v3329 = vadd.f32 %v3017, %v3235
      %v3330 = vadd.f32 %v3018, %v3238
      %v3331 = vadd.f32 %v3019, %v3240
      %v3332 = vadd.f32 %v3020, %v3243
      %v3333 = vadd.f32 %v3021, %v3245
      %v3334 = vadd.f32 %v3022, %v3248
      %v3335 = vadd.f32 %v3023, %v3250
      %v3336 = vadd.f32 %v3024, %v3253
      %v3337 = vadd.f32 %v3025, %v3255
      %v3338 = vadd.f32 %v3026, %v3258
      %v3339 = vadd.f32 %v3027, %v3260
      %v3340 = vadd.f32 %v3028, %v3263
      %v3341 = vadd.f32 %v3029, %v3265
      %v3342 = vadd.f32 %v3030, %v3268
      %v3343 = vadd.f32 %v3031, %v3270
      %v3344 = vadd.f32 %v3032, %v3273
      %v3345 = vadd.f32 %v3033, %v3275
      %v3346 = vadd.f32 %v3034, %v3278
      %v3347 = vadd.f32 %v3035, %v3280
      %v3348 = vadd.f32 %v3036, %v3283
      %v3349 = vadd.f32 %v3037, %v3285
      %v3350 = vlaneseq
      %v3351 = vshrl.u32 %v3350, 7
      %v3352 = vsub.s32 1, %v3351
      %v3353 = vrot.slane %v743, %v3352
      %v3354 = vmul.f32 %v690, %v3353
      %v3355 = vmul.f32 %v691, %v3353
      %v3356 = vmul.f32 %v692, %v3353
      %v3357 = vmul.f32 %v693, %v3353
      %v3358 = vmul.f32 %v694, %v3353
      %v3359 = vmul.f32 %v695, %v3353
      %v3360 = vmul.f32 %v696, %v3353
      %v3361 = vmul.f32 %v697, %v3353
      %v3362 = vmul.f32 %v698, %v3353
      %v3363 = vmul.f32 %v699, %v3353
      %v3364 = vmul.f32 %v700, %v3353
      %v3365 = vmul.f32 %v701, %v3353
      %v3366 = vmul.f32 %v702, %v3353
      %v3367 = vmul.f32 %v703, %v3353
      %v3368 = vmul.f32 %v704, %v3353
      %v3369 = vmul.f32 %v705, %v3353
      %v3370 = vmul.f32 %v706, %v3353
      %v3371 = vmul.f32 %v707, %v3353
      %v3372 = vmul.f32 %v708, %v3353
      %v3373 = vmul.f32 %v709, %v3353
      %v3374 = vmul.f32 %v710, %v3353
      %v3375 = vmul.f32 %v711, %v3353
      %v3376 = vmul.f32 %v712, %v3353
      %v3377 = vmul.f32 %v713, %v3353
      %v3378 = vmul.f32 %v714, %v3353
      %v3379 = vmul.f32 %v715, %v3353
      %v3380 = vmul.f32 %v716, %v3353
      %v3381 = vmul.f32 %v717, %v3353
      %v3382 = vmul.f32 %v718, %v3353
      %v3383 = vmul.f32 %v719, %v3353
      %v3384 = vmul.f32 %v720, %v3353
      %v3385 = vmul.f32 %v721, %v3353
      %v3386 = vmul.f32 %v722, %v3353
      %v3387 = vmul.f32 %v723, %v3353
      %v3388 = vmul.f32 %v724, %v3353
      %v3389 = vmul.f32 %v725, %v3353
      %v3390 = vmul.f32 %v726, %v3353
      %v3391 = vmul.f32 %v727, %v3353
      %v3392 = vmul.f32 %v728, %v3353
      %v3393 = vmul.f32 %v729, %v3353
      %v3394 = vmul.f32 %v730, %v3353
      %v3395 = vmul.f32 %v731, %v3353
      %v3396 = vmul.f32 %v732, %v3353
      %v3397 = vmul.f32 %v733, %v3353
      %v3398 = vmul.f32 %v734, %v3353
      %v3399 = vmul.f32 %v735, %v3353
      %v3400 = vmul.f32 %v736, %v3353
      %v3401 = vmul.f32 %v737, %v3353
      %v3450 = vrot.slane %v3354, 1
      %v3451 = vrot.slane %v3355, 1
      %v3452 = vsel %vm980, %v3450, %v3451
      %v3453 = vrot.slane %v3356, 1
      %v3454 = vsel %vm980, %v3451, %v3453
      %v3455 = vrot.slane %v3357, 1
      %v3456 = vrot.slane %v3358, 1
      %v3457 = vsel %vm980, %v3455, %v3456
      %v3458 = vrot.slane %v3359, 1
      %v3459 = vsel %vm980, %v3456, %v3458
      %v3460 = vrot.slane %v3360, 1
      %v3461 = vrot.slane %v3361, 1
      %v3462 = vsel %vm980, %v3460, %v3461
      %v3463 = vrot.slane %v3362, 1
      %v3464 = vsel %vm980, %v3461, %v3463
      %v3465 = vrot.slane %v3363, 1
      %v3466 = vrot.slane %v3364, 1
      %v3467 = vsel %vm980, %v3465, %v3466
      %v3468 = vrot.slane %v3365, 1
      %v3469 = vsel %vm980, %v3466, %v3468
      %v3470 = vrot.slane %v3366, 1
      %v3471 = vrot.slane %v3367, 1
      %v3472 = vsel %vm980, %v3470, %v3471
      %v3473 = vrot.slane %v3368, 1
      %v3474 = vsel %vm980, %v3471, %v3473
      %v3475 = vrot.slane %v3369, 1
      %v3476 = vrot.slane %v3370, 1
      %v3477 = vsel %vm980, %v3475, %v3476
      %v3478 = vrot.slane %v3371, 1
      %v3479 = vsel %vm980, %v3476, %v3478
      %v3480 = vrot.slane %v3372, 1
      %v3481 = vrot.slane %v3373, 1
      %v3482 = vsel %vm980, %v3480, %v3481
      %v3483 = vrot.slane %v3374, 1
      %v3484 = vsel %vm980, %v3481, %v3483
      %v3485 = vrot.slane %v3375, 1
      %v3486 = vrot.slane %v3376, 1
      %v3487 = vsel %vm980, %v3485, %v3486
      %v3488 = vrot.slane %v3377, 1
      %v3489 = vsel %vm980, %v3486, %v3488
      %v3490 = vrot.slane %v3378, 1
      %v3491 = vrot.slane %v3379, 1
      %v3492 = vsel %vm980, %v3490, %v3491
      %v3493 = vrot.slane %v3380, 1
      %v3494 = vsel %vm980, %v3491, %v3493
      %v3495 = vrot.slane %v3381, 1
      %v3496 = vrot.slane %v3382, 1
      %v3497 = vsel %vm980, %v3495, %v3496
      %v3498 = vrot.slane %v3383, 1
      %v3499 = vsel %vm980, %v3496, %v3498
      %v3500 = vrot.slane %v3384, 1
      %v3501 = vrot.slane %v3385, 1
      %v3502 = vsel %vm980, %v3500, %v3501
      %v3503 = vrot.slane %v3386, 1
      %v3504 = vsel %vm980, %v3501, %v3503
      %v3505 = vrot.slane %v3387, 1
      %v3506 = vrot.slane %v3388, 1
      %v3507 = vsel %vm980, %v3505, %v3506
      %v3508 = vrot.slane %v3389, 1
      %v3509 = vsel %vm980, %v3506, %v3508
      %v3510 = vrot.slane %v3390, 1
      %v3511 = vrot.slane %v3391, 1
      %v3512 = vsel %vm980, %v3510, %v3511
      %v3513 = vrot.slane %v3392, 1
      %v3514 = vsel %vm980, %v3511, %v3513
      %v3515 = vrot.slane %v3393, 1
      %v3516 = vrot.slane %v3394, 1
      %v3517 = vsel %vm980, %v3515, %v3516
      %v3518 = vrot.slane %v3395, 1
      %v3519 = vsel %vm980, %v3516, %v3518
      %v3520 = vrot.slane %v3396, 1
      %v3521 = vrot.slane %v3397, 1
      %v3522 = vsel %vm980, %v3520, %v3521
      %v3523 = vrot.slane %v3398, 1
      %v3524 = vsel %vm980, %v3521, %v3523
      %v3525 = vrot.slane %v3399, 1
      %v3526 = vrot.slane %v3400, 1
      %v3527 = vsel %vm980, %v3525, %v3526
      %v3528 = vrot.slane %v3401, 1
      %v3529 = vsel %vm980, %v3526, %v3528
      %v3562 = vadd.f32 %v3074, %v3452
      %v3563 = vadd.f32 %v3075, %v3454
      %v3564 = vadd.f32 %v3076, %v3457
      %v3565 = vadd.f32 %v3077, %v3459
      %v3566 = vadd.f32 %v3078, %v3462
      %v3567 = vadd.f32 %v3079, %v3464
      %v3568 = vadd.f32 %v3080, %v3467
      %v3569 = vadd.f32 %v3081, %v3469
      %v3570 = vadd.f32 %v3082, %v3472
      %v3571 = vadd.f32 %v3083, %v3474
      %v3572 = vadd.f32 %v3084, %v3477
      %v3573 = vadd.f32 %v3085, %v3479
      %v3574 = vadd.f32 %v3086, %v3482
      %v3575 = vadd.f32 %v3087, %v3484
      %v3576 = vadd.f32 %v3088, %v3487
      %v3577 = vadd.f32 %v3089, %v3489
      %v3578 = vadd.f32 %v3090, %v3492
      %v3579 = vadd.f32 %v3091, %v3494
      %v3580 = vadd.f32 %v3092, %v3497
      %v3581 = vadd.f32 %v3093, %v3499
      %v3582 = vadd.f32 %v3094, %v3502
      %v3583 = vadd.f32 %v3095, %v3504
      %v3584 = vadd.f32 %v3096, %v3507
      %v3585 = vadd.f32 %v3097, %v3509
      %v3586 = vadd.f32 %v3098, %v3512
      %v3587 = vadd.f32 %v3099, %v3514
      %v3588 = vadd.f32 %v3100, %v3517
      %v3589 = vadd.f32 %v3101, %v3519
      %v3590 = vadd.f32 %v3102, %v3522
      %v3591 = vadd.f32 %v3103, %v3524
      %v3592 = vadd.f32 %v3104, %v3527
      %v3593 = vadd.f32 %v3105, %v3529
      %v3594 = vlaneseq
      %v3595 = vshrl.u32 %v3594, 7
      %v3596 = vsub.s32 2, %v3595
      %v3597 = vrot.slane %v740, %v3596
      %v3598 = vmul.f32 %v636, %v3597
      %v3599 = vmul.f32 %v637, %v3597
      %v3600 = vmul.f32 %v638, %v3597
      %v3601 = vmul.f32 %v639, %v3597
      %v3602 = vmul.f32 %v640, %v3597
      %v3603 = vmul.f32 %v641, %v3597
      %v3604 = vmul.f32 %v642, %v3597
      %v3605 = vmul.f32 %v643, %v3597
      %v3606 = vmul.f32 %v644, %v3597
      %v3607 = vmul.f32 %v645, %v3597
      %v3608 = vmul.f32 %v646, %v3597
      %v3609 = vmul.f32 %v647, %v3597
      %v3610 = vmul.f32 %v648, %v3597
      %v3611 = vmul.f32 %v649, %v3597
      %v3612 = vmul.f32 %v650, %v3597
      %v3613 = vmul.f32 %v651, %v3597
      %v3614 = vmul.f32 %v652, %v3597
      %v3615 = vmul.f32 %v653, %v3597
      %v3616 = vmul.f32 %v654, %v3597
      %v3617 = vmul.f32 %v655, %v3597
      %v3618 = vmul.f32 %v656, %v3597
      %v3619 = vmul.f32 %v657, %v3597
      %v3620 = vmul.f32 %v658, %v3597
      %v3621 = vmul.f32 %v659, %v3597
      %v3622 = vmul.f32 %v660, %v3597
      %v3623 = vmul.f32 %v661, %v3597
      %v3624 = vmul.f32 %v662, %v3597
      %v3625 = vmul.f32 %v663, %v3597
      %v3626 = vmul.f32 %v664, %v3597
      %v3627 = vmul.f32 %v665, %v3597
      %v3628 = vmul.f32 %v666, %v3597
      %v3629 = vmul.f32 %v667, %v3597
      %v3630 = vmul.f32 %v668, %v3597
      %v3631 = vmul.f32 %v669, %v3597
      %v3632 = vmul.f32 %v670, %v3597
      %v3633 = vmul.f32 %v671, %v3597
      %v3634 = vmul.f32 %v672, %v3597
      %v3635 = vmul.f32 %v673, %v3597
      %v3636 = vmul.f32 %v674, %v3597
      %v3637 = vmul.f32 %v675, %v3597
      %v3638 = vmul.f32 %v676, %v3597
      %v3639 = vmul.f32 %v677, %v3597
      %v3640 = vmul.f32 %v678, %v3597
      %v3641 = vmul.f32 %v679, %v3597
      %v3642 = vmul.f32 %v680, %v3597
      %v3643 = vmul.f32 %v681, %v3597
      %v3644 = vmul.f32 %v682, %v3597
      %v3645 = vmul.f32 %v683, %v3597
      %v3694 = vrot.slane %v3598, 2
      %v3695 = vrot.slane %v3599, 2
      %v3696 = vsel %vm1469, %v3694, %v3695
      %v3697 = vrot.slane %v3600, 2
      %v3698 = vsel %vm1469, %v3695, %v3697
      %v3699 = vrot.slane %v3601, 2
      %v3700 = vrot.slane %v3602, 2
      %v3701 = vsel %vm1469, %v3699, %v3700
      %v3702 = vrot.slane %v3603, 2
      %v3703 = vsel %vm1469, %v3700, %v3702
      %v3704 = vrot.slane %v3604, 2
      %v3705 = vrot.slane %v3605, 2
      %v3706 = vsel %vm1469, %v3704, %v3705
      %v3707 = vrot.slane %v3606, 2
      %v3708 = vsel %vm1469, %v3705, %v3707
      %v3709 = vrot.slane %v3607, 2
      %v3710 = vrot.slane %v3608, 2
      %v3711 = vsel %vm1469, %v3709, %v3710
      %v3712 = vrot.slane %v3609, 2
      %v3713 = vsel %vm1469, %v3710, %v3712
      %v3714 = vrot.slane %v3610, 2
      %v3715 = vrot.slane %v3611, 2
      %v3716 = vsel %vm1469, %v3714, %v3715
      %v3717 = vrot.slane %v3612, 2
      %v3718 = vsel %vm1469, %v3715, %v3717
      %v3719 = vrot.slane %v3613, 2
      %v3720 = vrot.slane %v3614, 2
      %v3721 = vsel %vm1469, %v3719, %v3720
      %v3722 = vrot.slane %v3615, 2
      %v3723 = vsel %vm1469, %v3720, %v3722
      %v3724 = vrot.slane %v3616, 2
      %v3725 = vrot.slane %v3617, 2
      %v3726 = vsel %vm1469, %v3724, %v3725
      %v3727 = vrot.slane %v3618, 2
      %v3728 = vsel %vm1469, %v3725, %v3727
      %v3729 = vrot.slane %v3619, 2
      %v3730 = vrot.slane %v3620, 2
      %v3731 = vsel %vm1469, %v3729, %v3730
      %v3732 = vrot.slane %v3621, 2
      %v3733 = vsel %vm1469, %v3730, %v3732
      %v3734 = vrot.slane %v3622, 2
      %v3735 = vrot.slane %v3623, 2
      %v3736 = vsel %vm1469, %v3734, %v3735
      %v3737 = vrot.slane %v3624, 2
      %v3738 = vsel %vm1469, %v3735, %v3737
      %v3739 = vrot.slane %v3625, 2
      %v3740 = vrot.slane %v3626, 2
      %v3741 = vsel %vm1469, %v3739, %v3740
      %v3742 = vrot.slane %v3627, 2
      %v3743 = vsel %vm1469, %v3740, %v3742
      %v3744 = vrot.slane %v3628, 2
      %v3745 = vrot.slane %v3629, 2
      %v3746 = vsel %vm1469, %v3744, %v3745
      %v3747 = vrot.slane %v3630, 2
      %v3748 = vsel %vm1469, %v3745, %v3747
      %v3749 = vrot.slane %v3631, 2
      %v3750 = vrot.slane %v3632, 2
      %v3751 = vsel %vm1469, %v3749, %v3750
      %v3752 = vrot.slane %v3633, 2
      %v3753 = vsel %vm1469, %v3750, %v3752
      %v3754 = vrot.slane %v3634, 2
      %v3755 = vrot.slane %v3635, 2
      %v3756 = vsel %vm1469, %v3754, %v3755
      %v3757 = vrot.slane %v3636, 2
      %v3758 = vsel %vm1469, %v3755, %v3757
      %v3759 = vrot.slane %v3637, 2
      %v3760 = vrot.slane %v3638, 2
      %v3761 = vsel %vm1469, %v3759, %v3760
      %v3762 = vrot.slane %v3639, 2
      %v3763 = vsel %vm1469, %v3760, %v3762
      %v3764 = vrot.slane %v3640, 2
      %v3765 = vrot.slane %v3641, 2
      %v3766 = vsel %vm1469, %v3764, %v3765
      %v3767 = vrot.slane %v3642, 2
      %v3768 = vsel %vm1469, %v3765, %v3767
      %v3769 = vrot.slane %v3643, 2
      %v3770 = vrot.slane %v3644, 2
      %v3771 = vsel %vm1469, %v3769, %v3770
      %v3772 = vrot.slane %v3645, 2
      %v3773 = vsel %vm1469, %v3770, %v3772
      %v3806 = vadd.f32 %v3318, %v3696
      %v3807 = vadd.f32 %v3319, %v3698
      %v3808 = vadd.f32 %v3320, %v3701
      %v3809 = vadd.f32 %v3321, %v3703
      %v3810 = vadd.f32 %v3322, %v3706
      %v3811 = vadd.f32 %v3323, %v3708
      %v3812 = vadd.f32 %v3324, %v3711
      %v3813 = vadd.f32 %v3325, %v3713
      %v3814 = vadd.f32 %v3326, %v3716
      %v3815 = vadd.f32 %v3327, %v3718
      %v3816 = vadd.f32 %v3328, %v3721
      %v3817 = vadd.f32 %v3329, %v3723
      %v3818 = vadd.f32 %v3330, %v3726
      %v3819 = vadd.f32 %v3331, %v3728
      %v3820 = vadd.f32 %v3332, %v3731
      %v3821 = vadd.f32 %v3333, %v3733
      %v3822 = vadd.f32 %v3334, %v3736
      %v3823 = vadd.f32 %v3335, %v3738
      %v3824 = vadd.f32 %v3336, %v3741
      %v3825 = vadd.f32 %v3337, %v3743
      %v3826 = vadd.f32 %v3338, %v3746
      %v3827 = vadd.f32 %v3339, %v3748
      %v3828 = vadd.f32 %v3340, %v3751
      %v3829 = vadd.f32 %v3341, %v3753
      %v3830 = vadd.f32 %v3342, %v3756
      %v3831 = vadd.f32 %v3343, %v3758
      %v3832 = vadd.f32 %v3344, %v3761
      %v3833 = vadd.f32 %v3345, %v3763
      %v3834 = vadd.f32 %v3346, %v3766
      %v3835 = vadd.f32 %v3347, %v3768
      %v3836 = vadd.f32 %v3348, %v3771
      %v3837 = vadd.f32 %v3349, %v3773
      %v3838 = vlaneseq
      %v3839 = vshrl.u32 %v3838, 7
      %v3840 = vsub.s32 2, %v3839
      %v3841 = vrot.slane %v743, %v3840
      %v3842 = vmul.f32 %v690, %v3841
      %v3843 = vmul.f32 %v691, %v3841
      %v3844 = vmul.f32 %v692, %v3841
      %v3845 = vmul.f32 %v693, %v3841
      %v3846 = vmul.f32 %v694, %v3841
      %v3847 = vmul.f32 %v695, %v3841
      %v3848 = vmul.f32 %v696, %v3841
      %v3849 = vmul.f32 %v697, %v3841
      %v3850 = vmul.f32 %v698, %v3841
      %v3851 = vmul.f32 %v699, %v3841
      %v3852 = vmul.f32 %v700, %v3841
      %v3853 = vmul.f32 %v701, %v3841
      %v3854 = vmul.f32 %v702, %v3841
      %v3855 = vmul.f32 %v703, %v3841
      %v3856 = vmul.f32 %v704, %v3841
      %v3857 = vmul.f32 %v705, %v3841
      %v3858 = vmul.f32 %v706, %v3841
      %v3859 = vmul.f32 %v707, %v3841
      %v3860 = vmul.f32 %v708, %v3841
      %v3861 = vmul.f32 %v709, %v3841
      %v3862 = vmul.f32 %v710, %v3841
      %v3863 = vmul.f32 %v711, %v3841
      %v3864 = vmul.f32 %v712, %v3841
      %v3865 = vmul.f32 %v713, %v3841
      %v3866 = vmul.f32 %v714, %v3841
      %v3867 = vmul.f32 %v715, %v3841
      %v3868 = vmul.f32 %v716, %v3841
      %v3869 = vmul.f32 %v717, %v3841
      %v3870 = vmul.f32 %v718, %v3841
      %v3871 = vmul.f32 %v719, %v3841
      %v3872 = vmul.f32 %v720, %v3841
      %v3873 = vmul.f32 %v721, %v3841
      %v3874 = vmul.f32 %v722, %v3841
      %v3875 = vmul.f32 %v723, %v3841
      %v3876 = vmul.f32 %v724, %v3841
      %v3877 = vmul.f32 %v725, %v3841
      %v3878 = vmul.f32 %v726, %v3841
      %v3879 = vmul.f32 %v727, %v3841
      %v3880 = vmul.f32 %v728, %v3841
      %v3881 = vmul.f32 %v729, %v3841
      %v3882 = vmul.f32 %v730, %v3841
      %v3883 = vmul.f32 %v731, %v3841
      %v3884 = vmul.f32 %v732, %v3841
      %v3885 = vmul.f32 %v733, %v3841
      %v3886 = vmul.f32 %v734, %v3841
      %v3887 = vmul.f32 %v735, %v3841
      %v3888 = vmul.f32 %v736, %v3841
      %v3889 = vmul.f32 %v737, %v3841
      %v3938 = vrot.slane %v3842, 2
      %v3939 = vrot.slane %v3843, 2
      %v3940 = vsel %vm1469, %v3938, %v3939
      %v3941 = vrot.slane %v3844, 2
      %v3942 = vsel %vm1469, %v3939, %v3941
      %v3943 = vrot.slane %v3845, 2
      %v3944 = vrot.slane %v3846, 2
      %v3945 = vsel %vm1469, %v3943, %v3944
      %v3946 = vrot.slane %v3847, 2
      %v3947 = vsel %vm1469, %v3944, %v3946
      %v3948 = vrot.slane %v3848, 2
      %v3949 = vrot.slane %v3849, 2
      %v3950 = vsel %vm1469, %v3948, %v3949
      %v3951 = vrot.slane %v3850, 2
      %v3952 = vsel %vm1469, %v3949, %v3951
      %v3953 = vrot.slane %v3851, 2
      %v3954 = vrot.slane %v3852, 2
      %v3955 = vsel %vm1469, %v3953, %v3954
      %v3956 = vrot.slane %v3853, 2
      %v3957 = vsel %vm1469, %v3954, %v3956
      %v3958 = vrot.slane %v3854, 2
      %v3959 = vrot.slane %v3855, 2
      %v3960 = vsel %vm1469, %v3958, %v3959
      %v3961 = vrot.slane %v3856, 2
      %v3962 = vsel %vm1469, %v3959, %v3961
      %v3963 = vrot.slane %v3857, 2
      %v3964 = vrot.slane %v3858, 2
      %v3965 = vsel %vm1469, %v3963, %v3964
      %v3966 = vrot.slane %v3859, 2
      %v3967 = vsel %vm1469, %v3964, %v3966
      %v3968 = vrot.slane %v3860, 2
      %v3969 = vrot.slane %v3861, 2
      %v3970 = vsel %vm1469, %v3968, %v3969
      %v3971 = vrot.slane %v3862, 2
      %v3972 = vsel %vm1469, %v3969, %v3971
      %v3973 = vrot.slane %v3863, 2
      %v3974 = vrot.slane %v3864, 2
      %v3975 = vsel %vm1469, %v3973, %v3974
      %v3976 = vrot.slane %v3865, 2
      %v3977 = vsel %vm1469, %v3974, %v3976
      %v3978 = vrot.slane %v3866, 2
      %v3979 = vrot.slane %v3867, 2
      %v3980 = vsel %vm1469, %v3978, %v3979
      %v3981 = vrot.slane %v3868, 2
      %v3982 = vsel %vm1469, %v3979, %v3981
      %v3983 = vrot.slane %v3869, 2
      %v3984 = vrot.slane %v3870, 2
      %v3985 = vsel %vm1469, %v3983, %v3984
      %v3986 = vrot.slane %v3871, 2
      %v3987 = vsel %vm1469, %v3984, %v3986
      %v3988 = vrot.slane %v3872, 2
      %v3989 = vrot.slane %v3873, 2
      %v3990 = vsel %vm1469, %v3988, %v3989
      %v3991 = vrot.slane %v3874, 2
      %v3992 = vsel %vm1469, %v3989, %v3991
      %v3993 = vrot.slane %v3875, 2
      %v3994 = vrot.slane %v3876, 2
      %v3995 = vsel %vm1469, %v3993, %v3994
      %v3996 = vrot.slane %v3877, 2
      %v3997 = vsel %vm1469, %v3994, %v3996
      %v3998 = vrot.slane %v3878, 2
      %v3999 = vrot.slane %v3879, 2
      %v4000 = vsel %vm1469, %v3998, %v3999
      %v4001 = vrot.slane %v3880, 2
      %v4002 = vsel %vm1469, %v3999, %v4001
      %v4003 = vrot.slane %v3881, 2
      %v4004 = vrot.slane %v3882, 2
      %v4005 = vsel %vm1469, %v4003, %v4004
      %v4006 = vrot.slane %v3883, 2
      %v4007 = vsel %vm1469, %v4004, %v4006
      %v4008 = vrot.slane %v3884, 2
      %v4009 = vrot.slane %v3885, 2
      %v4010 = vsel %vm1469, %v4008, %v4009
      %v4011 = vrot.slane %v3886, 2
      %v4012 = vsel %vm1469, %v4009, %v4011
      %v4013 = vrot.slane %v3887, 2
      %v4014 = vrot.slane %v3888, 2
      %v4015 = vsel %vm1469, %v4013, %v4014
      %v4016 = vrot.slane %v3889, 2
      %v4017 = vsel %vm1469, %v4014, %v4016
      %v4050 = vadd.f32 %v3562, %v3940
      %v4051 = vadd.f32 %v3563, %v3942
      %v4052 = vadd.f32 %v3564, %v3945
      %v4053 = vadd.f32 %v3565, %v3947
      %v4054 = vadd.f32 %v3566, %v3950
      %v4055 = vadd.f32 %v3567, %v3952
      %v4056 = vadd.f32 %v3568, %v3955
      %v4057 = vadd.f32 %v3569, %v3957
      %v4058 = vadd.f32 %v3570, %v3960
      %v4059 = vadd.f32 %v3571, %v3962
      %v4060 = vadd.f32 %v3572, %v3965
      %v4061 = vadd.f32 %v3573, %v3967
      %v4062 = vadd.f32 %v3574, %v3970
      %v4063 = vadd.f32 %v3575, %v3972
      %v4064 = vadd.f32 %v3576, %v3975
      %v4065 = vadd.f32 %v3577, %v3977
      %v4066 = vadd.f32 %v3578, %v3980
      %v4067 = vadd.f32 %v3579, %v3982
      %v4068 = vadd.f32 %v3580, %v3985
      %v4069 = vadd.f32 %v3581, %v3987
      %v4070 = vadd.f32 %v3582, %v3990
      %v4071 = vadd.f32 %v3583, %v3992
      %v4072 = vadd.f32 %v3584, %v3995
      %v4073 = vadd.f32 %v3585, %v3997
      %v4074 = vadd.f32 %v3586, %v4000
      %v4075 = vadd.f32 %v3587, %v4002
      %v4076 = vadd.f32 %v3588, %v4005
      %v4077 = vadd.f32 %v3589, %v4007
      %v4078 = vadd.f32 %v3590, %v4010
      %v4079 = vadd.f32 %v3591, %v4012
      %v4080 = vadd.f32 %v3592, %v4015
      %v4081 = vadd.f32 %v3593, %v4017
      %v4082 = vld [vmem:[%s4] sm:$0x1]
      %v4084 = vlaneseq
      %v4085 = vshrl.u32 %v4084, 7
      %v4086 = vsub.s32 0, %v4085
      %v4087 = vrot.slane %v4082, %v4086
      %v4089 = vadd.f32 %v3806, %v4087
      %v4090 = vadd.f32 %v3807, %v4087
      %v4091 = vadd.f32 %v3808, %v4087
      %v4092 = vadd.f32 %v3809, %v4087
      %v4093 = vadd.f32 %v3810, %v4087
      %v4094 = vadd.f32 %v3811, %v4087
      %v4095 = vadd.f32 %v3812, %v4087
      %v4096 = vadd.f32 %v3813, %v4087
      %v4097 = vadd.f32 %v3814, %v4087
      %v4098 = vadd.f32 %v3815, %v4087
      %v4099 = vadd.f32 %v3816, %v4087
      %v4100 = vadd.f32 %v3817, %v4087
      %v4101 = vadd.f32 %v3818, %v4087
      %v4102 = vadd.f32 %v3819, %v4087
      %v4103 = vadd.f32 %v3820, %v4087
      %v4104 = vadd.f32 %v3821, %v4087
      %v4105 = vadd.f32 %v3822, %v4087
      %v4106 = vadd.f32 %v3823, %v4087
      %v4107 = vadd.f32 %v3824, %v4087
      %v4108 = vadd.f32 %v3825, %v4087
      %v4109 = vadd.f32 %v3826, %v4087
      %v4110 = vadd.f32 %v3827, %v4087
      %v4111 = vadd.f32 %v3828, %v4087
      %v4112 = vadd.f32 %v3829, %v4087
      %v4113 = vadd.f32 %v3830, %v4087
      %v4114 = vadd.f32 %v3831, %v4087
      %v4115 = vadd.f32 %v3832, %v4087
      %v4116 = vadd.f32 %v3833, %v4087
      %v4117 = vadd.f32 %v3834, %v4087
      %v4118 = vadd.f32 %v3835, %v4087
      %v4119 = vadd.f32 %v3836, %v4087
      %v4120 = vadd.f32 %v3837, %v4087
      %v4121 = vld [vmem:[%s5] sm:$0x1]
      %v4123 = vlaneseq
      %v4124 = vshrl.u32 %v4123, 7
      %v4125 = vsub.s32 0, %v4124
      %v4126 = vrot.slane %v4121, %v4125
      %v4128 = vadd.f32 %v4050, %v4126
      %v4129 = vadd.f32 %v4051, %v4126
      %v4130 = vadd.f32 %v4052, %v4126
      %v4131 = vadd.f32 %v4053, %v4126
      %v4132 = vadd.f32 %v4054, %v4126
      %v4133 = vadd.f32 %v4055, %v4126
      %v4134 = vadd.f32 %v4056, %v4126
      %v4135 = vadd.f32 %v4057, %v4126
      %v4136 = vadd.f32 %v4058, %v4126
      %v4137 = vadd.f32 %v4059, %v4126
      %v4138 = vadd.f32 %v4060, %v4126
      %v4139 = vadd.f32 %v4061, %v4126
      %v4140 = vadd.f32 %v4062, %v4126
      %v4141 = vadd.f32 %v4063, %v4126
      %v4142 = vadd.f32 %v4064, %v4126
      %v4143 = vadd.f32 %v4065, %v4126
      %v4144 = vadd.f32 %v4066, %v4126
      %v4145 = vadd.f32 %v4067, %v4126
      %v4146 = vadd.f32 %v4068, %v4126
      %v4147 = vadd.f32 %v4069, %v4126
      %v4148 = vadd.f32 %v4070, %v4126
      %v4149 = vadd.f32 %v4071, %v4126
      %v4150 = vadd.f32 %v4072, %v4126
      %v4151 = vadd.f32 %v4073, %v4126
      %v4152 = vadd.f32 %v4074, %v4126
      %v4153 = vadd.f32 %v4075, %v4126
      %v4154 = vadd.f32 %v4076, %v4126
      %v4155 = vadd.f32 %v4077, %v4126
      %v4156 = vadd.f32 %v4078, %v4126
      %v4157 = vadd.f32 %v4079, %v4126
      %v4158 = vadd.f32 %v4080, %v4126
      %v4159 = vadd.f32 %v4081, %v4126
      %v4160 = vmul.f32 %v4089, %v4128
      %v4161 = vmul.f32 %v4090, %v4129
      %v4162 = vmul.f32 %v4091, %v4130
      %v4163 = vmul.f32 %v4092, %v4131
      %v4164 = vmul.f32 %v4093, %v4132
      %v4165 = vmul.f32 %v4094, %v4133
      %v4166 = vmul.f32 %v4095, %v4134
      %v4167 = vmul.f32 %v4096, %v4135
      %v4168 = vmul.f32 %v4097, %v4136
      %v4169 = vmul.f32 %v4098, %v4137
      %v4170 = vmul.f32 %v4099, %v4138
      %v4171 = vmul.f32 %v4100, %v4139
      %v4172 = vmul.f32 %v4101, %v4140
      %v4173 = vmul.f32 %v4102, %v4141
      %v4174 = vmul.f32 %v4103, %v4142
      %v4175 = vmul.f32 %v4104, %v4143
      %v4176 = vmul.f32 %v4105, %v4144
      %v4177 = vmul.f32 %v4106, %v4145
      %v4178 = vmul.f32 %v4107, %v4146
      %v4179 = vmul.f32 %v4108, %v4147
      %v4180 = vmul.f32 %v4109, %v4148
      %v4181 = vmul.f32 %v4110, %v4149
      %v4182 = vmul.f32 %v4111, %v4150
      %v4183 = vmul.f32 %v4112, %v4151
      %v4184 = vmul.f32 %v4113, %v4152
      %v4185 = vmul.f32 %v4114, %v4153
      %v4186 = vmul.f32 %v4115, %v4154
      %v4187 = vmul.f32 %v4116, %v4155
      %v4188 = vmul.f32 %v4117, %v4156
      %v4189 = vmul.f32 %v4118, %v4157
      %v4190 = vmul.f32 %v4119, %v4158
      %v4191 = vmul.f32 %v4120, %v4159
      %v4192 = vsel %vm326, %v4160, 0.0
      %v4193 = vsel %vm326, %v4162, 0.0
      %v4194 = vadd.f32 %v4192, %v4193
      %v4195 = vsel %vm326, %v4164, 0.0
      %v4196 = vadd.f32 %v4194, %v4195
      %v4197 = vsel %vm326, %v4166, 0.0
      %v4198 = vadd.f32 %v4196, %v4197
      %v4199 = vsel %vm326, %v4168, 0.0
      %v4200 = vadd.f32 %v4198, %v4199
      %v4201 = vsel %vm326, %v4170, 0.0
      %v4202 = vadd.f32 %v4200, %v4201
      %v4203 = vsel %vm326, %v4172, 0.0
      %v4204 = vadd.f32 %v4202, %v4203
      %v4205 = vsel %vm326, %v4174, 0.0
      %v4206 = vadd.f32 %v4204, %v4205
      %v4207 = vsel %vm326, %v4176, 0.0
      %v4208 = vadd.f32 %v4206, %v4207
      %v4209 = vsel %vm326, %v4178, 0.0
      %v4210 = vadd.f32 %v4208, %v4209
      %v4211 = vsel %vm326, %v4180, 0.0
      %v4212 = vadd.f32 %v4210, %v4211
      %v4213 = vsel %vm326, %v4182, 0.0
      %v4214 = vadd.f32 %v4212, %v4213
      %v4215 = vsel %vm326, %v4184, 0.0
      %v4216 = vadd.f32 %v4214, %v4215
      %v4217 = vsel %vm326, %v4186, 0.0
      %v4218 = vadd.f32 %v4216, %v4217
      %v4219 = vsel %vm326, %v4188, 0.0
      %v4220 = vadd.f32 %v4218, %v4219
      %v4221 = vsel %vm326, %v4190, 0.0
      %v4222 = vadd.f32 %v4220, %v4221
      %v4223 = vsel %vm326, %v4161, 0.0
      %v4224 = vsel %vm326, %v4163, 0.0
      %v4225 = vadd.f32 %v4223, %v4224
      %v4226 = vsel %vm326, %v4165, 0.0
      %v4227 = vadd.f32 %v4225, %v4226
      %v4228 = vsel %vm326, %v4167, 0.0
      %v4229 = vadd.f32 %v4227, %v4228
      %v4230 = vsel %vm326, %v4169, 0.0
      %v4231 = vadd.f32 %v4229, %v4230
      %v4232 = vsel %vm326, %v4171, 0.0
      %v4233 = vadd.f32 %v4231, %v4232
      %v4234 = vsel %vm326, %v4173, 0.0
      %v4235 = vadd.f32 %v4233, %v4234
      %v4236 = vsel %vm326, %v4175, 0.0
      %v4237 = vadd.f32 %v4235, %v4236
      %v4238 = vsel %vm326, %v4177, 0.0
      %v4239 = vadd.f32 %v4237, %v4238
      %v4240 = vsel %vm326, %v4179, 0.0
      %v4241 = vadd.f32 %v4239, %v4240
      %v4242 = vsel %vm326, %v4181, 0.0
      %v4243 = vadd.f32 %v4241, %v4242
      %v4244 = vsel %vm326, %v4183, 0.0
      %v4245 = vadd.f32 %v4243, %v4244
      %v4246 = vsel %vm326, %v4185, 0.0
      %v4247 = vadd.f32 %v4245, %v4246
      %v4248 = vsel %vm326, %v4187, 0.0
      %v4249 = vadd.f32 %v4247, %v4248
      %v4250 = vsel %vm326, %v4189, 0.0
      %v4251 = vadd.f32 %v4249, %v4250
      %v4252 = vsel %vm326, %v4191, 0.0
      %v4253 = vadd.f32 %v4251, %v4252
      %v4254 = vsel %vm326, %v4222, 0.0
      %v4255 = vsel %vm326, %v4253, 0.0
      %v4256 = vadd.f32 %v4254, %v4255
      %v4257 = vrot.slane %v4256, 4
      %v4258 = vadd.f32 %v4256, %v4257
      %v4259 = vrot.slane %v4258, 2
      %v4260 = vadd.f32 %v4258, %v4259
      %v4261 = vrot.slane %v4260, 1
      %v4262 = vadd.f32 %v4260, %v4261
      %v4263 = vmul.f32 %v4262, 0.00390625
      %v4264 = vld [vmem:[%s6] sm:$0xf]
      %v4265 = vld [vmem:[%s7] sm:$0x1]
      %v4267 = vsel %vm326, %v4263, 0
      %vm4269 = vcmask 1043456
      %v4271 = vsel %vm4269, %v4264, 0
      %4273 = vmatprep.subr.mxu0 0.0
      %4274 = vmatpush1.msra.mxu0 %v4271
      %4275 = vmatprep.subr.mxu0 0.0
      %4276 = vmatpush1.msra.mxu0 0.0
      %4277 = vmatprep.subr.mxu0 0.0
      %4278 = vmatpush1.msra.mxu0 0.0
      %4279 = vmatprep.subr.mxu0 0.0
      %4280 = vmatpush1.msra.mxu0 0.0
      %4281 = vmatprep.subr.mxu0 0.0
      %4282 = vmatpush1.msra.mxu0 0.0
      %4283 = vmatprep.subr.mxu0 0.0
      %4284 = vmatpush1.msra.mxu0 0.0
      %4285 = vmatprep.subr.mxu0 0.0
      %4286 = vmatpush1.msra.mxu0 0.0
      %4287 = vmatprep.subr.mxu0 0.0
      %4288 = vmatpush1.msra.mxu0 0.0
      %4289 = vmatprep.subr.mxu0 0.0
      %4290 = vmatpush1.msra.mxu0 0.0
      %4291 = vmatprep.subr.mxu0 0.0
      %4292 = vmatpush1.msra.mxu0 0.0
      %4293 = vmatprep.subr.mxu0 0.0
      %4294 = vmatpush1.msra.mxu0 0.0
      %4295 = vmatprep.subr.mxu0 0.0
      %4296 = vmatpush1.msra.mxu0 0.0
      %4297 = vmatprep.subr.mxu0 0.0
      %4298 = vmatpush1.msra.mxu0 0.0
      %4299 = vmatprep.subr.mxu0 0.0
      %4300 = vmatpush1.msra.mxu0 0.0
      %4301 = vmatprep.subr.mxu0 0.0
      %4302 = vmatpush1.msra.mxu0 0.0
      %4303 = vmatprep.subr.mxu0 0.0
      %4304 = vmatpush1.msra.mxu0 0.0
      %4305 = vmatprep.subr.mxu0 0.0
      %4306 = vmatpush1.msra.mxu0 0.0
      %4307 = vmatprep.subr.mxu0 0.0
      %4308 = vmatpush1.msra.mxu0 0.0
      %4309 = vmatprep.subr.mxu0 0.0
      %4310 = vmatpush1.msra.mxu0 0.0
      %4311 = vmatprep.subr.mxu0 0.0
      %4312 = vmatpush1.msra.mxu0 0.0
      %4313 = vmatprep.subr.mxu0 0.0
      %4314 = vmatpush1.msra.mxu0 0.0
      %4315 = vmatprep.subr.mxu0 0.0
      %4316 = vmatpush1.msra.mxu0 0.0
      %4317 = vmatprep.subr.mxu0 0.0
      %4318 = vmatpush1.msra.mxu0 0.0
      %4319 = vmatprep.subr.mxu0 0.0
      %4320 = vmatpush1.msra.mxu0 0.0
      %4321 = vmatprep.subr.mxu0 0.0
      %4322 = vmatpush1.msra.mxu0 0.0
      %4323 = vmatprep.subr.mxu0 0.0
      %4324 = vmatpush1.msra.mxu0 0.0
      %4325 = vmatprep.subr.mxu0 0.0
      %4326 = vmatpush1.msra.mxu0 0.0
      %4327 = vmatprep.subr.mxu0 0.0
      %4328 = vmatpush1.msra.mxu0 0.0
      %4329 = vmatprep.subr.mxu0 0.0
      %4330 = vmatpush1.msra.mxu0 0.0
      %4331 = vmatprep.subr.mxu0 0.0
      %4332 = vmatpush1.msra.mxu0 0.0
      %4333 = vmatprep.subr.mxu0 0.0
      %4334 = vmatpush1.msra.mxu0 0.0
      %4335 = vmatprep.subr.mxu0 0.0
      %4336 = vmatpush1.msra.mxu0 0.0
      %4337 = vmatprep.mubr.f32.mxu0 0.0
      %4338 = vmatmul.mubr.f32.gmra.mrb[0].mxu0 %v4267
      %v4339 = vpop.f32.mrb[0].mxu0
      %v4340 = vadd.f32 %v4265, %v4339
      %v4341 = vpop.f32.mrb[0].mxu0
      %4342 = vdwg.mxu0
      %v4343 = vlaneseq
      %v4344 = vshrl.u32 %v4343, 7
      %v4345 = vsub.s32 0, %v4344
      %v4346 = vrot.slane %v4340, %v4345
      %v4347 = vmul.f32 %v4160, %v4346
      %v4348 = vmul.f32 %v4161, %v4346
      %v4349 = vmul.f32 %v4162, %v4346
      %v4350 = vmul.f32 %v4163, %v4346
      %v4351 = vmul.f32 %v4164, %v4346
      %v4352 = vmul.f32 %v4165, %v4346
      %v4353 = vmul.f32 %v4166, %v4346
      %v4354 = vmul.f32 %v4167, %v4346
      %v4355 = vmul.f32 %v4168, %v4346
      %v4356 = vmul.f32 %v4169, %v4346
      %v4357 = vmul.f32 %v4170, %v4346
      %v4358 = vmul.f32 %v4171, %v4346
      %v4359 = vmul.f32 %v4172, %v4346
      %v4360 = vmul.f32 %v4173, %v4346
      %v4361 = vmul.f32 %v4174, %v4346
      %v4362 = vmul.f32 %v4175, %v4346
      %v4363 = vmul.f32 %v4176, %v4346
      %v4364 = vmul.f32 %v4177, %v4346
      %v4365 = vmul.f32 %v4178, %v4346
      %v4366 = vmul.f32 %v4179, %v4346
      %v4367 = vmul.f32 %v4180, %v4346
      %v4368 = vmul.f32 %v4181, %v4346
      %v4369 = vmul.f32 %v4182, %v4346
      %v4370 = vmul.f32 %v4183, %v4346
      %v4371 = vmul.f32 %v4184, %v4346
      %v4372 = vmul.f32 %v4185, %v4346
      %v4373 = vmul.f32 %v4186, %v4346
      %v4374 = vmul.f32 %v4187, %v4346
      %v4375 = vmul.f32 %v4188, %v4346
      %v4376 = vmul.f32 %v4189, %v4346
      %v4377 = vmul.f32 %v4190, %v4346
      %v4378 = vmul.f32 %v4191, %v4346
      %v4379 = vpack.c.bf16 %v4348, %v4347
      %v4380 = vpack.c.bf16 %v4350, %v4349
      %v4381 = vpack.c.bf16 %v4352, %v4351
      %v4382 = vpack.c.bf16 %v4354, %v4353
      %v4383 = vpack.c.bf16 %v4356, %v4355
      %v4384 = vpack.c.bf16 %v4358, %v4357
      %v4385 = vpack.c.bf16 %v4360, %v4359
      %v4386 = vpack.c.bf16 %v4362, %v4361
      %v4387 = vpack.c.bf16 %v4364, %v4363
      %v4388 = vpack.c.bf16 %v4366, %v4365
      %v4389 = vpack.c.bf16 %v4368, %v4367
      %v4390 = vpack.c.bf16 %v4370, %v4369
      %v4391 = vpack.c.bf16 %v4372, %v4371
      %v4392 = vpack.c.bf16 %v4374, %v4373
      %v4393 = vpack.c.bf16 %v4376, %v4375
      %v4394 = vpack.c.bf16 %v4378, %v4377
      %v4411 = vunpack.c.l.b16 %v4379
      %v4412 = vunpack.c.h.b16 %v4379
      %v4413 = vunpack.c.l.b16 %v4380
      %v4414 = vunpack.c.h.b16 %v4380
      %v4415 = vunpack.c.l.b16 %v4381
      %v4416 = vunpack.c.h.b16 %v4381
      %v4417 = vunpack.c.l.b16 %v4382
      %v4418 = vunpack.c.h.b16 %v4382
      %v4419 = vunpack.c.l.b16 %v4383
      %v4420 = vunpack.c.h.b16 %v4383
      %v4421 = vunpack.c.l.b16 %v4384
      %v4422 = vunpack.c.h.b16 %v4384
      %v4423 = vunpack.c.l.b16 %v4385
      %v4424 = vunpack.c.h.b16 %v4385
      %v4425 = vunpack.c.l.b16 %v4386
      %v4426 = vunpack.c.h.b16 %v4386
      %v4427 = vunpack.c.l.b16 %v4387
      %v4428 = vunpack.c.h.b16 %v4387
      %v4429 = vunpack.c.l.b16 %v4388
      %v4430 = vunpack.c.h.b16 %v4388
      %v4431 = vunpack.c.l.b16 %v4389
      %v4432 = vunpack.c.h.b16 %v4389
      %v4433 = vunpack.c.l.b16 %v4390
      %v4434 = vunpack.c.h.b16 %v4390
      %v4435 = vunpack.c.l.b16 %v4391
      %v4436 = vunpack.c.h.b16 %v4391
      %v4437 = vunpack.c.l.b16 %v4392
      %v4438 = vunpack.c.h.b16 %v4392
      %v4439 = vunpack.c.l.b16 %v4393
      %v4440 = vunpack.c.h.b16 %v4393
      %v4441 = vunpack.c.l.b16 %v4394
      %v4442 = vunpack.c.h.b16 %v4394
      %v4443 = vpack.c.b16 %v4411, %v4411
      %v4444 = vpack.c.b16 %v4412, %v4412
      %v4445 = vpack.c.b16 %v4413, %v4413
      %v4446 = vpack.c.b16 %v4414, %v4414
      %v4447 = vpack.c.b16 %v4415, %v4415
      %v4448 = vpack.c.b16 %v4416, %v4416
      %v4449 = vpack.c.b16 %v4417, %v4417
      %v4450 = vpack.c.b16 %v4418, %v4418
      %v4451 = vpack.c.b16 %v4419, %v4419
      %v4452 = vpack.c.b16 %v4420, %v4420
      %v4453 = vpack.c.b16 %v4421, %v4421
      %v4454 = vpack.c.b16 %v4422, %v4422
      %v4455 = vpack.c.b16 %v4423, %v4423
      %v4456 = vpack.c.b16 %v4424, %v4424
      %v4457 = vpack.c.b16 %v4425, %v4425
      %v4458 = vpack.c.b16 %v4426, %v4426
      %v4459 = vpack.c.b16 %v4427, %v4427
      %v4460 = vpack.c.b16 %v4428, %v4428
      %v4461 = vpack.c.b16 %v4429, %v4429
      %v4462 = vpack.c.b16 %v4430, %v4430
      %v4463 = vpack.c.b16 %v4431, %v4431
      %v4464 = vpack.c.b16 %v4432, %v4432
      %v4465 = vpack.c.b16 %v4433, %v4433
      %v4466 = vpack.c.b16 %v4434, %v4434
      %v4467 = vpack.c.b16 %v4435, %v4435
      %v4468 = vpack.c.b16 %v4436, %v4436
      %v4469 = vpack.c.b16 %v4437, %v4437
      %v4470 = vpack.c.b16 %v4438, %v4438
      %v4471 = vpack.c.b16 %v4439, %v4439
      %v4472 = vpack.c.b16 %v4440, %v4440
      %v4473 = vpack.c.b16 %v4441, %v4441
      %v4474 = vpack.c.b16 %v4442, %v4442
      %vm4507 = vcmask 27648
      %4508 = vst.msk [vmem:[%s325] sm:$0xf] %vm4507, %v4443
      %4509 = vst.msk [vmem:[%s325 + $0x4] sm:$0xf] %vm4507, %v4444
      %4510 = vst.msk [vmem:[%s325 + $0x8] sm:$0xf] %vm4507, %v4445
      %4511 = vst.msk [vmem:[%s325 + $0xc] sm:$0xf] %vm4507, %v4446
      %4512 = vst.msk [vmem:[%s325 + $0x10] sm:$0xf] %vm4507, %v4447
      %4513 = vst.msk [vmem:[%s325 + $0x14] sm:$0xf] %vm4507, %v4448
      %4514 = vst.msk [vmem:[%s325 + $0x18] sm:$0xf] %vm4507, %v4449
      %4515 = vst.msk [vmem:[%s325 + $0x1c] sm:$0xf] %vm4507, %v4450
      %4516 = vst.msk [vmem:[%s325 + $0x20] sm:$0xf] %vm4507, %v4451
      %4517 = vst.msk [vmem:[%s325 + $0x24] sm:$0xf] %vm4507, %v4452
      %4518 = vst.msk [vmem:[%s325 + $0x28] sm:$0xf] %vm4507, %v4453
      %4519 = vst.msk [vmem:[%s325 + $0x2c] sm:$0xf] %vm4507, %v4454
      %4520 = vst.msk [vmem:[%s325 + $0x30] sm:$0xf] %vm4507, %v4455
      %4521 = vst.msk [vmem:[%s325 + $0x34] sm:$0xf] %vm4507, %v4456
      %4522 = vst.msk [vmem:[%s325 + $0x38] sm:$0xf] %vm4507, %v4457
      %4523 = vst.msk [vmem:[%s325 + $0x3c] sm:$0xf] %vm4507, %v4458
      %4524 = vst.msk [vmem:[%s325 + $0x40] sm:$0xf] %vm4507, %v4459
      %4525 = vst.msk [vmem:[%s325 + $0x44] sm:$0xf] %vm4507, %v4460
      %4526 = vst.msk [vmem:[%s325 + $0x48] sm:$0xf] %vm4507, %v4461
      %4527 = vst.msk [vmem:[%s325 + $0x4c] sm:$0xf] %vm4507, %v4462
      %4528 = vst.msk [vmem:[%s325 + $0x50] sm:$0xf] %vm4507, %v4463
      %4529 = vst.msk [vmem:[%s325 + $0x54] sm:$0xf] %vm4507, %v4464
      %4530 = vst.msk [vmem:[%s325 + $0x58] sm:$0xf] %vm4507, %v4465
      %4531 = vst.msk [vmem:[%s325 + $0x5c] sm:$0xf] %vm4507, %v4466
      %4532 = vst.msk [vmem:[%s325 + $0x60] sm:$0xf] %vm4507, %v4467
      %4533 = vst.msk [vmem:[%s325 + $0x64] sm:$0xf] %vm4507, %v4468
      %4534 = vst.msk [vmem:[%s325 + $0x68] sm:$0xf] %vm4507, %v4469
      %4535 = vst.msk [vmem:[%s325 + $0x6c] sm:$0xf] %vm4507, %v4470
      %4536 = vst.msk [vmem:[%s325 + $0x70] sm:$0xf] %vm4507, %v4471
      %4537 = vst.msk [vmem:[%s325 + $0x74] sm:$0xf] %vm4507, %v4472
      %4538 = vst.msk [vmem:[%s325 + $0x78] sm:$0xf] %vm4507, %v4473
      %4539 = vst.msk [vmem:[%s325 + $0x7c] sm:$0xf] %vm4507, %v4474
      %p4540 = scmp.lt.s32.totalorder %s19, 1
      %s4541 = scalar_select %p4540, %s19, 1
      %s4542 = smul.addr %s4541, 32
      %s4543 = smul.addr %s4542, 4
      %s4544 = scalar_lea.vmem %s8, %s4543
      // Predicated region
      $region53: #{fnafnet_block_forward.5} parent=51 // pred_check
        %p4545 = pneg %p215
      $region54: #{fnafnet_block_forward.5} parent=51 // pred_check_branch
        %4547 = sbr.rel (%p4545) target = $region56
      $region55: #{fnafnet_block_forward.5} parent=51 // pred_region
        _
      $region56: #{fnafnet_block_forward.5} parent=51 // pred_fallthru
        _
    $region52: #{fnafnet_block_forward.5} parent=5 // pred_fallthru
      _
    %p4548 = scmp.le.s32.totalorder 2, %s14
    // Predicated region
    $region57: #{fnafnet_block_forward.5} parent=5 // pred_check
      %p4549 = pneg %p4548
    $region58: #{fnafnet_block_forward.5} parent=5 // pred_check_branch
      %4551 = sbr.rel (%p4549) target = $region60
    $region59: #{fnafnet_block_forward.5} parent=5 // pred_region
      %s4552 = ssub.s32 %s14, 2
      // Predicated region
      $region61: #{fnafnet_block_forward.5} parent=59 // pred_check
        %p4553 = pneg %p221
      $region62: #{fnafnet_block_forward.5} parent=59 // pred_check_branch
        %4555 = sbr.rel (%p4553) target = $region64
      $region63: #{fnafnet_block_forward.5} parent=59 // pred_region
        %p4556 = scmp.lt.s32.totalorder %s20, 1
        %s4557 = scalar_select %p4556, %s20, 1
        %s4558 = smul.addr %s4557, 32
        %s4559 = smul.addr %s4558, 4
        %s4560 = scalar_lea.vmem %s8, %s4559
      $region64: #{fnafnet_block_forward.5} parent=59 // pred_fallthru
        _
    $region60: #{fnafnet_block_forward.5} parent=5 // pred_fallthru
      _
  $region6: #{fnafnet_block_forward.5} parent=0 // loop_footer
    %s18 = sadd.s32 1, %s14
  $region7: #{fnafnet_block_forward.5} parent=0 // loop_footer_branch
    %13 = sbr.rel target = $region3
  $region8: #{fnafnet_block_forward.5} parent=0 // loop_exit
    _

// kernel: fnafnet_block_forward.7
$region0: #{fnafnet_block_forward.7}
  #allocation0 [shape = 'u32[]', space=smem, size = 0x4, offset = 0x4, fixed_abs, tag = 'smem constant byte address 0x4 - core index']
  #allocation1 [shape = 'u32[144,128]{1,0:T(1,128)}', space=vmem, size = 0x12000, scoped, tag = 'internal scratch']
  %s0 = inlined_call_operand.vmem [shape: bf16[512,4], index: 0, kind: input, shape index: {}]
  %s1 = inlined_call_operand.vmem [shape: f32[512,4], index: 1, kind: input, shape index: {}]
  %s2 = inlined_call_operand.vmem [shape: f32[512,4], index: 2, kind: input, shape index: {}, may-alias: {2,15}]
  %s3 = inlined_call_operand.vmem [shape: bf16[4,4], index: 3, kind: input, shape index: {}]
  %s4 = inlined_call_operand.vmem [shape: f32[1,4], index: 4, kind: input, shape index: {}]
  %s5 = inlined_call_operand.vmem [shape: f32[1,4], index: 5, kind: input, shape index: {}]
  %s6 = inlined_call_operand.vmem [shape: f32[1,4], index: 6, kind: input, shape index: {}]
  %s7 = inlined_call_operand.vmem [shape: f32[1,4], index: 7, kind: input, shape index: {}]
  %s8 = inlined_call_operand.vmem [shape: bf16[4,4], index: 8, kind: input, shape index: {}]
  %s9 = inlined_call_operand.vmem [shape: f32[1,4], index: 9, kind: input, shape index: {}]
  %s10 = inlined_call_operand.vmem [shape: bf16[4,4], index: 10, kind: input, shape index: {}]
  %s11 = inlined_call_operand.vmem [shape: f32[1,4], index: 11, kind: input, shape index: {}]
  %s12 = inlined_call_operand.vmem [shape: bf16[4,4], index: 12, kind: input, shape index: {}]
  %s13 = inlined_call_operand.vmem [shape: f32[1,4], index: 13, kind: input, shape index: {}]
  %s14 = inlined_call_operand.vmem [shape: f32[1,4], index: 14, kind: input, shape index: {}]
  %s15 = inlined_call_operand.vmem [shape: f32[512,4], index: 15, kind: output, shape index: {}, may-alias: {2,15}]
  %s16 = sld [smem:[#allocation0]]
  $region93: #{fnafnet_block_forward.7} parent=0
    _
  %s18 = ssub.s32 1, %s16
  %s19 = scalar_select 0, %s18, %s16
  loop: start=0, step=1, limit=6
  $region2: #{fnafnet_block_forward.7} parent=0 // loop_pre_header
    _
  $region3: #{fnafnet_block_forward.7} parent=0 // loop_header
    %s21 = sphi 0, %s25
    %p22 = scmp.ge.s32.totalorder %s21, 6
    %s31 = sphi 0, %s33
    %s34 = sphi 0, %s31
    %s35 = sphi 0, %s34
    %s51 = sphi 0, %s35
    %s57 = sphi 0, %s59
    %s60 = sphi 0, %s57
    %s61 = sphi 0, %s60
    %s77 = sphi 0, %s61
    %s83 = sphi 0, %s85
    %s86 = sphi 0, %s83
    %s87 = sphi 0, %s86
    %s103 = sphi 0, %s87
    %s107 = sphi 0, %s107
    %s109 = sphi 0, %s107
    %s110 = sphi 0, %s109
    %s124 = sphi 0, %s110
    %s128 = sphi 0, %s128
    %s130 = sphi 0, %s128
    %s131 = sphi 0, %s130
    %s145 = sphi 0, %s131
    %s149 = sphi 0, %s149
    %s151 = sphi 0, %s149
    %s152 = sphi 0, %s151
    %s166 = sphi 0, %s152
    %s170 = sphi 0, %s170
    %s172 = sphi 0, %s170
    %s173 = sphi 0, %s172
    %s187 = sphi 0, %s173
    %s191 = sphi 0, %s191
    %s193 = sphi 0, %s191
    %s194 = sphi 0, %s193
    %s208 = sphi 0, %s194
    %s212 = sphi 0, %s212
    %s214 = sphi 0, %s212
    %s215 = sphi 0, %s214
    %s229 = sphi 0, %s215
    %s233 = sphi 0, %s233
    %s235 = sphi 0, %s233
    %s236 = sphi 0, %s235
    %s250 = sphi 0, %s236
    %s254 = sphi 0, %s254
    %s256 = sphi 0, %s254
    %s257 = sphi 0, %s256
    %s271 = sphi 0, %s257
    %s275 = sphi 0, %s275
    %s277 = sphi 0, %s275
    %s278 = sphi 0, %s277
    %s292 = sphi 0, %s278
    %s296 = sphi 0, %s296
    %s298 = sphi 0, %s296
    %s299 = sphi 0, %s298
    %s313 = sphi 0, %s299
    %s317 = sphi 0, %s317
    %s319 = sphi 0, %s317
    %s320 = sphi 0, %s319
    %s334 = sphi 0, %s320
    %s338 = sphi 0, %s338
    %s340 = sphi 0, %s338
    %s341 = sphi 0, %s340
    %s355 = sphi 0, %s341
    %s361 = sphi 0, %s363
    %s364 = sphi 0, %s361
    %s365 = sphi 0, %s364
    %s381 = sphi 0, %s365
  $region4: #{fnafnet_block_forward.7} parent=0 // loop_header_branch
    %24 = sbr.rel (%p22) target = $region8
  $region5: #{fnafnet_block_forward.7} parent=0 // loop_body
    %s26 = ssub.s32 %s21, 1
    %s27 = ssub.s32 %s21, 2
    %s28 = sadd.s32 %s21, 1
    %s29 = ssub.s32 %s21, %s28
    %p30 = scmp.eq.s32.totalorder %s29, 0
    %s32 = sadd.s32 %s31, 1
    %s33 = scalar_select %p30, %s31, %s32
    %p36 = pneg %p30
    %p37 = scmp.eq.s32.totalorder %s21, 3
    %p38 = por %p36, %p37
    %p39 = scmp.ne.s32.totalorder %s31, %s34
    %p40 = scmp.eq.s32.totalorder %s21, 0
    %p41 = por %p39, %p40
    %p42 = scmp.ne.s32.totalorder %s31, %s34
    %p43 = scmp.eq.s32.totalorder %s26, 3
    %p44 = por %p42, %p43
    %p45 = scmp.ne.s32.totalorder %s34, %s35
    %p46 = scmp.eq.s32.totalorder %s26, 0
    %p47 = por %p45, %p46
    %p48 = scmp.ne.s32.totalorder %s34, %s35
    %p49 = scmp.eq.s32.totalorder %s27, 3
    %p50 = por %p48, %p49
    %p52 = scmp.ne.s32.totalorder %s35, %s51
    %p53 = scmp.eq.s32.totalorder %s27, 0
    %p54 = por %p52, %p53
    %s55 = ssub.s32 %s21, %s28
    %p56 = scmp.eq.s32.totalorder %s55, 0
    %s58 = sadd.s32 %s57, 1
    %s59 = scalar_select %p56, %s57, %s58
    %p62 = pneg %p56
    %p63 = scmp.eq.s32.totalorder %s21, 3
    %p64 = por %p62, %p63
    %p65 = scmp.ne.s32.totalorder %s57, %s60
    %p66 = scmp.eq.s32.totalorder %s21, 0
    %p67 = por %p65, %p66
    %p68 = scmp.ne.s32.totalorder %s57, %s60
    %p69 = scmp.eq.s32.totalorder %s26, 3
    %p70 = por %p68, %p69
    %p71 = scmp.ne.s32.totalorder %s60, %s61
    %p72 = scmp.eq.s32.totalorder %s26, 0
    %p73 = por %p71, %p72
    %p74 = scmp.ne.s32.totalorder %s60, %s61
    %p75 = scmp.eq.s32.totalorder %s27, 3
    %p76 = por %p74, %p75
    %p78 = scmp.ne.s32.totalorder %s61, %s77
    %p79 = scmp.eq.s32.totalorder %s27, 0
    %p80 = por %p78, %p79
    %s81 = ssub.s32 %s21, %s28
    %p82 = scmp.eq.s32.totalorder %s81, 0
    %s84 = sadd.s32 %s83, 1
    %s85 = scalar_select %p82, %s83, %s84
    %p88 = pneg %p82
    %p89 = scmp.eq.s32.totalorder %s21, 3
    %p90 = por %p88, %p89
    %p91 = scmp.ne.s32.totalorder %s83, %s86
    %p92 = scmp.eq.s32.totalorder %s21, 0
    %p93 = por %p91, %p92
    %p94 = scmp.ne.s32.totalorder %s83, %s86
    %p95 = scmp.eq.s32.totalorder %s26, 3
    %p96 = por %p94, %p95
    %p97 = scmp.ne.s32.totalorder %s86, %s87
    %p98 = scmp.eq.s32.totalorder %s26, 0
    %p99 = por %p97, %p98
    %p100 = scmp.ne.s32.totalorder %s86, %s87
    %p101 = scmp.eq.s32.totalorder %s27, 3
    %p102 = por %p100, %p101
    %p104 = scmp.ne.s32.totalorder %s87, %s103
    %p105 = scmp.eq.s32.totalorder %s27, 0
    %p106 = por %p104, %p105
    %s108 = sadd.s32 %s107, 1
    %p111 = scmp.eq.s32.totalorder %s21, 3
    %p112 = scmp.ne.s32.totalorder %s107, %s109
    %p113 = scmp.eq.s32.totalorder %s21, 0
    %p114 = por %p112, %p113
    %p115 = scmp.ne.s32.totalorder %s107, %s109
    %p116 = scmp.eq.s32.totalorder %s26, 3
    %p117 = por %p115, %p116
    %p118 = scmp.ne.s32.totalorder %s109, %s110
    %p119 = scmp.eq.s32.totalorder %s26, 0
    %p120 = por %p118, %p119
    %p121 = scmp.ne.s32.totalorder %s109, %s110
    %p122 = scmp.eq.s32.totalorder %s27, 3
    %p123 = por %p121, %p122
    %p125 = scmp.ne.s32.totalorder %s110, %s124
    %p126 = scmp.eq.s32.totalorder %s27, 0
    %p127 = por %p125, %p126
    %s129 = sadd.s32 %s128, 1
    %p132 = scmp.eq.s32.totalorder %s21, 3
    %p133 = scmp.ne.s32.totalorder %s128, %s130
    %p134 = scmp.eq.s32.totalorder %s21, 0
    %p135 = por %p133, %p134
    %p136 = scmp.ne.s32.totalorder %s128, %s130
    %p137 = scmp.eq.s32.totalorder %s26, 3
    %p138 = por %p136, %p137
    %p139 = scmp.ne.s32.totalorder %s130, %s131
    %p140 = scmp.eq.s32.totalorder %s26, 0
    %p141 = por %p139, %p140
    %p142 = scmp.ne.s32.totalorder %s130, %s131
    %p143 = scmp.eq.s32.totalorder %s27, 3
    %p144 = por %p142, %p143
    %p146 = scmp.ne.s32.totalorder %s131, %s145
    %p147 = scmp.eq.s32.totalorder %s27, 0
    %p148 = por %p146, %p147
    %s150 = sadd.s32 %s149, 1
    %p153 = scmp.eq.s32.totalorder %s21, 3
    %p154 = scmp.ne.s32.totalorder %s149, %s151
    %p155 = scmp.eq.s32.totalorder %s21, 0
    %p156 = por %p154, %p155
    %p157 = scmp.ne.s32.totalorder %s149, %s151
    %p158 = scmp.eq.s32.totalorder %s26, 3
    %p159 = por %p157, %p158
    %p160 = scmp.ne.s32.totalorder %s151, %s152
    %p161 = scmp.eq.s32.totalorder %s26, 0
    %p162 = por %p160, %p161
    %p163 = scmp.ne.s32.totalorder %s151, %s152
    %p164 = scmp.eq.s32.totalorder %s27, 3
    %p165 = por %p163, %p164
    %p167 = scmp.ne.s32.totalorder %s152, %s166
    %p168 = scmp.eq.s32.totalorder %s27, 0
    %p169 = por %p167, %p168
    %s171 = sadd.s32 %s170, 1
    %p174 = scmp.eq.s32.totalorder %s21, 3
    %p175 = scmp.ne.s32.totalorder %s170, %s172
    %p176 = scmp.eq.s32.totalorder %s21, 0
    %p177 = por %p175, %p176
    %p178 = scmp.ne.s32.totalorder %s170, %s172
    %p179 = scmp.eq.s32.totalorder %s26, 3
    %p180 = por %p178, %p179
    %p181 = scmp.ne.s32.totalorder %s172, %s173
    %p182 = scmp.eq.s32.totalorder %s26, 0
    %p183 = por %p181, %p182
    %p184 = scmp.ne.s32.totalorder %s172, %s173
    %p185 = scmp.eq.s32.totalorder %s27, 3
    %p186 = por %p184, %p185
    %p188 = scmp.ne.s32.totalorder %s173, %s187
    %p189 = scmp.eq.s32.totalorder %s27, 0
    %p190 = por %p188, %p189
    %s192 = sadd.s32 %s191, 1
    %p195 = scmp.eq.s32.totalorder %s21, 3
    %p196 = scmp.ne.s32.totalorder %s191, %s193
    %p197 = scmp.eq.s32.totalorder %s21, 0
    %p198 = por %p196, %p197
    %p199 = scmp.ne.s32.totalorder %s191, %s193
    %p200 = scmp.eq.s32.totalorder %s26, 3
    %p201 = por %p199, %p200
    %p202 = scmp.ne.s32.totalorder %s193, %s194
    %p203 = scmp.eq.s32.totalorder %s26, 0
    %p204 = por %p202, %p203
    %p205 = scmp.ne.s32.totalorder %s193, %s194
    %p206 = scmp.eq.s32.totalorder %s27, 3
    %p207 = por %p205, %p206
    %p209 = scmp.ne.s32.totalorder %s194, %s208
    %p210 = scmp.eq.s32.totalorder %s27, 0
    %p211 = por %p209, %p210
    %s213 = sadd.s32 %s212, 1
    %p216 = scmp.eq.s32.totalorder %s21, 3
    %p217 = scmp.ne.s32.totalorder %s212, %s214
    %p218 = scmp.eq.s32.totalorder %s21, 0
    %p219 = por %p217, %p218
    %p220 = scmp.ne.s32.totalorder %s212, %s214
    %p221 = scmp.eq.s32.totalorder %s26, 3
    %p222 = por %p220, %p221
    %p223 = scmp.ne.s32.totalorder %s214, %s215
    %p224 = scmp.eq.s32.totalorder %s26, 0
    %p225 = por %p223, %p224
    %p226 = scmp.ne.s32.totalorder %s214, %s215
    %p227 = scmp.eq.s32.totalorder %s27, 3
    %p228 = por %p226, %p227
    %p230 = scmp.ne.s32.totalorder %s215, %s229
    %p231 = scmp.eq.s32.totalorder %s27, 0
    %p232 = por %p230, %p231
    %s234 = sadd.s32 %s233, 1
    %p237 = scmp.eq.s32.totalorder %s21, 3
    %p238 = scmp.ne.s32.totalorder %s233, %s235
    %p239 = scmp.eq.s32.totalorder %s21, 0
    %p240 = por %p238, %p239
    %p241 = scmp.ne.s32.totalorder %s233, %s235
    %p242 = scmp.eq.s32.totalorder %s26, 3
    %p243 = por %p241, %p242
    %p244 = scmp.ne.s32.totalorder %s235, %s236
    %p245 = scmp.eq.s32.totalorder %s26, 0
    %p246 = por %p244, %p245
    %p247 = scmp.ne.s32.totalorder %s235, %s236
    %p248 = scmp.eq.s32.totalorder %s27, 3
    %p249 = por %p247, %p248
    %p251 = scmp.ne.s32.totalorder %s236, %s250
    %p252 = scmp.eq.s32.totalorder %s27, 0
    %p253 = por %p251, %p252
    %s255 = sadd.s32 %s254, 1
    %p258 = scmp.eq.s32.totalorder %s21, 3
    %p259 = scmp.ne.s32.totalorder %s254, %s256
    %p260 = scmp.eq.s32.totalorder %s21, 0
    %p261 = por %p259, %p260
    %p262 = scmp.ne.s32.totalorder %s254, %s256
    %p263 = scmp.eq.s32.totalorder %s26, 3
    %p264 = por %p262, %p263
    %p265 = scmp.ne.s32.totalorder %s256, %s257
    %p266 = scmp.eq.s32.totalorder %s26, 0
    %p267 = por %p265, %p266
    %p268 = scmp.ne.s32.totalorder %s256, %s257
    %p269 = scmp.eq.s32.totalorder %s27, 3
    %p270 = por %p268, %p269
    %p272 = scmp.ne.s32.totalorder %s257, %s271
    %p273 = scmp.eq.s32.totalorder %s27, 0
    %p274 = por %p272, %p273
    %s276 = sadd.s32 %s275, 1
    %p279 = scmp.eq.s32.totalorder %s21, 3
    %p280 = scmp.ne.s32.totalorder %s275, %s277
    %p281 = scmp.eq.s32.totalorder %s21, 0
    %p282 = por %p280, %p281
    %p283 = scmp.ne.s32.totalorder %s275, %s277
    %p284 = scmp.eq.s32.totalorder %s26, 3
    %p285 = por %p283, %p284
    %p286 = scmp.ne.s32.totalorder %s277, %s278
    %p287 = scmp.eq.s32.totalorder %s26, 0
    %p288 = por %p286, %p287
    %p289 = scmp.ne.s32.totalorder %s277, %s278
    %p290 = scmp.eq.s32.totalorder %s27, 3
    %p291 = por %p289, %p290
    %p293 = scmp.ne.s32.totalorder %s278, %s292
    %p294 = scmp.eq.s32.totalorder %s27, 0
    %p295 = por %p293, %p294
    %s297 = sadd.s32 %s296, 1
    %p300 = scmp.eq.s32.totalorder %s21, 3
    %p301 = scmp.ne.s32.totalorder %s296, %s298
    %p302 = scmp.eq.s32.totalorder %s21, 0
    %p303 = por %p301, %p302
    %p304 = scmp.ne.s32.totalorder %s296, %s298
    %p305 = scmp.eq.s32.totalorder %s26, 3
    %p306 = por %p304, %p305
    %p307 = scmp.ne.s32.totalorder %s298, %s299
    %p308 = scmp.eq.s32.totalorder %s26, 0
    %p309 = por %p307, %p308
    %p310 = scmp.ne.s32.totalorder %s298, %s299
    %p311 = scmp.eq.s32.totalorder %s27, 3
    %p312 = por %p310, %p311
    %p314 = scmp.ne.s32.totalorder %s299, %s313
    %p315 = scmp.eq.s32.totalorder %s27, 0
    %p316 = por %p314, %p315
    %s318 = sadd.s32 %s317, 1
    %p321 = scmp.eq.s32.totalorder %s21, 3
    %p322 = scmp.ne.s32.totalorder %s317, %s319
    %p323 = scmp.eq.s32.totalorder %s21, 0
    %p324 = por %p322, %p323
    %p325 = scmp.ne.s32.totalorder %s317, %s319
    %p326 = scmp.eq.s32.totalorder %s26, 3
    %p327 = por %p325, %p326
    %p328 = scmp.ne.s32.totalorder %s319, %s320
    %p329 = scmp.eq.s32.totalorder %s26, 0
    %p330 = por %p328, %p329
    %p331 = scmp.ne.s32.totalorder %s319, %s320
    %p332 = scmp.eq.s32.totalorder %s27, 3
    %p333 = por %p331, %p332
    %p335 = scmp.ne.s32.totalorder %s320, %s334
    %p336 = scmp.eq.s32.totalorder %s27, 0
    %p337 = por %p335, %p336
    %s339 = sadd.s32 %s338, 1
    %p342 = scmp.eq.s32.totalorder %s21, 3
    %p343 = scmp.ne.s32.totalorder %s338, %s340
    %p344 = scmp.eq.s32.totalorder %s21, 0
    %p345 = por %p343, %p344
    %p346 = scmp.ne.s32.totalorder %s338, %s340
    %p347 = scmp.eq.s32.totalorder %s26, 3
    %p348 = por %p346, %p347
    %p349 = scmp.ne.s32.totalorder %s340, %s341
    %p350 = scmp.eq.s32.totalorder %s26, 0
    %p351 = por %p349, %p350
    %p352 = scmp.ne.s32.totalorder %s340, %s341
    %p353 = scmp.eq.s32.totalorder %s27, 3
    %p354 = por %p352, %p353
    %p356 = scmp.ne.s32.totalorder %s341, %s355
    %p357 = scmp.eq.s32.totalorder %s27, 0
    %p358 = por %p356, %p357
    %s359 = ssub.s32 %s21, %s28
    %p360 = scmp.eq.s32.totalorder %s359, 0
    %s362 = sadd.s32 %s361, 1
    %s363 = scalar_select %p360, %s361, %s362
    %p366 = pneg %p360
    %p367 = scmp.eq.s32.totalorder %s21, 3
    %p368 = por %p366, %p367
    %p369 = scmp.ne.s32.totalorder %s361, %s364
    %p370 = scmp.eq.s32.totalorder %s21, 0
    %p371 = por %p369, %p370
    %p372 = scmp.ne.s32.totalorder %s361, %s364
    %p373 = scmp.eq.s32.totalorder %s26, 3
    %p374 = por %p372, %p373
    %p375 = scmp.ne.s32.totalorder %s364, %s365
    %p376 = scmp.eq.s32.totalorder %s26, 0
    %p377 = por %p375, %p376
    %p378 = scmp.ne.s32.totalorder %s364, %s365
    %p379 = scmp.eq.s32.totalorder %s27, 3
    %p380 = por %p378, %p379
    %p382 = scmp.ne.s32.totalorder %s365, %s381
    %p383 = scmp.eq.s32.totalorder %s27, 0
    %p384 = por %p382, %p383
    %p385 = scmp.le.s32.totalorder 1, %s21
    %p386 = scmp.lt.s32.totalorder %s21, 5
    %p387 = pnand %p385, %p386
    %p388 = pneg %p387
    // Predicated region
    $region9: #{fnafnet_block_forward.7} parent=5 // pred_check
      _
    $region10: #{fnafnet_block_forward.7} parent=5 // pred_check_branch
      %390 = sbr.rel (%p387) target = $region12
    $region11: #{fnafnet_block_forward.7} parent=5 // pred_region
      %s391 = ssub.s32 %s21, 1
      // Predicated region
      $region13: #{fnafnet_block_forward.7} parent=11 // pred_check
        %p392 = pneg %p120
      $region14: #{fnafnet_block_forward.7} parent=11 // pred_check_branch
        %394 = sbr.rel (%p392) target = $region16
      $region15: #{fnafnet_block_forward.7} parent=11 // pred_region
        _
      $region16: #{fnafnet_block_forward.7} parent=11 // pred_fallthru
        _
      // Predicated region
      $region17: #{fnafnet_block_forward.7} parent=11 // pred_check
        %p395 = pneg %p141
      $region18: #{fnafnet_block_forward.7} parent=11 // pred_check_branch
        %397 = sbr.rel (%p395) target = $region20
      $region19: #{fnafnet_block_forward.7} parent=11 // pred_region
        _
      $region20: #{fnafnet_block_forward.7} parent=11 // pred_fallthru
        _
      // Predicated region
      $region21: #{fnafnet_block_forward.7} parent=11 // pred_check
        %p398 = pneg %p162
      $region22: #{fnafnet_block_forward.7} parent=11 // pred_check_branch
        %400 = sbr.rel (%p398) target = $region24
      $region23: #{fnafnet_block_forward.7} parent=11 // pred_region
        _
      $region24: #{fnafnet_block_forward.7} parent=11 // pred_fallthru
        _
      // Predicated region
      $region25: #{fnafnet_block_forward.7} parent=11 // pred_check
        %p401 = pneg %p183
      $region26: #{fnafnet_block_forward.7} parent=11 // pred_check_branch
        %403 = sbr.rel (%p401) target = $region28
      $region27: #{fnafnet_block_forward.7} parent=11 // pred_region
        _
      $region28: #{fnafnet_block_forward.7} parent=11 // pred_fallthru
        _
      // Predicated region
      $region29: #{fnafnet_block_forward.7} parent=11 // pred_check
        %p404 = pneg %p204
      $region30: #{fnafnet_block_forward.7} parent=11 // pred_check_branch
        %406 = sbr.rel (%p404) target = $region32
      $region31: #{fnafnet_block_forward.7} parent=11 // pred_region
        _
      $region32: #{fnafnet_block_forward.7} parent=11 // pred_fallthru
        _
      // Predicated region
      $region33: #{fnafnet_block_forward.7} parent=11 // pred_check
        %p407 = pneg %p225
      $region34: #{fnafnet_block_forward.7} parent=11 // pred_check_branch
        %409 = sbr.rel (%p407) target = $region36
      $region35: #{fnafnet_block_forward.7} parent=11 // pred_region
        _
      $region36: #{fnafnet_block_forward.7} parent=11 // pred_fallthru
        _
      // Predicated region
      $region37: #{fnafnet_block_forward.7} parent=11 // pred_check
        %p410 = pneg %p246
      $region38: #{fnafnet_block_forward.7} parent=11 // pred_check_branch
        %412 = sbr.rel (%p410) target = $region40
      $region39: #{fnafnet_block_forward.7} parent=11 // pred_region
        _
      $region40: #{fnafnet_block_forward.7} parent=11 // pred_fallthru
        _
      // Predicated region
      $region41: #{fnafnet_block_forward.7} parent=11 // pred_check
        %p413 = pneg %p267
      $region42: #{fnafnet_block_forward.7} parent=11 // pred_check_branch
        %415 = sbr.rel (%p413) target = $region44
      $region43: #{fnafnet_block_forward.7} parent=11 // pred_region
        _
      $region44: #{fnafnet_block_forward.7} parent=11 // pred_fallthru
        _
      // Predicated region
      $region45: #{fnafnet_block_forward.7} parent=11 // pred_check
        %p416 = pneg %p288
      $region46: #{fnafnet_block_forward.7} parent=11 // pred_check_branch
        %418 = sbr.rel (%p416) target = $region48
      $region47: #{fnafnet_block_forward.7} parent=11 // pred_region
        _
      $region48: #{fnafnet_block_forward.7} parent=11 // pred_fallthru
        _
      // Predicated region
      $region49: #{fnafnet_block_forward.7} parent=11 // pred_check
        %p419 = pneg %p309
      $region50: #{fnafnet_block_forward.7} parent=11 // pred_check_branch
        %421 = sbr.rel (%p419) target = $region52
      $region51: #{fnafnet_block_forward.7} parent=11 // pred_region
        _
      $region52: #{fnafnet_block_forward.7} parent=11 // pred_fallthru
        _
      // Predicated region
      $region53: #{fnafnet_block_forward.7} parent=11 // pred_check
        %p422 = pneg %p330
      $region54: #{fnafnet_block_forward.7} parent=11 // pred_check_branch
        %424 = sbr.rel (%p422) target = $region56
      $region55: #{fnafnet_block_forward.7} parent=11 // pred_region
        _
      $region56: #{fnafnet_block_forward.7} parent=11 // pred_fallthru
        _
      // Predicated region
      $region57: #{fnafnet_block_forward.7} parent=11 // pred_check
        %p425 = pneg %p351
      $region58: #{fnafnet_block_forward.7} parent=11 // pred_check_branch
        %427 = sbr.rel (%p425) target = $region60
      $region59: #{fnafnet_block_forward.7} parent=11 // pred_region
        _
      $region60: #{fnafnet_block_forward.7} parent=11 // pred_fallthru
        _
    $region12: #{fnafnet_block_forward.7} parent=5 // pred_fallthru
      _
    %p428 = scmp.lt.s32.totalorder %s21, 4
    // Predicated region
    $region61: #{fnafnet_block_forward.7} parent=5 // pred_check
      %p429 = pneg %p428
    $region62: #{fnafnet_block_forward.7} parent=5 // pred_check_branch
      %431 = sbr.rel (%p429) target = $region64
    $region63: #{fnafnet_block_forward.7} parent=5 // pred_region
      // Predicated region
      $region65: #{fnafnet_block_forward.7} parent=63 // pred_check
        %p432 = pneg %p41
      $region66: #{fnafnet_block_forward.7} parent=63 // pred_check_branch
        %434 = sbr.rel (%p432) target = $region68
      $region67: #{fnafnet_block_forward.7} parent=63 // pred_region
        %s435 = smul.u32 16, %s21
        %p436 = scmp.lt.s32.totalorder %s435, 63
        %s437 = scalar_select %p436, %s435, 63
        %s438 = smul.addr %s437, 4
        %s439 = scalar_lea.vmem %s0, %s438
        %s440 = smul.u32 16, %s21
      $region68: #{fnafnet_block_forward.7} parent=63 // pred_fallthru
        _
      // Predicated region
      $region69: #{fnafnet_block_forward.7} parent=63 // pred_check
        %p441 = pneg %p67
      $region70: #{fnafnet_block_forward.7} parent=63 // pred_check_branch
        %443 = sbr.rel (%p441) target = $region72
      $region71: #{fnafnet_block_forward.7} parent=63 // pred_region
        %s444 = smul.u32 16, %s21
        %p445 = scmp.lt.s32.totalorder %s444, 63
        %s446 = scalar_select %p445, %s444, 63
        %s447 = smul.addr %s446, 8
        %s448 = scalar_lea.vmem %s1, %s447
        %s449 = smul.u32 16, %s21
      $region72: #{fnafnet_block_forward.7} parent=63 // pred_fallthru
        _
      // Predicated region
      $region73: #{fnafnet_block_forward.7} parent=63 // pred_check
        %p450 = pneg %p93
      $region74: #{fnafnet_block_forward.7} parent=63 // pred_check_branch
        %452 = sbr.rel (%p450) target = $region76
      $region75: #{fnafnet_block_forward.7} parent=63 // pred_region
        %s453 = smul.u32 16, %s21
        %p454 = scmp.lt.s32.totalorder %s453, 63
        %s455 = scalar_select %p454, %s453, 63
        %s456 = smul.addr %s455, 8
        %s457 = scalar_lea.vmem %s2, %s456
        %s458 = smul.u32 16, %s21
      $region76: #{fnafnet_block_forward.7} parent=63 // pred_fallthru
        _
    $region64: #{fnafnet_block_forward.7} parent=5 // pred_fallthru
      _
    %p459 = scmp.le.s32.totalorder 1, %s21
    %p460 = scmp.lt.s32.totalorder %s21, 5
    %p461 = pnand %p459, %p460
    %p462 = pneg %p461
    // Predicated region
    $region77: #{fnafnet_block_forward.7} parent=5 // pred_check
      _
    $region78: #{fnafnet_block_forward.7} parent=5 // pred_check_branch
      %464 = sbr.rel (%p461) target = $region80
    $region79: #{fnafnet_block_forward.7} parent=5 // pred_region
      %s465 = ssub.s32 %s21, 1
      %s466 = smul.u32 16, %s26
      %p467 = scmp.lt.s32.totalorder %s466, 63
      %s468 = scalar_select %p467, %s466, 63
      %s469 = smul.addr %s468, 4
      %s470 = scalar_lea.vmem %s0, %s469
      %p471 = pneg %p47
      %p472 = pneg %p44
      %s473 = smul.u32 16, %s26
      %p474 = scmp.lt.s32.totalorder %s473, 63
      %s475 = scalar_select %p474, %s473, 63
      %s476 = smul.addr %s475, 8
      %s477 = scalar_lea.vmem %s1, %s476
      %p478 = pneg %p73
      %p479 = pneg %p70
      %s480 = smul.u32 16, %s26
      %p481 = scmp.lt.s32.totalorder %s480, 63
      %s482 = scalar_select %p481, %s480, 63
      %s483 = smul.addr %s482, 8
      %s484 = scalar_lea.vmem %s2, %s483
      %p485 = pneg %p99
      %p486 = pneg %p96
      %p487 = pneg %p120
      %p488 = pneg %p117
      %p489 = pneg %p141
      %p490 = pneg %p138
      %p491 = pneg %p162
      %p492 = pneg %p159
      %p493 = pneg %p183
      %p494 = pneg %p180
      %p495 = pneg %p204
      %p496 = pneg %p201
      %p497 = pneg %p225
      %p498 = pneg %p222
      %p499 = pneg %p246
      %p500 = pneg %p243
      %p501 = pneg %p267
      %p502 = pneg %p264
      %p503 = pneg %p288
      %p504 = pneg %p285
      %p505 = pneg %p309
      %p506 = pneg %p306
      %p507 = pneg %p330
      %p508 = pneg %p327
      %p509 = pneg %p351
      %p510 = pneg %p348
      %p511 = pneg %p377
      %p512 = pneg %p374
      %s513 = smul.u32 16, %s26
      %p514 = scmp.lt.s32.totalorder %s513, 63
      %s515 = scalar_select %p514, %s513, 63
      %s516 = smul.addr %s515, 8
      %s517 = scalar_lea.vmem %s15, %s516
      %s518 = smul.u32 16, %s26
      %p519 = scmp.lt.s32.totalorder %s518, 63
      %s520 = scalar_select %p519, %s518, 63
      %s521 = smul.addr %s520, 4
      %s522 = scalar_lea.vmem %s0, %s521
      %s523 = smul.u32 16, %s26
      %s524 = smul.u32 16, %s26
      %p525 = scmp.lt.s32.totalorder %s524, 63
      %s526 = scalar_select %p525, %s524, 63
      %s527 = smul.addr %s526, 8
      %s528 = scalar_lea.vmem %s1, %s527
      %s529 = smul.u32 16, %s26
      %s530 = smul.u32 16, %s26
      %p531 = scmp.lt.s32.totalorder %s530, 63
      %s532 = scalar_select %p531, %s530, 63
      %s533 = smul.addr %s532, 8
      %s534 = scalar_lea.vmem %s2, %s533
      %s535 = smul.u32 16, %s26
      %s536 = smul.u32 16, %s26
      %p537 = scmp.lt.s32.totalorder %s536, 63
      %s538 = scalar_select %p537, %s536, 63
      %s539 = smul.addr %s538, 8
      %s540 = scalar_lea.vmem %s15, %s539
      %s541 = smul.u32 16, %s26
      %v543 = vld [vmem:[%s522] sm:$0xf]
      %v544 = vld [vmem:[%s522 + $0x4] sm:$0xf]
      %v545 = vld [vmem:[%s522 + $0x8] sm:$0xf]
      %v546 = vld [vmem:[%s522 + $0xc] sm:$0xf]
      %v547 = vld [vmem:[%s522 + $0x10] sm:$0xf]
      %v548 = vld [vmem:[%s522 + $0x14] sm:$0xf]
      %v549 = vld [vmem:[%s522 + $0x18] sm:$0xf]
      %v550 = vld [vmem:[%s522 + $0x1c] sm:$0xf]
      %v551 = vld [vmem:[%s522 + $0x20] sm:$0xf]
      %v552 = vld [vmem:[%s522 + $0x24] sm:$0xf]
      %v553 = vld [vmem:[%s522 + $0x28] sm:$0xf]
      %v554 = vld [vmem:[%s522 + $0x2c] sm:$0xf]
      %v555 = vld [vmem:[%s522 + $0x30] sm:$0xf]
      %v556 = vld [vmem:[%s522 + $0x34] sm:$0xf]
      %v557 = vld [vmem:[%s522 + $0x38] sm:$0xf]
      %v558 = vld [vmem:[%s522 + $0x3c] sm:$0xf]
      %v559 = vld [vmem:[%s3] sm:$0x3]
      %v560 = vld [vmem:[%s4] sm:$0x1]
      %v562 = vlaneseq
      %v563 = vshrl.u32 %v562, 7
      %v564 = vsub.s32 0, %v563
      %v565 = vrot.slane %v560, %v564
      %v583 = vunpack.c.l.b16 %v543
      %v584 = vunpack.c.l.b16 %v544
      %v585 = vunpack.c.l.b16 %v545
      %v586 = vunpack.c.l.b16 %v546
      %v587 = vunpack.c.l.b16 %v547
      %v588 = vunpack.c.l.b16 %v548
      %v589 = vunpack.c.l.b16 %v549
      %v590 = vunpack.c.l.b16 %v550
      %v591 = vunpack.c.l.b16 %v551
      %v592 = vunpack.c.l.b16 %v552
      %v593 = vunpack.c.l.b16 %v553
      %v594 = vunpack.c.l.b16 %v554
      %v595 = vunpack.c.l.b16 %v555
      %v596 = vunpack.c.l.b16 %v556
      %v597 = vunpack.c.l.b16 %v557
      %v598 = vunpack.c.l.b16 %v558
      %v599 = vpack.c.b16 %v584, %v583
      %v600 = vpack.c.b16 %v586, %v585
      %v601 = vpack.c.b16 %v588, %v587
      %v602 = vpack.c.b16 %v590, %v589
      %v603 = vpack.c.b16 %v592, %v591
      %v604 = vpack.c.b16 %v594, %v593
      %v605 = vpack.c.b16 %v596, %v595
      %v606 = vpack.c.b16 %v598, %v597
      %vm607 = vcmask 31744
      %v609 = vsel %vm607, %v599, 0
      %v612 = vsel %vm607, %v600, 0
      %v615 = vsel %vm607, %v601, 0
      %v618 = vsel %vm607, %v602, 0
      %v621 = vsel %vm607, %v603, 0
      %v624 = vsel %vm607, %v604, 0
      %v627 = vsel %vm607, %v605, 0
      %v630 = vsel %vm607, %v606, 0
      %vm632 = vcmask 1041408
      %v634 = vsel %vm632, %v559, 0
      %636 = vmatprep.subr.bf16.mxu0 0
      %637 = vmatpush1.bf16.msra.mxu0 %v634
      %638 = vmatprep.subr.bf16.mxu0 0
      %639 = vmatpush1.bf16.msra.mxu0 0
      %640 = vmatprep.subr.bf16.mxu0 0
      %641 = vmatpush1.bf16.msra.mxu0 0
      %642 = vmatprep.subr.bf16.mxu0 0
      %643 = vmatpush1.bf16.msra.mxu0 0
      %644 = vmatprep.subr.bf16.mxu0 0
      %645 = vmatpush1.bf16.msra.mxu0 0
      %646 = vmatprep.subr.bf16.mxu0 0
      %647 = vmatpush1.bf16.msra.mxu0 0
      %648 = vmatprep.subr.bf16.mxu0 0
      %649 = vmatpush1.bf16.msra.mxu0 0
      %650 = vmatprep.subr.bf16.mxu0 0
      %651 = vmatpush1.bf16.msra.mxu0 0
      %652 = vmatprep.subr.bf16.mxu0 0
      %653 = vmatpush1.bf16.msra.mxu0 0
      %654 = vmatprep.subr.bf16.mxu0 0
      %655 = vmatpush1.bf16.msra.mxu0 0
      %656 = vmatprep.subr.bf16.mxu0 0
      %657 = vmatpush1.bf16.msra.mxu0 0
      %658 = vmatprep.subr.bf16.mxu0 0
      %659 = vmatpush1.bf16.msra.mxu0 0
      %660 = vmatprep.subr.bf16.mxu0 0
      %661 = vmatpush1.bf16.msra.mxu0 0
      %662 = vmatprep.subr.bf16.mxu0 0
      %663 = vmatpush1.bf16.msra.mxu0 0
      %664 = vmatprep.subr.bf16.mxu0 0
      %665 = vmatpush1.bf16.msra.mxu0 0
      %666 = vmatprep.subr.bf16.mxu0 0
      %667 = vmatpush1.bf16.msra.mxu0 0
      %668 = vmatprep.mubr.bf16.mxu0 0
      %669 = vmatmul.mubr.bf16.gmra.mrb[0].mxu0 %v609
      %v670 = vpop.f32.mrb[0].mxu0
      %v671 = vadd.f32 %v565, %v670
      %v672 = vpop.f32.mrb[0].mxu0
      %v673 = vpop.f32.mrb[0].mxu0
      %v674 = vadd.f32 %v565, %v673
      %v675 = vpop.f32.mrb[0].mxu0
      %676 = vmatprep.mubr.bf16.mxu0 0
      %677 = vmatmul.mubr.bf16.gmra.mrb[0].mxu0 %v612
      %v678 = vpop.f32.mrb[0].mxu0
      %v679 = vadd.f32 %v565, %v678
      %v680 = vpop.f32.mrb[0].mxu0
      %v681 = vpop.f32.mrb[0].mxu0
      %v682 = vadd.f32 %v565, %v681
      %v683 = vpop.f32.mrb[0].mxu0
      %684 = vmatprep.mubr.bf16.mxu0 0
      %685 = vmatmul.mubr.bf16.gmra.mrb[0].mxu0 %v615
      %v686 = vpop.f32.mrb[0].mxu0
      %v687 = vadd.f32 %v565, %v686
      %v688 = vpop.f32.mrb[0].mxu0
      %v689 = vpop.f32.mrb[0].mxu0
      %v690 = vadd.f32 %v565, %v689
      %v691 = vpop.f32.mrb[0].mxu0
      %692 = vmatprep.mubr.bf16.mxu0 0
      %693 = vmatmul.mubr.bf16.gmra.mrb[0].mxu0 %v618
      %v694 = vpop.f32.mrb[0].mxu0
      %v695 = vadd.f32 %v565, %v694
      %v696 = vpop.f32.mrb[0].mxu0
      %v697 = vpop.f32.mrb[0].mxu0
      %v698 = vadd.f32 %v565, %v697
      %v699 = vpop.f32.mrb[0].mxu0
      %700 = vmatprep.mubr.bf16.mxu0 0
      %701 = vmatmul.mubr.bf16.gmra.mrb[0].mxu0 %v621
      %v702 = vpop.f32.mrb[0].mxu0
      %v703 = vadd.f32 %v565, %v702
      %v704 = vpop.f32.mrb[0].mxu0
      %v705 = vpop.f32.mrb[0].mxu0
      %v706 = vadd.f32 %v565, %v705
      %v707 = vpop.f32.mrb[0].mxu0
      %708 = vmatprep.mubr.bf16.mxu0 0
      %709 = vmatmul.mubr.bf16.gmra.mrb[0].mxu0 %v624
      %v710 = vpop.f32.mrb[0].mxu0
      %v711 = vadd.f32 %v565, %v710
      %v712 = vpop.f32.mrb[0].mxu0
      %v713 = vpop.f32.mrb[0].mxu0
      %v714 = vadd.f32 %v565, %v713
      %v715 = vpop.f32.mrb[0].mxu0
      %716 = vmatprep.mubr.bf16.mxu0 0
      %717 = vmatmul.mubr.bf16.gmra.mrb[0].mxu0 %v627
      %v718 = vpop.f32.mrb[0].mxu0
      %v719 = vadd.f32 %v565, %v718
      %v720 = vpop.f32.mrb[0].mxu0
      %v721 = vpop.f32.mrb[0].mxu0
      %v722 = vadd.f32 %v565, %v721
      %v723 = vpop.f32.mrb[0].mxu0
      %724 = vmatprep.mubr.bf16.mxu0 0
      %725 = vmatmul.mubr.bf16.gmra.mrb[0].mxu0 %v630
      %v726 = vpop.f32.mrb[0].mxu0
      %v727 = vadd.f32 %v565, %v726
      %v728 = vpop.f32.mrb[0].mxu0
      %v729 = vpop.f32.mrb[0].mxu0
      %v730 = vadd.f32 %v565, %v729
      %v731 = vpop.f32.mrb[0].mxu0
      %732 = vdwg.mxu0
      %v733 = vld [vmem:[%s528] sm:$0xff]
      %v734 = vld [vmem:[%s528 + $0x8] sm:$0xff]
      %v735 = vld [vmem:[%s528 + $0x10] sm:$0xff]
      %v736 = vld [vmem:[%s528 + $0x18] sm:$0xff]
      %v737 = vld [vmem:[%s528 + $0x20] sm:$0xff]
      %v738 = vld [vmem:[%s528 + $0x28] sm:$0xff]
      %v739 = vld [vmem:[%s528 + $0x30] sm:$0xff]
      %v740 = vld [vmem:[%s528 + $0x38] sm:$0xff]
      %v741 = vld [vmem:[%s528 + $0x40] sm:$0xff]
      %v742 = vld [vmem:[%s528 + $0x48] sm:$0xff]
      %v743 = vld [vmem:[%s528 + $0x50] sm:$0xff]
      %v744 = vld [vmem:[%s528 + $0x58] sm:$0xff]
      %v745 = vld [vmem:[%s528 + $0x60] sm:$0xff]
      %v746 = vld [vmem:[%s528 + $0x68] sm:$0xff]
      %v747 = vld [vmem:[%s528 + $0x70] sm:$0xff]
      %v748 = vld [vmem:[%s528 + $0x78] sm:$0xff]
      %v749 = vld [vmem:[%s5] sm:$0x1]
      %v751 = vlaneseq
      %v752 = vshrl.u32 %v751, 7
      %v753 = vsub.s32 0, %v752
      %v754 = vrot.slane %v749, %v753
      %v756 = vmul.f32 %v671, %v754
      %v757 = vmul.f32 %v674, %v754
      %v758 = vmul.f32 %v679, %v754
      %v759 = vmul.f32 %v682, %v754
      %v760 = vmul.f32 %v687, %v754
      %v761 = vmul.f32 %v690, %v754
      %v762 = vmul.f32 %v695, %v754
      %v763 = vmul.f32 %v698, %v754
      %v764 = vmul.f32 %v703, %v754
      %v765 = vmul.f32 %v706, %v754
      %v766 = vmul.f32 %v711, %v754
      %v767 = vmul.f32 %v714, %v754
      %v768 = vmul.f32 %v719, %v754
      %v769 = vmul.f32 %v722, %v754
      %v770 = vmul.f32 %v727, %v754
      %v771 = vmul.f32 %v730, %v754
      %v772 = vadd.f32 %v733, %v756
      %v773 = vadd.f32 %v734, %v757
      %v774 = vadd.f32 %v735, %v758
      %v775 = vadd.f32 %v736, %v759
      %v776 = vadd.f32 %v737, %v760
      %v777 = vadd.f32 %v738, %v761
      %v778 = vadd.f32 %v739, %v762
      %v779 = vadd.f32 %v740, %v763
      %v780 = vadd.f32 %v741, %v764
      %v781 = vadd.f32 %v742, %v765
      %v782 = vadd.f32 %v743, %v766
      %v783 = vadd.f32 %v744, %v767
      %v784 = vadd.f32 %v745, %v768
      %v785 = vadd.f32 %v746, %v769
      %v786 = vadd.f32 %v747, %v770
      %v787 = vadd.f32 %v748, %v771
      %v788 = vsel %vm607, %v772, 0.0
      %789 = vadd.xlane.f32.xlu0 %v788
      %v790 = vpop.xlane.xlu0 %789
      %v791 = vsel %vm607, %v773, 0.0
      %792 = vadd.xlane.f32.xlu0 %v791
      %v793 = vpop.xlane.xlu0 %792
      %v794 = vsel %vm607, %v774, 0.0
      %795 = vadd.xlane.f32.xlu0 %v794
      %v796 = vpop.xlane.xlu0 %795
      %v797 = vsel %vm607, %v775, 0.0
      %798 = vadd.xlane.f32.xlu0 %v797
      %v799 = vpop.xlane.xlu0 %798
      %v800 = vsel %vm607, %v776, 0.0
      %801 = vadd.xlane.f32.xlu0 %v800
      %v802 = vpop.xlane.xlu0 %801
      %v803 = vsel %vm607, %v777, 0.0
      %804 = vadd.xlane.f32.xlu0 %v803
      %v805 = vpop.xlane.xlu0 %804
      %v806 = vsel %vm607, %v778, 0.0
      %807 = vadd.xlane.f32.xlu0 %v806
      %v808 = vpop.xlane.xlu0 %807
      %v809 = vsel %vm607, %v779, 0.0
      %810 = vadd.xlane.f32.xlu0 %v809
      %v811 = vpop.xlane.xlu0 %810
      %v812 = vsel %vm607, %v780, 0.0
      %813 = vadd.xlane.f32.xlu0 %v812
      %v814 = vpop.xlane.xlu0 %813
      %v815 = vsel %vm607, %v781, 0.0
      %816 = vadd.xlane.f32.xlu0 %v815
      %v817 = vpop.xlane.xlu0 %816
      %v818 = vsel %vm607, %v782, 0.0
      %819 = vadd.xlane.f32.xlu0 %v818
      %v820 = vpop.xlane.xlu0 %819
      %v821 = vsel %vm607, %v783, 0.0
      %822 = vadd.xlane.f32.xlu0 %v821
      %v823 = vpop.xlane.xlu0 %822
      %v824 = vsel %vm607, %v784, 0.0
      %825 = vadd.xlane.f32.xlu0 %v824
      %v826 = vpop.xlane.xlu0 %825
      %v827 = vsel %vm607, %v785, 0.0
      %828 = vadd.xlane.f32.xlu0 %v827
      %v829 = vpop.xlane.xlu0 %828
      %v830 = vsel %vm607, %v786, 0.0
      %831 = vadd.xlane.f32.xlu0 %v830
      %v832 = vpop.xlane.xlu0 %831
      %v833 = vsel %vm607, %v787, 0.0
      %834 = vadd.xlane.f32.xlu0 %v833
      %v835 = vpop.xlane.xlu0 %834
      %v836 = vrcp.pop 4.0
      %v837 = vmul.f32 %v790, %v836
      %v838 = vmul.f32 %v793, %v836
      %v839 = vmul.f32 %v796, %v836
      %v840 = vmul.f32 %v799, %v836
      %v841 = vmul.f32 %v802, %v836
      %v842 = vmul.f32 %v805, %v836
      %v843 = vmul.f32 %v808, %v836
      %v844 = vmul.f32 %v811, %v836
      %v845 = vmul.f32 %v814, %v836
      %v846 = vmul.f32 %v817, %v836
      %v847 = vmul.f32 %v820, %v836
      %v848 = vmul.f32 %v823, %v836
      %v849 = vmul.f32 %v826, %v836
      %v850 = vmul.f32 %v829, %v836
      %v851 = vmul.f32 %v832, %v836
      %v852 = vmul.f32 %v835, %v836
      %v853 = vsub.f32 %v772, %v837
      %v854 = vsub.f32 %v773, %v838
      %v855 = vsub.f32 %v774, %v839
      %v856 = vsub.f32 %v775, %v840
      %v857 = vsub.f32 %v776, %v841
      %v858 = vsub.f32 %v777, %v842
      %v859 = vsub.f32 %v778, %v843
      %v860 = vsub.f32 %v779, %v844
      %v861 = vsub.f32 %v780, %v845
      %v862 = vsub.f32 %v781, %v846
      %v863 = vsub.f32 %v782, %v847
      %v864 = vsub.f32 %v783, %v848
      %v865 = vsub.f32 %v784, %v849
      %v866 = vsub.f32 %v785, %v850
      %v867 = vsub.f32 %v786, %v851
      %v868 = vsub.f32 %v787, %v852
      %v869 = vmul.f32 %v853, %v853
      %v870 = vmul.f32 %v854, %v854
      %v871 = vmul.f32 %v855, %v855
      %v872 = vmul.f32 %v856, %v856
      %v873 = vmul.f32 %v857, %v857
      %v874 = vmul.f32 %v858, %v858
      %v875 = vmul.f32 %v859, %v859
      %v876 = vmul.f32 %v860, %v860
      %v877 = vmul.f32 %v861, %v861
      %v878 = vmul.f32 %v862, %v862
      %v879 = vmul.f32 %v863, %v863
      %v880 = vmul.f32 %v864, %v864
      %v881 = vmul.f32 %v865, %v865
      %v882 = vmul.f32 %v866, %v866
      %v883 = vmul.f32 %v867, %v867
      %v884 = vmul.f32 %v868, %v868
      %v885 = vsel %vm607, %v869, 0.0
      %886 = vadd.xlane.f32.xlu0 %v885
      %v887 = vpop.xlane.xlu0 %886
      %v888 = vsel %vm607, %v870, 0.0
      %889 = vadd.xlane.f32.xlu0 %v888
      %v890 = vpop.xlane.xlu0 %889
      %v891 = vsel %vm607, %v871, 0.0
      %892 = vadd.xlane.f32.xlu0 %v891
      %v893 = vpop.xlane.xlu0 %892
      %v894 = vsel %vm607, %v872, 0.0
      %895 = vadd.xlane.f32.xlu0 %v894
      %v896 = vpop.xlane.xlu0 %895
      %v897 = vsel %vm607, %v873, 0.0
      %898 = vadd.xlane.f32.xlu0 %v897
      %v899 = vpop.xlane.xlu0 %898
      %v900 = vsel %vm607, %v874, 0.0
      %901 = vadd.xlane.f32.xlu0 %v900
      %v902 = vpop.xlane.xlu0 %901
      %v903 = vsel %vm607, %v875, 0.0
      %904 = vadd.xlane.f32.xlu0 %v903
      %v905 = vpop.xlane.xlu0 %904
      %v906 = vsel %vm607, %v876, 0.0
      %907 = vadd.xlane.f32.xlu0 %v906
      %v908 = vpop.xlane.xlu0 %907
      %v909 = vsel %vm607, %v877, 0.0
      %910 = vadd.xlane.f32.xlu0 %v909
      %v911 = vpop.xlane.xlu0 %910
      %v912 = vsel %vm607, %v878, 0.0
      %913 = vadd.xlane.f32.xlu0 %v912
      %v914 = vpop.xlane.xlu0 %913
      %v915 = vsel %vm607, %v879, 0.0
      %916 = vadd.xlane.f32.xlu0 %v915
      %v917 = vpop.xlane.xlu0 %916
      %v918 = vsel %vm607, %v880, 0.0
      %919 = vadd.xlane.f32.xlu0 %v918
      %v920 = vpop.xlane.xlu0 %919
      %v921 = vsel %vm607, %v881, 0.0
      %922 = vadd.xlane.f32.xlu0 %v921
      %v923 = vpop.xlane.xlu0 %922
      %v924 = vsel %vm607, %v882, 0.0
      %925 = vadd.xlane.f32.xlu0 %v924
      %v926 = vpop.xlane.xlu0 %925
      %v927 = vsel %vm607, %v883, 0.0
      %928 = vadd.xlane.f32.xlu0 %v927
      %v929 = vpop.xlane.xlu0 %928
      %v930 = vsel %vm607, %v884, 0.0
      %931 = vadd.xlane.f32.xlu0 %v930
      %v932 = vpop.xlane.xlu0 %931
      %v933 = vmul.f32 %v887, %v836
      %v934 = vmul.f32 %v890, %v836
      %v935 = vmul.f32 %v893, %v836
      %v936 = vmul.f32 %v896, %v836
      %v937 = vmul.f32 %v899, %v836
      %v938 = vmul.f32 %v902, %v836
      %v939 = vmul.f32 %v905, %v836
      %v940 = vmul.f32 %v908, %v836
      %v941 = vmul.f32 %v911, %v836
      %v942 = vmul.f32 %v914, %v836
      %v943 = vmul.f32 %v917, %v836
      %v944 = vmul.f32 %v920, %v836
      %v945 = vmul.f32 %v923, %v836
      %v946 = vmul.f32 %v926, %v836
      %v947 = vmul.f32 %v929, %v836
      %v948 = vmul.f32 %v932, %v836
      %v949 = vadd.f32 %v933, 1e-05
      %v950 = vadd.f32 %v934, 1e-05
      %v951 = vadd.f32 %v935, 1e-05
      %v952 = vadd.f32 %v936, 1e-05
      %v953 = vadd.f32 %v937, 1e-05
      %v954 = vadd.f32 %v938, 1e-05
      %v955 = vadd.f32 %v939, 1e-05
      %v956 = vadd.f32 %v940, 1e-05
      %v957 = vadd.f32 %v941, 1e-05
      %v958 = vadd.f32 %v942, 1e-05
      %v959 = vadd.f32 %v943, 1e-05
      %v960 = vadd.f32 %v944, 1e-05
      %v961 = vadd.f32 %v945, 1e-05
      %v962 = vadd.f32 %v946, 1e-05
      %v963 = vadd.f32 %v947, 1e-05
      %v964 = vadd.f32 %v948, 1e-05
      %v965 = vrsqrt.pop %v949
      %v966 = vrsqrt.pop %v950
      %v967 = vrsqrt.pop %v951
      %v968 = vrsqrt.pop %v952
      %v969 = vrsqrt.pop %v953
      %v970 = vrsqrt.pop %v954
      %v971 = vrsqrt.pop %v955
      %v972 = vrsqrt.pop %v956
      %v973 = vrsqrt.pop %v957
      %v974 = vrsqrt.pop %v958
      %v975 = vrsqrt.pop %v959
      %v976 = vrsqrt.pop %v960
      %v977 = vrsqrt.pop %v961
      %v978 = vrsqrt.pop %v962
      %v979 = vrsqrt.pop %v963
      %v980 = vrsqrt.pop %v964
      %v981 = vmul.f32 %v853, %v965
      %v982 = vmul.f32 %v854, %v966
      %v983 = vmul.f32 %v855, %v967
      %v984 = vmul.f32 %v856, %v968
      %v985 = vmul.f32 %v857, %v969
      %v986 = vmul.f32 %v858, %v970
      %v987 = vmul.f32 %v859, %v971
      %v988 = vmul.f32 %v860, %v972
      %v989 = vmul.f32 %v861, %v973
      %v990 = vmul.f32 %v862, %v974
      %v991 = vmul.f32 %v863, %v975
      %v992 = vmul.f32 %v864, %v976
      %v993 = vmul.f32 %v865, %v977
      %v994 = vmul.f32 %v866, %v978
      %v995 = vmul.f32 %v867, %v979
      %v996 = vmul.f32 %v868, %v980
      %v997 = vld [vmem:[%s6] sm:$0x1]
      %v999 = vlaneseq
      %v1000 = vshrl.u32 %v999, 7
      %v1001 = vsub.s32 0, %v1000
      %v1002 = vrot.slane %v997, %v1001
      %v1004 = vmul.f32 %v981, %v1002
      %v1005 = vmul.f32 %v982, %v1002
      %v1006 = vmul.f32 %v983, %v1002
      %v1007 = vmul.f32 %v984, %v1002
      %v1008 = vmul.f32 %v985, %v1002
      %v1009 = vmul.f32 %v986, %v1002
      %v1010 = vmul.f32 %v987, %v1002
      %v1011 = vmul.f32 %v988, %v1002
      %v1012 = vmul.f32 %v989, %v1002
      %v1013 = vmul.f32 %v990, %v1002
      %v1014 = vmul.f32 %v991, %v1002
      %v1015 = vmul.f32 %v992, %v1002
      %v1016 = vmul.f32 %v993, %v1002
      %v1017 = vmul.f32 %v994, %v1002
      %v1018 = vmul.f32 %v995, %v1002
      %v1019 = vmul.f32 %v996, %v1002
      %v1020 = vld [vmem:[%s7] sm:$0x1]
      %v1022 = vlaneseq
      %v1023 = vshrl.u32 %v1022, 7
      %v1024 = vsub.s32 0, %v1023
      %v1025 = vrot.slane %v1020, %v1024
      %v1027 = vadd.f32 %v1004, %v1025
      %v1028 = vadd.f32 %v1005, %v1025
      %v1029 = vadd.f32 %v1006, %v1025
      %v1030 = vadd.f32 %v1007, %v1025
      %v1031 = vadd.f32 %v1008, %v1025
      %v1032 = vadd.f32 %v1009, %v1025
      %v1033 = vadd.f32 %v1010, %v1025
      %v1034 = vadd.f32 %v1011, %v1025
      %v1035 = vadd.f32 %v1012, %v1025
      %v1036 = vadd.f32 %v1013, %v1025
      %v1037 = vadd.f32 %v1014, %v1025
      %v1038 = vadd.f32 %v1015, %v1025
      %v1039 = vadd.f32 %v1016, %v1025
      %v1040 = vadd.f32 %v1017, %v1025
      %v1041 = vadd.f32 %v1018, %v1025
      %v1042 = vadd.f32 %v1019, %v1025
      %v1043 = vpack.c.bf16 %v1028, %v1027
      %v1044 = vpack.c.bf16 %v1030, %v1029
      %v1045 = vpack.c.bf16 %v1032, %v1031
      %v1046 = vpack.c.bf16 %v1034, %v1033
      %v1047 = vpack.c.bf16 %v1036, %v1035
      %v1048 = vpack.c.bf16 %v1038, %v1037
      %v1049 = vpack.c.bf16 %v1040, %v1039
      %v1050 = vpack.c.bf16 %v1042, %v1041
      %v1051 = vld [vmem:[%s8] sm:$0x3]
      %v1052 = vld [vmem:[%s9] sm:$0x1]
      %v1054 = vlaneseq
      %v1055 = vshrl.u32 %v1054, 7
      %v1056 = vsub.s32 0, %v1055
      %v1057 = vrot.slane %v1052, %v1056
      %v1060 = vsel %vm607, %v1043, 0
      %v1063 = vsel %vm607, %v1044, 0
      %v1066 = vsel %vm607, %v1045, 0
      %v1069 = vsel %vm607, %v1046, 0
      %v1072 = vsel %vm607, %v1047, 0
      %v1075 = vsel %vm607, %v1048, 0
      %v1078 = vsel %vm607, %v1049, 0
      %v1081 = vsel %vm607, %v1050, 0
      %v1084 = vsel %vm632, %v1051, 0
      %1086 = vmatprep.subr.bf16.mxu0 0
      %1087 = vmatpush1.bf16.msra.mxu0 %v1084
      %1088 = vmatprep.subr.bf16.mxu0 0
      %1089 = vmatpush1.bf16.msra.mxu0 0
      %1090 = vmatprep.subr.bf16.mxu0 0
      %1091 = vmatpush1.bf16.msra.mxu0 0
      %1092 = vmatprep.subr.bf16.mxu0 0
      %1093 = vmatpush1.bf16.msra.mxu0 0
      %1094 = vmatprep.subr.bf16.mxu0 0
      %1095 = vmatpush1.bf16.msra.mxu0 0
      %1096 = vmatprep.subr.bf16.mxu0 0
      %1097 = vmatpush1.bf16.msra.mxu0 0
      %1098 = vmatprep.subr.bf16.mxu0 0
      %1099 = vmatpush1.bf16.msra.mxu0 0
      %1100 = vmatprep.subr.bf16.mxu0 0
      %1101 = vmatpush1.bf16.msra.mxu0 0
      %1102 = vmatprep.subr.bf16.mxu0 0
      %1103 = vmatpush1.bf16.msra.mxu0 0
      %1104 = vmatprep.subr.bf16.mxu0 0
      %1105 = vmatpush1.bf16.msra.mxu0 0
      %1106 = vmatprep.subr.bf16.mxu0 0
      %1107 = vmatpush1.bf16.msra.mxu0 0
      %1108 = vmatprep.subr.bf16.mxu0 0
      %1109 = vmatpush1.bf16.msra.mxu0 0
      %1110 = vmatprep.subr.bf16.mxu0 0
      %1111 = vmatpush1.bf16.msra.mxu0 0
      %1112 = vmatprep.subr.bf16.mxu0 0
      %1113 = vmatpush1.bf16.msra.mxu0 0
      %1114 = vmatprep.subr.bf16.mxu0 0
      %1115 = vmatpush1.bf16.msra.mxu0 0
      %1116 = vmatprep.subr.bf16.mxu0 0
      %1117 = vmatpush1.bf16.msra.mxu0 0
      %1118 = vmatprep.mubr.bf16.mxu0 0
      %1119 = vmatmul.mubr.bf16.gmra.mrb[0].mxu0 %v1060
      %v1120 = vpop.f32.mrb[0].mxu0
      %v1121 = vadd.f32 %v1057, %v1120
      %v1122 = vpop.f32.mrb[0].mxu0
      %v1123 = vpop.f32.mrb[0].mxu0
      %v1124 = vadd.f32 %v1057, %v1123
      %v1125 = vpop.f32.mrb[0].mxu0
      %1126 = vmatprep.mubr.bf16.mxu0 0
      %1127 = vmatmul.mubr.bf16.gmra.mrb[0].mxu0 %v1063
      %v1128 = vpop.f32.mrb[0].mxu0
      %v1129 = vadd.f32 %v1057, %v1128
      %v1130 = vpop.f32.mrb[0].mxu0
      %v1131 = vpop.f32.mrb[0].mxu0
      %v1132 = vadd.f32 %v1057, %v1131
      %v1133 = vpop.f32.mrb[0].mxu0
      %1134 = vmatprep.mubr.bf16.mxu0 0
      %1135 = vmatmul.mubr.bf16.gmra.mrb[0].mxu0 %v1066
      %v1136 = vpop.f32.mrb[0].mxu0
      %v1137 = vadd.f32 %v1057, %v1136
      %v1138 = vpop.f32.mrb[0].mxu0
      %v1139 = vpop.f32.mrb[0].mxu0
      %v1140 = vadd.f32 %v1057, %v1139
      %v1141 = vpop.f32.mrb[0].mxu0
      %1142 = vmatprep.mubr.bf16.mxu0 0
      %1143 = vmatmul.mubr.bf16.gmra.mrb[0].mxu0 %v1069
      %v1144 = vpop.f32.mrb[0].mxu0
      %v1145 = vadd.f32 %v1057, %v1144
      %v1146 = vpop.f32.mrb[0].mxu0
      %v1147 = vpop.f32.mrb[0].mxu0
      %v1148 = vadd.f32 %v1057, %v1147
      %v1149 = vpop.f32.mrb[0].mxu0
      %1150 = vmatprep.mubr.bf16.mxu0 0
      %1151 = vmatmul.mubr.bf16.gmra.mrb[0].mxu0 %v1072
      %v1152 = vpop.f32.mrb[0].mxu0
      %v1153 = vadd.f32 %v1057, %v1152
      %v1154 = vpop.f32.mrb[0].mxu0
      %v1155 = vpop.f32.mrb[0].mxu0
      %v1156 = vadd.f32 %v1057, %v1155
      %v1157 = vpop.f32.mrb[0].mxu0
      %1158 = vmatprep.mubr.bf16.mxu0 0
      %1159 = vmatmul.mubr.bf16.gmra.mrb[0].mxu0 %v1075
      %v1160 = vpop.f32.mrb[0].mxu0
      %v1161 = vadd.f32 %v1057, %v1160
      %v1162 = vpop.f32.mrb[0].mxu0
      %v1163 = vpop.f32.mrb[0].mxu0
      %v1164 = vadd.f32 %v1057, %v1163
      %v1165 = vpop.f32.mrb[0].mxu0
      %1166 = vmatprep.mubr.bf16.mxu0 0
      %1167 = vmatmul.mubr.bf16.gmra.mrb[0].mxu0 %v1078
      %v1168 = vpop.f32.mrb[0].mxu0
      %v1169 = vadd.f32 %v1057, %v1168
      %v1170 = vpop.f32.mrb[0].mxu0
      %v1171 = vpop.f32.mrb[0].mxu0
      %v1172 = vadd.f32 %v1057, %v1171
      %v1173 = vpop.f32.mrb[0].mxu0
      %1174 = vmatprep.mubr.bf16.mxu0 0
      %1175 = vmatmul.mubr.bf16.gmra.mrb[0].mxu0 %v1081
      %v1176 = vpop.f32.mrb[0].mxu0
      %v1177 = vadd.f32 %v1057, %v1176
      %v1178 = vpop.f32.mrb[0].mxu0
      %v1179 = vpop.f32.mrb[0].mxu0
      %v1180 = vadd.f32 %v1057, %v1179
      %v1181 = vpop.f32.mrb[0].mxu0
      %1182 = vdwg.mxu0
      %v1183 = vld [vmem:[%s10] sm:$0x3]
      %v1184 = vld [vmem:[%s11] sm:$0x1]
      %v1186 = vlaneseq
      %v1187 = vshrl.u32 %v1186, 7
      %v1188 = vsub.s32 0, %v1187
      %v1189 = vrot.slane %v1184, %v1188
      %v1192 = vsel %vm632, %v1183, 0
      %1194 = vmatprep.subr.bf16.mxu0 0
      %1195 = vmatpush1.bf16.msra.mxu0 %v1192
      %1196 = vmatprep.subr.bf16.mxu0 0
      %1197 = vmatpush1.bf16.msra.mxu0 0
      %1198 = vmatprep.subr.bf16.mxu0 0
      %1199 = vmatpush1.bf16.msra.mxu0 0
      %1200 = vmatprep.subr.bf16.mxu0 0
      %1201 = vmatpush1.bf16.msra.mxu0 0
      %1202 = vmatprep.subr.bf16.mxu0 0
      %1203 = vmatpush1.bf16.msra.mxu0 0
      %1204 = vmatprep.subr.bf16.mxu0 0
      %1205 = vmatpush1.bf16.msra.mxu0 0
      %1206 = vmatprep.subr.bf16.mxu0 0
      %1207 = vmatpush1.bf16.msra.mxu0 0
      %1208 = vmatprep.subr.bf16.mxu0 0
      %1209 = vmatpush1.bf16.msra.mxu0 0
      %1210 = vmatprep.subr.bf16.mxu0 0
      %1211 = vmatpush1.bf16.msra.mxu0 0
      %1212 = vmatprep.subr.bf16.mxu0 0
      %1213 = vmatpush1.bf16.msra.mxu0 0
      %1214 = vmatprep.subr.bf16.mxu0 0
      %1215 = vmatpush1.bf16.msra.mxu0 0
      %1216 = vmatprep.subr.bf16.mxu0 0
      %1217 = vmatpush1.bf16.msra.mxu0 0
      %1218 = vmatprep.subr.bf16.mxu0 0
      %1219 = vmatpush1.bf16.msra.mxu0 0
      %1220 = vmatprep.subr.bf16.mxu0 0
      %1221 = vmatpush1.bf16.msra.mxu0 0
      %1222 = vmatprep.subr.bf16.mxu0 0
      %1223 = vmatpush1.bf16.msra.mxu0 0
      %1224 = vmatprep.subr.bf16.mxu0 0
      %1225 = vmatpush1.bf16.msra.mxu0 0
      %1226 = vmatprep.mubr.bf16.mxu0 0
      %1227 = vmatmul.mubr.bf16.gmra.mrb[0].mxu0 %v1060
      %v1228 = vpop.f32.mrb[0].mxu0
      %v1229 = vadd.f32 %v1189, %v1228
      %v1230 = vpop.f32.mrb[0].mxu0
      %v1231 = vpop.f32.mrb[0].mxu0
      %v1232 = vadd.f32 %v1189, %v1231
      %v1233 = vpop.f32.mrb[0].mxu0
      %1234 = vmatprep.mubr.bf16.mxu0 0
      %1235 = vmatmul.mubr.bf16.gmra.mrb[0].mxu0 %v1063
      %v1236 = vpop.f32.mrb[0].mxu0
      %v1237 = vadd.f32 %v1189, %v1236
      %v1238 = vpop.f32.mrb[0].mxu0
      %v1239 = vpop.f32.mrb[0].mxu0
      %v1240 = vadd.f32 %v1189, %v1239
      %v1241 = vpop.f32.mrb[0].mxu0
      %1242 = vmatprep.mubr.bf16.mxu0 0
      %1243 = vmatmul.mubr.bf16.gmra.mrb[0].mxu0 %v1066
      %v1244 = vpop.f32.mrb[0].mxu0
      %v1245 = vadd.f32 %v1189, %v1244
      %v1246 = vpop.f32.mrb[0].mxu0
      %v1247 = vpop.f32.mrb[0].mxu0
      %v1248 = vadd.f32 %v1189, %v1247
      %v1249 = vpop.f32.mrb[0].mxu0
      %1250 = vmatprep.mubr.bf16.mxu0 0
      %1251 = vmatmul.mubr.bf16.gmra.mrb[0].mxu0 %v1069
      %v1252 = vpop.f32.mrb[0].mxu0
      %v1253 = vadd.f32 %v1189, %v1252
      %v1254 = vpop.f32.mrb[0].mxu0
      %v1255 = vpop.f32.mrb[0].mxu0
      %v1256 = vadd.f32 %v1189, %v1255
      %v1257 = vpop.f32.mrb[0].mxu0
      %1258 = vmatprep.mubr.bf16.mxu0 0
      %1259 = vmatmul.mubr.bf16.gmra.mrb[0].mxu0 %v1072
      %v1260 = vpop.f32.mrb[0].mxu0
      %v1261 = vadd.f32 %v1189, %v1260
      %v1262 = vpop.f32.mrb[0].mxu0
      %v1263 = vpop.f32.mrb[0].mxu0
      %v1264 = vadd.f32 %v1189, %v1263
      %v1265 = vpop.f32.mrb[0].mxu0
      %1266 = vmatprep.mubr.bf16.mxu0 0
      %1267 = vmatmul.mubr.bf16.gmra.mrb[0].mxu0 %v1075
      %v1268 = vpop.f32.mrb[0].mxu0
      %v1269 = vadd.f32 %v1189, %v1268
      %v1270 = vpop.f32.mrb[0].mxu0
      %v1271 = vpop.f32.mrb[0].mxu0
      %v1272 = vadd.f32 %v1189, %v1271
      %v1273 = vpop.f32.mrb[0].mxu0
      %1274 = vmatprep.mubr.bf16.mxu0 0
      %1275 = vmatmul.mubr.bf16.gmra.mrb[0].mxu0 %v1078
      %v1276 = vpop.f32.mrb[0].mxu0
      %v1277 = vadd.f32 %v1189, %v1276
      %v1278 = vpop.f32.mrb[0].mxu0
      %v1279 = vpop.f32.mrb[0].mxu0
      %v1280 = vadd.f32 %v1189, %v1279
      %v1281 = vpop.f32.mrb[0].mxu0
      %1282 = vmatprep.mubr.bf16.mxu0 0
      %1283 = vmatmul.mubr.bf16.gmra.mrb[0].mxu0 %v1081
      %v1284 = vpop.f32.mrb[0].mxu0
      %v1285 = vadd.f32 %v1189, %v1284
      %v1286 = vpop.f32.mrb[0].mxu0
      %v1287 = vpop.f32.mrb[0].mxu0
      %v1288 = vadd.f32 %v1189, %v1287
      %v1289 = vpop.f32.mrb[0].mxu0
      %1290 = vdwg.mxu0
      %v1291 = vmul.f32 %v1121, %v1229
      %v1292 = vmul.f32 %v1124, %v1232
      %v1293 = vmul.f32 %v1129, %v1237
      %v1294 = vmul.f32 %v1132, %v1240
      %v1295 = vmul.f32 %v1137, %v1245
      %v1296 = vmul.f32 %v1140, %v1248
      %v1297 = vmul.f32 %v1145, %v1253
      %v1298 = vmul.f32 %v1148, %v1256
      %v1299 = vmul.f32 %v1153, %v1261
      %v1300 = vmul.f32 %v1156, %v1264
      %v1301 = vmul.f32 %v1161, %v1269
      %v1302 = vmul.f32 %v1164, %v1272
      %v1303 = vmul.f32 %v1169, %v1277
      %v1304 = vmul.f32 %v1172, %v1280
      %v1305 = vmul.f32 %v1177, %v1285
      %v1306 = vmul.f32 %v1180, %v1288
      %v1307 = vpack.c.bf16 %v1292, %v1291
      %v1308 = vpack.c.bf16 %v1294, %v1293
      %v1309 = vpack.c.bf16 %v1296, %v1295
      %v1310 = vpack.c.bf16 %v1298, %v1297
      %v1311 = vpack.c.bf16 %v1300, %v1299
      %v1312 = vpack.c.bf16 %v1302, %v1301
      %v1313 = vpack.c.bf16 %v1304, %v1303
      %v1314 = vpack.c.bf16 %v1306, %v1305
      %v1315 = vld [vmem:[%s12] sm:$0x3]
      %v1316 = vld [vmem:[%s13] sm:$0x1]
      %v1318 = vlaneseq
      %v1319 = vshrl.u32 %v1318, 7
      %v1320 = vsub.s32 0, %v1319
      %v1321 = vrot.slane %v1316, %v1320
      %v1324 = vsel %vm607, %v1307, 0
      %v1327 = vsel %vm607, %v1308, 0
      %v1330 = vsel %vm607, %v1309, 0
      %v1333 = vsel %vm607, %v1310, 0
      %v1336 = vsel %vm607, %v1311, 0
      %v1339 = vsel %vm607, %v1312, 0
      %v1342 = vsel %vm607, %v1313, 0
      %v1345 = vsel %vm607, %v1314, 0
      %v1348 = vsel %vm632, %v1315, 0
      %1350 = vmatprep.subr.bf16.mxu0 0
      %1351 = vmatpush1.bf16.msra.mxu0 %v1348
      %1352 = vmatprep.subr.bf16.mxu0 0
      %1353 = vmatpush1.bf16.msra.mxu0 0
      %1354 = vmatprep.subr.bf16.mxu0 0
      %1355 = vmatpush1.bf16.msra.mxu0 0
      %1356 = vmatprep.subr.bf16.mxu0 0
      %1357 = vmatpush1.bf16.msra.mxu0 0
      %1358 = vmatprep.subr.bf16.mxu0 0
      %1359 = vmatpush1.bf16.msra.mxu0 0
      %1360 = vmatprep.subr.bf16.mxu0 0
      %1361 = vmatpush1.bf16.msra.mxu0 0
      %1362 = vmatprep.subr.bf16.mxu0 0
      %1363 = vmatpush1.bf16.msra.mxu0 0
      %1364 = vmatprep.subr.bf16.mxu0 0
      %1365 = vmatpush1.bf16.msra.mxu0 0
      %1366 = vmatprep.subr.bf16.mxu0 0
      %1367 = vmatpush1.bf16.msra.mxu0 0
      %1368 = vmatprep.subr.bf16.mxu0 0
      %1369 = vmatpush1.bf16.msra.mxu0 0
      %1370 = vmatprep.subr.bf16.mxu0 0
      %1371 = vmatpush1.bf16.msra.mxu0 0
      %1372 = vmatprep.subr.bf16.mxu0 0
      %1373 = vmatpush1.bf16.msra.mxu0 0
      %1374 = vmatprep.subr.bf16.mxu0 0
      %1375 = vmatpush1.bf16.msra.mxu0 0
      %1376 = vmatprep.subr.bf16.mxu0 0
      %1377 = vmatpush1.bf16.msra.mxu0 0
      %1378 = vmatprep.subr.bf16.mxu0 0
      %1379 = vmatpush1.bf16.msra.mxu0 0
      %1380 = vmatprep.subr.bf16.mxu0 0
      %1381 = vmatpush1.bf16.msra.mxu0 0
      %1382 = vmatprep.mubr.bf16.mxu0 0
      %1383 = vmatmul.mubr.bf16.gmra.mrb[0].mxu0 %v1324
      %v1384 = vpop.f32.mrb[0].mxu0
      %v1385 = vadd.f32 %v1321, %v1384
      %v1386 = vpop.f32.mrb[0].mxu0
      %v1387 = vpop.f32.mrb[0].mxu0
      %v1388 = vadd.f32 %v1321, %v1387
      %v1389 = vpop.f32.mrb[0].mxu0
      %1390 = vmatprep.mubr.bf16.mxu0 0
      %1391 = vmatmul.mubr.bf16.gmra.mrb[0].mxu0 %v1327
      %v1392 = vpop.f32.mrb[0].mxu0
      %v1393 = vadd.f32 %v1321, %v1392
      %v1394 = vpop.f32.mrb[0].mxu0
      %v1395 = vpop.f32.mrb[0].mxu0
      %v1396 = vadd.f32 %v1321, %v1395
      %v1397 = vpop.f32.mrb[0].mxu0
      %1398 = vmatprep.mubr.bf16.mxu0 0
      %1399 = vmatmul.mubr.bf16.gmra.mrb[0].mxu0 %v1330
      %v1400 = vpop.f32.mrb[0].mxu0
      %v1401 = vadd.f32 %v1321, %v1400
      %v1402 = vpop.f32.mrb[0].mxu0
      %v1403 = vpop.f32.mrb[0].mxu0
      %v1404 = vadd.f32 %v1321, %v1403
      %v1405 = vpop.f32.mrb[0].mxu0
      %1406 = vmatprep.mubr.bf16.mxu0 0
      %1407 = vmatmul.mubr.bf16.gmra.mrb[0].mxu0 %v1333
      %v1408 = vpop.f32.mrb[0].mxu0
      %v1409 = vadd.f32 %v1321, %v1408
      %v1410 = vpop.f32.mrb[0].mxu0
      %v1411 = vpop.f32.mrb[0].mxu0
      %v1412 = vadd.f32 %v1321, %v1411
      %v1413 = vpop.f32.mrb[0].mxu0
      %1414 = vmatprep.mubr.bf16.mxu0 0
      %1415 = vmatmul.mubr.bf16.gmra.mrb[0].mxu0 %v1336
      %v1416 = vpop.f32.mrb[0].mxu0
      %v1417 = vadd.f32 %v1321, %v1416
      %v1418 = vpop.f32.mrb[0].mxu0
      %v1419 = vpop.f32.mrb[0].mxu0
      %v1420 = vadd.f32 %v1321, %v1419
      %v1421 = vpop.f32.mrb[0].mxu0
      %1422 = vmatprep.mubr.bf16.mxu0 0
      %1423 = vmatmul.mubr.bf16.gmra.mrb[0].mxu0 %v1339
      %v1424 = vpop.f32.mrb[0].mxu0
      %v1425 = vadd.f32 %v1321, %v1424
      %v1426 = vpop.f32.mrb[0].mxu0
      %v1427 = vpop.f32.mrb[0].mxu0
      %v1428 = vadd.f32 %v1321, %v1427
      %v1429 = vpop.f32.mrb[0].mxu0
      %1430 = vmatprep.mubr.bf16.mxu0 0
      %1431 = vmatmul.mubr.bf16.gmra.mrb[0].mxu0 %v1342
      %v1432 = vpop.f32.mrb[0].mxu0
      %v1433 = vadd.f32 %v1321, %v1432
      %v1434 = vpop.f32.mrb[0].mxu0
      %v1435 = vpop.f32.mrb[0].mxu0
      %v1436 = vadd.f32 %v1321, %v1435
      %v1437 = vpop.f32.mrb[0].mxu0
      %1438 = vmatprep.mubr.bf16.mxu0 0
      %1439 = vmatmul.mubr.bf16.gmra.mrb[0].mxu0 %v1345
      %v1440 = vpop.f32.mrb[0].mxu0
      %v1441 = vadd.f32 %v1321, %v1440
      %v1442 = vpop.f32.mrb[0].mxu0
      %v1443 = vpop.f32.mrb[0].mxu0
      %v1444 = vadd.f32 %v1321, %v1443
      %v1445 = vpop.f32.mrb[0].mxu0
      %1446 = vdwg.mxu0
      %v1447 = vld [vmem:[%s14] sm:$0x1]
      %v1449 = vlaneseq
      %v1450 = vshrl.u32 %v1449, 7
      %v1451 = vsub.s32 0, %v1450
      %v1452 = vrot.slane %v1447, %v1451
      %v1454 = vmul.f32 %v1385, %v1452
      %v1455 = vmul.f32 %v1388, %v1452
      %v1456 = vmul.f32 %v1393, %v1452
      %v1457 = vmul.f32 %v1396, %v1452
      %v1458 = vmul.f32 %v1401, %v1452
      %v1459 = vmul.f32 %v1404, %v1452
      %v1460 = vmul.f32 %v1409, %v1452
      %v1461 = vmul.f32 %v1412, %v1452
      %v1462 = vmul.f32 %v1417, %v1452
      %v1463 = vmul.f32 %v1420, %v1452
      %v1464 = vmul.f32 %v1425, %v1452
      %v1465 = vmul.f32 %v1428, %v1452
      %v1466 = vmul.f32 %v1433, %v1452
      %v1467 = vmul.f32 %v1436, %v1452
      %v1468 = vmul.f32 %v1441, %v1452
      %v1469 = vmul.f32 %v1444, %v1452
      %v1470 = vadd.f32 %v772, %v1454
      %v1471 = vadd.f32 %v773, %v1455
      %v1472 = vadd.f32 %v774, %v1456
      %v1473 = vadd.f32 %v775, %v1457
      %v1474 = vadd.f32 %v776, %v1458
      %v1475 = vadd.f32 %v777, %v1459
      %v1476 = vadd.f32 %v778, %v1460
      %v1477 = vadd.f32 %v779, %v1461
      %v1478 = vadd.f32 %v780, %v1462
      %v1479 = vadd.f32 %v781, %v1463
      %v1480 = vadd.f32 %v782, %v1464
      %v1481 = vadd.f32 %v783, %v1465
      %v1482 = vadd.f32 %v784, %v1466
      %v1483 = vadd.f32 %v785, %v1467
      %v1484 = vadd.f32 %v786, %v1468
      %v1485 = vadd.f32 %v787, %v1469
      %v1486 = vld [vmem:[%s534] sm:$0xff]
      %v1487 = vld [vmem:[%s534 + $0x8] sm:$0xff]
      %v1488 = vld [vmem:[%s534 + $0x10] sm:$0xff]
      %v1489 = vld [vmem:[%s534 + $0x18] sm:$0xff]
      %v1490 = vld [vmem:[%s534 + $0x20] sm:$0xff]
      %v1491 = vld [vmem:[%s534 + $0x28] sm:$0xff]
      %v1492 = vld [vmem:[%s534 + $0x30] sm:$0xff]
      %v1493 = vld [vmem:[%s534 + $0x38] sm:$0xff]
      %v1494 = vld [vmem:[%s534 + $0x40] sm:$0xff]
      %v1495 = vld [vmem:[%s534 + $0x48] sm:$0xff]
      %v1496 = vld [vmem:[%s534 + $0x50] sm:$0xff]
      %v1497 = vld [vmem:[%s534 + $0x58] sm:$0xff]
      %v1498 = vld [vmem:[%s534 + $0x60] sm:$0xff]
      %v1499 = vld [vmem:[%s534 + $0x68] sm:$0xff]
      %v1500 = vld [vmem:[%s534 + $0x70] sm:$0xff]
      %v1501 = vld [vmem:[%s534 + $0x78] sm:$0xff]
      %v1502 = vadd.f32 %v1470, %v1486
      %v1503 = vadd.f32 %v1471, %v1487
      %v1504 = vadd.f32 %v1472, %v1488
      %v1505 = vadd.f32 %v1473, %v1489
      %v1506 = vadd.f32 %v1474, %v1490
      %v1507 = vadd.f32 %v1475, %v1491
      %v1508 = vadd.f32 %v1476, %v1492
      %v1509 = vadd.f32 %v1477, %v1493
      %v1510 = vadd.f32 %v1478, %v1494
      %v1511 = vadd.f32 %v1479, %v1495
      %v1512 = vadd.f32 %v1480, %v1496
      %v1513 = vadd.f32 %v1481, %v1497
      %v1514 = vadd.f32 %v1482, %v1498
      %v1515 = vadd.f32 %v1483, %v1499
      %v1516 = vadd.f32 %v1484, %v1500
      %v1517 = vadd.f32 %v1485, %v1501
      %1518 = vst.msk [vmem:[%s540] sm:$0xff] %vm607, %v1502
      %1519 = vst.msk [vmem:[%s540 + $0x8] sm:$0xff] %vm607, %v1503
      %1520 = vst.msk [vmem:[%s540 + $0x10] sm:$0xff] %vm607, %v1504
      %1521 = vst.msk [vmem:[%s540 + $0x18] sm:$0xff] %vm607, %v1505
      %1522 = vst.msk [vmem:[%s540 + $0x20] sm:$0xff] %vm607, %v1506
      %1523 = vst.msk [vmem:[%s540 + $0x28] sm:$0xff] %vm607, %v1507
      %1524 = vst.msk [vmem:[%s540 + $0x30] sm:$0xff] %vm607, %v1508
      %1525 = vst.msk [vmem:[%s540 + $0x38] sm:$0xff] %vm607, %v1509
      %1526 = vst.msk [vmem:[%s540 + $0x40] sm:$0xff] %vm607, %v1510
      %1527 = vst.msk [vmem:[%s540 + $0x48] sm:$0xff] %vm607, %v1511
      %1528 = vst.msk [vmem:[%s540 + $0x50] sm:$0xff] %vm607, %v1512
      %1529 = vst.msk [vmem:[%s540 + $0x58] sm:$0xff] %vm607, %v1513
      %1530 = vst.msk [vmem:[%s540 + $0x60] sm:$0xff] %vm607, %v1514
      %1531 = vst.msk [vmem:[%s540 + $0x68] sm:$0xff] %vm607, %v1515
      %1532 = vst.msk [vmem:[%s540 + $0x70] sm:$0xff] %vm607, %v1516
      %1533 = vst.msk [vmem:[%s540 + $0x78] sm:$0xff] %vm607, %v1517
      %s1534 = smul.u32 16, %s26
      %p1535 = scmp.lt.s32.totalorder %s1534, 63
      %s1536 = scalar_select %p1535, %s1534, 63
      %s1537 = smul.addr %s1536, 8
      %s1538 = scalar_lea.vmem %s15, %s1537
      // Predicated region
      $region81: #{fnafnet_block_forward.7} parent=79 // pred_check
        %p1539 = pneg %p374
      $region82: #{fnafnet_block_forward.7} parent=79 // pred_check_branch
        %1541 = sbr.rel (%p1539) target = $region84
      $region83: #{fnafnet_block_forward.7} parent=79 // pred_region
        %s1542 = smul.u32 16, %s26
      $region84: #{fnafnet_block_forward.7} parent=79 // pred_fallthru
        _
    $region80: #{fnafnet_block_forward.7} parent=5 // pred_fallthru
      _
    %p1543 = scmp.le.s32.totalorder 2, %s21
    // Predicated region
    $region85: #{fnafnet_block_forward.7} parent=5 // pred_check
      %p1544 = pneg %p1543
    $region86: #{fnafnet_block_forward.7} parent=5 // pred_check_branch
      %1546 = sbr.rel (%p1544) target = $region88
    $region87: #{fnafnet_block_forward.7} parent=5 // pred_region
      %s1547 = ssub.s32 %s21, 2
      // Predicated region
      $region89: #{fnafnet_block_forward.7} parent=87 // pred_check
        %p1548 = pneg %p380
      $region90: #{fnafnet_block_forward.7} parent=87 // pred_check_branch
        %1550 = sbr.rel (%p1548) target = $region92
      $region91: #{fnafnet_block_forward.7} parent=87 // pred_region
        %s1551 = smul.u32 16, %s27
        %p1552 = scmp.lt.s32.totalorder %s1551, 63
        %s1553 = scalar_select %p1552, %s1551, 63
        %s1554 = smul.addr %s1553, 8
        %s1555 = scalar_lea.vmem %s15, %s1554
      $region92: #{fnafnet_block_forward.7} parent=87 // pred_fallthru
        _
    $region88: #{fnafnet_block_forward.7} parent=5 // pred_fallthru
      _
  $region6: #{fnafnet_block_forward.7} parent=0 // loop_footer
    %s25 = sadd.s32 1, %s21
  $region7: #{fnafnet_block_forward.7} parent=0 // loop_footer_branch
    %20 = sbr.rel target = $region3
  $region8: #{fnafnet_block_forward.7} parent=0 // loop_exit
    _

</llo_original>
